<compile_context>
chip_gen: v7x
topology: tpu7x:2x2x1
jax: 0.10.0
libtpu: 0.0.40
codegen_flags: <defaults>
</compile_context>

<pallas_src>
import jax
import jax.numpy as jnp
import numpy as np
from jax.experimental import pallas as pl
from jax.experimental.pallas import tpu as pltpu

GELU_APPROX = True  # tanh GELU -> EUP slot; set False for PyTorch's exact erf


# ----------------------------- shared math helpers ---------------------------
def _gelu(x):
    return jax.nn.gelu(x, approximate=GELU_APPROX)


def _round_up(n, m):
    return ((n + m - 1) // m) * m


def _pad_to(a, shape):
    return jnp.pad(a, [(0, s - d) for d, s in zip(a.shape, shape)])


# --------------------------------- Pallas kernel ------------------------------
def _make_kernel(meta):
    t_valid, t_pad, pad_rows = meta["T"], meta["Tp"], meta["pad"]
    n_in_ch, hp = meta["C"], meta["Hp"]
    blocks = meta["blocks"]  # tuples: (d_eff, has_proj, cin_p, cout_p)

    def kernel(*refs):
        x_ref, fc_w_ref, fc_b_ref = refs[0], refs[1], refs[2]
        o_ref, pad_ref = refs[-2], refs[-1]
        w_refs = refs[3:-2]

        tb = x_ref.shape[0]
        total_rows, lanes = pad_ref.shape[1], pad_ref.shape[2]

        # Only the conv halo (leading) and tail rows of the scratch need to be
        # zero — they are never written, so the shifted slices below see exact
        # "same" zero padding.  Re-zeroed every step (a handful of rows, cheap)
        # so this stays correct when the parallel grid is split across cores.
        pad_ref[:, :pad_rows, :] = jnp.zeros((tb, pad_rows, lanes), pad_ref.dtype)
        tail = total_rows - (pad_rows + t_valid)
        pad_ref[:, pad_rows + t_valid:, :] = jnp.zeros((tb, tail, lanes),
                                                       pad_ref.dtype)

        x = x_ref[...]                                   # (tb, Tp, C) f32, C tiny
        # nan_mask = ~isnan(x).any(-1)  (exact torch semantics)
        nan_any = jnp.sum(jnp.where(jnp.isnan(x), 1.0, 0.0),
                          axis=-1, keepdims=True) > 0
        x = jnp.where(nan_any, 0.0, x)

        # input_fc: K = C (4..5) -> C broadcast-FMAs on the VPU; channels stay
        # unpadded in HBM (no 32x-inflated input DMA, no K full of zeros).
        w_fc = fc_w_ref[...]                             # (C, Hp) f32
        h = x[:, :, 0:1] * w_fc[0:1, :].reshape(1, 1, hp)
        for c in range(1, n_in_ch):
            h = h + x[:, :, c:c + 1] * w_fc[c:c + 1, :].reshape(1, 1, hp)
        h = h + fc_b_ref[...].reshape(1, 1, hp)
        h = jnp.where(nan_any, 0.0, h)                   # eval: all_true & nan_mask

        def dilated_conv(act_bf, w_ref, b_ref, d, cin_p, cout_p):
            # Valid time rows of the (bf16-valued) activation go into the f32
            # halo scratch; halo/tail rows stay zero -> exact 'same' padding.
            pad_ref[:, pad_rows:pad_rows + t_valid, :cin_p] = (
                act_bf[:, :t_valid, :].astype(jnp.float32))
            left = pad_ref[:, pad_rows - d:pad_rows - d + t_pad, :cin_p]   # x[t-d]
            right = pad_ref[:, pad_rows + d:pad_rows + d + t_pad, :cin_p]  # x[t+d]
            rows = tb * t_pad
            # Three accumulated K=cin_p MXU dots (no 3*Cin im2col buffer).
            y = jnp.dot(left.astype(jnp.bfloat16).reshape(rows, cin_p), w_ref[0],
                        preferred_element_type=jnp.float32)
            y = y + jnp.dot(act_bf.reshape(rows, cin_p), w_ref[1],
                            preferred_element_type=jnp.float32)
            y = y + jnp.dot(right.astype(jnp.bfloat16).reshape(rows, cin_p),
                            w_ref[2], preferred_element_type=jnp.float32)
            y = y + b_ref[...]
            return y.reshape(tb, t_pad, cout_p)

        idx = 0
        for d, has_proj, cin_p, cout_p in blocks:
            w1, b1, w2, b2 = (w_refs[idx], w_refs[idx + 1],
                              w_refs[idx + 2], w_refs[idx + 3])
            idx += 4
            if has_proj:
                pw, pb = w_refs[idx], w_refs[idx + 1]
                idx += 2
                rows = tb * t_pad
                residual = (jnp.dot(h.astype(jnp.bfloat16).reshape(rows, cin_p),
                                    pw[...], preferred_element_type=jnp.float32)
                            + pb[...]).reshape(tb, t_pad, cout_p)
            else:
                residual = h
            act = _gelu(h.astype(jnp.bfloat16))          # bf16 GELU (EUP/VPU 2x)
            y = dilated_conv(act, w1, b1, d, cin_p, cout_p)
            act2 = _gelu(y.astype(jnp.bfloat16))
            y2 = dilated_conv(act2, w2, b2, d, cout_p, cout_p)
            h = y2 + residual

        # TODO(synk): repr_dropout (p=0.1) is identity in eval mode.

        # max-pool over the valid time rows (static slice), then F.normalize.
        pooled = jnp.max(h[:, :t_valid, :], axis=1, keepdims=True)  # (tb, 1, Op)
        ssq = jnp.sum(pooled * pooled, axis=-1, keepdims=True)
        o_ref[...] = pooled * jax.lax.rsqrt(jnp.maximum(ssq, 1e-24))

    return kernel


# ---------------------------- wrapper-side packing -----------------------------
def prepare_params(params, block_cfgs):
    """Pad hidden/output channel dims to multiples of 128 (input C stays as-is),
    keep conv taps separate as (3, Cin_p, Cout_p), cast matmul weights to bf16
    (input_fc + biases stay f32)."""
    C, H = params["fc_w"].shape
    Hp = _round_up(H, 128)
    packed = {
        "fc_w": _pad_to(params["fc_w"], (C, Hp)).astype(jnp.float32),
        "fc_b": _pad_to(params["fc_b"], (1, Hp)).astype(jnp.float32),
        "C": C, "H": H, "Hp": Hp,
    }
    blocks = []
    for blk, cfg in zip(params["blocks"], block_cfgs):
        _, cin, cout = blk["w1"].shape
        cin_p, cout_p = _round_up(cin, 128), _round_up(cout, 128)
        entry = {
            "dilation": int(cfg["dilation"]),
            "has_proj": bool(cfg["has_proj"]),
            "cin_p": cin_p, "cout_p": cout_p,
            "w1": _pad_to(blk["w1"], (3, cin_p, cout_p)).astype(jnp.bfloat16),
            "b1": _pad_to(blk["b1"], (1, cout_p)).astype(jnp.float32),
            "w2": _pad_to(blk["w2"], (3, cout_p, cout_p)).astype(jnp.bfloat16),
            "b2": _pad_to(blk["b2"], (1, cout_p)).astype(jnp.float32),
        }
        if entry["has_proj"]:
            entry["pw"] = _pad_to(blk["pw"], (cin_p, cout_p)).astype(jnp.bfloat16)
            entry["pb"] = _pad_to(blk["pb"], (1, cout_p)).astype(jnp.float32)
        blocks.append(entry)
    packed["blocks"] = blocks
    packed["O"] = int(params["blocks"][-1]["b2"].shape[-1])
    packed["Op"] = blocks[-1]["cout_p"]
    return packed


def ts_encoder_forward(x_nchw, packed):
    # (B, C, T, 1) -> (B, T, C), matching x.transpose(1, 2).squeeze(-1)
    x = jnp.squeeze(jnp.swapaxes(x_nchw, 1, 2), -1).astype(jnp.float32)
    B, T, C = x.shape
    Hp, Op = packed["Hp"], packed["Op"]
    Tp = _round_up(T, 8)
    blocks = packed["blocks"]

    # Bounded dilation halo: a shift >= T reads only zeros, so clamp it.
    maxd = max(b["dilation"] for b in blocks)
    pad_rows = _round_up(max(min(maxd, Tp), 1), 8)
    d_effs = [min(b["dilation"], pad_rows) for b in blocks]
    cmax = max([Hp] + [b["cin_p"] for b in blocks] + [b["cout_p"] for b in blocks])

    weight_inputs = [packed["fc_w"], packed["fc_b"]]
    for b in blocks:
        weight_inputs += [b["w1"], b["b1"], b["w2"], b["b2"]]
        if b["has_proj"]:
            weight_inputs += [b["pw"], b["pb"]]
    weight_bytes = sum(int(a.size) * a.dtype.itemsize for a in weight_inputs)

    # Generation-aware VMEM budget (128 MiB on v5e/v6e, 64 MiB per-TC on v7x).
    try:
        info = pltpu.get_tpu_info()
        vmem_cap = int(getattr(info, "vmem_capacity_bytes", 0)) or (64 << 20)
    except Exception:
        vmem_cap = 64 << 20
    budget = (vmem_cap * 3) // 4

    def tile_bytes(t):
        live = 14 * t * Tp * cmax * 4                 # f32/bf16 activation temps
        scratch = t * (Tp + 2 * pad_rows) * cmax * 4  # f32 conv halo scratch
        io = 2 * t * Tp * C * 4 + 2 * t * Op * 4      # double-buffered x / out
        return live + scratch + io

    weight_foot = 2 * weight_bytes  # worst case: pipeliner double-buffers weights

    # Batch tile: largest power-of-two <= B that fits the budget, but keep at
    # least 2 grid steps when B > 1 so both v7x TensorCores get work.
    tb_cap = 1
    while tb_cap * 2 <= max(B, 1):
        tb_cap *= 2
    tb = 1
    while tb < tb_cap and weight_foot + tile_bytes(tb * 2) <= budget:
        tb *= 2
    if B > 1 and _round_up(B, tb) // tb < 2:
        tb = max(tb // 2, 1)
    Bp = _round_up(B, tb)

    # Pad batch + time only; channels stay at their true width in HBM.
    x_p = jnp.pad(x, ((0, Bp - B), (0, Tp - T), (0, 0)))

    meta = {
        "T": T, "Tp": Tp, "pad": pad_rows, "C": C, "Hp": Hp,
        "blocks": tuple((de, b["has_proj"], b["cin_p"], b["cout_p"])
                        for de, b in zip(d_effs, blocks)),
    }
    kernel = _make_kernel(meta)

    # Advisory cost hint for XLA's scheduler.
    rows = Bp * Tp
    flops = 2 * rows * C * Hp
    trans = 0
    for b in blocks:
        flops += 2 * rows * 3 * (b["cin_p"] * b["cout_p"]
                                 + b["cout_p"] * b["cout_p"])
        if b["has_proj"]:
            flops += 2 * rows * b["cin_p"] * b["cout_p"]
        trans += rows * (b["cin_p"] + b["cout_p"])
    bytes_accessed = int(x_p.size) * 4 + weight_bytes + Bp * Op * 4

    vmem_limit = int(min(max(weight_foot + tile_bytes(tb) + (4 << 20), 16 << 20),
                         budget))

    def call(single_buffer_weights):
        def wspec(a):
            zeros = (0,) * a.ndim
            kw = {"pipeline_mode": pl.Buffered(1)} if single_buffer_weights else {}
            return pl.BlockSpec(a.shape, lambda i, _z=zeros: _z, **kw)

        in_specs = [pl.BlockSpec((tb, Tp, C), lambda i: (i, 0, 0))]
        in_specs += [wspec(a) for a in weight_inputs]
        return pl.pallas_call(
            kernel,
            grid=(Bp // tb,),
            in_specs=in_specs,
            out_specs=pl.BlockSpec((tb, 1, Op), lambda i: (i, 0, 0)),
            out_shape=jax.ShapeDtypeStruct((Bp, 1, Op), jnp.float32),
            scratch_shapes=[pltpu.VMEM((tb, Tp + 2 * pad_rows, cmax),
                                       jnp.float32)],
            compiler_params=pltpu.CompilerParams(
                dimension_semantics=("parallel",),
                vmem_limit_bytes=vmem_limit),
            cost_estimate=pl.CostEstimate(flops=int(flops),
                                          transcendentals=int(trans),
                                          bytes_accessed=int(bytes_accessed)),
        )(x_p, *weight_inputs)

    try:
        out = call(True)    # resident weights single-buffered (frees VMEM on v7x)
    except Exception:
        out = call(False)   # fall back if pipeline_mode=Buffered(1) is rejected
    return out[:B, 0, :packed["O"]]


# ------------------------------- pure-JAX reference ---------------------------
def _shift_time_ref(x, off):
    # y[t] = x[t + off] with zero padding outside [0, T)
    B, T, C = x.shape
    if off == 0:
        return x
    o = min(abs(off), T)
    z = jnp.zeros((B, o, C), x.dtype)
    if off > 0:
        return jnp.concatenate([x[:, o:, :], z], axis=1)
    return jnp.concatenate([z, x[:, :T - o, :]], axis=1)


def _ref_mm(x3, w_bf16, b_f32):
    B, T, K = x3.shape
    y = jnp.dot(x3.reshape(B * T, K).astype(jnp.bfloat16), w_bf16,
                preferred_element_type=jnp.float32) + b_f32
    return y.reshape(B, T, w_bf16.shape[1])


def _ref_conv(act_bf, w3, b, d):
    B, T, K = act_bf.shape
    left = _shift_time_ref(act_bf, -d)      # x[t-d]  <-> tap 0
    right = _shift_time_ref(act_bf, d)      # x[t+d]  <-> tap 2

    def mm(a, w):
        return jnp.dot(a.reshape(B * T, K), w, preferred_element_type=jnp.float32)

    y = mm(left, w3[0]) + mm(act_bf, w3[1]) + mm(right, w3[2]) + b
    return y.reshape(B, T, w3.shape[2])


def ts_encoder_reference(x_nchw, packed):
    x = jnp.squeeze(jnp.swapaxes(x_nchw, 1, 2), -1).astype(jnp.float32)
    nan_any = jnp.any(jnp.isnan(x), axis=-1, keepdims=True)
    x = jnp.where(nan_any, 0.0, x)
    h = jnp.einsum("btc,ch->bth", x, packed["fc_w"],
                   precision=jax.lax.Precision.HIGHEST) + packed["fc_b"].reshape(1, 1, -1)
    h = jnp.where(nan_any, 0.0, h)
    for blk in packed["blocks"]:
        d = blk["dilation"]
        residual = _ref_mm(h, blk["pw"], blk["pb"]) if blk["has_proj"] else h
        act = _gelu(h.astype(jnp.bfloat16))
        y = _ref_conv(act, blk["w1"], blk["b1"], d)
        act2 = _gelu(y.astype(jnp.bfloat16))
        y2 = _ref_conv(act2, blk["w2"], blk["b2"], d)
        h = y2 + residual
    pooled = jnp.max(h, axis=1)
    norm = jnp.sqrt(jnp.sum(pooled * pooled, axis=-1, keepdims=True))
    return (pooled / jnp.maximum(norm, 1e-12))[:, :packed["O"]]


# ------------------------------- deterministic init ---------------------------
def init_params(key, C, H, O, depth):
    keys = iter(jax.random.split(key, 8 * (depth + 2) + 4))

    def nrm(shape, scale=0.1):
        return (scale * jax.random.normal(next(keys), shape)).astype(jnp.float32)

    params = {"fc_w": nrm((C, H)), "fc_b": nrm((1, H))}
    channels = [H] * depth + [O]
    blocks, cfgs = [], []
    for i, cout in enumerate(channels):
        cin = H if i == 0 else channels[i - 1]
        final = i == len(channels) - 1
        has_proj = (cin != cout) or final
        blk = {"w1": nrm((3, cin, cout)), "b1": nrm((1, cout)),
               "w2": nrm((3, cout, cout)), "b2": nrm((1, cout))}
        if has_proj:
            blk["pw"] = nrm((cin, cout))
            blk["pb"] = nrm((1, cout))
        blocks.append(blk)
        cfgs.append({"dilation": 2 ** i, "has_proj": has_proj})
    params["blocks"] = blocks
    return params, cfgs


# -------------------------------------- main ----------------------------------
if __name__ == "__main__":
    def run_case(B, C, T, H, O, depth):
        key = jax.random.PRNGKey(0)
        kx, kp = jax.random.split(key)
        x = jax.random.normal(kx, (B, C, T, 1), jnp.float32)
        # inject NaNs at a couple of timesteps to exercise the nan-mask path
        x = x.at[0, 1, min(3, T - 1), 0].set(jnp.nan)
        x = x.at[B - 1, 0, min(7, T - 1), 0].set(jnp.nan)
        params, cfgs = init_params(kp, C, H, O, depth)
        packed = prepare_params(params, cfgs)

        out = jax.block_until_ready(ts_encoder_forward(x, packed))
        ref = ts_encoder_reference(x, packed)
        assert out.shape == (B, O)
        np.testing.assert_allclose(np.asarray(out), np.asarray(ref),
                                   rtol=2e-3, atol=2e-3)

    # cfg: CHANNELS=4, HIDDEN_SIZE=32, PROJECTION_DIM=16, DEPTH=2; B=2, T=16
    run_case(B=2, C=4, T=16, H=32, O=16, depth=2)
    # exercises time padding (T % 8 != 0), odd B, and a multi-step batch grid
    run_case(B=3, C=5, T=13, H=24, O=16, depth=1)

    print("KERNEL_OK")
</pallas_src>

<mosaic_0001>
module attributes {stable_mosaic.version = 11 : i64} {
  func.func @kernel(%arg0: i32, %arg1: memref<1x16x4xf32, #tpu.memory_space<vmem>>, %arg2: memref<4x128xf32, #tpu.memory_space<vmem>>, %arg3: memref<1x128xf32, #tpu.memory_space<vmem>>, %arg4: memref<3x128x128xbf16, #tpu.memory_space<vmem>>, %arg5: memref<1x128xf32, #tpu.memory_space<vmem>>, %arg6: memref<3x128x128xbf16, #tpu.memory_space<vmem>>, %arg7: memref<1x128xf32, #tpu.memory_space<vmem>>, %arg8: memref<3x128x128xbf16, #tpu.memory_space<vmem>>, %arg9: memref<1x128xf32, #tpu.memory_space<vmem>>, %arg10: memref<3x128x128xbf16, #tpu.memory_space<vmem>>, %arg11: memref<1x128xf32, #tpu.memory_space<vmem>>, %arg12: memref<3x128x128xbf16, #tpu.memory_space<vmem>>, %arg13: memref<1x128xf32, #tpu.memory_space<vmem>>, %arg14: memref<3x128x128xbf16, #tpu.memory_space<vmem>>, %arg15: memref<1x128xf32, #tpu.memory_space<vmem>>, %arg16: memref<128x128xbf16, #tpu.memory_space<vmem>>, %arg17: memref<1x128xf32, #tpu.memory_space<vmem>>, %arg18: memref<1x1x128xf32, #tpu.memory_space<vmem>>, %arg19: memref<1x32x128xf32, #tpu.memory_space<vmem>>) attributes {dimension_semantics = [#tpu.dimension_semantics<parallel>], iteration_bounds = array<i64: 2>, scalar_prefetch = 0 : i64, scratch_operands = 1 : i64, tpu.core_type = #tpu.core_type<tc>, window_params = [{transform_indices = @transform_0, window_bounds = array<i64: 1, 16, 4>}, {pipeline_mode = #tpu.pipeline_mode<synchronous>, transform_indices = @transform_1, window_bounds = array<i64: 4, 128>}, {pipeline_mode = #tpu.pipeline_mode<synchronous>, transform_indices = @transform_2, window_bounds = array<i64: 1, 128>}, {pipeline_mode = #tpu.pipeline_mode<synchronous>, transform_indices = @transform_3, window_bounds = array<i64: 3, 128, 128>}, {pipeline_mode = #tpu.pipeline_mode<synchronous>, transform_indices = @transform_4, window_bounds = array<i64: 1, 128>}, {pipeline_mode = #tpu.pipeline_mode<synchronous>, transform_indices = @transform_5, window_bounds = array<i64: 3, 128, 128>}, {pipeline_mode = #tpu.pipeline_mode<synchronous>, transform_indices = @transform_6, window_bounds = array<i64: 1, 128>}, {pipeline_mode = #tpu.pipeline_mode<synchronous>, transform_indices = @transform_7, window_bounds = array<i64: 3, 128, 128>}, {pipeline_mode = #tpu.pipeline_mode<synchronous>, transform_indices = @transform_8, window_bounds = array<i64: 1, 128>}, {pipeline_mode = #tpu.pipeline_mode<synchronous>, transform_indices = @transform_9, window_bounds = array<i64: 3, 128, 128>}, {pipeline_mode = #tpu.pipeline_mode<synchronous>, transform_indices = @transform_10, window_bounds = array<i64: 1, 128>}, {pipeline_mode = #tpu.pipeline_mode<synchronous>, transform_indices = @transform_11, window_bounds = array<i64: 3, 128, 128>}, {pipeline_mode = #tpu.pipeline_mode<synchronous>, transform_indices = @transform_12, window_bounds = array<i64: 1, 128>}, {pipeline_mode = #tpu.pipeline_mode<synchronous>, transform_indices = @transform_13, window_bounds = array<i64: 3, 128, 128>}, {pipeline_mode = #tpu.pipeline_mode<synchronous>, transform_indices = @transform_14, window_bounds = array<i64: 1, 128>}, {pipeline_mode = #tpu.pipeline_mode<synchronous>, transform_indices = @transform_15, window_bounds = array<i64: 128, 128>}, {pipeline_mode = #tpu.pipeline_mode<synchronous>, transform_indices = @transform_16, window_bounds = array<i64: 1, 128>}, {transform_indices = @transform_17, window_bounds = array<i64: 1, 1, 128>}]} {
    %cst = arith.constant 0.000000e+00 : f32
    %0 = vector.broadcast %cst : f32 to vector<1x8x128xf32>
    %c0 = arith.constant 0 : index
    %c0_0 = arith.constant 0 : index
    %c0_1 = arith.constant 0 : index
    %1 = vector.load %arg19[%c0, %c0_0, %c0_1] : memref<1x32x128xf32, #tpu.memory_space<vmem>>, vector<1x8x128xf32>
    tpu.vector_store %arg19[%c0, %c0_0, %c0_1], %0 {strides = array<i32>} : memref<1x32x128xf32, #tpu.memory_space<vmem>>, vector<1x8x128xf32>,
    %cst_2 = arith.constant 0.000000e+00 : f32
    %2 = vector.broadcast %cst_2 : f32 to vector<1x8x128xf32>
    %c0_3 = arith.constant 0 : index
    %c24 = arith.constant 24 : index
    %c0_4 = arith.constant 0 : index
    %3 = vector.load %arg19[%c0_3, %c24, %c0_4] : memref<1x32x128xf32, #tpu.memory_space<vmem>>, vector<1x8x128xf32>
    tpu.vector_store %arg19[%c0_3, %c24, %c0_4], %2 {strides = array<i32>} : memref<1x32x128xf32, #tpu.memory_space<vmem>>, vector<1x8x128xf32>,
    %c0_5 = arith.constant 0 : index
    %c0_6 = arith.constant 0 : index
    %c0_7 = arith.constant 0 : index
    %4 = vector.load %arg1[%c0_5, %c0_6, %c0_7] : memref<1x16x4xf32, #tpu.memory_space<vmem>>, vector<1x16x4xf32>
    %5 = arith.cmpf one, %4, %4 : vector<1x16x4xf32>
    %cst_8 = arith.constant 1.000000e+00 : f32
    %cst_9 = arith.constant 0.000000e+00 : f32
    %6 = vector.broadcast %cst_8 : f32 to vector<1x16x4xf32>
    %7 = vector.broadcast %cst_9 : f32 to vector<1x16x4xf32>
    %8 = arith.select %5, %6, %7 : vector<1x16x4xi1>, vector<1x16x4xf32>
    %cst_10 = arith.constant dense<0.000000e+00> : vector<1x16xf32>
    %9 = vector.multi_reduction <add>, %8, %cst_10 [2] : vector<1x16x4xf32> to vector<1x16xf32>
    %10 = vector.shape_cast %9 : vector<1x16xf32> to vector<1x16x1xf32>
    %cst_11 = arith.constant 0.000000e+00 : f32
    %11 = vector.broadcast %cst_11 : f32 to vector<1x16x1xf32>
    %12 = arith.cmpf ogt, %10, %11 : vector<1x16x1xf32>
    %cst_12 = arith.constant 0.000000e+00 : f32
    %13 = vector.shape_cast %12 : vector<1x16x1xi1> to vector<1x16x1xi1>
    %14 = vector.broadcast %13 : vector<1x16x1xi1> to vector<1x16x4xi1>
    %15 = vector.broadcast %cst_12 : f32 to vector<1x16x4xf32>
    %16 = arith.select %14, %15, %4 : vector<1x16x4xi1>, vector<1x16x4xf32>
    %c0_13 = arith.constant 0 : index
    %c0_14 = arith.constant 0 : index
    %17 = vector.load %arg2[%c0_13, %c0_14] : memref<4x128xf32, #tpu.memory_space<vmem>>, vector<4x128xf32>
    %18 = vector.extract_strided_slice %16 {offsets = [0, 0, 0], sizes = [1, 16, 1], strides = [1, 1, 1]} : vector<1x16x4xf32> to vector<1x16x1xf32>
    %19 = vector.extract_strided_slice %17 {offsets = [0, 0], sizes = [1, 128], strides = [1, 1]} : vector<4x128xf32> to vector<1x128xf32>
    %20 = vector.shape_cast %19 : vector<1x128xf32> to vector<1x1x128xf32>
    %21 = vector.broadcast %18 : vector<1x16x1xf32> to vector<1x16x128xf32>
    %22 = vector.broadcast %20 : vector<1x1x128xf32> to vector<1x16x128xf32>
    %23 = arith.mulf %21, %22 : vector<1x16x128xf32>
    %24 = vector.extract_strided_slice %16 {offsets = [0, 0, 1], sizes = [1, 16, 1], strides = [1, 1, 1]} : vector<1x16x4xf32> to vector<1x16x1xf32>
    %25 = vector.extract_strided_slice %17 {offsets = [1, 0], sizes = [1, 128], strides = [1, 1]} : vector<4x128xf32> to vector<1x128xf32>
    %26 = vector.shape_cast %25 : vector<1x128xf32> to vector<1x1x128xf32>
    %27 = vector.broadcast %24 : vector<1x16x1xf32> to vector<1x16x128xf32>
    %28 = vector.broadcast %26 : vector<1x1x128xf32> to vector<1x16x128xf32>
    %29 = arith.mulf %27, %28 : vector<1x16x128xf32>
    %30 = arith.addf %23, %29 : vector<1x16x128xf32>
    %31 = vector.extract_strided_slice %16 {offsets = [0, 0, 2], sizes = [1, 16, 1], strides = [1, 1, 1]} : vector<1x16x4xf32> to vector<1x16x1xf32>
    %32 = vector.extract_strided_slice %17 {offsets = [2, 0], sizes = [1, 128], strides = [1, 1]} : vector<4x128xf32> to vector<1x128xf32>
    %33 = vector.shape_cast %32 : vector<1x128xf32> to vector<1x1x128xf32>
    %34 = vector.broadcast %31 : vector<1x16x1xf32> to vector<1x16x128xf32>
    %35 = vector.broadcast %33 : vector<1x1x128xf32> to vector<1x16x128xf32>
    %36 = arith.mulf %34, %35 : vector<1x16x128xf32>
    %37 = arith.addf %30, %36 : vector<1x16x128xf32>
    %38 = vector.extract_strided_slice %16 {offsets = [0, 0, 3], sizes = [1, 16, 1], strides = [1, 1, 1]} : vector<1x16x4xf32> to vector<1x16x1xf32>
    %39 = vector.extract_strided_slice %17 {offsets = [3, 0], sizes = [1, 128], strides = [1, 1]} : vector<4x128xf32> to vector<1x128xf32>
    %40 = vector.shape_cast %39 : vector<1x128xf32> to vector<1x1x128xf32>
    %41 = vector.broadcast %38 : vector<1x16x1xf32> to vector<1x16x128xf32>
    %42 = vector.broadcast %40 : vector<1x1x128xf32> to vector<1x16x128xf32>
    %43 = arith.mulf %41, %42 : vector<1x16x128xf32>
    %44 = arith.addf %37, %43 : vector<1x16x128xf32>
    %c0_15 = arith.constant 0 : index
    %c0_16 = arith.constant 0 : index
    %45 = vector.load %arg3[%c0_15, %c0_16] : memref<1x128xf32, #tpu.memory_space<vmem>>, vector<1x128xf32>
    %46 = vector.shape_cast %45 : vector<1x128xf32> to vector<1x1x128xf32>
    %47 = vector.broadcast %46 : vector<1x1x128xf32> to vector<1x16x128xf32>
    %48 = arith.addf %44, %47 : vector<1x16x128xf32>
    %cst_17 = arith.constant 0.000000e+00 : f32
    %49 = vector.shape_cast %12 : vector<1x16x1xi1> to vector<1x16x1xi1>
    %50 = vector.broadcast %49 : vector<1x16x1xi1> to vector<1x16x128xi1>
    %51 = vector.broadcast %cst_17 : f32 to vector<1x16x128xf32>
    %52 = arith.select %50, %51, %48 : vector<1x16x128xi1>, vector<1x16x128xf32>
    %53 = arith.truncf %52 : vector<1x16x128xf32> to vector<1x16x128xbf16>
    %54 = arith.mulf %53, %53 : vector<1x16x128xbf16>
    %55 = arith.mulf %53, %54 : vector<1x16x128xbf16>
    %cst_18 = arith.constant 4.467770e-02 : bf16
    %56 = vector.broadcast %cst_18 : bf16 to vector<1x16x128xbf16>
    %57 = arith.mulf %56, %55 : vector<1x16x128xbf16>
    %58 = arith.addf %53, %57 : vector<1x16x128xbf16>
    %cst_19 = arith.constant 7.968750e-01 : bf16
    %59 = vector.broadcast %cst_19 : bf16 to vector<1x16x128xbf16>
    %60 = arith.mulf %59, %58 : vector<1x16x128xbf16>
    %61 = math.tanh %60 : vector<1x16x128xbf16>
    %cst_20 = arith.constant 1.000000e+00 : bf16
    %62 = vector.broadcast %cst_20 : bf16 to vector<1x16x128xbf16>
    %63 = arith.addf %62, %61 : vector<1x16x128xbf16>
    %cst_21 = arith.constant 5.000000e-01 : bf16
    %64 = vector.broadcast %cst_21 : bf16 to vector<1x16x128xbf16>
    %65 = arith.mulf %64, %63 : vector<1x16x128xbf16>
    %66 = arith.mulf %53, %65 : vector<1x16x128xbf16>
    %67 = arith.extf %66 : vector<1x16x128xbf16> to vector<1x16x128xf32>
    %c0_22 = arith.constant 0 : index
    %c8 = arith.constant 8 : index
    %c0_23 = arith.constant 0 : index
    %68 = vector.load %arg19[%c0_22, %c8, %c0_23] : memref<1x32x128xf32, #tpu.memory_space<vmem>>, vector<1x16x128xf32>
    tpu.vector_store %arg19[%c0_22, %c8, %c0_23], %67 {strides = array<i32>} : memref<1x32x128xf32, #tpu.memory_space<vmem>>, vector<1x16x128xf32>,
    %c0_24 = arith.constant 0 : index
    %c7 = arith.constant 7 : index
    %c0_25 = arith.constant 0 : index
    %69 = vector.load %arg19[%c0_24, %c7, %c0_25] : memref<1x32x128xf32, #tpu.memory_space<vmem>>, vector<1x16x128xf32>
    %c0_26 = arith.constant 0 : index
    %c9 = arith.constant 9 : index
    %c0_27 = arith.constant 0 : index
    %70 = vector.load %arg19[%c0_26, %c9, %c0_27] : memref<1x32x128xf32, #tpu.memory_space<vmem>>, vector<1x16x128xf32>
    %71 = arith.truncf %69 : vector<1x16x128xf32> to vector<1x16x128xbf16>
    %72 = vector.shape_cast %71 : vector<1x16x128xbf16> to vector<16x128xbf16>
    %c0_28 = arith.constant 0 : index
    %c0_29 = arith.constant 0 : index
    %c0_30 = arith.constant 0 : index
    %73 = vector.load %arg4[%c0_28, %c0_29, %c0_30] : memref<3x128x128xbf16, #tpu.memory_space<vmem>>, vector<1x128x128xbf16>
    %74 = vector.shape_cast %73 : vector<1x128x128xbf16> to vector<128x128xbf16>
    %cst_31 = arith.constant dense<0.000000e+00> : vector<16x128xf32>
    %75 = tpu.matmul %72, %74, %cst_31 {dimension_numbers = #tpu.dot_dimension_numbers<[1], [0], [0], [1], [0, 0, 1, 1], [], []>} : vector<16x128xbf16>, vector<128x128xbf16>, vector<16x128xf32> -> vector<16x128xf32>
    %76 = vector.shape_cast %66 : vector<1x16x128xbf16> to vector<16x128xbf16>
    %c1 = arith.constant 1 : index
    %c0_32 = arith.constant 0 : index
    %c0_33 = arith.constant 0 : index
    %77 = vector.load %arg4[%c1, %c0_32, %c0_33] : memref<3x128x128xbf16, #tpu.memory_space<vmem>>, vector<1x128x128xbf16>
    %78 = vector.shape_cast %77 : vector<1x128x128xbf16> to vector<128x128xbf16>
    %cst_34 = arith.constant dense<0.000000e+00> : vector<16x128xf32>
    %79 = tpu.matmul %76, %78, %cst_34 {dimension_numbers = #tpu.dot_dimension_numbers<[1], [0], [0], [1], [0, 0, 1, 1], [], []>} : vector<16x128xbf16>, vector<128x128xbf16>, vector<16x128xf32> -> vector<16x128xf32>
    %80 = arith.addf %75, %79 : vector<16x128xf32>
    %81 = arith.truncf %70 : vector<1x16x128xf32> to vector<1x16x128xbf16>
    %82 = vector.shape_cast %81 : vector<1x16x128xbf16> to vector<16x128xbf16>
    %c2 = arith.constant 2 : index
    %c0_35 = arith.constant 0 : index
    %c0_36 = arith.constant 0 : index
    %83 = vector.load %arg4[%c2, %c0_35, %c0_36] : memref<3x128x128xbf16, #tpu.memory_space<vmem>>, vector<1x128x128xbf16>
    %84 = vector.shape_cast %83 : vector<1x128x128xbf16> to vector<128x128xbf16>
    %cst_37 = arith.constant dense<0.000000e+00> : vector<16x128xf32>
    %85 = tpu.matmul %82, %84, %cst_37 {dimension_numbers = #tpu.dot_dimension_numbers<[1], [0], [0], [1], [0, 0, 1, 1], [], []>} : vector<16x128xbf16>, vector<128x128xbf16>, vector<16x128xf32> -> vector<16x128xf32>
    %86 = arith.addf %80, %85 : vector<16x128xf32>
    %c0_38 = arith.constant 0 : index
    %c0_39 = arith.constant 0 : index
    %87 = vector.load %arg5[%c0_38, %c0_39] : memref<1x128xf32, #tpu.memory_space<vmem>>, vector<1x128xf32>
    %88 = vector.broadcast %87 : vector<1x128xf32> to vector<16x128xf32>
    %89 = arith.addf %86, %88 : vector<16x128xf32>
    %90 = vector.shape_cast %89 : vector<16x128xf32> to vector<1x16x128xf32>
    %91 = arith.truncf %90 : vector<1x16x128xf32> to vector<1x16x128xbf16>
    %92 = arith.mulf %91, %91 : vector<1x16x128xbf16>
    %93 = arith.mulf %91, %92 : vector<1x16x128xbf16>
    %cst_40 = arith.constant 4.467770e-02 : bf16
    %94 = vector.broadcast %cst_40 : bf16 to vector<1x16x128xbf16>
    %95 = arith.mulf %94, %93 : vector<1x16x128xbf16>
    %96 = arith.addf %91, %95 : vector<1x16x128xbf16>
    %cst_41 = arith.constant 7.968750e-01 : bf16
    %97 = vector.broadcast %cst_41 : bf16 to vector<1x16x128xbf16>
    %98 = arith.mulf %97, %96 : vector<1x16x128xbf16>
    %99 = math.tanh %98 : vector<1x16x128xbf16>
    %cst_42 = arith.constant 1.000000e+00 : bf16
    %100 = vector.broadcast %cst_42 : bf16 to vector<1x16x128xbf16>
    %101 = arith.addf %100, %99 : vector<1x16x128xbf16>
    %cst_43 = arith.constant 5.000000e-01 : bf16
    %102 = vector.broadcast %cst_43 : bf16 to vector<1x16x128xbf16>
    %103 = arith.mulf %102, %101 : vector<1x16x128xbf16>
    %104 = arith.mulf %91, %103 : vector<1x16x128xbf16>
    %105 = arith.extf %104 : vector<1x16x128xbf16> to vector<1x16x128xf32>
    %c0_44 = arith.constant 0 : index
    %c8_45 = arith.constant 8 : index
    %c0_46 = arith.constant 0 : index
    %106 = vector.load %arg19[%c0_44, %c8_45, %c0_46] : memref<1x32x128xf32, #tpu.memory_space<vmem>>, vector<1x16x128xf32>
    tpu.vector_store %arg19[%c0_44, %c8_45, %c0_46], %105 {strides = array<i32>} : memref<1x32x128xf32, #tpu.memory_space<vmem>>, vector<1x16x128xf32>,
    %c0_47 = arith.constant 0 : index
    %c7_48 = arith.constant 7 : index
    %c0_49 = arith.constant 0 : index
    %107 = vector.load %arg19[%c0_47, %c7_48, %c0_49] : memref<1x32x128xf32, #tpu.memory_space<vmem>>, vector<1x16x128xf32>
    %c0_50 = arith.constant 0 : index
    %c9_51 = arith.constant 9 : index
    %c0_52 = arith.constant 0 : index
    %108 = vector.load %arg19[%c0_50, %c9_51, %c0_52] : memref<1x32x128xf32, #tpu.memory_space<vmem>>, vector<1x16x128xf32>
    %109 = arith.truncf %107 : vector<1x16x128xf32> to vector<1x16x128xbf16>
    %110 = vector.shape_cast %109 : vector<1x16x128xbf16> to vector<16x128xbf16>
    %c0_53 = arith.constant 0 : index
    %c0_54 = arith.constant 0 : index
    %c0_55 = arith.constant 0 : index
    %111 = vector.load %arg6[%c0_53, %c0_54, %c0_55] : memref<3x128x128xbf16, #tpu.memory_space<vmem>>, vector<1x128x128xbf16>
    %112 = vector.shape_cast %111 : vector<1x128x128xbf16> to vector<128x128xbf16>
    %cst_56 = arith.constant dense<0.000000e+00> : vector<16x128xf32>
    %113 = tpu.matmul %110, %112, %cst_56 {dimension_numbers = #tpu.dot_dimension_numbers<[1], [0], [0], [1], [0, 0, 1, 1], [], []>} : vector<16x128xbf16>, vector<128x128xbf16>, vector<16x128xf32> -> vector<16x128xf32>
    %114 = vector.shape_cast %104 : vector<1x16x128xbf16> to vector<16x128xbf16>
    %c1_57 = arith.constant 1 : index
    %c0_58 = arith.constant 0 : index
    %c0_59 = arith.constant 0 : index
    %115 = vector.load %arg6[%c1_57, %c0_58, %c0_59] : memref<3x128x128xbf16, #tpu.memory_space<vmem>>, vector<1x128x128xbf16>
    %116 = vector.shape_cast %115 : vector<1x128x128xbf16> to vector<128x128xbf16>
    %cst_60 = arith.constant dense<0.000000e+00> : vector<16x128xf32>
    %117 = tpu.matmul %114, %116, %cst_60 {dimension_numbers = #tpu.dot_dimension_numbers<[1], [0], [0], [1], [0, 0, 1, 1], [], []>} : vector<16x128xbf16>, vector<128x128xbf16>, vector<16x128xf32> -> vector<16x128xf32>
    %118 = arith.addf %113, %117 : vector<16x128xf32>
    %119 = arith.truncf %108 : vector<1x16x128xf32> to vector<1x16x128xbf16>
    %120 = vector.shape_cast %119 : vector<1x16x128xbf16> to vector<16x128xbf16>
    %c2_61 = arith.constant 2 : index
    %c0_62 = arith.constant 0 : index
    %c0_63 = arith.constant 0 : index
    %121 = vector.load %arg6[%c2_61, %c0_62, %c0_63] : memref<3x128x128xbf16, #tpu.memory_space<vmem>>, vector<1x128x128xbf16>
    %122 = vector.shape_cast %121 : vector<1x128x128xbf16> to vector<128x128xbf16>
    %cst_64 = arith.constant dense<0.000000e+00> : vector<16x128xf32>
    %123 = tpu.matmul %120, %122, %cst_64 {dimension_numbers = #tpu.dot_dimension_numbers<[1], [0], [0], [1], [0, 0, 1, 1], [], []>} : vector<16x128xbf16>, vector<128x128xbf16>, vector<16x128xf32> -> vector<16x128xf32>
    %124 = arith.addf %118, %123 : vector<16x128xf32>
    %c0_65 = arith.constant 0 : index
    %c0_66 = arith.constant 0 : index
    %125 = vector.load %arg7[%c0_65, %c0_66] : memref<1x128xf32, #tpu.memory_space<vmem>>, vector<1x128xf32>
    %126 = vector.broadcast %125 : vector<1x128xf32> to vector<16x128xf32>
    %127 = arith.addf %124, %126 : vector<16x128xf32>
    %128 = vector.shape_cast %127 : vector<16x128xf32> to vector<1x16x128xf32>
    %129 = arith.addf %128, %52 : vector<1x16x128xf32>
    %130 = arith.truncf %129 : vector<1x16x128xf32> to vector<1x16x128xbf16>
    %131 = arith.mulf %130, %130 : vector<1x16x128xbf16>
    %132 = arith.mulf %130, %131 : vector<1x16x128xbf16>
    %cst_67 = arith.constant 4.467770e-02 : bf16
    %133 = vector.broadcast %cst_67 : bf16 to vector<1x16x128xbf16>
    %134 = arith.mulf %133, %132 : vector<1x16x128xbf16>
    %135 = arith.addf %130, %134 : vector<1x16x128xbf16>
    %cst_68 = arith.constant 7.968750e-01 : bf16
    %136 = vector.broadcast %cst_68 : bf16 to vector<1x16x128xbf16>
    %137 = arith.mulf %136, %135 : vector<1x16x128xbf16>
    %138 = math.tanh %137 : vector<1x16x128xbf16>
    %cst_69 = arith.constant 1.000000e+00 : bf16
    %139 = vector.broadcast %cst_69 : bf16 to vector<1x16x128xbf16>
    %140 = arith.addf %139, %138 : vector<1x16x128xbf16>
    %cst_70 = arith.constant 5.000000e-01 : bf16
    %141 = vector.broadcast %cst_70 : bf16 to vector<1x16x128xbf16>
    %142 = arith.mulf %141, %140 : vector<1x16x128xbf16>
    %143 = arith.mulf %130, %142 : vector<1x16x128xbf16>
    %144 = arith.extf %143 : vector<1x16x128xbf16> to vector<1x16x128xf32>
    %c0_71 = arith.constant 0 : index
    %c8_72 = arith.constant 8 : index
    %c0_73 = arith.constant 0 : index
    %145 = vector.load %arg19[%c0_71, %c8_72, %c0_73] : memref<1x32x128xf32, #tpu.memory_space<vmem>>, vector<1x16x128xf32>
    tpu.vector_store %arg19[%c0_71, %c8_72, %c0_73], %144 {strides = array<i32>} : memref<1x32x128xf32, #tpu.memory_space<vmem>>, vector<1x16x128xf32>,
    %c0_74 = arith.constant 0 : index
    %c6 = arith.constant 6 : index
    %c0_75 = arith.constant 0 : index
    %146 = vector.load %arg19[%c0_74, %c6, %c0_75] : memref<1x32x128xf32, #tpu.memory_space<vmem>>, vector<1x16x128xf32>
    %c0_76 = arith.constant 0 : index
    %c10 = arith.constant 10 : index
    %c0_77 = arith.constant 0 : index
    %147 = vector.load %arg19[%c0_76, %c10, %c0_77] : memref<1x32x128xf32, #tpu.memory_space<vmem>>, vector<1x16x128xf32>
    %148 = arith.truncf %146 : vector<1x16x128xf32> to vector<1x16x128xbf16>
    %149 = vector.shape_cast %148 : vector<1x16x128xbf16> to vector<16x128xbf16>
    %c0_78 = arith.constant 0 : index
    %c0_79 = arith.constant 0 : index
    %c0_80 = arith.constant 0 : index
    %150 = vector.load %arg8[%c0_78, %c0_79, %c0_80] : memref<3x128x128xbf16, #tpu.memory_space<vmem>>, vector<1x128x128xbf16>
    %151 = vector.shape_cast %150 : vector<1x128x128xbf16> to vector<128x128xbf16>
    %cst_81 = arith.constant dense<0.000000e+00> : vector<16x128xf32>
    %152 = tpu.matmul %149, %151, %cst_81 {dimension_numbers = #tpu.dot_dimension_numbers<[1], [0], [0], [1], [0, 0, 1, 1], [], []>} : vector<16x128xbf16>, vector<128x128xbf16>, vector<16x128xf32> -> vector<16x128xf32>
    %153 = vector.shape_cast %143 : vector<1x16x128xbf16> to vector<16x128xbf16>
    %c1_82 = arith.constant 1 : index
    %c0_83 = arith.constant 0 : index
    %c0_84 = arith.constant 0 : index
    %154 = vector.load %arg8[%c1_82, %c0_83, %c0_84] : memref<3x128x128xbf16, #tpu.memory_space<vmem>>, vector<1x128x128xbf16>
    %155 = vector.shape_cast %154 : vector<1x128x128xbf16> to vector<128x128xbf16>
    %cst_85 = arith.constant dense<0.000000e+00> : vector<16x128xf32>
    %156 = tpu.matmul %153, %155, %cst_85 {dimension_numbers = #tpu.dot_dimension_numbers<[1], [0], [0], [1], [0, 0, 1, 1], [], []>} : vector<16x128xbf16>, vector<128x128xbf16>, vector<16x128xf32> -> vector<16x128xf32>
    %157 = arith.addf %152, %156 : vector<16x128xf32>
    %158 = arith.truncf %147 : vector<1x16x128xf32> to vector<1x16x128xbf16>
    %159 = vector.shape_cast %158 : vector<1x16x128xbf16> to vector<16x128xbf16>
    %c2_86 = arith.constant 2 : index
    %c0_87 = arith.constant 0 : index
    %c0_88 = arith.constant 0 : index
    %160 = vector.load %arg8[%c2_86, %c0_87, %c0_88] : memref<3x128x128xbf16, #tpu.memory_space<vmem>>, vector<1x128x128xbf16>
    %161 = vector.shape_cast %160 : vector<1x128x128xbf16> to vector<128x128xbf16>
    %cst_89 = arith.constant dense<0.000000e+00> : vector<16x128xf32>
    %162 = tpu.matmul %159, %161, %cst_89 {dimension_numbers = #tpu.dot_dimension_numbers<[1], [0], [0], [1], [0, 0, 1, 1], [], []>} : vector<16x128xbf16>, vector<128x128xbf16>, vector<16x128xf32> -> vector<16x128xf32>
    %163 = arith.addf %157, %162 : vector<16x128xf32>
    %c0_90 = arith.constant 0 : index
    %c0_91 = arith.constant 0 : index
    %164 = vector.load %arg9[%c0_90, %c0_91] : memref<1x128xf32, #tpu.memory_space<vmem>>, vector<1x128xf32>
    %165 = vector.broadcast %164 : vector<1x128xf32> to vector<16x128xf32>
    %166 = arith.addf %163, %165 : vector<16x128xf32>
    %167 = vector.shape_cast %166 : vector<16x128xf32> to vector<1x16x128xf32>
    %168 = arith.truncf %167 : vector<1x16x128xf32> to vector<1x16x128xbf16>
    %169 = arith.mulf %168, %168 : vector<1x16x128xbf16>
    %170 = arith.mulf %168, %169 : vector<1x16x128xbf16>
    %cst_92 = arith.constant 4.467770e-02 : bf16
    %171 = vector.broadcast %cst_92 : bf16 to vector<1x16x128xbf16>
    %172 = arith.mulf %171, %170 : vector<1x16x128xbf16>
    %173 = arith.addf %168, %172 : vector<1x16x128xbf16>
    %cst_93 = arith.constant 7.968750e-01 : bf16
    %174 = vector.broadcast %cst_93 : bf16 to vector<1x16x128xbf16>
    %175 = arith.mulf %174, %173 : vector<1x16x128xbf16>
    %176 = math.tanh %175 : vector<1x16x128xbf16>
    %cst_94 = arith.constant 1.000000e+00 : bf16
    %177 = vector.broadcast %cst_94 : bf16 to vector<1x16x128xbf16>
    %178 = arith.addf %177, %176 : vector<1x16x128xbf16>
    %cst_95 = arith.constant 5.000000e-01 : bf16
    %179 = vector.broadcast %cst_95 : bf16 to vector<1x16x128xbf16>
    %180 = arith.mulf %179, %178 : vector<1x16x128xbf16>
    %181 = arith.mulf %168, %180 : vector<1x16x128xbf16>
    %182 = arith.extf %181 : vector<1x16x128xbf16> to vector<1x16x128xf32>
    %c0_96 = arith.constant 0 : index
    %c8_97 = arith.constant 8 : index
    %c0_98 = arith.constant 0 : index
    %183 = vector.load %arg19[%c0_96, %c8_97, %c0_98] : memref<1x32x128xf32, #tpu.memory_space<vmem>>, vector<1x16x128xf32>
    tpu.vector_store %arg19[%c0_96, %c8_97, %c0_98], %182 {strides = array<i32>} : memref<1x32x128xf32, #tpu.memory_space<vmem>>, vector<1x16x128xf32>,
    %c0_99 = arith.constant 0 : index
    %c6_100 = arith.constant 6 : index
    %c0_101 = arith.constant 0 : index
    %184 = vector.load %arg19[%c0_99, %c6_100, %c0_101] : memref<1x32x128xf32, #tpu.memory_space<vmem>>, vector<1x16x128xf32>
    %c0_102 = arith.constant 0 : index
    %c10_103 = arith.constant 10 : index
    %c0_104 = arith.constant 0 : index
    %185 = vector.load %arg19[%c0_102, %c10_103, %c0_104] : memref<1x32x128xf32, #tpu.memory_space<vmem>>, vector<1x16x128xf32>
    %186 = arith.truncf %184 : vector<1x16x128xf32> to vector<1x16x128xbf16>
    %187 = vector.shape_cast %186 : vector<1x16x128xbf16> to vector<16x128xbf16>
    %c0_105 = arith.constant 0 : index
    %c0_106 = arith.constant 0 : index
    %c0_107 = arith.constant 0 : index
    %188 = vector.load %arg10[%c0_105, %c0_106, %c0_107] : memref<3x128x128xbf16, #tpu.memory_space<vmem>>, vector<1x128x128xbf16>
    %189 = vector.shape_cast %188 : vector<1x128x128xbf16> to vector<128x128xbf16>
    %cst_108 = arith.constant dense<0.000000e+00> : vector<16x128xf32>
    %190 = tpu.matmul %187, %189, %cst_108 {dimension_numbers = #tpu.dot_dimension_numbers<[1], [0], [0], [1], [0, 0, 1, 1], [], []>} : vector<16x128xbf16>, vector<128x128xbf16>, vector<16x128xf32> -> vector<16x128xf32>
    %191 = vector.shape_cast %181 : vector<1x16x128xbf16> to vector<16x128xbf16>
    %c1_109 = arith.constant 1 : index
    %c0_110 = arith.constant 0 : index
    %c0_111 = arith.constant 0 : index
    %192 = vector.load %arg10[%c1_109, %c0_110, %c0_111] : memref<3x128x128xbf16, #tpu.memory_space<vmem>>, vector<1x128x128xbf16>
    %193 = vector.shape_cast %192 : vector<1x128x128xbf16> to vector<128x128xbf16>
    %cst_112 = arith.constant dense<0.000000e+00> : vector<16x128xf32>
    %194 = tpu.matmul %191, %193, %cst_112 {dimension_numbers = #tpu.dot_dimension_numbers<[1], [0], [0], [1], [0, 0, 1, 1], [], []>} : vector<16x128xbf16>, vector<128x128xbf16>, vector<16x128xf32> -> vector<16x128xf32>
    %195 = arith.addf %190, %194 : vector<16x128xf32>
    %196 = arith.truncf %185 : vector<1x16x128xf32> to vector<1x16x128xbf16>
    %197 = vector.shape_cast %196 : vector<1x16x128xbf16> to vector<16x128xbf16>
    %c2_113 = arith.constant 2 : index
    %c0_114 = arith.constant 0 : index
    %c0_115 = arith.constant 0 : index
    %198 = vector.load %arg10[%c2_113, %c0_114, %c0_115] : memref<3x128x128xbf16, #tpu.memory_space<vmem>>, vector<1x128x128xbf16>
    %199 = vector.shape_cast %198 : vector<1x128x128xbf16> to vector<128x128xbf16>
    %cst_116 = arith.constant dense<0.000000e+00> : vector<16x128xf32>
    %200 = tpu.matmul %197, %199, %cst_116 {dimension_numbers = #tpu.dot_dimension_numbers<[1], [0], [0], [1], [0, 0, 1, 1], [], []>} : vector<16x128xbf16>, vector<128x128xbf16>, vector<16x128xf32> -> vector<16x128xf32>
    %201 = arith.addf %195, %200 : vector<16x128xf32>
    %c0_117 = arith.constant 0 : index
    %c0_118 = arith.constant 0 : index
    %202 = vector.load %arg11[%c0_117, %c0_118] : memref<1x128xf32, #tpu.memory_space<vmem>>, vector<1x128xf32>
    %203 = vector.broadcast %202 : vector<1x128xf32> to vector<16x128xf32>
    %204 = arith.addf %201, %203 : vector<16x128xf32>
    %205 = vector.shape_cast %204 : vector<16x128xf32> to vector<1x16x128xf32>
    %206 = arith.addf %205, %129 : vector<1x16x128xf32>
    %207 = arith.truncf %206 : vector<1x16x128xf32> to vector<1x16x128xbf16>
    %208 = vector.shape_cast %207 : vector<1x16x128xbf16> to vector<16x128xbf16>
    %c0_119 = arith.constant 0 : index
    %c0_120 = arith.constant 0 : index
    %209 = vector.load %arg16[%c0_119, %c0_120] : memref<128x128xbf16, #tpu.memory_space<vmem>>, vector<128x128xbf16>
    %cst_121 = arith.constant dense<0.000000e+00> : vector<16x128xf32>
    %210 = tpu.matmul %208, %209, %cst_121 {dimension_numbers = #tpu.dot_dimension_numbers<[1], [0], [0], [1], [0, 0, 1, 1], [], []>} : vector<16x128xbf16>, vector<128x128xbf16>, vector<16x128xf32> -> vector<16x128xf32>
    %c0_122 = arith.constant 0 : index
    %c0_123 = arith.constant 0 : index
    %211 = vector.load %arg17[%c0_122, %c0_123] : memref<1x128xf32, #tpu.memory_space<vmem>>, vector<1x128xf32>
    %212 = vector.broadcast %211 : vector<1x128xf32> to vector<16x128xf32>
    %213 = arith.addf %210, %212 : vector<16x128xf32>
    %214 = vector.shape_cast %213 : vector<16x128xf32> to vector<1x16x128xf32>
    %215 = arith.truncf %206 : vector<1x16x128xf32> to vector<1x16x128xbf16>
    %216 = arith.mulf %215, %215 : vector<1x16x128xbf16>
    %217 = arith.mulf %215, %216 : vector<1x16x128xbf16>
    %cst_124 = arith.constant 4.467770e-02 : bf16
    %218 = vector.broadcast %cst_124 : bf16 to vector<1x16x128xbf16>
    %219 = arith.mulf %218, %217 : vector<1x16x128xbf16>
    %220 = arith.addf %215, %219 : vector<1x16x128xbf16>
    %cst_125 = arith.constant 7.968750e-01 : bf16
    %221 = vector.broadcast %cst_125 : bf16 to vector<1x16x128xbf16>
    %222 = arith.mulf %221, %220 : vector<1x16x128xbf16>
    %223 = math.tanh %222 : vector<1x16x128xbf16>
    %cst_126 = arith.constant 1.000000e+00 : bf16
    %224 = vector.broadcast %cst_126 : bf16 to vector<1x16x128xbf16>
    %225 = arith.addf %224, %223 : vector<1x16x128xbf16>
    %cst_127 = arith.constant 5.000000e-01 : bf16
    %226 = vector.broadcast %cst_127 : bf16 to vector<1x16x128xbf16>
    %227 = arith.mulf %226, %225 : vector<1x16x128xbf16>
    %228 = arith.mulf %215, %227 : vector<1x16x128xbf16>
    %229 = arith.extf %228 : vector<1x16x128xbf16> to vector<1x16x128xf32>
    %c0_128 = arith.constant 0 : index
    %c8_129 = arith.constant 8 : index
    %c0_130 = arith.constant 0 : index
    %230 = vector.load %arg19[%c0_128, %c8_129, %c0_130] : memref<1x32x128xf32, #tpu.memory_space<vmem>>, vector<1x16x128xf32>
    tpu.vector_store %arg19[%c0_128, %c8_129, %c0_130], %229 {strides = array<i32>} : memref<1x32x128xf32, #tpu.memory_space<vmem>>, vector<1x16x128xf32>,
    %c0_131 = arith.constant 0 : index
    %c4 = arith.constant 4 : index
    %c0_132 = arith.constant 0 : index
    %231 = vector.load %arg19[%c0_131, %c4, %c0_132] : memref<1x32x128xf32, #tpu.memory_space<vmem>>, vector<1x16x128xf32>
    %c0_133 = arith.constant 0 : index
    %c12 = arith.constant 12 : index
    %c0_134 = arith.constant 0 : index
    %232 = vector.load %arg19[%c0_133, %c12, %c0_134] : memref<1x32x128xf32, #tpu.memory_space<vmem>>, vector<1x16x128xf32>
    %233 = arith.truncf %231 : vector<1x16x128xf32> to vector<1x16x128xbf16>
    %234 = vector.shape_cast %233 : vector<1x16x128xbf16> to vector<16x128xbf16>
    %c0_135 = arith.constant 0 : index
    %c0_136 = arith.constant 0 : index
    %c0_137 = arith.constant 0 : index
    %235 = vector.load %arg12[%c0_135, %c0_136, %c0_137] : memref<3x128x128xbf16, #tpu.memory_space<vmem>>, vector<1x128x128xbf16>
    %236 = vector.shape_cast %235 : vector<1x128x128xbf16> to vector<128x128xbf16>
    %cst_138 = arith.constant dense<0.000000e+00> : vector<16x128xf32>
    %237 = tpu.matmul %234, %236, %cst_138 {dimension_numbers = #tpu.dot_dimension_numbers<[1], [0], [0], [1], [0, 0, 1, 1], [], []>} : vector<16x128xbf16>, vector<128x128xbf16>, vector<16x128xf32> -> vector<16x128xf32>
    %238 = vector.shape_cast %228 : vector<1x16x128xbf16> to vector<16x128xbf16>
    %c1_139 = arith.constant 1 : index
    %c0_140 = arith.constant 0 : index
    %c0_141 = arith.constant 0 : index
    %239 = vector.load %arg12[%c1_139, %c0_140, %c0_141] : memref<3x128x128xbf16, #tpu.memory_space<vmem>>, vector<1x128x128xbf16>
    %240 = vector.shape_cast %239 : vector<1x128x128xbf16> to vector<128x128xbf16>
    %cst_142 = arith.constant dense<0.000000e+00> : vector<16x128xf32>
    %241 = tpu.matmul %238, %240, %cst_142 {dimension_numbers = #tpu.dot_dimension_numbers<[1], [0], [0], [1], [0, 0, 1, 1], [], []>} : vector<16x128xbf16>, vector<128x128xbf16>, vector<16x128xf32> -> vector<16x128xf32>
    %242 = arith.addf %237, %241 : vector<16x128xf32>
    %243 = arith.truncf %232 : vector<1x16x128xf32> to vector<1x16x128xbf16>
    %244 = vector.shape_cast %243 : vector<1x16x128xbf16> to vector<16x128xbf16>
    %c2_143 = arith.constant 2 : index
    %c0_144 = arith.constant 0 : index
    %c0_145 = arith.constant 0 : index
    %245 = vector.load %arg12[%c2_143, %c0_144, %c0_145] : memref<3x128x128xbf16, #tpu.memory_space<vmem>>, vector<1x128x128xbf16>
    %246 = vector.shape_cast %245 : vector<1x128x128xbf16> to vector<128x128xbf16>
    %cst_146 = arith.constant dense<0.000000e+00> : vector<16x128xf32>
    %247 = tpu.matmul %244, %246, %cst_146 {dimension_numbers = #tpu.dot_dimension_numbers<[1], [0], [0], [1], [0, 0, 1, 1], [], []>} : vector<16x128xbf16>, vector<128x128xbf16>, vector<16x128xf32> -> vector<16x128xf32>
    %248 = arith.addf %242, %247 : vector<16x128xf32>
    %c0_147 = arith.constant 0 : index
    %c0_148 = arith.constant 0 : index
    %249 = vector.load %arg13[%c0_147, %c0_148] : memref<1x128xf32, #tpu.memory_space<vmem>>, vector<1x128xf32>
    %250 = vector.broadcast %249 : vector<1x128xf32> to vector<16x128xf32>
    %251 = arith.addf %248, %250 : vector<16x128xf32>
    %252 = vector.shape_cast %251 : vector<16x128xf32> to vector<1x16x128xf32>
    %253 = arith.truncf %252 : vector<1x16x128xf32> to vector<1x16x128xbf16>
    %254 = arith.mulf %253, %253 : vector<1x16x128xbf16>
    %255 = arith.mulf %253, %254 : vector<1x16x128xbf16>
    %cst_149 = arith.constant 4.467770e-02 : bf16
    %256 = vector.broadcast %cst_149 : bf16 to vector<1x16x128xbf16>
    %257 = arith.mulf %256, %255 : vector<1x16x128xbf16>
    %258 = arith.addf %253, %257 : vector<1x16x128xbf16>
    %cst_150 = arith.constant 7.968750e-01 : bf16
    %259 = vector.broadcast %cst_150 : bf16 to vector<1x16x128xbf16>
    %260 = arith.mulf %259, %258 : vector<1x16x128xbf16>
    %261 = math.tanh %260 : vector<1x16x128xbf16>
    %cst_151 = arith.constant 1.000000e+00 : bf16
    %262 = vector.broadcast %cst_151 : bf16 to vector<1x16x128xbf16>
    %263 = arith.addf %262, %261 : vector<1x16x128xbf16>
    %cst_152 = arith.constant 5.000000e-01 : bf16
    %264 = vector.broadcast %cst_152 : bf16 to vector<1x16x128xbf16>
    %265 = arith.mulf %264, %263 : vector<1x16x128xbf16>
    %266 = arith.mulf %253, %265 : vector<1x16x128xbf16>
    %267 = arith.extf %266 : vector<1x16x128xbf16> to vector<1x16x128xf32>
    %c0_153 = arith.constant 0 : index
    %c8_154 = arith.constant 8 : index
    %c0_155 = arith.constant 0 : index
    %268 = vector.load %arg19[%c0_153, %c8_154, %c0_155] : memref<1x32x128xf32, #tpu.memory_space<vmem>>, vector<1x16x128xf32>
    tpu.vector_store %arg19[%c0_153, %c8_154, %c0_155], %267 {strides = array<i32>} : memref<1x32x128xf32, #tpu.memory_space<vmem>>, vector<1x16x128xf32>,
    %c0_156 = arith.constant 0 : index
    %c4_157 = arith.constant 4 : index
    %c0_158 = arith.constant 0 : index
    %269 = vector.load %arg19[%c0_156, %c4_157, %c0_158] : memref<1x32x128xf32, #tpu.memory_space<vmem>>, vector<1x16x128xf32>
    %c0_159 = arith.constant 0 : index
    %c12_160 = arith.constant 12 : index
    %c0_161 = arith.constant 0 : index
    %270 = vector.load %arg19[%c0_159, %c12_160, %c0_161] : memref<1x32x128xf32, #tpu.memory_space<vmem>>, vector<1x16x128xf32>
    %271 = arith.truncf %269 : vector<1x16x128xf32> to vector<1x16x128xbf16>
    %272 = vector.shape_cast %271 : vector<1x16x128xbf16> to vector<16x128xbf16>
    %c0_162 = arith.constant 0 : index
    %c0_163 = arith.constant 0 : index
    %c0_164 = arith.constant 0 : index
    %273 = vector.load %arg14[%c0_162, %c0_163, %c0_164] : memref<3x128x128xbf16, #tpu.memory_space<vmem>>, vector<1x128x128xbf16>
    %274 = vector.shape_cast %273 : vector<1x128x128xbf16> to vector<128x128xbf16>
    %cst_165 = arith.constant dense<0.000000e+00> : vector<16x128xf32>
    %275 = tpu.matmul %272, %274, %cst_165 {dimension_numbers = #tpu.dot_dimension_numbers<[1], [0], [0], [1], [0, 0, 1, 1], [], []>} : vector<16x128xbf16>, vector<128x128xbf16>, vector<16x128xf32> -> vector<16x128xf32>
    %276 = vector.shape_cast %266 : vector<1x16x128xbf16> to vector<16x128xbf16>
    %c1_166 = arith.constant 1 : index
    %c0_167 = arith.constant 0 : index
    %c0_168 = arith.constant 0 : index
    %277 = vector.load %arg14[%c1_166, %c0_167, %c0_168] : memref<3x128x128xbf16, #tpu.memory_space<vmem>>, vector<1x128x128xbf16>
    %278 = vector.shape_cast %277 : vector<1x128x128xbf16> to vector<128x128xbf16>
    %cst_169 = arith.constant dense<0.000000e+00> : vector<16x128xf32>
    %279 = tpu.matmul %276, %278, %cst_169 {dimension_numbers = #tpu.dot_dimension_numbers<[1], [0], [0], [1], [0, 0, 1, 1], [], []>} : vector<16x128xbf16>, vector<128x128xbf16>, vector<16x128xf32> -> vector<16x128xf32>
    %280 = arith.addf %275, %279 : vector<16x128xf32>
    %281 = arith.truncf %270 : vector<1x16x128xf32> to vector<1x16x128xbf16>
    %282 = vector.shape_cast %281 : vector<1x16x128xbf16> to vector<16x128xbf16>
    %c2_170 = arith.constant 2 : index
    %c0_171 = arith.constant 0 : index
    %c0_172 = arith.constant 0 : index
    %283 = vector.load %arg14[%c2_170, %c0_171, %c0_172] : memref<3x128x128xbf16, #tpu.memory_space<vmem>>, vector<1x128x128xbf16>
    %284 = vector.shape_cast %283 : vector<1x128x128xbf16> to vector<128x128xbf16>
    %cst_173 = arith.constant dense<0.000000e+00> : vector<16x128xf32>
    %285 = tpu.matmul %282, %284, %cst_173 {dimension_numbers = #tpu.dot_dimension_numbers<[1], [0], [0], [1], [0, 0, 1, 1], [], []>} : vector<16x128xbf16>, vector<128x128xbf16>, vector<16x128xf32> -> vector<16x128xf32>
    %286 = arith.addf %280, %285 : vector<16x128xf32>
    %c0_174 = arith.constant 0 : index
    %c0_175 = arith.constant 0 : index
    %287 = vector.load %arg15[%c0_174, %c0_175] : memref<1x128xf32, #tpu.memory_space<vmem>>, vector<1x128xf32>
    %288 = vector.broadcast %287 : vector<1x128xf32> to vector<16x128xf32>
    %289 = arith.addf %286, %288 : vector<16x128xf32>
    %290 = vector.shape_cast %289 : vector<16x128xf32> to vector<1x16x128xf32>
    %291 = arith.addf %290, %214 : vector<1x16x128xf32>
    %cst_176 = arith.constant dense<0xFF800000> : vector<1x128xf32>
    %292 = vector.multi_reduction <maximumf>, %291, %cst_176 [1] : vector<1x16x128xf32> to vector<1x128xf32>
    %293 = vector.shape_cast %292 : vector<1x128xf32> to vector<1x1x128xf32>
    %294 = arith.mulf %293, %293 : vector<1x1x128xf32>
    %cst_177 = arith.constant dense<0.000000e+00> : vector<1x1xf32>
    %295 = vector.multi_reduction <add>, %294, %cst_177 [2] : vector<1x1x128xf32> to vector<1x1xf32>
    %296 = vector.shape_cast %295 : vector<1x1xf32> to vector<1x1x1xf32>
    %cst_178 = arith.constant 1.000000e-24 : f32
    %297 = vector.broadcast %cst_178 : f32 to vector<1x1x1xf32>
    %298 = arith.maximumf %296, %297 : vector<1x1x1xf32>
    %299 = math.rsqrt %298 : vector<1x1x1xf32>
    %300 = vector.broadcast %299 : vector<1x1x1xf32> to vector<1x1x128xf32>
    %301 = arith.mulf %293, %300 : vector<1x1x128xf32>
    %c0_179 = arith.constant 0 : index
    %c0_180 = arith.constant 0 : index
    %c0_181 = arith.constant 0 : index
    %302 = vector.load %arg18[%c0_179, %c0_180, %c0_181] : memref<1x1x128xf32, #tpu.memory_space<vmem>>, vector<1x1x128xf32>
    tpu.vector_store %arg18[%c0_179, %c0_180, %c0_181], %301 {strides = array<i32>} : memref<1x1x128xf32, #tpu.memory_space<vmem>>, vector<1x1x128xf32>,
    return
  }
  func.func @transform_0(%arg0: i32) -> (i32, i32, i32) {
    %c0_i32 = arith.constant 0 : i32
    %c0_i32_0 = arith.constant 0 : i32
    %c0_i32_1 = arith.constant 0 : i32
    return %arg0, %c0_i32, %c0_i32_0 : i32, i32, i32
  }
  func.func @transform_1(%arg0: i32) -> (i32, i32) {
    %c0_i32 = arith.constant 0 : i32
    %c0_i32_0 = arith.constant 0 : i32
    %c0_i32_1 = arith.constant 0 : i32
    return %c0_i32, %c0_i32_0 : i32, i32
  }
  func.func @transform_2(%arg0: i32) -> (i32, i32) {
    %c0_i32 = arith.constant 0 : i32
    %c0_i32_0 = arith.constant 0 : i32
    %c0_i32_1 = arith.constant 0 : i32
    return %c0_i32, %c0_i32_0 : i32, i32
  }
  func.func @transform_3(%arg0: i32) -> (i32, i32, i32) {
    %c0_i32 = arith.constant 0 : i32
    %c0_i32_0 = arith.constant 0 : i32
    %c0_i32_1 = arith.constant 0 : i32
    %c0_i32_2 = arith.constant 0 : i32
    return %c0_i32, %c0_i32_0, %c0_i32_1 : i32, i32, i32
  }
  func.func @transform_4(%arg0: i32) -> (i32, i32) {
    %c0_i32 = arith.constant 0 : i32
    %c0_i32_0 = arith.constant 0 : i32
    %c0_i32_1 = arith.constant 0 : i32
    return %c0_i32, %c0_i32_0 : i32, i32
  }
  func.func @transform_5(%arg0: i32) -> (i32, i32, i32) {
    %c0_i32 = arith.constant 0 : i32
    %c0_i32_0 = arith.constant 0 : i32
    %c0_i32_1 = arith.constant 0 : i32
    %c0_i32_2 = arith.constant 0 : i32
    return %c0_i32, %c0_i32_0, %c0_i32_1 : i32, i32, i32
  }
  func.func @transform_6(%arg0: i32) -> (i32, i32) {
    %c0_i32 = arith.constant 0 : i32
    %c0_i32_0 = arith.constant 0 : i32
    %c0_i32_1 = arith.constant 0 : i32
    return %c0_i32, %c0_i32_0 : i32, i32
  }
  func.func @transform_7(%arg0: i32) -> (i32, i32, i32) {
    %c0_i32 = arith.constant 0 : i32
    %c0_i32_0 = arith.constant 0 : i32
    %c0_i32_1 = arith.constant 0 : i32
    %c0_i32_2 = arith.constant 0 : i32
    return %c0_i32, %c0_i32_0, %c0_i32_1 : i32, i32, i32
  }
  func.func @transform_8(%arg0: i32) -> (i32, i32) {
    %c0_i32 = arith.constant 0 : i32
    %c0_i32_0 = arith.constant 0 : i32
    %c0_i32_1 = arith.constant 0 : i32
    return %c0_i32, %c0_i32_0 : i32, i32
  }
  func.func @transform_9(%arg0: i32) -> (i32, i32, i32) {
    %c0_i32 = arith.constant 0 : i32
    %c0_i32_0 = arith.constant 0 : i32
    %c0_i32_1 = arith.constant 0 : i32
    %c0_i32_2 = arith.constant 0 : i32
    return %c0_i32, %c0_i32_0, %c0_i32_1 : i32, i32, i32
  }
  func.func @transform_10(%arg0: i32) -> (i32, i32) {
    %c0_i32 = arith.constant 0 : i32
    %c0_i32_0 = arith.constant 0 : i32
    %c0_i32_1 = arith.constant 0 : i32
    return %c0_i32, %c0_i32_0 : i32, i32
  }
  func.func @transform_11(%arg0: i32) -> (i32, i32, i32) {
    %c0_i32 = arith.constant 0 : i32
    %c0_i32_0 = arith.constant 0 : i32
    %c0_i32_1 = arith.constant 0 : i32
    %c0_i32_2 = arith.constant 0 : i32
    return %c0_i32, %c0_i32_0, %c0_i32_1 : i32, i32, i32
  }
  func.func @transform_12(%arg0: i32) -> (i32, i32) {
    %c0_i32 = arith.constant 0 : i32
    %c0_i32_0 = arith.constant 0 : i32
    %c0_i32_1 = arith.constant 0 : i32
    return %c0_i32, %c0_i32_0 : i32, i32
  }
  func.func @transform_13(%arg0: i32) -> (i32, i32, i32) {
    %c0_i32 = arith.constant 0 : i32
    %c0_i32_0 = arith.constant 0 : i32
    %c0_i32_1 = arith.constant 0 : i32
    %c0_i32_2 = arith.constant 0 : i32
    return %c0_i32, %c0_i32_0, %c0_i32_1 : i32, i32, i32
  }
  func.func @transform_14(%arg0: i32) -> (i32, i32) {
    %c0_i32 = arith.constant 0 : i32
    %c0_i32_0 = arith.constant 0 : i32
    %c0_i32_1 = arith.constant 0 : i32
    return %c0_i32, %c0_i32_0 : i32, i32
  }
  func.func @transform_15(%arg0: i32) -> (i32, i32) {
    %c0_i32 = arith.constant 0 : i32
    %c0_i32_0 = arith.constant 0 : i32
    %c0_i32_1 = arith.constant 0 : i32
    return %c0_i32, %c0_i32_0 : i32, i32
  }
  func.func @transform_16(%arg0: i32) -> (i32, i32) {
    %c0_i32 = arith.constant 0 : i32
    %c0_i32_0 = arith.constant 0 : i32
    %c0_i32_1 = arith.constant 0 : i32
    return %c0_i32, %c0_i32_0 : i32, i32
  }
  func.func @transform_17(%arg0: i32) -> (i32, i32, i32) {
    %c0_i32 = arith.constant 0 : i32
    %c0_i32_0 = arith.constant 0 : i32
    %c0_i32_1 = arith.constant 0 : i32
    return %arg0, %c0_i32, %c0_i32_0 : i32, i32, i32
  }
}

module attributes {stable_mosaic.version = 11 : i64} {
  func.func @kernel(%arg0: i32, %arg1: memref<1x16x4xf32, #tpu.memory_space<vmem>>, %arg2: memref<4x128xf32, #tpu.memory_space<vmem>>, %arg3: memref<1x128xf32, #tpu.memory_space<vmem>>, %arg4: memref<3x128x128xbf16, #tpu.memory_space<vmem>>, %arg5: memref<1x128xf32, #tpu.memory_space<vmem>>, %arg6: memref<3x128x128xbf16, #tpu.memory_space<vmem>>, %arg7: memref<1x128xf32, #tpu.memory_space<vmem>>, %arg8: memref<3x128x128xbf16, #tpu.memory_space<vmem>>, %arg9: memref<1x128xf32, #tpu.memory_space<vmem>>, %arg10: memref<3x128x128xbf16, #tpu.memory_space<vmem>>, %arg11: memref<1x128xf32, #tpu.memory_space<vmem>>, %arg12: memref<3x128x128xbf16, #tpu.memory_space<vmem>>, %arg13: memref<1x128xf32, #tpu.memory_space<vmem>>, %arg14: memref<3x128x128xbf16, #tpu.memory_space<vmem>>, %arg15: memref<1x128xf32, #tpu.memory_space<vmem>>, %arg16: memref<128x128xbf16, #tpu.memory_space<vmem>>, %arg17: memref<1x128xf32, #tpu.memory_space<vmem>>, %arg18: memref<1x1x128xf32, #tpu.memory_space<vmem>>, %arg19: memref<1x32x128xf32, #tpu.memory_space<vmem>>) attributes {dimension_semantics = [#tpu.dimension_semantics<parallel>], iteration_bounds = array<i64: 2>, scalar_prefetch = 0 : i64, scratch_operands = 1 : i64, tpu.core_type = #tpu.core_type<tc>, window_params = [{transform_indices = @transform_0, window_bounds = array<i64: 1, 16, 4>}, {pipeline_mode = #tpu.pipeline_mode<synchronous>, transform_indices = @transform_1, window_bounds = array<i64: 4, 128>}, {pipeline_mode = #tpu.pipeline_mode<synchronous>, transform_indices = @transform_2, window_bounds = array<i64: 1, 128>}, {pipeline_mode = #tpu.pipeline_mode<synchronous>, transform_indices = @transform_3, window_bounds = array<i64: 3, 128, 128>}, {pipeline_mode = #tpu.pipeline_mode<synchronous>, transform_indices = @transform_4, window_bounds = array<i64: 1, 128>}, {pipeline_mode = #tpu.pipeline_mode<synchronous>, transform_indices = @transform_5, window_bounds = array<i64: 3, 128, 128>}, {pipeline_mode = #tpu.pipeline_mode<synchronous>, transform_indices = @transform_6, window_bounds = array<i64: 1, 128>}, {pipeline_mode = #tpu.pipeline_mode<synchronous>, transform_indices = @transform_7, window_bounds = array<i64: 3, 128, 128>}, {pipeline_mode = #tpu.pipeline_mode<synchronous>, transform_indices = @transform_8, window_bounds = array<i64: 1, 128>}, {pipeline_mode = #tpu.pipeline_mode<synchronous>, transform_indices = @transform_9, window_bounds = array<i64: 3, 128, 128>}, {pipeline_mode = #tpu.pipeline_mode<synchronous>, transform_indices = @transform_10, window_bounds = array<i64: 1, 128>}, {pipeline_mode = #tpu.pipeline_mode<synchronous>, transform_indices = @transform_11, window_bounds = array<i64: 3, 128, 128>}, {pipeline_mode = #tpu.pipeline_mode<synchronous>, transform_indices = @transform_12, window_bounds = array<i64: 1, 128>}, {pipeline_mode = #tpu.pipeline_mode<synchronous>, transform_indices = @transform_13, window_bounds = array<i64: 3, 128, 128>}, {pipeline_mode = #tpu.pipeline_mode<synchronous>, transform_indices = @transform_14, window_bounds = array<i64: 1, 128>}, {pipeline_mode = #tpu.pipeline_mode<synchronous>, transform_indices = @transform_15, window_bounds = array<i64: 128, 128>}, {pipeline_mode = #tpu.pipeline_mode<synchronous>, transform_indices = @transform_16, window_bounds = array<i64: 1, 128>}, {transform_indices = @transform_17, window_bounds = array<i64: 1, 1, 128>}]} {
    %cst = arith.constant 0.000000e+00 : f32
    %0 = vector.broadcast %cst : f32 to vector<1x8x128xf32>
    %c0 = arith.constant 0 : index
    %c0_0 = arith.constant 0 : index
    %c0_1 = arith.constant 0 : index
    %1 = vector.load %arg19[%c0, %c0_0, %c0_1] : memref<1x32x128xf32, #tpu.memory_space<vmem>>, vector<1x8x128xf32>
    tpu.vector_store %arg19[%c0, %c0_0, %c0_1], %0 {strides = array<i32>} : memref<1x32x128xf32, #tpu.memory_space<vmem>>, vector<1x8x128xf32>,
    %cst_2 = arith.constant 0.000000e+00 : f32
    %2 = vector.broadcast %cst_2 : f32 to vector<1x8x128xf32>
    %c0_3 = arith.constant 0 : index
    %c24 = arith.constant 24 : index
    %c0_4 = arith.constant 0 : index
    %3 = vector.load %arg19[%c0_3, %c24, %c0_4] : memref<1x32x128xf32, #tpu.memory_space<vmem>>, vector<1x8x128xf32>
    tpu.vector_store %arg19[%c0_3, %c24, %c0_4], %2 {strides = array<i32>} : memref<1x32x128xf32, #tpu.memory_space<vmem>>, vector<1x8x128xf32>,
    %c0_5 = arith.constant 0 : index
    %c0_6 = arith.constant 0 : index
    %c0_7 = arith.constant 0 : index
    %4 = vector.load %arg1[%c0_5, %c0_6, %c0_7] : memref<1x16x4xf32, #tpu.memory_space<vmem>>, vector<1x16x4xf32>
    %5 = arith.cmpf one, %4, %4 : vector<1x16x4xf32>
    %cst_8 = arith.constant 1.000000e+00 : f32
    %cst_9 = arith.constant 0.000000e+00 : f32
    %6 = vector.broadcast %cst_8 : f32 to vector<1x16x4xf32>
    %7 = vector.broadcast %cst_9 : f32 to vector<1x16x4xf32>
    %8 = arith.select %5, %6, %7 : vector<1x16x4xi1>, vector<1x16x4xf32>
    %cst_10 = arith.constant dense<0.000000e+00> : vector<1x16xf32>
    %9 = vector.multi_reduction <add>, %8, %cst_10 [2] : vector<1x16x4xf32> to vector<1x16xf32>
    %10 = vector.shape_cast %9 : vector<1x16xf32> to vector<1x16x1xf32>
    %cst_11 = arith.constant 0.000000e+00 : f32
    %11 = vector.broadcast %cst_11 : f32 to vector<1x16x1xf32>
    %12 = arith.cmpf ogt, %10, %11 : vector<1x16x1xf32>
    %cst_12 = arith.constant 0.000000e+00 : f32
    %13 = vector.shape_cast %12 : vector<1x16x1xi1> to vector<1x16x1xi1>
    %14 = vector.broadcast %13 : vector<1x16x1xi1> to vector<1x16x4xi1>
    %15 = vector.broadcast %cst_12 : f32 to vector<1x16x4xf32>
    %16 = arith.select %14, %15, %4 : vector<1x16x4xi1>, vector<1x16x4xf32>
    %c0_13 = arith.constant 0 : index
    %c0_14 = arith.constant 0 : index
    %17 = vector.load %arg2[%c0_13, %c0_14] : memref<4x128xf32, #tpu.memory_space<vmem>>, vector<4x128xf32>
    %18 = vector.extract_strided_slice %16 {offsets = [0, 0, 0], sizes = [1, 16, 1], strides = [1, 1, 1]} : vector<1x16x4xf32> to vector<1x16x1xf32>
    %19 = vector.extract_strided_slice %17 {offsets = [0, 0], sizes = [1, 128], strides = [1, 1]} : vector<4x128xf32> to vector<1x128xf32>
    %20 = vector.shape_cast %19 : vector<1x128xf32> to vector<1x1x128xf32>
    %21 = vector.broadcast %18 : vector<1x16x1xf32> to vector<1x16x128xf32>
    %22 = vector.broadcast %20 : vector<1x1x128xf32> to vector<1x16x128xf32>
    %23 = arith.mulf %21, %22 : vector<1x16x128xf32>
    %24 = vector.extract_strided_slice %16 {offsets = [0, 0, 1], sizes = [1, 16, 1], strides = [1, 1, 1]} : vector<1x16x4xf32> to vector<1x16x1xf32>
    %25 = vector.extract_strided_slice %17 {offsets = [1, 0], sizes = [1, 128], strides = [1, 1]} : vector<4x128xf32> to vector<1x128xf32>
    %26 = vector.shape_cast %25 : vector<1x128xf32> to vector<1x1x128xf32>
    %27 = vector.broadcast %24 : vector<1x16x1xf32> to vector<1x16x128xf32>
    %28 = vector.broadcast %26 : vector<1x1x128xf32> to vector<1x16x128xf32>
    %29 = arith.mulf %27, %28 : vector<1x16x128xf32>
    %30 = arith.addf %23, %29 : vector<1x16x128xf32>
    %31 = vector.extract_strided_slice %16 {offsets = [0, 0, 2], sizes = [1, 16, 1], strides = [1, 1, 1]} : vector<1x16x4xf32> to vector<1x16x1xf32>
    %32 = vector.extract_strided_slice %17 {offsets = [2, 0], sizes = [1, 128], strides = [1, 1]} : vector<4x128xf32> to vector<1x128xf32>
    %33 = vector.shape_cast %32 : vector<1x128xf32> to vector<1x1x128xf32>
    %34 = vector.broadcast %31 : vector<1x16x1xf32> to vector<1x16x128xf32>
    %35 = vector.broadcast %33 : vector<1x1x128xf32> to vector<1x16x128xf32>
    %36 = arith.mulf %34, %35 : vector<1x16x128xf32>
    %37 = arith.addf %30, %36 : vector<1x16x128xf32>
    %38 = vector.extract_strided_slice %16 {offsets = [0, 0, 3], sizes = [1, 16, 1], strides = [1, 1, 1]} : vector<1x16x4xf32> to vector<1x16x1xf32>
    %39 = vector.extract_strided_slice %17 {offsets = [3, 0], sizes = [1, 128], strides = [1, 1]} : vector<4x128xf32> to vector<1x128xf32>
    %40 = vector.shape_cast %39 : vector<1x128xf32> to vector<1x1x128xf32>
    %41 = vector.broadcast %38 : vector<1x16x1xf32> to vector<1x16x128xf32>
    %42 = vector.broadcast %40 : vector<1x1x128xf32> to vector<1x16x128xf32>
    %43 = arith.mulf %41, %42 : vector<1x16x128xf32>
    %44 = arith.addf %37, %43 : vector<1x16x128xf32>
    %c0_15 = arith.constant 0 : index
    %c0_16 = arith.constant 0 : index
    %45 = vector.load %arg3[%c0_15, %c0_16] : memref<1x128xf32, #tpu.memory_space<vmem>>, vector<1x128xf32>
    %46 = vector.shape_cast %45 : vector<1x128xf32> to vector<1x1x128xf32>
    %47 = vector.broadcast %46 : vector<1x1x128xf32> to vector<1x16x128xf32>
    %48 = arith.addf %44, %47 : vector<1x16x128xf32>
    %cst_17 = arith.constant 0.000000e+00 : f32
    %49 = vector.shape_cast %12 : vector<1x16x1xi1> to vector<1x16x1xi1>
    %50 = vector.broadcast %49 : vector<1x16x1xi1> to vector<1x16x128xi1>
    %51 = vector.broadcast %cst_17 : f32 to vector<1x16x128xf32>
    %52 = arith.select %50, %51, %48 : vector<1x16x128xi1>, vector<1x16x128xf32>
    %53 = arith.truncf %52 : vector<1x16x128xf32> to vector<1x16x128xbf16>
    %54 = arith.mulf %53, %53 : vector<1x16x128xbf16>
    %55 = arith.mulf %53, %54 : vector<1x16x128xbf16>
    %cst_18 = arith.constant 4.467770e-02 : bf16
    %56 = vector.broadcast %cst_18 : bf16 to vector<1x16x128xbf16>
    %57 = arith.mulf %56, %55 : vector<1x16x128xbf16>
    %58 = arith.addf %53, %57 : vector<1x16x128xbf16>
    %cst_19 = arith.constant 7.968750e-01 : bf16
    %59 = vector.broadcast %cst_19 : bf16 to vector<1x16x128xbf16>
    %60 = arith.mulf %59, %58 : vector<1x16x128xbf16>
    %61 = math.tanh %60 : vector<1x16x128xbf16>
    %cst_20 = arith.constant 1.000000e+00 : bf16
    %62 = vector.broadcast %cst_20 : bf16 to vector<1x16x128xbf16>
    %63 = arith.addf %62, %61 : vector<1x16x128xbf16>
    %cst_21 = arith.constant 5.000000e-01 : bf16
    %64 = vector.broadcast %cst_21 : bf16 to vector<1x16x128xbf16>
    %65 = arith.mulf %64, %63 : vector<1x16x128xbf16>
    %66 = arith.mulf %53, %65 : vector<1x16x128xbf16>
    %67 = arith.extf %66 : vector<1x16x128xbf16> to vector<1x16x128xf32>
    %c0_22 = arith.constant 0 : index
    %c8 = arith.constant 8 : index
    %c0_23 = arith.constant 0 : index
    %68 = vector.load %arg19[%c0_22, %c8, %c0_23] : memref<1x32x128xf32, #tpu.memory_space<vmem>>, vector<1x16x128xf32>
    tpu.vector_store %arg19[%c0_22, %c8, %c0_23], %67 {strides = array<i32>} : memref<1x32x128xf32, #tpu.memory_space<vmem>>, vector<1x16x128xf32>,
    %c0_24 = arith.constant 0 : index
    %c7 = arith.constant 7 : index
    %c0_25 = arith.constant 0 : index
    %69 = vector.load %arg19[%c0_24, %c7, %c0_25] : memref<1x32x128xf32, #tpu.memory_space<vmem>>, vector<1x16x128xf32>
    %c0_26 = arith.constant 0 : index
    %c9 = arith.constant 9 : index
    %c0_27 = arith.constant 0 : index
    %70 = vector.load %arg19[%c0_26, %c9, %c0_27] : memref<1x32x128xf32, #tpu.memory_space<vmem>>, vector<1x16x128xf32>
    %71 = arith.truncf %69 : vector<1x16x128xf32> to vector<1x16x128xbf16>
    %72 = vector.shape_cast %71 : vector<1x16x128xbf16> to vector<16x128xbf16>
    %c0_28 = arith.constant 0 : index
    %c0_29 = arith.constant 0 : index
    %c0_30 = arith.constant 0 : index
    %73 = vector.load %arg4[%c0_28, %c0_29, %c0_30] : memref<3x128x128xbf16, #tpu.memory_space<vmem>>, vector<1x128x128xbf16>
    %74 = vector.shape_cast %73 : vector<1x128x128xbf16> to vector<128x128xbf16>
    %cst_31 = arith.constant dense<0.000000e+00> : vector<16x128xf32>
    %75 = tpu.matmul %72, %74, %cst_31 {dimension_numbers = #tpu.dot_dimension_numbers<[1], [0], [0], [1], [0, 0, 1, 1], [], []>} : vector<16x128xbf16>, vector<128x128xbf16>, vector<16x128xf32> -> vector<16x128xf32>
    %76 = vector.shape_cast %66 : vector<1x16x128xbf16> to vector<16x128xbf16>
    %c1 = arith.constant 1 : index
    %c0_32 = arith.constant 0 : index
    %c0_33 = arith.constant 0 : index
    %77 = vector.load %arg4[%c1, %c0_32, %c0_33] : memref<3x128x128xbf16, #tpu.memory_space<vmem>>, vector<1x128x128xbf16>
    %78 = vector.shape_cast %77 : vector<1x128x128xbf16> to vector<128x128xbf16>
    %cst_34 = arith.constant dense<0.000000e+00> : vector<16x128xf32>
    %79 = tpu.matmul %76, %78, %cst_34 {dimension_numbers = #tpu.dot_dimension_numbers<[1], [0], [0], [1], [0, 0, 1, 1], [], []>} : vector<16x128xbf16>, vector<128x128xbf16>, vector<16x128xf32> -> vector<16x128xf32>
    %80 = arith.addf %75, %79 : vector<16x128xf32>
    %81 = arith.truncf %70 : vector<1x16x128xf32> to vector<1x16x128xbf16>
    %82 = vector.shape_cast %81 : vector<1x16x128xbf16> to vector<16x128xbf16>
    %c2 = arith.constant 2 : index
    %c0_35 = arith.constant 0 : index
    %c0_36 = arith.constant 0 : index
    %83 = vector.load %arg4[%c2, %c0_35, %c0_36] : memref<3x128x128xbf16, #tpu.memory_space<vmem>>, vector<1x128x128xbf16>
    %84 = vector.shape_cast %83 : vector<1x128x128xbf16> to vector<128x128xbf16>
    %cst_37 = arith.constant dense<0.000000e+00> : vector<16x128xf32>
    %85 = tpu.matmul %82, %84, %cst_37 {dimension_numbers = #tpu.dot_dimension_numbers<[1], [0], [0], [1], [0, 0, 1, 1], [], []>} : vector<16x128xbf16>, vector<128x128xbf16>, vector<16x128xf32> -> vector<16x128xf32>
    %86 = arith.addf %80, %85 : vector<16x128xf32>
    %c0_38 = arith.constant 0 : index
    %c0_39 = arith.constant 0 : index
    %87 = vector.load %arg5[%c0_38, %c0_39] : memref<1x128xf32, #tpu.memory_space<vmem>>, vector<1x128xf32>
    %88 = vector.broadcast %87 : vector<1x128xf32> to vector<16x128xf32>
    %89 = arith.addf %86, %88 : vector<16x128xf32>
    %90 = vector.shape_cast %89 : vector<16x128xf32> to vector<1x16x128xf32>
    %91 = arith.truncf %90 : vector<1x16x128xf32> to vector<1x16x128xbf16>
    %92 = arith.mulf %91, %91 : vector<1x16x128xbf16>
    %93 = arith.mulf %91, %92 : vector<1x16x128xbf16>
    %cst_40 = arith.constant 4.467770e-02 : bf16
    %94 = vector.broadcast %cst_40 : bf16 to vector<1x16x128xbf16>
    %95 = arith.mulf %94, %93 : vector<1x16x128xbf16>
    %96 = arith.addf %91, %95 : vector<1x16x128xbf16>
    %cst_41 = arith.constant 7.968750e-01 : bf16
    %97 = vector.broadcast %cst_41 : bf16 to vector<1x16x128xbf16>
    %98 = arith.mulf %97, %96 : vector<1x16x128xbf16>
    %99 = math.tanh %98 : vector<1x16x128xbf16>
    %cst_42 = arith.constant 1.000000e+00 : bf16
    %100 = vector.broadcast %cst_42 : bf16 to vector<1x16x128xbf16>
    %101 = arith.addf %100, %99 : vector<1x16x128xbf16>
    %cst_43 = arith.constant 5.000000e-01 : bf16
    %102 = vector.broadcast %cst_43 : bf16 to vector<1x16x128xbf16>
    %103 = arith.mulf %102, %101 : vector<1x16x128xbf16>
    %104 = arith.mulf %91, %103 : vector<1x16x128xbf16>
    %105 = arith.extf %104 : vector<1x16x128xbf16> to vector<1x16x128xf32>
    %c0_44 = arith.constant 0 : index
    %c8_45 = arith.constant 8 : index
    %c0_46 = arith.constant 0 : index
    %106 = vector.load %arg19[%c0_44, %c8_45, %c0_46] : memref<1x32x128xf32, #tpu.memory_space<vmem>>, vector<1x16x128xf32>
    tpu.vector_store %arg19[%c0_44, %c8_45, %c0_46], %105 {strides = array<i32>} : memref<1x32x128xf32, #tpu.memory_space<vmem>>, vector<1x16x128xf32>,
    %c0_47 = arith.constant 0 : index
    %c7_48 = arith.constant 7 : index
    %c0_49 = arith.constant 0 : index
    %107 = vector.load %arg19[%c0_47, %c7_48, %c0_49] : memref<1x32x128xf32, #tpu.memory_space<vmem>>, vector<1x16x128xf32>
    %c0_50 = arith.constant 0 : index
    %c9_51 = arith.constant 9 : index
    %c0_52 = arith.constant 0 : index
    %108 = vector.load %arg19[%c0_50, %c9_51, %c0_52] : memref<1x32x128xf32, #tpu.memory_space<vmem>>, vector<1x16x128xf32>
    %109 = arith.truncf %107 : vector<1x16x128xf32> to vector<1x16x128xbf16>
    %110 = vector.shape_cast %109 : vector<1x16x128xbf16> to vector<16x128xbf16>
    %c0_53 = arith.constant 0 : index
    %c0_54 = arith.constant 0 : index
    %c0_55 = arith.constant 0 : index
    %111 = vector.load %arg6[%c0_53, %c0_54, %c0_55] : memref<3x128x128xbf16, #tpu.memory_space<vmem>>, vector<1x128x128xbf16>
    %112 = vector.shape_cast %111 : vector<1x128x128xbf16> to vector<128x128xbf16>
    %cst_56 = arith.constant dense<0.000000e+00> : vector<16x128xf32>
    %113 = tpu.matmul %110, %112, %cst_56 {dimension_numbers = #tpu.dot_dimension_numbers<[1], [0], [0], [1], [0, 0, 1, 1], [], []>} : vector<16x128xbf16>, vector<128x128xbf16>, vector<16x128xf32> -> vector<16x128xf32>
    %114 = vector.shape_cast %104 : vector<1x16x128xbf16> to vector<16x128xbf16>
    %c1_57 = arith.constant 1 : index
    %c0_58 = arith.constant 0 : index
    %c0_59 = arith.constant 0 : index
    %115 = vector.load %arg6[%c1_57, %c0_58, %c0_59] : memref<3x128x128xbf16, #tpu.memory_space<vmem>>, vector<1x128x128xbf16>
    %116 = vector.shape_cast %115 : vector<1x128x128xbf16> to vector<128x128xbf16>
    %cst_60 = arith.constant dense<0.000000e+00> : vector<16x128xf32>
    %117 = tpu.matmul %114, %116, %cst_60 {dimension_numbers = #tpu.dot_dimension_numbers<[1], [0], [0], [1], [0, 0, 1, 1], [], []>} : vector<16x128xbf16>, vector<128x128xbf16>, vector<16x128xf32> -> vector<16x128xf32>
    %118 = arith.addf %113, %117 : vector<16x128xf32>
    %119 = arith.truncf %108 : vector<1x16x128xf32> to vector<1x16x128xbf16>
    %120 = vector.shape_cast %119 : vector<1x16x128xbf16> to vector<16x128xbf16>
    %c2_61 = arith.constant 2 : index
    %c0_62 = arith.constant 0 : index
    %c0_63 = arith.constant 0 : index
    %121 = vector.load %arg6[%c2_61, %c0_62, %c0_63] : memref<3x128x128xbf16, #tpu.memory_space<vmem>>, vector<1x128x128xbf16>
    %122 = vector.shape_cast %121 : vector<1x128x128xbf16> to vector<128x128xbf16>
    %cst_64 = arith.constant dense<0.000000e+00> : vector<16x128xf32>
    %123 = tpu.matmul %120, %122, %cst_64 {dimension_numbers = #tpu.dot_dimension_numbers<[1], [0], [0], [1], [0, 0, 1, 1], [], []>} : vector<16x128xbf16>, vector<128x128xbf16>, vector<16x128xf32> -> vector<16x128xf32>
    %124 = arith.addf %118, %123 : vector<16x128xf32>
    %c0_65 = arith.constant 0 : index
    %c0_66 = arith.constant 0 : index
    %125 = vector.load %arg7[%c0_65, %c0_66] : memref<1x128xf32, #tpu.memory_space<vmem>>, vector<1x128xf32>
    %126 = vector.broadcast %125 : vector<1x128xf32> to vector<16x128xf32>
    %127 = arith.addf %124, %126 : vector<16x128xf32>
    %128 = vector.shape_cast %127 : vector<16x128xf32> to vector<1x16x128xf32>
    %129 = arith.addf %128, %52 : vector<1x16x128xf32>
    %130 = arith.truncf %129 : vector<1x16x128xf32> to vector<1x16x128xbf16>
    %131 = arith.mulf %130, %130 : vector<1x16x128xbf16>
    %132 = arith.mulf %130, %131 : vector<1x16x128xbf16>
    %cst_67 = arith.constant 4.467770e-02 : bf16
    %133 = vector.broadcast %cst_67 : bf16 to vector<1x16x128xbf16>
    %134 = arith.mulf %133, %132 : vector<1x16x128xbf16>
    %135 = arith.addf %130, %134 : vector<1x16x128xbf16>
    %cst_68 = arith.constant 7.968750e-01 : bf16
    %136 = vector.broadcast %cst_68 : bf16 to vector<1x16x128xbf16>
    %137 = arith.mulf %136, %135 : vector<1x16x128xbf16>
    %138 = math.tanh %137 : vector<1x16x128xbf16>
    %cst_69 = arith.constant 1.000000e+00 : bf16
    %139 = vector.broadcast %cst_69 : bf16 to vector<1x16x128xbf16>
    %140 = arith.addf %139, %138 : vector<1x16x128xbf16>
    %cst_70 = arith.constant 5.000000e-01 : bf16
    %141 = vector.broadcast %cst_70 : bf16 to vector<1x16x128xbf16>
    %142 = arith.mulf %141, %140 : vector<1x16x128xbf16>
    %143 = arith.mulf %130, %142 : vector<1x16x128xbf16>
    %144 = arith.extf %143 : vector<1x16x128xbf16> to vector<1x16x128xf32>
    %c0_71 = arith.constant 0 : index
    %c8_72 = arith.constant 8 : index
    %c0_73 = arith.constant 0 : index
    %145 = vector.load %arg19[%c0_71, %c8_72, %c0_73] : memref<1x32x128xf32, #tpu.memory_space<vmem>>, vector<1x16x128xf32>
    tpu.vector_store %arg19[%c0_71, %c8_72, %c0_73], %144 {strides = array<i32>} : memref<1x32x128xf32, #tpu.memory_space<vmem>>, vector<1x16x128xf32>,
    %c0_74 = arith.constant 0 : index
    %c6 = arith.constant 6 : index
    %c0_75 = arith.constant 0 : index
    %146 = vector.load %arg19[%c0_74, %c6, %c0_75] : memref<1x32x128xf32, #tpu.memory_space<vmem>>, vector<1x16x128xf32>
    %c0_76 = arith.constant 0 : index
    %c10 = arith.constant 10 : index
    %c0_77 = arith.constant 0 : index
    %147 = vector.load %arg19[%c0_76, %c10, %c0_77] : memref<1x32x128xf32, #tpu.memory_space<vmem>>, vector<1x16x128xf32>
    %148 = arith.truncf %146 : vector<1x16x128xf32> to vector<1x16x128xbf16>
    %149 = vector.shape_cast %148 : vector<1x16x128xbf16> to vector<16x128xbf16>
    %c0_78 = arith.constant 0 : index
    %c0_79 = arith.constant 0 : index
    %c0_80 = arith.constant 0 : index
    %150 = vector.load %arg8[%c0_78, %c0_79, %c0_80] : memref<3x128x128xbf16, #tpu.memory_space<vmem>>, vector<1x128x128xbf16>
    %151 = vector.shape_cast %150 : vector<1x128x128xbf16> to vector<128x128xbf16>
    %cst_81 = arith.constant dense<0.000000e+00> : vector<16x128xf32>
    %152 = tpu.matmul %149, %151, %cst_81 {dimension_numbers = #tpu.dot_dimension_numbers<[1], [0], [0], [1], [0, 0, 1, 1], [], []>} : vector<16x128xbf16>, vector<128x128xbf16>, vector<16x128xf32> -> vector<16x128xf32>
    %153 = vector.shape_cast %143 : vector<1x16x128xbf16> to vector<16x128xbf16>
    %c1_82 = arith.constant 1 : index
    %c0_83 = arith.constant 0 : index
    %c0_84 = arith.constant 0 : index
    %154 = vector.load %arg8[%c1_82, %c0_83, %c0_84] : memref<3x128x128xbf16, #tpu.memory_space<vmem>>, vector<1x128x128xbf16>
    %155 = vector.shape_cast %154 : vector<1x128x128xbf16> to vector<128x128xbf16>
    %cst_85 = arith.constant dense<0.000000e+00> : vector<16x128xf32>
    %156 = tpu.matmul %153, %155, %cst_85 {dimension_numbers = #tpu.dot_dimension_numbers<[1], [0], [0], [1], [0, 0, 1, 1], [], []>} : vector<16x128xbf16>, vector<128x128xbf16>, vector<16x128xf32> -> vector<16x128xf32>
    %157 = arith.addf %152, %156 : vector<16x128xf32>
    %158 = arith.truncf %147 : vector<1x16x128xf32> to vector<1x16x128xbf16>
    %159 = vector.shape_cast %158 : vector<1x16x128xbf16> to vector<16x128xbf16>
    %c2_86 = arith.constant 2 : index
    %c0_87 = arith.constant 0 : index
    %c0_88 = arith.constant 0 : index
    %160 = vector.load %arg8[%c2_86, %c0_87, %c0_88] : memref<3x128x128xbf16, #tpu.memory_space<vmem>>, vector<1x128x128xbf16>
    %161 = vector.shape_cast %160 : vector<1x128x128xbf16> to vector<128x128xbf16>
    %cst_89 = arith.constant dense<0.000000e+00> : vector<16x128xf32>
    %162 = tpu.matmul %159, %161, %cst_89 {dimension_numbers = #tpu.dot_dimension_numbers<[1], [0], [0], [1], [0, 0, 1, 1], [], []>} : vector<16x128xbf16>, vector<128x128xbf16>, vector<16x128xf32> -> vector<16x128xf32>
    %163 = arith.addf %157, %162 : vector<16x128xf32>
    %c0_90 = arith.constant 0 : index
    %c0_91 = arith.constant 0 : index
    %164 = vector.load %arg9[%c0_90, %c0_91] : memref<1x128xf32, #tpu.memory_space<vmem>>, vector<1x128xf32>
    %165 = vector.broadcast %164 : vector<1x128xf32> to vector<16x128xf32>
    %166 = arith.addf %163, %165 : vector<16x128xf32>
    %167 = vector.shape_cast %166 : vector<16x128xf32> to vector<1x16x128xf32>
    %168 = arith.truncf %167 : vector<1x16x128xf32> to vector<1x16x128xbf16>
    %169 = arith.mulf %168, %168 : vector<1x16x128xbf16>
    %170 = arith.mulf %168, %169 : vector<1x16x128xbf16>
    %cst_92 = arith.constant 4.467770e-02 : bf16
    %171 = vector.broadcast %cst_92 : bf16 to vector<1x16x128xbf16>
    %172 = arith.mulf %171, %170 : vector<1x16x128xbf16>
    %173 = arith.addf %168, %172 : vector<1x16x128xbf16>
    %cst_93 = arith.constant 7.968750e-01 : bf16
    %174 = vector.broadcast %cst_93 : bf16 to vector<1x16x128xbf16>
    %175 = arith.mulf %174, %173 : vector<1x16x128xbf16>
    %176 = math.tanh %175 : vector<1x16x128xbf16>
    %cst_94 = arith.constant 1.000000e+00 : bf16
    %177 = vector.broadcast %cst_94 : bf16 to vector<1x16x128xbf16>
    %178 = arith.addf %177, %176 : vector<1x16x128xbf16>
    %cst_95 = arith.constant 5.000000e-01 : bf16
    %179 = vector.broadcast %cst_95 : bf16 to vector<1x16x128xbf16>
    %180 = arith.mulf %179, %178 : vector<1x16x128xbf16>
    %181 = arith.mulf %168, %180 : vector<1x16x128xbf16>
    %182 = arith.extf %181 : vector<1x16x128xbf16> to vector<1x16x128xf32>
    %c0_96 = arith.constant 0 : index
    %c8_97 = arith.constant 8 : index
    %c0_98 = arith.constant 0 : index
    %183 = vector.load %arg19[%c0_96, %c8_97, %c0_98] : memref<1x32x128xf32, #tpu.memory_space<vmem>>, vector<1x16x128xf32>
    tpu.vector_store %arg19[%c0_96, %c8_97, %c0_98], %182 {strides = array<i32>} : memref<1x32x128xf32, #tpu.memory_space<vmem>>, vector<1x16x128xf32>,
    %c0_99 = arith.constant 0 : index
    %c6_100 = arith.constant 6 : index
    %c0_101 = arith.constant 0 : index
    %184 = vector.load %arg19[%c0_99, %c6_100, %c0_101] : memref<1x32x128xf32, #tpu.memory_space<vmem>>, vector<1x16x128xf32>
    %c0_102 = arith.constant 0 : index
    %c10_103 = arith.constant 10 : index
    %c0_104 = arith.constant 0 : index
    %185 = vector.load %arg19[%c0_102, %c10_103, %c0_104] : memref<1x32x128xf32, #tpu.memory_space<vmem>>, vector<1x16x128xf32>
    %186 = arith.truncf %184 : vector<1x16x128xf32> to vector<1x16x128xbf16>
    %187 = vector.shape_cast %186 : vector<1x16x128xbf16> to vector<16x128xbf16>
    %c0_105 = arith.constant 0 : index
    %c0_106 = arith.constant 0 : index
    %c0_107 = arith.constant 0 : index
    %188 = vector.load %arg10[%c0_105, %c0_106, %c0_107] : memref<3x128x128xbf16, #tpu.memory_space<vmem>>, vector<1x128x128xbf16>
    %189 = vector.shape_cast %188 : vector<1x128x128xbf16> to vector<128x128xbf16>
    %cst_108 = arith.constant dense<0.000000e+00> : vector<16x128xf32>
    %190 = tpu.matmul %187, %189, %cst_108 {dimension_numbers = #tpu.dot_dimension_numbers<[1], [0], [0], [1], [0, 0, 1, 1], [], []>} : vector<16x128xbf16>, vector<128x128xbf16>, vector<16x128xf32> -> vector<16x128xf32>
    %191 = vector.shape_cast %181 : vector<1x16x128xbf16> to vector<16x128xbf16>
    %c1_109 = arith.constant 1 : index
    %c0_110 = arith.constant 0 : index
    %c0_111 = arith.constant 0 : index
    %192 = vector.load %arg10[%c1_109, %c0_110, %c0_111] : memref<3x128x128xbf16, #tpu.memory_space<vmem>>, vector<1x128x128xbf16>
    %193 = vector.shape_cast %192 : vector<1x128x128xbf16> to vector<128x128xbf16>
    %cst_112 = arith.constant dense<0.000000e+00> : vector<16x128xf32>
    %194 = tpu.matmul %191, %193, %cst_112 {dimension_numbers = #tpu.dot_dimension_numbers<[1], [0], [0], [1], [0, 0, 1, 1], [], []>} : vector<16x128xbf16>, vector<128x128xbf16>, vector<16x128xf32> -> vector<16x128xf32>
    %195 = arith.addf %190, %194 : vector<16x128xf32>
    %196 = arith.truncf %185 : vector<1x16x128xf32> to vector<1x16x128xbf16>
    %197 = vector.shape_cast %196 : vector<1x16x128xbf16> to vector<16x128xbf16>
    %c2_113 = arith.constant 2 : index
    %c0_114 = arith.constant 0 : index
    %c0_115 = arith.constant 0 : index
    %198 = vector.load %arg10[%c2_113, %c0_114, %c0_115] : memref<3x128x128xbf16, #tpu.memory_space<vmem>>, vector<1x128x128xbf16>
    %199 = vector.shape_cast %198 : vector<1x128x128xbf16> to vector<128x128xbf16>
    %cst_116 = arith.constant dense<0.000000e+00> : vector<16x128xf32>
    %200 = tpu.matmul %197, %199, %cst_116 {dimension_numbers = #tpu.dot_dimension_numbers<[1], [0], [0], [1], [0, 0, 1, 1], [], []>} : vector<16x128xbf16>, vector<128x128xbf16>, vector<16x128xf32> -> vector<16x128xf32>
    %201 = arith.addf %195, %200 : vector<16x128xf32>
    %c0_117 = arith.constant 0 : index
    %c0_118 = arith.constant 0 : index
    %202 = vector.load %arg11[%c0_117, %c0_118] : memref<1x128xf32, #tpu.memory_space<vmem>>, vector<1x128xf32>
    %203 = vector.broadcast %202 : vector<1x128xf32> to vector<16x128xf32>
    %204 = arith.addf %201, %203 : vector<16x128xf32>
    %205 = vector.shape_cast %204 : vector<16x128xf32> to vector<1x16x128xf32>
    %206 = arith.addf %205, %129 : vector<1x16x128xf32>
    %207 = arith.truncf %206 : vector<1x16x128xf32> to vector<1x16x128xbf16>
    %208 = vector.shape_cast %207 : vector<1x16x128xbf16> to vector<16x128xbf16>
    %c0_119 = arith.constant 0 : index
    %c0_120 = arith.constant 0 : index
    %209 = vector.load %arg16[%c0_119, %c0_120] : memref<128x128xbf16, #tpu.memory_space<vmem>>, vector<128x128xbf16>
    %cst_121 = arith.constant dense<0.000000e+00> : vector<16x128xf32>
    %210 = tpu.matmul %208, %209, %cst_121 {dimension_numbers = #tpu.dot_dimension_numbers<[1], [0], [0], [1], [0, 0, 1, 1], [], []>} : vector<16x128xbf16>, vector<128x128xbf16>, vector<16x128xf32> -> vector<16x128xf32>
    %c0_122 = arith.constant 0 : index
    %c0_123 = arith.constant 0 : index
    %211 = vector.load %arg17[%c0_122, %c0_123] : memref<1x128xf32, #tpu.memory_space<vmem>>, vector<1x128xf32>
    %212 = vector.broadcast %211 : vector<1x128xf32> to vector<16x128xf32>
    %213 = arith.addf %210, %212 : vector<16x128xf32>
    %214 = vector.shape_cast %213 : vector<16x128xf32> to vector<1x16x128xf32>
    %215 = arith.truncf %206 : vector<1x16x128xf32> to vector<1x16x128xbf16>
    %216 = arith.mulf %215, %215 : vector<1x16x128xbf16>
    %217 = arith.mulf %215, %216 : vector<1x16x128xbf16>
    %cst_124 = arith.constant 4.467770e-02 : bf16
    %218 = vector.broadcast %cst_124 : bf16 to vector<1x16x128xbf16>
    %219 = arith.mulf %218, %217 : vector<1x16x128xbf16>
    %220 = arith.addf %215, %219 : vector<1x16x128xbf16>
    %cst_125 = arith.constant 7.968750e-01 : bf16
    %221 = vector.broadcast %cst_125 : bf16 to vector<1x16x128xbf16>
    %222 = arith.mulf %221, %220 : vector<1x16x128xbf16>
    %223 = math.tanh %222 : vector<1x16x128xbf16>
    %cst_126 = arith.constant 1.000000e+00 : bf16
    %224 = vector.broadcast %cst_126 : bf16 to vector<1x16x128xbf16>
    %225 = arith.addf %224, %223 : vector<1x16x128xbf16>
    %cst_127 = arith.constant 5.000000e-01 : bf16
    %226 = vector.broadcast %cst_127 : bf16 to vector<1x16x128xbf16>
    %227 = arith.mulf %226, %225 : vector<1x16x128xbf16>
    %228 = arith.mulf %215, %227 : vector<1x16x128xbf16>
    %229 = arith.extf %228 : vector<1x16x128xbf16> to vector<1x16x128xf32>
    %c0_128 = arith.constant 0 : index
    %c8_129 = arith.constant 8 : index
    %c0_130 = arith.constant 0 : index
    %230 = vector.load %arg19[%c0_128, %c8_129, %c0_130] : memref<1x32x128xf32, #tpu.memory_space<vmem>>, vector<1x16x128xf32>
    tpu.vector_store %arg19[%c0_128, %c8_129, %c0_130], %229 {strides = array<i32>} : memref<1x32x128xf32, #tpu.memory_space<vmem>>, vector<1x16x128xf32>,
    %c0_131 = arith.constant 0 : index
    %c4 = arith.constant 4 : index
    %c0_132 = arith.constant 0 : index
    %231 = vector.load %arg19[%c0_131, %c4, %c0_132] : memref<1x32x128xf32, #tpu.memory_space<vmem>>, vector<1x16x128xf32>
    %c0_133 = arith.constant 0 : index
    %c12 = arith.constant 12 : index
    %c0_134 = arith.constant 0 : index
    %232 = vector.load %arg19[%c0_133, %c12, %c0_134] : memref<1x32x128xf32, #tpu.memory_space<vmem>>, vector<1x16x128xf32>
    %233 = arith.truncf %231 : vector<1x16x128xf32> to vector<1x16x128xbf16>
    %234 = vector.shape_cast %233 : vector<1x16x128xbf16> to vector<16x128xbf16>
    %c0_135 = arith.constant 0 : index
    %c0_136 = arith.constant 0 : index
    %c0_137 = arith.constant 0 : index
    %235 = vector.load %arg12[%c0_135, %c0_136, %c0_137] : memref<3x128x128xbf16, #tpu.memory_space<vmem>>, vector<1x128x128xbf16>
    %236 = vector.shape_cast %235 : vector<1x128x128xbf16> to vector<128x128xbf16>
    %cst_138 = arith.constant dense<0.000000e+00> : vector<16x128xf32>
    %237 = tpu.matmul %234, %236, %cst_138 {dimension_numbers = #tpu.dot_dimension_numbers<[1], [0], [0], [1], [0, 0, 1, 1], [], []>} : vector<16x128xbf16>, vector<128x128xbf16>, vector<16x128xf32> -> vector<16x128xf32>
    %238 = vector.shape_cast %228 : vector<1x16x128xbf16> to vector<16x128xbf16>
    %c1_139 = arith.constant 1 : index
    %c0_140 = arith.constant 0 : index
    %c0_141 = arith.constant 0 : index
    %239 = vector.load %arg12[%c1_139, %c0_140, %c0_141] : memref<3x128x128xbf16, #tpu.memory_space<vmem>>, vector<1x128x128xbf16>
    %240 = vector.shape_cast %239 : vector<1x128x128xbf16> to vector<128x128xbf16>
    %cst_142 = arith.constant dense<0.000000e+00> : vector<16x128xf32>
    %241 = tpu.matmul %238, %240, %cst_142 {dimension_numbers = #tpu.dot_dimension_numbers<[1], [0], [0], [1], [0, 0, 1, 1], [], []>} : vector<16x128xbf16>, vector<128x128xbf16>, vector<16x128xf32> -> vector<16x128xf32>
    %242 = arith.addf %237, %241 : vector<16x128xf32>
    %243 = arith.truncf %232 : vector<1x16x128xf32> to vector<1x16x128xbf16>
    %244 = vector.shape_cast %243 : vector<1x16x128xbf16> to vector<16x128xbf16>
    %c2_143 = arith.constant 2 : index
    %c0_144 = arith.constant 0 : index
    %c0_145 = arith.constant 0 : index
    %245 = vector.load %arg12[%c2_143, %c0_144, %c0_145] : memref<3x128x128xbf16, #tpu.memory_space<vmem>>, vector<1x128x128xbf16>
    %246 = vector.shape_cast %245 : vector<1x128x128xbf16> to vector<128x128xbf16>
    %cst_146 = arith.constant dense<0.000000e+00> : vector<16x128xf32>
    %247 = tpu.matmul %244, %246, %cst_146 {dimension_numbers = #tpu.dot_dimension_numbers<[1], [0], [0], [1], [0, 0, 1, 1], [], []>} : vector<16x128xbf16>, vector<128x128xbf16>, vector<16x128xf32> -> vector<16x128xf32>
    %248 = arith.addf %242, %247 : vector<16x128xf32>
    %c0_147 = arith.constant 0 : index
    %c0_148 = arith.constant 0 : index
    %249 = vector.load %arg13[%c0_147, %c0_148] : memref<1x128xf32, #tpu.memory_space<vmem>>, vector<1x128xf32>
    %250 = vector.broadcast %249 : vector<1x128xf32> to vector<16x128xf32>
    %251 = arith.addf %248, %250 : vector<16x128xf32>
    %252 = vector.shape_cast %251 : vector<16x128xf32> to vector<1x16x128xf32>
    %253 = arith.truncf %252 : vector<1x16x128xf32> to vector<1x16x128xbf16>
    %254 = arith.mulf %253, %253 : vector<1x16x128xbf16>
    %255 = arith.mulf %253, %254 : vector<1x16x128xbf16>
    %cst_149 = arith.constant 4.467770e-02 : bf16
    %256 = vector.broadcast %cst_149 : bf16 to vector<1x16x128xbf16>
    %257 = arith.mulf %256, %255 : vector<1x16x128xbf16>
    %258 = arith.addf %253, %257 : vector<1x16x128xbf16>
    %cst_150 = arith.constant 7.968750e-01 : bf16
    %259 = vector.broadcast %cst_150 : bf16 to vector<1x16x128xbf16>
    %260 = arith.mulf %259, %258 : vector<1x16x128xbf16>
    %261 = math.tanh %260 : vector<1x16x128xbf16>
    %cst_151 = arith.constant 1.000000e+00 : bf16
    %262 = vector.broadcast %cst_151 : bf16 to vector<1x16x128xbf16>
    %263 = arith.addf %262, %261 : vector<1x16x128xbf16>
    %cst_152 = arith.constant 5.000000e-01 : bf16
    %264 = vector.broadcast %cst_152 : bf16 to vector<1x16x128xbf16>
    %265 = arith.mulf %264, %263 : vector<1x16x128xbf16>
    %266 = arith.mulf %253, %265 : vector<1x16x128xbf16>
    %267 = arith.extf %266 : vector<1x16x128xbf16> to vector<1x16x128xf32>
    %c0_153 = arith.constant 0 : index
    %c8_154 = arith.constant 8 : index
    %c0_155 = arith.constant 0 : index
    %268 = vector.load %arg19[%c0_153, %c8_154, %c0_155] : memref<1x32x128xf32, #tpu.memory_space<vmem>>, vector<1x16x128xf32>
    tpu.vector_store %arg19[%c0_153, %c8_154, %c0_155], %267 {strides = array<i32>} : memref<1x32x128xf32, #tpu.memory_space<vmem>>, vector<1x16x128xf32>,
    %c0_156 = arith.constant 0 : index
    %c4_157 = arith.constant 4 : index
    %c0_158 = arith.constant 0 : index
    %269 = vector.load %arg19[%c0_156, %c4_157, %c0_158] : memref<1x32x128xf32, #tpu.memory_space<vmem>>, vector<1x16x128xf32>
    %c0_159 = arith.constant 0 : index
    %c12_160 = arith.constant 12 : index
    %c0_161 = arith.constant 0 : index
    %270 = vector.load %arg19[%c0_159, %c12_160, %c0_161] : memref<1x32x128xf32, #tpu.memory_space<vmem>>, vector<1x16x128xf32>
    %271 = arith.truncf %269 : vector<1x16x128xf32> to vector<1x16x128xbf16>
    %272 = vector.shape_cast %271 : vector<1x16x128xbf16> to vector<16x128xbf16>
    %c0_162 = arith.constant 0 : index
    %c0_163 = arith.constant 0 : index
    %c0_164 = arith.constant 0 : index
    %273 = vector.load %arg14[%c0_162, %c0_163, %c0_164] : memref<3x128x128xbf16, #tpu.memory_space<vmem>>, vector<1x128x128xbf16>
    %274 = vector.shape_cast %273 : vector<1x128x128xbf16> to vector<128x128xbf16>
    %cst_165 = arith.constant dense<0.000000e+00> : vector<16x128xf32>
    %275 = tpu.matmul %272, %274, %cst_165 {dimension_numbers = #tpu.dot_dimension_numbers<[1], [0], [0], [1], [0, 0, 1, 1], [], []>} : vector<16x128xbf16>, vector<128x128xbf16>, vector<16x128xf32> -> vector<16x128xf32>
    %276 = vector.shape_cast %266 : vector<1x16x128xbf16> to vector<16x128xbf16>
    %c1_166 = arith.constant 1 : index
    %c0_167 = arith.constant 0 : index
    %c0_168 = arith.constant 0 : index
    %277 = vector.load %arg14[%c1_166, %c0_167, %c0_168] : memref<3x128x128xbf16, #tpu.memory_space<vmem>>, vector<1x128x128xbf16>
    %278 = vector.shape_cast %277 : vector<1x128x128xbf16> to vector<128x128xbf16>
    %cst_169 = arith.constant dense<0.000000e+00> : vector<16x128xf32>
    %279 = tpu.matmul %276, %278, %cst_169 {dimension_numbers = #tpu.dot_dimension_numbers<[1], [0], [0], [1], [0, 0, 1, 1], [], []>} : vector<16x128xbf16>, vector<128x128xbf16>, vector<16x128xf32> -> vector<16x128xf32>
    %280 = arith.addf %275, %279 : vector<16x128xf32>
    %281 = arith.truncf %270 : vector<1x16x128xf32> to vector<1x16x128xbf16>
    %282 = vector.shape_cast %281 : vector<1x16x128xbf16> to vector<16x128xbf16>
    %c2_170 = arith.constant 2 : index
    %c0_171 = arith.constant 0 : index
    %c0_172 = arith.constant 0 : index
    %283 = vector.load %arg14[%c2_170, %c0_171, %c0_172] : memref<3x128x128xbf16, #tpu.memory_space<vmem>>, vector<1x128x128xbf16>
    %284 = vector.shape_cast %283 : vector<1x128x128xbf16> to vector<128x128xbf16>
    %cst_173 = arith.constant dense<0.000000e+00> : vector<16x128xf32>
    %285 = tpu.matmul %282, %284, %cst_173 {dimension_numbers = #tpu.dot_dimension_numbers<[1], [0], [0], [1], [0, 0, 1, 1], [], []>} : vector<16x128xbf16>, vector<128x128xbf16>, vector<16x128xf32> -> vector<16x128xf32>
    %286 = arith.addf %280, %285 : vector<16x128xf32>
    %c0_174 = arith.constant 0 : index
    %c0_175 = arith.constant 0 : index
    %287 = vector.load %arg15[%c0_174, %c0_175] : memref<1x128xf32, #tpu.memory_space<vmem>>, vector<1x128xf32>
    %288 = vector.broadcast %287 : vector<1x128xf32> to vector<16x128xf32>
    %289 = arith.addf %286, %288 : vector<16x128xf32>
    %290 = vector.shape_cast %289 : vector<16x128xf32> to vector<1x16x128xf32>
    %291 = arith.addf %290, %214 : vector<1x16x128xf32>
    %cst_176 = arith.constant dense<0xFF800000> : vector<1x128xf32>
    %292 = vector.multi_reduction <maximumf>, %291, %cst_176 [1] : vector<1x16x128xf32> to vector<1x128xf32>
    %293 = vector.shape_cast %292 : vector<1x128xf32> to vector<1x1x128xf32>
    %294 = arith.mulf %293, %293 : vector<1x1x128xf32>
    %cst_177 = arith.constant dense<0.000000e+00> : vector<1x1xf32>
    %295 = vector.multi_reduction <add>, %294, %cst_177 [2] : vector<1x1x128xf32> to vector<1x1xf32>
    %296 = vector.shape_cast %295 : vector<1x1xf32> to vector<1x1x1xf32>
    %cst_178 = arith.constant 1.000000e-24 : f32
    %297 = vector.broadcast %cst_178 : f32 to vector<1x1x1xf32>
    %298 = arith.maximumf %296, %297 : vector<1x1x1xf32>
    %299 = math.rsqrt %298 : vector<1x1x1xf32>
    %300 = vector.broadcast %299 : vector<1x1x1xf32> to vector<1x1x128xf32>
    %301 = arith.mulf %293, %300 : vector<1x1x128xf32>
    %c0_179 = arith.constant 0 : index
    %c0_180 = arith.constant 0 : index
    %c0_181 = arith.constant 0 : index
    %302 = vector.load %arg18[%c0_179, %c0_180, %c0_181] : memref<1x1x128xf32, #tpu.memory_space<vmem>>, vector<1x1x128xf32>
    tpu.vector_store %arg18[%c0_179, %c0_180, %c0_181], %301 {strides = array<i32>} : memref<1x1x128xf32, #tpu.memory_space<vmem>>, vector<1x1x128xf32>,
    return
  }
  func.func @transform_0(%arg0: i32) -> (i32, i32, i32) {
    %c0_i32 = arith.constant 0 : i32
    %c0_i32_0 = arith.constant 0 : i32
    %c0_i32_1 = arith.constant 0 : i32
    return %arg0, %c0_i32, %c0_i32_0 : i32, i32, i32
  }
  func.func @transform_1(%arg0: i32) -> (i32, i32) {
    %c0_i32 = arith.constant 0 : i32
    %c0_i32_0 = arith.constant 0 : i32
    %c0_i32_1 = arith.constant 0 : i32
    return %c0_i32, %c0_i32_0 : i32, i32
  }
  func.func @transform_2(%arg0: i32) -> (i32, i32) {
    %c0_i32 = arith.constant 0 : i32
    %c0_i32_0 = arith.constant 0 : i32
    %c0_i32_1 = arith.constant 0 : i32
    return %c0_i32, %c0_i32_0 : i32, i32
  }
  func.func @transform_3(%arg0: i32) -> (i32, i32, i32) {
    %c0_i32 = arith.constant 0 : i32
    %c0_i32_0 = arith.constant 0 : i32
    %c0_i32_1 = arith.constant 0 : i32
    %c0_i32_2 = arith.constant 0 : i32
    return %c0_i32, %c0_i32_0, %c0_i32_1 : i32, i32, i32
  }
  func.func @transform_4(%arg0: i32) -> (i32, i32) {
    %c0_i32 = arith.constant 0 : i32
    %c0_i32_0 = arith.constant 0 : i32
    %c0_i32_1 = arith.constant 0 : i32
    return %c0_i32, %c0_i32_0 : i32, i32
  }
  func.func @transform_5(%arg0: i32) -> (i32, i32, i32) {
    %c0_i32 = arith.constant 0 : i32
    %c0_i32_0 = arith.constant 0 : i32
    %c0_i32_1 = arith.constant 0 : i32
    %c0_i32_2 = arith.constant 0 : i32
    return %c0_i32, %c0_i32_0, %c0_i32_1 : i32, i32, i32
  }
  func.func @transform_6(%arg0: i32) -> (i32, i32) {
    %c0_i32 = arith.constant 0 : i32
    %c0_i32_0 = arith.constant 0 : i32
    %c0_i32_1 = arith.constant 0 : i32
    return %c0_i32, %c0_i32_0 : i32, i32
  }
  func.func @transform_7(%arg0: i32) -> (i32, i32, i32) {
    %c0_i32 = arith.constant 0 : i32
    %c0_i32_0 = arith.constant 0 : i32
    %c0_i32_1 = arith.constant 0 : i32
    %c0_i32_2 = arith.constant 0 : i32
    return %c0_i32, %c0_i32_0, %c0_i32_1 : i32, i32, i32
  }
  func.func @transform_8(%arg0: i32) -> (i32, i32) {
    %c0_i32 = arith.constant 0 : i32
    %c0_i32_0 = arith.constant 0 : i32
    %c0_i32_1 = arith.constant 0 : i32
    return %c0_i32, %c0_i32_0 : i32, i32
  }
  func.func @transform_9(%arg0: i32) -> (i32, i32, i32) {
    %c0_i32 = arith.constant 0 : i32
    %c0_i32_0 = arith.constant 0 : i32
    %c0_i32_1 = arith.constant 0 : i32
    %c0_i32_2 = arith.constant 0 : i32
    return %c0_i32, %c0_i32_0, %c0_i32_1 : i32, i32, i32
  }
  func.func @transform_10(%arg0: i32) -> (i32, i32) {
    %c0_i32 = arith.constant 0 : i32
    %c0_i32_0 = arith.constant 0 : i32
    %c0_i32_1 = arith.constant 0 : i32
    return %c0_i32, %c0_i32_0 : i32, i32
  }
  func.func @transform_11(%arg0: i32) -> (i32, i32, i32) {
    %c0_i32 = arith.constant 0 : i32
    %c0_i32_0 = arith.constant 0 : i32
    %c0_i32_1 = arith.constant 0 : i32
    %c0_i32_2 = arith.constant 0 : i32
    return %c0_i32, %c0_i32_0, %c0_i32_1 : i32, i32, i32
  }
  func.func @transform_12(%arg0: i32) -> (i32, i32) {
    %c0_i32 = arith.constant 0 : i32
    %c0_i32_0 = arith.constant 0 : i32
    %c0_i32_1 = arith.constant 0 : i32
    return %c0_i32, %c0_i32_0 : i32, i32
  }
  func.func @transform_13(%arg0: i32) -> (i32, i32, i32) {
    %c0_i32 = arith.constant 0 : i32
    %c0_i32_0 = arith.constant 0 : i32
    %c0_i32_1 = arith.constant 0 : i32
    %c0_i32_2 = arith.constant 0 : i32
    return %c0_i32, %c0_i32_0, %c0_i32_1 : i32, i32, i32
  }
  func.func @transform_14(%arg0: i32) -> (i32, i32) {
    %c0_i32 = arith.constant 0 : i32
    %c0_i32_0 = arith.constant 0 : i32
    %c0_i32_1 = arith.constant 0 : i32
    return %c0_i32, %c0_i32_0 : i32, i32
  }
  func.func @transform_15(%arg0: i32) -> (i32, i32) {
    %c0_i32 = arith.constant 0 : i32
    %c0_i32_0 = arith.constant 0 : i32
    %c0_i32_1 = arith.constant 0 : i32
    return %c0_i32, %c0_i32_0 : i32, i32
  }
  func.func @transform_16(%arg0: i32) -> (i32, i32) {
    %c0_i32 = arith.constant 0 : i32
    %c0_i32_0 = arith.constant 0 : i32
    %c0_i32_1 = arith.constant 0 : i32
    return %c0_i32, %c0_i32_0 : i32, i32
  }
  func.func @transform_17(%arg0: i32) -> (i32, i32, i32) {
    %c0_i32 = arith.constant 0 : i32
    %c0_i32_0 = arith.constant 0 : i32
    %c0_i32_1 = arith.constant 0 : i32
    return %arg0, %c0_i32, %c0_i32_0 : i32, i32, i32
  }
}

</mosaic_0001>

<llo_original>
// kernel: tpu_custom_call.1
$region0: #{tpu_custom_call.1}
  #allocation0 [shape = 'u32[]', space=smem, size = 0x4, offset = 0x4, fixed_abs, tag = 'smem constant byte address 0x4 - core index']
  #allocation1 [shape = 'u32[144,128]{1,0:T(1,128)}', space=vmem, size = 0x12000, scoped, tag = 'internal scratch']
  #allocation2 [shape = 'f32[1,32,128]{2,1,0:T(8,128)}', space=vmem, size = 0x4000, scoped, tag = 'scratch operand']
  %s0 = inlined_call_operand.vmem [shape: f32[2,16,4], index: 0, kind: input, shape index: {}]
  %s1 = inlined_call_operand.vmem [shape: f32[4,128], index: 1, kind: input, shape index: {}]
  %s2 = inlined_call_operand.vmem [shape: f32[1,128], index: 2, kind: input, shape index: {}]
  %s3 = inlined_call_operand.hbm [shape: bf16[3,128,128], index: 3, kind: input, shape index: {}]
  %s4 = inlined_call_operand.vmem [shape: f32[1,128], index: 4, kind: input, shape index: {}]
  %s5 = inlined_call_operand.hbm [shape: bf16[3,128,128], index: 5, kind: input, shape index: {}]
  %s6 = inlined_call_operand.vmem [shape: f32[1,128], index: 6, kind: input, shape index: {}]
  %s7 = inlined_call_operand.hbm [shape: bf16[3,128,128], index: 7, kind: input, shape index: {}]
  %s8 = inlined_call_operand.vmem [shape: f32[1,128], index: 8, kind: input, shape index: {}]
  %s9 = inlined_call_operand.hbm [shape: bf16[3,128,128], index: 9, kind: input, shape index: {}]
  %s10 = inlined_call_operand.vmem [shape: f32[1,128], index: 10, kind: input, shape index: {}]
  %s11 = inlined_call_operand.hbm [shape: bf16[3,128,128], index: 11, kind: input, shape index: {}]
  %s12 = inlined_call_operand.vmem [shape: f32[1,128], index: 12, kind: input, shape index: {}]
  %s13 = inlined_call_operand.hbm [shape: bf16[3,128,128], index: 13, kind: input, shape index: {}]
  %s14 = inlined_call_operand.vmem [shape: f32[1,128], index: 14, kind: input, shape index: {}]
  %s15 = inlined_call_operand.vmem [shape: bf16[128,128], index: 15, kind: input, shape index: {}]
  %s16 = inlined_call_operand.vmem [shape: f32[1,128], index: 16, kind: input, shape index: {}]
  %s17 = inlined_call_operand.hbm [shape: f32[2,1,128], index: 17, kind: output, shape index: {}]
  %s18 = sld [smem:[#allocation0]]
  $region125: #{tpu_custom_call.1} parent=0
    _
  %s20 = ssub.s32 1, %s18
  %s21 = scalar_select 0, %s20, %s18
  $region1: #{tpu_custom_call.1} parent=0
    #allocation3 [shape = 'u8[98304]{0}', space=vmem, size = 0x18000, scoped, tag = 'input window, operand 3, single buffered']
    #allocation4 [shape = 's32[2]{0}', space=sflag, size = 0x8, scoped, tag = 'scoped memory for tpu_custom_call.1']
    #allocation5 [shape = 's32[2]{0}', space=sflag, size = 0x8, scoped, tag = 'scoped memory for tpu_custom_call.1']
    #allocation6 [shape = 'u8[98304]{0}', space=vmem, size = 0x18000, scoped, tag = 'input window, operand 5, single buffered']
    #allocation7 [shape = 's32[1]{0}', space=sflag, size = 0x4, scoped, tag = 'scoped memory for tpu_custom_call.1']
    #allocation8 [shape = 'u8[98304]{0}', space=vmem, size = 0x18000, scoped, tag = 'input window, operand 7, single buffered']
    #allocation9 [shape = 'u8[98304]{0}', space=vmem, size = 0x18000, scoped, tag = 'input window, operand 9, single buffered']
    #allocation10 [shape = 's32[1]{0}', space=sflag, size = 0x4, scoped, tag = 'scoped memory for tpu_custom_call.1']
    #allocation11 [shape = 'u8[98304]{0}', space=vmem, size = 0x18000, scoped, tag = 'input window, operand 11, single buffered']
    #allocation12 [shape = 'u8[98304]{0}', space=vmem, size = 0x18000, scoped, tag = 'input window, operand 13, single buffered']
    #allocation13 [shape = 's32[1]{0}', space=sflag, size = 0x4, scoped, tag = 'scoped memory for tpu_custom_call.1']
    #allocation14 [shape = 'u8[1024]{0}', space=vmem, size = 0x400, scoped, tag = 'output window, operand 0']
    %22 = vsyncpa [#allocation4], 0
    %23 = vsyncpa [#allocation7], 0
    %24 = vsyncpa [#allocation10], 0
    %25 = vsyncpa [#allocation13], 0
    %26 = vsyncpa [#allocation5], 0
    %s27 = scalar_lea.sflag [#allocation5], 1
    %28 = vsyncpa %s27, 0
    loop: start=0, step=1, limit=4
    $region2: #{tpu_custom_call.1} parent=1 // loop_pre_header
      _
    $region3: #{tpu_custom_call.1} parent=1 // loop_header
      %s30 = sphi 0, %s34
      %p31 = scmp.ge.s32.totalorder %s30, 4
      %s40 = sphi 0, %s42
      %s43 = sphi 0, %s40
      %s44 = sphi 0, %s43
      %s60 = sphi 0, %s44
      %s64 = sphi 0, %s64
      %s66 = sphi 0, %s64
      %s67 = sphi 0, %s66
      %s81 = sphi 0, %s67
      %s85 = sphi 0, %s85
      %s87 = sphi 0, %s85
      %s88 = sphi 0, %s87
      %s102 = sphi 0, %s88
      %s106 = sphi 0, %s106
      %s108 = sphi 0, %s106
      %s109 = sphi 0, %s108
      %s123 = sphi 0, %s109
      %s127 = sphi 0, %s127
      %s129 = sphi 0, %s127
      %s130 = sphi 0, %s129
      %s144 = sphi 0, %s130
      %s148 = sphi 0, %s148
      %s150 = sphi 0, %s148
      %s151 = sphi 0, %s150
      %s165 = sphi 0, %s151
      %s169 = sphi 0, %s169
      %s171 = sphi 0, %s169
      %s172 = sphi 0, %s171
      %s186 = sphi 0, %s172
      %s190 = sphi 0, %s190
      %s192 = sphi 0, %s190
      %s193 = sphi 0, %s192
      %s207 = sphi 0, %s193
      %s211 = sphi 0, %s211
      %s213 = sphi 0, %s211
      %s214 = sphi 0, %s213
      %s228 = sphi 0, %s214
      %s232 = sphi 0, %s232
      %s234 = sphi 0, %s232
      %s235 = sphi 0, %s234
      %s249 = sphi 0, %s235
      %s253 = sphi 0, %s253
      %s255 = sphi 0, %s253
      %s256 = sphi 0, %s255
      %s270 = sphi 0, %s256
      %s274 = sphi 0, %s274
      %s276 = sphi 0, %s274
      %s277 = sphi 0, %s276
      %s291 = sphi 0, %s277
      %s295 = sphi 0, %s295
      %s297 = sphi 0, %s295
      %s298 = sphi 0, %s297
      %s312 = sphi 0, %s298
      %s316 = sphi 0, %s316
      %s318 = sphi 0, %s316
      %s319 = sphi 0, %s318
      %s333 = sphi 0, %s319
      %s337 = sphi 0, %s337
      %s339 = sphi 0, %s337
      %s340 = sphi 0, %s339
      %s354 = sphi 0, %s340
      %s358 = sphi 0, %s358
      %s360 = sphi 0, %s358
      %s361 = sphi 0, %s360
      %s375 = sphi 0, %s361
      %s379 = sphi 0, %s379
      %s381 = sphi 0, %s379
      %s382 = sphi 0, %s381
      %s396 = sphi 0, %s382
      %s402 = sphi 0, %s404
      %s405 = sphi 0, %s402
      %s406 = sphi 0, %s405
      %s422 = sphi 0, %s406
    $region4: #{tpu_custom_call.1} parent=1 // loop_header_branch
      %33 = sbr.rel (%p31) target = $region8
    $region5: #{tpu_custom_call.1} parent=1 // loop_body
      %s35 = ssub.s32 %s30, 1
      %s36 = ssub.s32 %s30, 2
      %s37 = sadd.s32 %s30, 1
      %s38 = ssub.s32 %s30, %s37
      %p39 = scmp.eq.s32.totalorder %s38, 0
      %s41 = sadd.s32 %s40, 1
      %s42 = scalar_select %p39, %s40, %s41
      %p45 = pneg %p39
      %p46 = scmp.eq.s32.totalorder %s30, 1
      %p47 = por %p45, %p46
      %p48 = scmp.ne.s32.totalorder %s40, %s43
      %p49 = scmp.eq.s32.totalorder %s30, 0
      %p50 = por %p48, %p49
      %p51 = scmp.ne.s32.totalorder %s40, %s43
      %p52 = scmp.eq.s32.totalorder %s35, 1
      %p53 = por %p51, %p52
      %p54 = scmp.ne.s32.totalorder %s43, %s44
      %p55 = scmp.eq.s32.totalorder %s35, 0
      %p56 = por %p54, %p55
      %p57 = scmp.ne.s32.totalorder %s43, %s44
      %p58 = scmp.eq.s32.totalorder %s36, 1
      %p59 = por %p57, %p58
      %p61 = scmp.ne.s32.totalorder %s44, %s60
      %p62 = scmp.eq.s32.totalorder %s36, 0
      %p63 = por %p61, %p62
      %s65 = sadd.s32 %s64, 1
      %p68 = scmp.eq.s32.totalorder %s30, 1
      %p69 = scmp.ne.s32.totalorder %s64, %s66
      %p70 = scmp.eq.s32.totalorder %s30, 0
      %p71 = por %p69, %p70
      %p72 = scmp.ne.s32.totalorder %s64, %s66
      %p73 = scmp.eq.s32.totalorder %s35, 1
      %p74 = por %p72, %p73
      %p75 = scmp.ne.s32.totalorder %s66, %s67
      %p76 = scmp.eq.s32.totalorder %s35, 0
      %p77 = por %p75, %p76
      %p78 = scmp.ne.s32.totalorder %s66, %s67
      %p79 = scmp.eq.s32.totalorder %s36, 1
      %p80 = por %p78, %p79
      %p82 = scmp.ne.s32.totalorder %s67, %s81
      %p83 = scmp.eq.s32.totalorder %s36, 0
      %p84 = por %p82, %p83
      %s86 = sadd.s32 %s85, 1
      %p89 = scmp.eq.s32.totalorder %s30, 1
      %p90 = scmp.ne.s32.totalorder %s85, %s87
      %p91 = scmp.eq.s32.totalorder %s30, 0
      %p92 = por %p90, %p91
      %p93 = scmp.ne.s32.totalorder %s85, %s87
      %p94 = scmp.eq.s32.totalorder %s35, 1
      %p95 = por %p93, %p94
      %p96 = scmp.ne.s32.totalorder %s87, %s88
      %p97 = scmp.eq.s32.totalorder %s35, 0
      %p98 = por %p96, %p97
      %p99 = scmp.ne.s32.totalorder %s87, %s88
      %p100 = scmp.eq.s32.totalorder %s36, 1
      %p101 = por %p99, %p100
      %p103 = scmp.ne.s32.totalorder %s88, %s102
      %p104 = scmp.eq.s32.totalorder %s36, 0
      %p105 = por %p103, %p104
      %s107 = sadd.s32 %s106, 1
      %p110 = scmp.eq.s32.totalorder %s30, 1
      %p111 = scmp.ne.s32.totalorder %s106, %s108
      %p112 = scmp.eq.s32.totalorder %s30, 0
      %p113 = por %p111, %p112
      %p114 = scmp.ne.s32.totalorder %s106, %s108
      %p115 = scmp.eq.s32.totalorder %s35, 1
      %p116 = por %p114, %p115
      %p117 = scmp.ne.s32.totalorder %s108, %s109
      %p118 = scmp.eq.s32.totalorder %s35, 0
      %p119 = por %p117, %p118
      %p120 = scmp.ne.s32.totalorder %s108, %s109
      %p121 = scmp.eq.s32.totalorder %s36, 1
      %p122 = por %p120, %p121
      %p124 = scmp.ne.s32.totalorder %s109, %s123
      %p125 = scmp.eq.s32.totalorder %s36, 0
      %p126 = por %p124, %p125
      %s128 = sadd.s32 %s127, 1
      %p131 = scmp.eq.s32.totalorder %s30, 1
      %p132 = scmp.ne.s32.totalorder %s127, %s129
      %p133 = scmp.eq.s32.totalorder %s30, 0
      %p134 = por %p132, %p133
      %p135 = scmp.ne.s32.totalorder %s127, %s129
      %p136 = scmp.eq.s32.totalorder %s35, 1
      %p137 = por %p135, %p136
      %p138 = scmp.ne.s32.totalorder %s129, %s130
      %p139 = scmp.eq.s32.totalorder %s35, 0
      %p140 = por %p138, %p139
      %p141 = scmp.ne.s32.totalorder %s129, %s130
      %p142 = scmp.eq.s32.totalorder %s36, 1
      %p143 = por %p141, %p142
      %p145 = scmp.ne.s32.totalorder %s130, %s144
      %p146 = scmp.eq.s32.totalorder %s36, 0
      %p147 = por %p145, %p146
      %s149 = sadd.s32 %s148, 1
      %p152 = scmp.eq.s32.totalorder %s30, 1
      %p153 = scmp.ne.s32.totalorder %s148, %s150
      %p154 = scmp.eq.s32.totalorder %s30, 0
      %p155 = por %p153, %p154
      %p156 = scmp.ne.s32.totalorder %s148, %s150
      %p157 = scmp.eq.s32.totalorder %s35, 1
      %p158 = por %p156, %p157
      %p159 = scmp.ne.s32.totalorder %s150, %s151
      %p160 = scmp.eq.s32.totalorder %s35, 0
      %p161 = por %p159, %p160
      %p162 = scmp.ne.s32.totalorder %s150, %s151
      %p163 = scmp.eq.s32.totalorder %s36, 1
      %p164 = por %p162, %p163
      %p166 = scmp.ne.s32.totalorder %s151, %s165
      %p167 = scmp.eq.s32.totalorder %s36, 0
      %p168 = por %p166, %p167
      %s170 = sadd.s32 %s169, 1
      %p173 = scmp.eq.s32.totalorder %s30, 1
      %p174 = scmp.ne.s32.totalorder %s169, %s171
      %p175 = scmp.eq.s32.totalorder %s30, 0
      %p176 = por %p174, %p175
      %p177 = scmp.ne.s32.totalorder %s169, %s171
      %p178 = scmp.eq.s32.totalorder %s35, 1
      %p179 = por %p177, %p178
      %p180 = scmp.ne.s32.totalorder %s171, %s172
      %p181 = scmp.eq.s32.totalorder %s35, 0
      %p182 = por %p180, %p181
      %p183 = scmp.ne.s32.totalorder %s171, %s172
      %p184 = scmp.eq.s32.totalorder %s36, 1
      %p185 = por %p183, %p184
      %p187 = scmp.ne.s32.totalorder %s172, %s186
      %p188 = scmp.eq.s32.totalorder %s36, 0
      %p189 = por %p187, %p188
      %s191 = sadd.s32 %s190, 1
      %p194 = scmp.eq.s32.totalorder %s30, 1
      %p195 = scmp.ne.s32.totalorder %s190, %s192
      %p196 = scmp.eq.s32.totalorder %s30, 0
      %p197 = por %p195, %p196
      %p198 = scmp.ne.s32.totalorder %s190, %s192
      %p199 = scmp.eq.s32.totalorder %s35, 1
      %p200 = por %p198, %p199
      %p201 = scmp.ne.s32.totalorder %s192, %s193
      %p202 = scmp.eq.s32.totalorder %s35, 0
      %p203 = por %p201, %p202
      %p204 = scmp.ne.s32.totalorder %s192, %s193
      %p205 = scmp.eq.s32.totalorder %s36, 1
      %p206 = por %p204, %p205
      %p208 = scmp.ne.s32.totalorder %s193, %s207
      %p209 = scmp.eq.s32.totalorder %s36, 0
      %p210 = por %p208, %p209
      %s212 = sadd.s32 %s211, 1
      %p215 = scmp.eq.s32.totalorder %s30, 1
      %p216 = scmp.ne.s32.totalorder %s211, %s213
      %p217 = scmp.eq.s32.totalorder %s30, 0
      %p218 = por %p216, %p217
      %p219 = scmp.ne.s32.totalorder %s211, %s213
      %p220 = scmp.eq.s32.totalorder %s35, 1
      %p221 = por %p219, %p220
      %p222 = scmp.ne.s32.totalorder %s213, %s214
      %p223 = scmp.eq.s32.totalorder %s35, 0
      %p224 = por %p222, %p223
      %p225 = scmp.ne.s32.totalorder %s213, %s214
      %p226 = scmp.eq.s32.totalorder %s36, 1
      %p227 = por %p225, %p226
      %p229 = scmp.ne.s32.totalorder %s214, %s228
      %p230 = scmp.eq.s32.totalorder %s36, 0
      %p231 = por %p229, %p230
      %s233 = sadd.s32 %s232, 1
      %p236 = scmp.eq.s32.totalorder %s30, 1
      %p237 = scmp.ne.s32.totalorder %s232, %s234
      %p238 = scmp.eq.s32.totalorder %s30, 0
      %p239 = por %p237, %p238
      %p240 = scmp.ne.s32.totalorder %s232, %s234
      %p241 = scmp.eq.s32.totalorder %s35, 1
      %p242 = por %p240, %p241
      %p243 = scmp.ne.s32.totalorder %s234, %s235
      %p244 = scmp.eq.s32.totalorder %s35, 0
      %p245 = por %p243, %p244
      %p246 = scmp.ne.s32.totalorder %s234, %s235
      %p247 = scmp.eq.s32.totalorder %s36, 1
      %p248 = por %p246, %p247
      %p250 = scmp.ne.s32.totalorder %s235, %s249
      %p251 = scmp.eq.s32.totalorder %s36, 0
      %p252 = por %p250, %p251
      %s254 = sadd.s32 %s253, 1
      %p257 = scmp.eq.s32.totalorder %s30, 1
      %p258 = scmp.ne.s32.totalorder %s253, %s255
      %p259 = scmp.eq.s32.totalorder %s30, 0
      %p260 = por %p258, %p259
      %p261 = scmp.ne.s32.totalorder %s253, %s255
      %p262 = scmp.eq.s32.totalorder %s35, 1
      %p263 = por %p261, %p262
      %p264 = scmp.ne.s32.totalorder %s255, %s256
      %p265 = scmp.eq.s32.totalorder %s35, 0
      %p266 = por %p264, %p265
      %p267 = scmp.ne.s32.totalorder %s255, %s256
      %p268 = scmp.eq.s32.totalorder %s36, 1
      %p269 = por %p267, %p268
      %p271 = scmp.ne.s32.totalorder %s256, %s270
      %p272 = scmp.eq.s32.totalorder %s36, 0
      %p273 = por %p271, %p272
      %s275 = sadd.s32 %s274, 1
      %p278 = scmp.eq.s32.totalorder %s30, 1
      %p279 = scmp.ne.s32.totalorder %s274, %s276
      %p280 = scmp.eq.s32.totalorder %s30, 0
      %p281 = por %p279, %p280
      %p282 = scmp.ne.s32.totalorder %s274, %s276
      %p283 = scmp.eq.s32.totalorder %s35, 1
      %p284 = por %p282, %p283
      %p285 = scmp.ne.s32.totalorder %s276, %s277
      %p286 = scmp.eq.s32.totalorder %s35, 0
      %p287 = por %p285, %p286
      %p288 = scmp.ne.s32.totalorder %s276, %s277
      %p289 = scmp.eq.s32.totalorder %s36, 1
      %p290 = por %p288, %p289
      %p292 = scmp.ne.s32.totalorder %s277, %s291
      %p293 = scmp.eq.s32.totalorder %s36, 0
      %p294 = por %p292, %p293
      %s296 = sadd.s32 %s295, 1
      %p299 = scmp.eq.s32.totalorder %s30, 1
      %p300 = scmp.ne.s32.totalorder %s295, %s297
      %p301 = scmp.eq.s32.totalorder %s30, 0
      %p302 = por %p300, %p301
      %p303 = scmp.ne.s32.totalorder %s295, %s297
      %p304 = scmp.eq.s32.totalorder %s35, 1
      %p305 = por %p303, %p304
      %p306 = scmp.ne.s32.totalorder %s297, %s298
      %p307 = scmp.eq.s32.totalorder %s35, 0
      %p308 = por %p306, %p307
      %p309 = scmp.ne.s32.totalorder %s297, %s298
      %p310 = scmp.eq.s32.totalorder %s36, 1
      %p311 = por %p309, %p310
      %p313 = scmp.ne.s32.totalorder %s298, %s312
      %p314 = scmp.eq.s32.totalorder %s36, 0
      %p315 = por %p313, %p314
      %s317 = sadd.s32 %s316, 1
      %p320 = scmp.eq.s32.totalorder %s30, 1
      %p321 = scmp.ne.s32.totalorder %s316, %s318
      %p322 = scmp.eq.s32.totalorder %s30, 0
      %p323 = por %p321, %p322
      %p324 = scmp.ne.s32.totalorder %s316, %s318
      %p325 = scmp.eq.s32.totalorder %s35, 1
      %p326 = por %p324, %p325
      %p327 = scmp.ne.s32.totalorder %s318, %s319
      %p328 = scmp.eq.s32.totalorder %s35, 0
      %p329 = por %p327, %p328
      %p330 = scmp.ne.s32.totalorder %s318, %s319
      %p331 = scmp.eq.s32.totalorder %s36, 1
      %p332 = por %p330, %p331
      %p334 = scmp.ne.s32.totalorder %s319, %s333
      %p335 = scmp.eq.s32.totalorder %s36, 0
      %p336 = por %p334, %p335
      %s338 = sadd.s32 %s337, 1
      %p341 = scmp.eq.s32.totalorder %s30, 1
      %p342 = scmp.ne.s32.totalorder %s337, %s339
      %p343 = scmp.eq.s32.totalorder %s30, 0
      %p344 = por %p342, %p343
      %p345 = scmp.ne.s32.totalorder %s337, %s339
      %p346 = scmp.eq.s32.totalorder %s35, 1
      %p347 = por %p345, %p346
      %p348 = scmp.ne.s32.totalorder %s339, %s340
      %p349 = scmp.eq.s32.totalorder %s35, 0
      %p350 = por %p348, %p349
      %p351 = scmp.ne.s32.totalorder %s339, %s340
      %p352 = scmp.eq.s32.totalorder %s36, 1
      %p353 = por %p351, %p352
      %p355 = scmp.ne.s32.totalorder %s340, %s354
      %p356 = scmp.eq.s32.totalorder %s36, 0
      %p357 = por %p355, %p356
      %s359 = sadd.s32 %s358, 1
      %p362 = scmp.eq.s32.totalorder %s30, 1
      %p363 = scmp.ne.s32.totalorder %s358, %s360
      %p364 = scmp.eq.s32.totalorder %s30, 0
      %p365 = por %p363, %p364
      %p366 = scmp.ne.s32.totalorder %s358, %s360
      %p367 = scmp.eq.s32.totalorder %s35, 1
      %p368 = por %p366, %p367
      %p369 = scmp.ne.s32.totalorder %s360, %s361
      %p370 = scmp.eq.s32.totalorder %s35, 0
      %p371 = por %p369, %p370
      %p372 = scmp.ne.s32.totalorder %s360, %s361
      %p373 = scmp.eq.s32.totalorder %s36, 1
      %p374 = por %p372, %p373
      %p376 = scmp.ne.s32.totalorder %s361, %s375
      %p377 = scmp.eq.s32.totalorder %s36, 0
      %p378 = por %p376, %p377
      %s380 = sadd.s32 %s379, 1
      %p383 = scmp.eq.s32.totalorder %s30, 1
      %p384 = scmp.ne.s32.totalorder %s379, %s381
      %p385 = scmp.eq.s32.totalorder %s30, 0
      %p386 = por %p384, %p385
      %p387 = scmp.ne.s32.totalorder %s379, %s381
      %p388 = scmp.eq.s32.totalorder %s35, 1
      %p389 = por %p387, %p388
      %p390 = scmp.ne.s32.totalorder %s381, %s382
      %p391 = scmp.eq.s32.totalorder %s35, 0
      %p392 = por %p390, %p391
      %p393 = scmp.ne.s32.totalorder %s381, %s382
      %p394 = scmp.eq.s32.totalorder %s36, 1
      %p395 = por %p393, %p394
      %p397 = scmp.ne.s32.totalorder %s382, %s396
      %p398 = scmp.eq.s32.totalorder %s36, 0
      %p399 = por %p397, %p398
      %s400 = ssub.s32 %s30, %s37
      %p401 = scmp.eq.s32.totalorder %s400, 0
      %s403 = sadd.s32 %s402, 1
      %s404 = scalar_select %p401, %s402, %s403
      %p407 = pneg %p401
      %p408 = scmp.eq.s32.totalorder %s30, 1
      %p409 = por %p407, %p408
      %p410 = scmp.ne.s32.totalorder %s402, %s405
      %p411 = scmp.eq.s32.totalorder %s30, 0
      %p412 = por %p410, %p411
      %p413 = scmp.ne.s32.totalorder %s402, %s405
      %p414 = scmp.eq.s32.totalorder %s35, 1
      %p415 = por %p413, %p414
      %p416 = scmp.ne.s32.totalorder %s405, %s406
      %p417 = scmp.eq.s32.totalorder %s35, 0
      %p418 = por %p416, %p417
      %p419 = scmp.ne.s32.totalorder %s405, %s406
      %p420 = scmp.eq.s32.totalorder %s36, 1
      %p421 = por %p419, %p420
      %p423 = scmp.ne.s32.totalorder %s406, %s422
      %p424 = scmp.eq.s32.totalorder %s36, 0
      %p425 = por %p423, %p424
      %p426 = scmp.le.s32.totalorder 1, %s30
      %p427 = scmp.lt.s32.totalorder %s30, 3
      %p428 = pnand %p426, %p427
      %p429 = pneg %p428
      // Predicated region
      $region9: #{tpu_custom_call.1} parent=5 // pred_check
        _
      $region10: #{tpu_custom_call.1} parent=5 // pred_check_branch
        %431 = sbr.rel (%p428) target = $region12
      $region11: #{tpu_custom_call.1} parent=5 // pred_region
        %s432 = ssub.s32 %s30, 1
        // Predicated region
        $region13: #{tpu_custom_call.1} parent=11 // pred_check
          %p433 = pneg %p77
        $region14: #{tpu_custom_call.1} parent=11 // pred_check_branch
          %435 = sbr.rel (%p433) target = $region16
        $region15: #{tpu_custom_call.1} parent=11 // pred_region
          _
        $region16: #{tpu_custom_call.1} parent=11 // pred_fallthru
          _
        // Predicated region
        $region17: #{tpu_custom_call.1} parent=11 // pred_check
          %p436 = pneg %p98
        $region18: #{tpu_custom_call.1} parent=11 // pred_check_branch
          %438 = sbr.rel (%p436) target = $region20
        $region19: #{tpu_custom_call.1} parent=11 // pred_region
          _
        $region20: #{tpu_custom_call.1} parent=11 // pred_fallthru
          _
        // Predicated region
        $region21: #{tpu_custom_call.1} parent=11 // pred_check
          %p439 = pneg %p119
        $region22: #{tpu_custom_call.1} parent=11 // pred_check_branch
          %441 = sbr.rel (%p439) target = $region24
        $region23: #{tpu_custom_call.1} parent=11 // pred_region
          %s443 = ssub.s32 3072, 3072
          %444 = vsyncadd [#allocation4], %s443
          %s445 = sshll.u32 [#allocation3], 4
          %s446 = int_to_ptr.vmem [resolvable:$true] %s445
          %451 = dma.hbm_to_vmem [thread:$0]  %s3, 3072, %s446, [#allocation4], 64, 64, 4
        $region24: #{tpu_custom_call.1} parent=11 // pred_fallthru
          _
        // Predicated region
        $region25: #{tpu_custom_call.1} parent=11 // pred_check
          %p452 = pneg %p140
        $region26: #{tpu_custom_call.1} parent=11 // pred_check_branch
          %454 = sbr.rel (%p452) target = $region28
        $region27: #{tpu_custom_call.1} parent=11 // pred_region
          _
        $region28: #{tpu_custom_call.1} parent=11 // pred_fallthru
          _
        // Predicated region
        $region29: #{tpu_custom_call.1} parent=11 // pred_check
          %p455 = pneg %p161
        $region30: #{tpu_custom_call.1} parent=11 // pred_check_branch
          %457 = sbr.rel (%p455) target = $region32
        $region31: #{tpu_custom_call.1} parent=11 // pred_region
          %s459 = ssub.s32 3072, 3072
          %460 = vsyncadd [#allocation7], %s459
          %s461 = sshll.u32 [#allocation6], 4
          %s462 = int_to_ptr.vmem [resolvable:$true] %s461
          %467 = dma.hbm_to_vmem [thread:$0]  %s5, 3072, %s462, [#allocation7], 64, 64, 4
        $region32: #{tpu_custom_call.1} parent=11 // pred_fallthru
          _
        // Predicated region
        $region33: #{tpu_custom_call.1} parent=11 // pred_check
          %p468 = pneg %p182
        $region34: #{tpu_custom_call.1} parent=11 // pred_check_branch
          %470 = sbr.rel (%p468) target = $region36
        $region35: #{tpu_custom_call.1} parent=11 // pred_region
          _
        $region36: #{tpu_custom_call.1} parent=11 // pred_fallthru
          _
        // Predicated region
        $region37: #{tpu_custom_call.1} parent=11 // pred_check
          %p471 = pneg %p203
        $region38: #{tpu_custom_call.1} parent=11 // pred_check_branch
          %473 = sbr.rel (%p471) target = $region40
        $region39: #{tpu_custom_call.1} parent=11 // pred_region
          %s475 = ssub.s32 3072, 3072
          %476 = vsyncadd [#allocation7], %s475
          %s477 = sshll.u32 [#allocation8], 4
          %s478 = int_to_ptr.vmem [resolvable:$true] %s477
          %483 = dma.hbm_to_vmem [thread:$0]  %s7, 3072, %s478, [#allocation7], 64, 64, 4
        $region40: #{tpu_custom_call.1} parent=11 // pred_fallthru
          _
        // Predicated region
        $region41: #{tpu_custom_call.1} parent=11 // pred_check
          %p484 = pneg %p224
        $region42: #{tpu_custom_call.1} parent=11 // pred_check_branch
          %486 = sbr.rel (%p484) target = $region44
        $region43: #{tpu_custom_call.1} parent=11 // pred_region
          _
        $region44: #{tpu_custom_call.1} parent=11 // pred_fallthru
          _
        // Predicated region
        $region45: #{tpu_custom_call.1} parent=11 // pred_check
          %p487 = pneg %p245
        $region46: #{tpu_custom_call.1} parent=11 // pred_check_branch
          %489 = sbr.rel (%p487) target = $region48
        $region47: #{tpu_custom_call.1} parent=11 // pred_region
          %s491 = ssub.s32 3072, 3072
          %492 = vsyncadd [#allocation10], %s491
          %s493 = sshll.u32 [#allocation9], 4
          %s494 = int_to_ptr.vmem [resolvable:$true] %s493
          %499 = dma.hbm_to_vmem [thread:$0]  %s9, 3072, %s494, [#allocation10], 64, 64, 4
        $region48: #{tpu_custom_call.1} parent=11 // pred_fallthru
          _
        // Predicated region
        $region49: #{tpu_custom_call.1} parent=11 // pred_check
          %p500 = pneg %p266
        $region50: #{tpu_custom_call.1} parent=11 // pred_check_branch
          %502 = sbr.rel (%p500) target = $region52
        $region51: #{tpu_custom_call.1} parent=11 // pred_region
          _
        $region52: #{tpu_custom_call.1} parent=11 // pred_fallthru
          _
        // Predicated region
        $region53: #{tpu_custom_call.1} parent=11 // pred_check
          %p503 = pneg %p287
        $region54: #{tpu_custom_call.1} parent=11 // pred_check_branch
          %505 = sbr.rel (%p503) target = $region56
        $region55: #{tpu_custom_call.1} parent=11 // pred_region
          %s507 = ssub.s32 3072, 3072
          %508 = vsyncadd [#allocation10], %s507
          %s509 = sshll.u32 [#allocation11], 4
          %s510 = int_to_ptr.vmem [resolvable:$true] %s509
          %515 = dma.hbm_to_vmem [thread:$0]  %s11, 3072, %s510, [#allocation10], 64, 64, 4
        $region56: #{tpu_custom_call.1} parent=11 // pred_fallthru
          _
        // Predicated region
        $region57: #{tpu_custom_call.1} parent=11 // pred_check
          %p516 = pneg %p308
        $region58: #{tpu_custom_call.1} parent=11 // pred_check_branch
          %518 = sbr.rel (%p516) target = $region60
        $region59: #{tpu_custom_call.1} parent=11 // pred_region
          _
        $region60: #{tpu_custom_call.1} parent=11 // pred_fallthru
          _
        // Predicated region
        $region61: #{tpu_custom_call.1} parent=11 // pred_check
          %p519 = pneg %p329
        $region62: #{tpu_custom_call.1} parent=11 // pred_check_branch
          %521 = sbr.rel (%p519) target = $region64
        $region63: #{tpu_custom_call.1} parent=11 // pred_region
          %s523 = ssub.s32 3072, 3072
          %524 = vsyncadd [#allocation13], %s523
          %s525 = sshll.u32 [#allocation12], 4
          %s526 = int_to_ptr.vmem [resolvable:$true] %s525
          %531 = dma.hbm_to_vmem [thread:$0]  %s13, 3072, %s526, [#allocation13], 64, 64, 4
        $region64: #{tpu_custom_call.1} parent=11 // pred_fallthru
          _
        // Predicated region
        $region65: #{tpu_custom_call.1} parent=11 // pred_check
          %p532 = pneg %p350
        $region66: #{tpu_custom_call.1} parent=11 // pred_check_branch
          %534 = sbr.rel (%p532) target = $region68
        $region67: #{tpu_custom_call.1} parent=11 // pred_region
          _
        $region68: #{tpu_custom_call.1} parent=11 // pred_fallthru
          _
        // Predicated region
        $region69: #{tpu_custom_call.1} parent=11 // pred_check
          %p535 = pneg %p371
        $region70: #{tpu_custom_call.1} parent=11 // pred_check_branch
          %537 = sbr.rel (%p535) target = $region72
        $region71: #{tpu_custom_call.1} parent=11 // pred_region
          _
        $region72: #{tpu_custom_call.1} parent=11 // pred_fallthru
          _
        // Predicated region
        $region73: #{tpu_custom_call.1} parent=11 // pred_check
          %p538 = pneg %p392
        $region74: #{tpu_custom_call.1} parent=11 // pred_check_branch
          %540 = sbr.rel (%p538) target = $region76
        $region75: #{tpu_custom_call.1} parent=11 // pred_region
          _
        $region76: #{tpu_custom_call.1} parent=11 // pred_fallthru
          _
      $region12: #{tpu_custom_call.1} parent=5 // pred_fallthru
        _
      %p541 = scmp.lt.s32.totalorder %s30, 2
      // Predicated region
      $region77: #{tpu_custom_call.1} parent=5 // pred_check
        %p542 = pneg %p541
      $region78: #{tpu_custom_call.1} parent=5 // pred_check_branch
        %544 = sbr.rel (%p542) target = $region80
      $region79: #{tpu_custom_call.1} parent=5 // pred_region
        // Predicated region
        $region81: #{tpu_custom_call.1} parent=79 // pred_check
          %p545 = pneg %p50
        $region82: #{tpu_custom_call.1} parent=79 // pred_check_branch
          %547 = sbr.rel (%p545) target = $region84
        $region83: #{tpu_custom_call.1} parent=79 // pred_region
          %p548 = scmp.lt.s32.totalorder %s30, 1
          %s549 = scalar_select %p548, %s30, 1
          %s550 = smul.addr %s549, 2
          %s551 = smul.addr %s550, 8
          %s552 = scalar_lea.vmem %s0, %s551
        $region84: #{tpu_custom_call.1} parent=79 // pred_fallthru
          _
      $region80: #{tpu_custom_call.1} parent=5 // pred_fallthru
        _
      %p553 = scmp.le.s32.totalorder 1, %s30
      %p554 = scmp.lt.s32.totalorder %s30, 3
      %p555 = pnand %p553, %p554
      %p556 = pneg %p555
      // Predicated region
      $region85: #{tpu_custom_call.1} parent=5 // pred_check
        _
      $region86: #{tpu_custom_call.1} parent=5 // pred_check_branch
        %558 = sbr.rel (%p555) target = $region88
      $region87: #{tpu_custom_call.1} parent=5 // pred_region
        %s559 = ssub.s32 %s30, 1
        // Predicated region
        $region89: #{tpu_custom_call.1} parent=87 // pred_check
          %p560 = pneg %p119
        $region90: #{tpu_custom_call.1} parent=87 // pred_check_branch
          %562 = sbr.rel (%p560) target = $region92
        $region91: #{tpu_custom_call.1} parent=87 // pred_region
          %563 = dma.done [#allocation4], 3072
        $region92: #{tpu_custom_call.1} parent=87 // pred_fallthru
          _
        // Predicated region
        $region93: #{tpu_custom_call.1} parent=87 // pred_check
          %p564 = pneg %p161
        $region94: #{tpu_custom_call.1} parent=87 // pred_check_branch
          %566 = sbr.rel (%p564) target = $region96
        $region95: #{tpu_custom_call.1} parent=87 // pred_region
          %567 = dma.done [#allocation7], 3072
        $region96: #{tpu_custom_call.1} parent=87 // pred_fallthru
          _
        // Predicated region
        $region97: #{tpu_custom_call.1} parent=87 // pred_check
          %p568 = pneg %p203
        $region98: #{tpu_custom_call.1} parent=87 // pred_check_branch
          %570 = sbr.rel (%p568) target = $region100
        $region99: #{tpu_custom_call.1} parent=87 // pred_region
          %571 = dma.done [#allocation7], 3072
        $region100: #{tpu_custom_call.1} parent=87 // pred_fallthru
          _
        // Predicated region
        $region101: #{tpu_custom_call.1} parent=87 // pred_check
          %p572 = pneg %p245
        $region102: #{tpu_custom_call.1} parent=87 // pred_check_branch
          %574 = sbr.rel (%p572) target = $region104
        $region103: #{tpu_custom_call.1} parent=87 // pred_region
          %575 = dma.done [#allocation10], 3072
        $region104: #{tpu_custom_call.1} parent=87 // pred_fallthru
          _
        // Predicated region
        $region105: #{tpu_custom_call.1} parent=87 // pred_check
          %p576 = pneg %p287
        $region106: #{tpu_custom_call.1} parent=87 // pred_check_branch
          %578 = sbr.rel (%p576) target = $region108
        $region107: #{tpu_custom_call.1} parent=87 // pred_region
          %579 = dma.done [#allocation10], 3072
        $region108: #{tpu_custom_call.1} parent=87 // pred_fallthru
          _
        // Predicated region
        $region109: #{tpu_custom_call.1} parent=87 // pred_check
          %p580 = pneg %p329
        $region110: #{tpu_custom_call.1} parent=87 // pred_check_branch
          %582 = sbr.rel (%p580) target = $region112
        $region111: #{tpu_custom_call.1} parent=87 // pred_region
          %583 = dma.done [#allocation13], 3072
        $region112: #{tpu_custom_call.1} parent=87 // pred_fallthru
          _
        %p584 = scmp.lt.s32.totalorder %s35, 1
        %s585 = scalar_select %p584, %s35, 1
        %s586 = smul.addr %s585, 2
        %s587 = smul.addr %s586, 8
        %s588 = scalar_lea.vmem %s0, %s587
        %p589 = pneg %p56
        %p590 = pneg %p53
        %p591 = pneg %p77
        %p592 = pneg %p74
        %p593 = pneg %p98
        %p594 = pneg %p95
        %p595 = pneg %p119
        %p596 = pneg %p116
        %p597 = pneg %p140
        %p598 = pneg %p137
        %p599 = pneg %p161
        %p600 = pneg %p158
        %p601 = pneg %p182
        %p602 = pneg %p179
        %p603 = pneg %p203
        %p604 = pneg %p200
        %p605 = pneg %p224
        %p606 = pneg %p221
        %p607 = pneg %p245
        %p608 = pneg %p242
        %p609 = pneg %p266
        %p610 = pneg %p263
        %p611 = pneg %p287
        %p612 = pneg %p284
        %p613 = pneg %p308
        %p614 = pneg %p305
        %p615 = pneg %p329
        %p616 = pneg %p326
        %p617 = pneg %p350
        %p618 = pneg %p347
        %p619 = pneg %p371
        %p620 = pneg %p368
        %p621 = pneg %p392
        %p622 = pneg %p389
        %p623 = pneg %p418
        %p624 = pneg %p415
        %s625 = sand.u32 %s405, 1
        %s626 = scalar_lea.sflag [#allocation5], %s625
        %s627 = sand.u32 %s405, 1
        %s628 = scalar_lea.vmem [#allocation14], %s627
        %p629 = scmp.lt.s32.totalorder %s35, 1
        %s630 = scalar_select %p629, %s35, 1
        %s631 = smul.addr %s630, 2
        %s632 = smul.addr %s631, 8
        %s633 = scalar_lea.vmem %s0, %s632
        %639 = vst [vmem:[#allocation2] sm:$0xff] 0.0
        %640 = vst [vmem:[#allocation2 + $0x18] sm:$0xff] 0.0
        %v641 = vld [vmem:[%s633] sm:$0xff]
        %v642 = vld [vmem:[%s633 + $0x8] sm:$0xff]
        %vm643 = vcmp.ne.f32.partialorder %v641, %v641
        %vm644 = vcmp.ne.f32.partialorder %v642, %v642
        %v645 = vsel %vm643, 1.0, 0.0
        %v646 = vsel %vm644, 1.0, 0.0
        %vm647 = vcmask 31744
        %v648 = vsel %vm647, %v645, 0.0
        %649 = vadd.xlane.f32.xlu0 %v648
        %v650 = vpop.xlane.xlu0 %649
        %v651 = vsel %vm647, %v646, 0.0
        %652 = vadd.xlane.f32.xlu0 %v651
        %v653 = vpop.xlane.xlu0 %652
        %vm654 = vcmp.gt.f32.partialorder %v650, 0.0
        %vm655 = vcmp.gt.f32.partialorder %v653, 0.0
        %v656 = vsel %vm654, 1, 0
        %v657 = vsel %vm655, 1, 0
        %vm658 = vcmp.eq.s32.totalorder %v656, 1
        %vm659 = vcmp.eq.s32.totalorder %v657, 1
        %v660 = vsel %vm658, 0.0, %v641
        %v661 = vsel %vm659, 0.0, %v642
        %v662 = vld [vmem:[%s1] sm:$0xf]
        %664 = vset.pattern.permute.xlu0 0
        %665 = vperm.xlu0 %664, %v660
        %v666 = vpop.permute.xlu0 %665
        %669 = vset.pattern.permute.xlu0 0
        %670 = vperm.xlu0 %669, %v661
        %v671 = vpop.permute.xlu0 %670
        %v673 = vlaneseq
        %v674 = vshrl.u32 %v673, 7
        %v675 = vsub.s32 0, %v674
        %v676 = vrot.slane %v662, %v675
        %v677 = vmul.f32 %v666, %v676
        %v678 = vmul.f32 %v671, %v676
        %679 = vset.pattern.permute.xlu0 1
        %680 = vperm.xlu0 %679, %v660
        %v681 = vpop.permute.xlu0 %680
        %683 = vset.pattern.permute.xlu0 1
        %684 = vperm.xlu0 %683, %v661
        %v685 = vpop.permute.xlu0 %684
        %v687 = vlaneseq
        %v688 = vshrl.u32 %v687, 7
        %v689 = vsub.s32 1, %v688
        %v690 = vrot.slane %v662, %v689
        %v691 = vmul.f32 %v681, %v690
        %v692 = vmul.f32 %v685, %v690
        %v693 = vadd.f32 %v677, %v691
        %v694 = vadd.f32 %v678, %v692
        %695 = vset.pattern.permute.xlu0 2
        %696 = vperm.xlu0 %695, %v660
        %v697 = vpop.permute.xlu0 %696
        %699 = vset.pattern.permute.xlu0 2
        %700 = vperm.xlu0 %699, %v661
        %v701 = vpop.permute.xlu0 %700
        %v703 = vlaneseq
        %v704 = vshrl.u32 %v703, 7
        %v705 = vsub.s32 2, %v704
        %v706 = vrot.slane %v662, %v705
        %v707 = vmul.f32 %v697, %v706
        %v708 = vmul.f32 %v701, %v706
        %v709 = vadd.f32 %v693, %v707
        %v710 = vadd.f32 %v694, %v708
        %711 = vset.pattern.permute.xlu0 3
        %712 = vperm.xlu0 %711, %v660
        %v713 = vpop.permute.xlu0 %712
        %715 = vset.pattern.permute.xlu0 3
        %716 = vperm.xlu0 %715, %v661
        %v717 = vpop.permute.xlu0 %716
        %v719 = vlaneseq
        %v720 = vshrl.u32 %v719, 7
        %v721 = vsub.s32 3, %v720
        %v722 = vrot.slane %v662, %v721
        %v723 = vmul.f32 %v713, %v722
        %v724 = vmul.f32 %v717, %v722
        %v725 = vadd.f32 %v709, %v723
        %v726 = vadd.f32 %v710, %v724
        %v727 = vld [vmem:[%s2] sm:$0x1]
        %v729 = vlaneseq
        %v730 = vshrl.u32 %v729, 7
        %v731 = vsub.s32 0, %v730
        %v732 = vrot.slane %v727, %v731
        %v734 = vadd.f32 %v725, %v732
        %v735 = vadd.f32 %v726, %v732
        %v736 = vsel %vm658, 0.0, %v734
        %v737 = vsel %vm659, 0.0, %v735
        %v738 = vpack.c.bf16 %v737, %v736
        %v739 = vmul.bf16 %v738, %v738
        %v740 = vmul.bf16 %v738, %v739
        %v741 = vmul.bf16 %v740, 1027030327
        %v742 = vadd.bf16 %v738, %v741
        %v743 = vmul.bf16 %v742, 1061961548
        %v744 = vtanh.bf16.pop %v743
        %v745 = vadd.bf16 %v744, 1065369472
        %v746 = vmul.bf16 %v745, 1056980736
        %v747 = vmul.bf16 %v738, %v746
        %v748 = vunpack.c.l.bf16 %v747
        %v749 = vunpack.c.h.bf16 %v747
        %750 = vst [vmem:[#allocation2 + $0x8] sm:$0xff] %v748
        %751 = vst [vmem:[#allocation2 + $0x10] sm:$0xff] %v749
        %v752 = vld [vmem:[#allocation2 + $0x7] sm:$0xff]
        %v753 = vld [vmem:[#allocation2 + $0xf] sm:$0xff]
        %v754 = vld [vmem:[#allocation2 + $0x9] sm:$0xff]
        %v755 = vld [vmem:[#allocation2 + $0x11] sm:$0xff]
        %v756 = vpack.c.bf16 %v753, %v752
        %v757 = vld [vmem:[#allocation3] sm:$0xf]
        %v758 = vld [vmem:[#allocation3 + $0x4] sm:$0xf]
        %v759 = vld [vmem:[#allocation3 + $0x8] sm:$0xf]
        %v760 = vld [vmem:[#allocation3 + $0xc] sm:$0xf]
        %v761 = vld [vmem:[#allocation3 + $0x10] sm:$0xf]
        %v762 = vld [vmem:[#allocation3 + $0x14] sm:$0xf]
        %v763 = vld [vmem:[#allocation3 + $0x18] sm:$0xf]
        %v764 = vld [vmem:[#allocation3 + $0x1c] sm:$0xf]
        %v765 = vld [vmem:[#allocation3 + $0x20] sm:$0xf]
        %v766 = vld [vmem:[#allocation3 + $0x24] sm:$0xf]
        %v767 = vld [vmem:[#allocation3 + $0x28] sm:$0xf]
        %v768 = vld [vmem:[#allocation3 + $0x2c] sm:$0xf]
        %v769 = vld [vmem:[#allocation3 + $0x30] sm:$0xf]
        %v770 = vld [vmem:[#allocation3 + $0x34] sm:$0xf]
        %v771 = vld [vmem:[#allocation3 + $0x38] sm:$0xf]
        %v772 = vld [vmem:[#allocation3 + $0x3c] sm:$0xf]
        %s773 = scalar_lea.vmem [#allocation3], 64
        %v774 = vld [vmem:[%s773] sm:$0xf]
        %v775 = vld [vmem:[%s773 + $0x4] sm:$0xf]
        %v776 = vld [vmem:[%s773 + $0x8] sm:$0xf]
        %v777 = vld [vmem:[%s773 + $0xc] sm:$0xf]
        %v778 = vld [vmem:[%s773 + $0x10] sm:$0xf]
        %v779 = vld [vmem:[%s773 + $0x14] sm:$0xf]
        %v780 = vld [vmem:[%s773 + $0x18] sm:$0xf]
        %v781 = vld [vmem:[%s773 + $0x1c] sm:$0xf]
        %v782 = vld [vmem:[%s773 + $0x20] sm:$0xf]
        %v783 = vld [vmem:[%s773 + $0x24] sm:$0xf]
        %v784 = vld [vmem:[%s773 + $0x28] sm:$0xf]
        %v785 = vld [vmem:[%s773 + $0x2c] sm:$0xf]
        %v786 = vld [vmem:[%s773 + $0x30] sm:$0xf]
        %v787 = vld [vmem:[%s773 + $0x34] sm:$0xf]
        %v788 = vld [vmem:[%s773 + $0x38] sm:$0xf]
        %v789 = vld [vmem:[%s773 + $0x3c] sm:$0xf]
        %v806 = vunpack.c.l.b16 %v774
        %v807 = vunpack.c.l.b16 %v775
        %v808 = vunpack.c.l.b16 %v776
        %v809 = vunpack.c.l.b16 %v777
        %v810 = vunpack.c.l.b16 %v778
        %v811 = vunpack.c.l.b16 %v779
        %v812 = vunpack.c.l.b16 %v780
        %v813 = vunpack.c.l.b16 %v781
        %v814 = vunpack.c.l.b16 %v782
        %v815 = vunpack.c.l.b16 %v783
        %v816 = vunpack.c.l.b16 %v784
        %v817 = vunpack.c.l.b16 %v785
        %v818 = vunpack.c.l.b16 %v786
        %v819 = vunpack.c.l.b16 %v787
        %v820 = vunpack.c.l.b16 %v788
        %v821 = vunpack.c.l.b16 %v789
        %v822 = vpack.c.b16 %v807, %v806
        %v823 = vpack.c.b16 %v809, %v808
        %v824 = vpack.c.b16 %v811, %v810
        %v825 = vpack.c.b16 %v813, %v812
        %v826 = vpack.c.b16 %v815, %v814
        %v827 = vpack.c.b16 %v817, %v816
        %v828 = vpack.c.b16 %v819, %v818
        %v829 = vpack.c.b16 %v821, %v820
        %838 = vmatprep.subr.bf16.mxu0 0
        %839 = vmatpush1.bf16.msra.mxu0 %v822
        %840 = vmatprep.subr.bf16.mxu0 0
        %841 = vmatpush1.bf16.msra.mxu0 %v823
        %842 = vmatprep.subr.bf16.mxu0 0
        %843 = vmatpush1.bf16.msra.mxu0 %v824
        %844 = vmatprep.subr.bf16.mxu0 0
        %845 = vmatpush1.bf16.msra.mxu0 %v825
        %846 = vmatprep.subr.bf16.mxu0 0
        %847 = vmatpush1.bf16.msra.mxu0 %v826
        %848 = vmatprep.subr.bf16.mxu0 0
        %849 = vmatpush1.bf16.msra.mxu0 %v827
        %850 = vmatprep.subr.bf16.mxu0 0
        %851 = vmatpush1.bf16.msra.mxu0 %v828
        %852 = vmatprep.subr.bf16.mxu0 0
        %853 = vmatpush1.bf16.msra.mxu0 %v829
        %854 = vmatprep.subr.bf16.mxu0 0
        %855 = vmatpush1.bf16.msra.mxu0 0
        %856 = vmatprep.subr.bf16.mxu0 0
        %857 = vmatpush1.bf16.msra.mxu0 0
        %858 = vmatprep.subr.bf16.mxu0 0
        %859 = vmatpush1.bf16.msra.mxu0 0
        %860 = vmatprep.subr.bf16.mxu0 0
        %861 = vmatpush1.bf16.msra.mxu0 0
        %862 = vmatprep.subr.bf16.mxu0 0
        %863 = vmatpush1.bf16.msra.mxu0 0
        %864 = vmatprep.subr.bf16.mxu0 0
        %865 = vmatpush1.bf16.msra.mxu0 0
        %866 = vmatprep.subr.bf16.mxu0 0
        %867 = vmatpush1.bf16.msra.mxu0 0
        %868 = vmatprep.subr.bf16.mxu0 0
        %869 = vmatpush1.bf16.msra.mxu0 0
        %870 = vmatprep.mubr.bf16.mxu0 0
        %871 = vmatmul.mubr.bf16.gmra.mrb[0].mxu0 %v747
        %v872 = vpop.f32.mrb[0].mxu0
        %v873 = vadd.f32 0.0, %v872
        %v874 = vpop.f32.mrb[0].mxu0
        %v875 = vpop.f32.mrb[0].mxu0
        %v876 = vadd.f32 0.0, %v875
        %v877 = vpop.f32.mrb[0].mxu0
        %878 = vdwg.mxu0
        %v895 = vunpack.c.l.b16 %v757
        %v896 = vunpack.c.l.b16 %v758
        %v897 = vunpack.c.l.b16 %v759
        %v898 = vunpack.c.l.b16 %v760
        %v899 = vunpack.c.l.b16 %v761
        %v900 = vunpack.c.l.b16 %v762
        %v901 = vunpack.c.l.b16 %v763
        %v902 = vunpack.c.l.b16 %v764
        %v903 = vunpack.c.l.b16 %v765
        %v904 = vunpack.c.l.b16 %v766
        %v905 = vunpack.c.l.b16 %v767
        %v906 = vunpack.c.l.b16 %v768
        %v907 = vunpack.c.l.b16 %v769
        %v908 = vunpack.c.l.b16 %v770
        %v909 = vunpack.c.l.b16 %v771
        %v910 = vunpack.c.l.b16 %v772
        %v911 = vpack.c.b16 %v896, %v895
        %v912 = vpack.c.b16 %v898, %v897
        %v913 = vpack.c.b16 %v900, %v899
        %v914 = vpack.c.b16 %v902, %v901
        %v915 = vpack.c.b16 %v904, %v903
        %v916 = vpack.c.b16 %v906, %v905
        %v917 = vpack.c.b16 %v908, %v907
        %v918 = vpack.c.b16 %v910, %v909
        %927 = vmatprep.subr.bf16.mxu0 0
        %928 = vmatpush1.bf16.msra.mxu0 %v911
        %929 = vmatprep.subr.bf16.mxu0 0
        %930 = vmatpush1.bf16.msra.mxu0 %v912
        %931 = vmatprep.subr.bf16.mxu0 0
        %932 = vmatpush1.bf16.msra.mxu0 %v913
        %933 = vmatprep.subr.bf16.mxu0 0
        %934 = vmatpush1.bf16.msra.mxu0 %v914
        %935 = vmatprep.subr.bf16.mxu0 0
        %936 = vmatpush1.bf16.msra.mxu0 %v915
        %937 = vmatprep.subr.bf16.mxu0 0
        %938 = vmatpush1.bf16.msra.mxu0 %v916
        %939 = vmatprep.subr.bf16.mxu0 0
        %940 = vmatpush1.bf16.msra.mxu0 %v917
        %941 = vmatprep.subr.bf16.mxu0 0
        %942 = vmatpush1.bf16.msra.mxu0 %v918
        %943 = vmatprep.subr.bf16.mxu0 0
        %944 = vmatpush1.bf16.msra.mxu0 0
        %945 = vmatprep.subr.bf16.mxu0 0
        %946 = vmatpush1.bf16.msra.mxu0 0
        %947 = vmatprep.subr.bf16.mxu0 0
        %948 = vmatpush1.bf16.msra.mxu0 0
        %949 = vmatprep.subr.bf16.mxu0 0
        %950 = vmatpush1.bf16.msra.mxu0 0
        %951 = vmatprep.subr.bf16.mxu0 0
        %952 = vmatpush1.bf16.msra.mxu0 0
        %953 = vmatprep.subr.bf16.mxu0 0
        %954 = vmatpush1.bf16.msra.mxu0 0
        %955 = vmatprep.subr.bf16.mxu0 0
        %956 = vmatpush1.bf16.msra.mxu0 0
        %957 = vmatprep.subr.bf16.mxu0 0
        %958 = vmatpush1.bf16.msra.mxu0 0
        %959 = vmatprep.mubr.bf16.mxu0 0
        %960 = vmatmul.mubr.bf16.gmra.mrb[0].mxu0 %v756
        %v961 = vpop.f32.mrb[0].mxu0
        %v962 = vadd.f32 %v873, %v961
        %v963 = vpop.f32.mrb[0].mxu0
        %v964 = vpop.f32.mrb[0].mxu0
        %v965 = vadd.f32 %v876, %v964
        %v966 = vpop.f32.mrb[0].mxu0
        %967 = vdwg.mxu0
        %v968 = vpack.c.bf16 %v755, %v754
        %s969 = scalar_lea.vmem [#allocation3], 128
        %v970 = vld [vmem:[%s969] sm:$0xf]
        %v971 = vld [vmem:[%s969 + $0x4] sm:$0xf]
        %v972 = vld [vmem:[%s969 + $0x8] sm:$0xf]
        %v973 = vld [vmem:[%s969 + $0xc] sm:$0xf]
        %v974 = vld [vmem:[%s969 + $0x10] sm:$0xf]
        %v975 = vld [vmem:[%s969 + $0x14] sm:$0xf]
        %v976 = vld [vmem:[%s969 + $0x18] sm:$0xf]
        %v977 = vld [vmem:[%s969 + $0x1c] sm:$0xf]
        %v978 = vld [vmem:[%s969 + $0x20] sm:$0xf]
        %v979 = vld [vmem:[%s969 + $0x24] sm:$0xf]
        %v980 = vld [vmem:[%s969 + $0x28] sm:$0xf]
        %v981 = vld [vmem:[%s969 + $0x2c] sm:$0xf]
        %v982 = vld [vmem:[%s969 + $0x30] sm:$0xf]
        %v983 = vld [vmem:[%s969 + $0x34] sm:$0xf]
        %v984 = vld [vmem:[%s969 + $0x38] sm:$0xf]
        %v985 = vld [vmem:[%s969 + $0x3c] sm:$0xf]
        %v1002 = vunpack.c.l.b16 %v970
        %v1003 = vunpack.c.l.b16 %v971
        %v1004 = vunpack.c.l.b16 %v972
        %v1005 = vunpack.c.l.b16 %v973
        %v1006 = vunpack.c.l.b16 %v974
        %v1007 = vunpack.c.l.b16 %v975
        %v1008 = vunpack.c.l.b16 %v976
        %v1009 = vunpack.c.l.b16 %v977
        %v1010 = vunpack.c.l.b16 %v978
        %v1011 = vunpack.c.l.b16 %v979
        %v1012 = vunpack.c.l.b16 %v980
        %v1013 = vunpack.c.l.b16 %v981
        %v1014 = vunpack.c.l.b16 %v982
        %v1015 = vunpack.c.l.b16 %v983
        %v1016 = vunpack.c.l.b16 %v984
        %v1017 = vunpack.c.l.b16 %v985
        %v1018 = vpack.c.b16 %v1003, %v1002
        %v1019 = vpack.c.b16 %v1005, %v1004
        %v1020 = vpack.c.b16 %v1007, %v1006
        %v1021 = vpack.c.b16 %v1009, %v1008
        %v1022 = vpack.c.b16 %v1011, %v1010
        %v1023 = vpack.c.b16 %v1013, %v1012
        %v1024 = vpack.c.b16 %v1015, %v1014
        %v1025 = vpack.c.b16 %v1017, %v1016
        %1034 = vmatprep.subr.bf16.mxu0 0
        %1035 = vmatpush1.bf16.msra.mxu0 %v1018
        %1036 = vmatprep.subr.bf16.mxu0 0
        %1037 = vmatpush1.bf16.msra.mxu0 %v1019
        %1038 = vmatprep.subr.bf16.mxu0 0
        %1039 = vmatpush1.bf16.msra.mxu0 %v1020
        %1040 = vmatprep.subr.bf16.mxu0 0
        %1041 = vmatpush1.bf16.msra.mxu0 %v1021
        %1042 = vmatprep.subr.bf16.mxu0 0
        %1043 = vmatpush1.bf16.msra.mxu0 %v1022
        %1044 = vmatprep.subr.bf16.mxu0 0
        %1045 = vmatpush1.bf16.msra.mxu0 %v1023
        %1046 = vmatprep.subr.bf16.mxu0 0
        %1047 = vmatpush1.bf16.msra.mxu0 %v1024
        %1048 = vmatprep.subr.bf16.mxu0 0
        %1049 = vmatpush1.bf16.msra.mxu0 %v1025
        %1050 = vmatprep.subr.bf16.mxu0 0
        %1051 = vmatpush1.bf16.msra.mxu0 0
        %1052 = vmatprep.subr.bf16.mxu0 0
        %1053 = vmatpush1.bf16.msra.mxu0 0
        %1054 = vmatprep.subr.bf16.mxu0 0
        %1055 = vmatpush1.bf16.msra.mxu0 0
        %1056 = vmatprep.subr.bf16.mxu0 0
        %1057 = vmatpush1.bf16.msra.mxu0 0
        %1058 = vmatprep.subr.bf16.mxu0 0
        %1059 = vmatpush1.bf16.msra.mxu0 0
        %1060 = vmatprep.subr.bf16.mxu0 0
        %1061 = vmatpush1.bf16.msra.mxu0 0
        %1062 = vmatprep.subr.bf16.mxu0 0
        %1063 = vmatpush1.bf16.msra.mxu0 0
        %1064 = vmatprep.subr.bf16.mxu0 0
        %1065 = vmatpush1.bf16.msra.mxu0 0
        %1066 = vmatprep.mubr.bf16.mxu0 0
        %1067 = vmatmul.mubr.bf16.gmra.mrb[0].mxu0 %v968
        %v1068 = vpop.f32.mrb[0].mxu0
        %v1069 = vadd.f32 0.0, %v1068
        %v1070 = vpop.f32.mrb[0].mxu0
        %v1071 = vpop.f32.mrb[0].mxu0
        %v1072 = vadd.f32 0.0, %v1071
        %v1073 = vpop.f32.mrb[0].mxu0
        %1074 = vdwg.mxu0
        %v1075 = vadd.f32 %v962, %v1069
        %v1076 = vadd.f32 %v965, %v1072
        %v1077 = vld [vmem:[%s4] sm:$0x1]
        %v1079 = vlaneseq
        %v1080 = vshrl.u32 %v1079, 7
        %v1081 = vsub.s32 0, %v1080
        %v1082 = vrot.slane %v1077, %v1081
        %v1084 = vadd.f32 %v1075, %v1082
        %v1085 = vadd.f32 %v1076, %v1082
        %v1086 = vpack.c.bf16 %v1085, %v1084
        %v1087 = vmul.bf16 %v1086, %v1086
        %v1088 = vmul.bf16 %v1086, %v1087
        %v1089 = vmul.bf16 %v1088, 1027030327
        %v1090 = vadd.bf16 %v1086, %v1089
        %v1091 = vmul.bf16 %v1090, 1061961548
        %v1092 = vtanh.bf16.pop %v1091
        %v1093 = vadd.bf16 %v1092, 1065369472
        %v1094 = vmul.bf16 %v1093, 1056980736
        %v1095 = vmul.bf16 %v1086, %v1094
        %v1096 = vunpack.c.l.bf16 %v1095
        %v1097 = vunpack.c.h.bf16 %v1095
        %1098 = vst [vmem:[#allocation2 + $0x8] sm:$0xff] %v1096
        %1099 = vst [vmem:[#allocation2 + $0x10] sm:$0xff] %v1097
        %v1100 = vld [vmem:[#allocation2 + $0x7] sm:$0xff]
        %v1101 = vld [vmem:[#allocation2 + $0xf] sm:$0xff]
        %v1102 = vld [vmem:[#allocation2 + $0x9] sm:$0xff]
        %v1103 = vld [vmem:[#allocation2 + $0x11] sm:$0xff]
        %v1104 = vpack.c.bf16 %v1101, %v1100
        %v1105 = vld [vmem:[#allocation6] sm:$0xf]
        %v1106 = vld [vmem:[#allocation6 + $0x4] sm:$0xf]
        %v1107 = vld [vmem:[#allocation6 + $0x8] sm:$0xf]
        %v1108 = vld [vmem:[#allocation6 + $0xc] sm:$0xf]
        %v1109 = vld [vmem:[#allocation6 + $0x10] sm:$0xf]
        %v1110 = vld [vmem:[#allocation6 + $0x14] sm:$0xf]
        %v1111 = vld [vmem:[#allocation6 + $0x18] sm:$0xf]
        %v1112 = vld [vmem:[#allocation6 + $0x1c] sm:$0xf]
        %v1113 = vld [vmem:[#allocation6 + $0x20] sm:$0xf]
        %v1114 = vld [vmem:[#allocation6 + $0x24] sm:$0xf]
        %v1115 = vld [vmem:[#allocation6 + $0x28] sm:$0xf]
        %v1116 = vld [vmem:[#allocation6 + $0x2c] sm:$0xf]
        %v1117 = vld [vmem:[#allocation6 + $0x30] sm:$0xf]
        %v1118 = vld [vmem:[#allocation6 + $0x34] sm:$0xf]
        %v1119 = vld [vmem:[#allocation6 + $0x38] sm:$0xf]
        %v1120 = vld [vmem:[#allocation6 + $0x3c] sm:$0xf]
        %s1121 = scalar_lea.vmem [#allocation6], 64
        %v1122 = vld [vmem:[%s1121] sm:$0xf]
        %v1123 = vld [vmem:[%s1121 + $0x4] sm:$0xf]
        %v1124 = vld [vmem:[%s1121 + $0x8] sm:$0xf]
        %v1125 = vld [vmem:[%s1121 + $0xc] sm:$0xf]
        %v1126 = vld [vmem:[%s1121 + $0x10] sm:$0xf]
        %v1127 = vld [vmem:[%s1121 + $0x14] sm:$0xf]
        %v1128 = vld [vmem:[%s1121 + $0x18] sm:$0xf]
        %v1129 = vld [vmem:[%s1121 + $0x1c] sm:$0xf]
        %v1130 = vld [vmem:[%s1121 + $0x20] sm:$0xf]
        %v1131 = vld [vmem:[%s1121 + $0x24] sm:$0xf]
        %v1132 = vld [vmem:[%s1121 + $0x28] sm:$0xf]
        %v1133 = vld [vmem:[%s1121 + $0x2c] sm:$0xf]
        %v1134 = vld [vmem:[%s1121 + $0x30] sm:$0xf]
        %v1135 = vld [vmem:[%s1121 + $0x34] sm:$0xf]
        %v1136 = vld [vmem:[%s1121 + $0x38] sm:$0xf]
        %v1137 = vld [vmem:[%s1121 + $0x3c] sm:$0xf]
        %v1154 = vunpack.c.l.b16 %v1122
        %v1155 = vunpack.c.l.b16 %v1123
        %v1156 = vunpack.c.l.b16 %v1124
        %v1157 = vunpack.c.l.b16 %v1125
        %v1158 = vunpack.c.l.b16 %v1126
        %v1159 = vunpack.c.l.b16 %v1127
        %v1160 = vunpack.c.l.b16 %v1128
        %v1161 = vunpack.c.l.b16 %v1129
        %v1162 = vunpack.c.l.b16 %v1130
        %v1163 = vunpack.c.l.b16 %v1131
        %v1164 = vunpack.c.l.b16 %v1132
        %v1165 = vunpack.c.l.b16 %v1133
        %v1166 = vunpack.c.l.b16 %v1134
        %v1167 = vunpack.c.l.b16 %v1135
        %v1168 = vunpack.c.l.b16 %v1136
        %v1169 = vunpack.c.l.b16 %v1137
        %v1170 = vpack.c.b16 %v1155, %v1154
        %v1171 = vpack.c.b16 %v1157, %v1156
        %v1172 = vpack.c.b16 %v1159, %v1158
        %v1173 = vpack.c.b16 %v1161, %v1160
        %v1174 = vpack.c.b16 %v1163, %v1162
        %v1175 = vpack.c.b16 %v1165, %v1164
        %v1176 = vpack.c.b16 %v1167, %v1166
        %v1177 = vpack.c.b16 %v1169, %v1168
        %1186 = vmatprep.subr.bf16.mxu0 0
        %1187 = vmatpush1.bf16.msra.mxu0 %v1170
        %1188 = vmatprep.subr.bf16.mxu0 0
        %1189 = vmatpush1.bf16.msra.mxu0 %v1171
        %1190 = vmatprep.subr.bf16.mxu0 0
        %1191 = vmatpush1.bf16.msra.mxu0 %v1172
        %1192 = vmatprep.subr.bf16.mxu0 0
        %1193 = vmatpush1.bf16.msra.mxu0 %v1173
        %1194 = vmatprep.subr.bf16.mxu0 0
        %1195 = vmatpush1.bf16.msra.mxu0 %v1174
        %1196 = vmatprep.subr.bf16.mxu0 0
        %1197 = vmatpush1.bf16.msra.mxu0 %v1175
        %1198 = vmatprep.subr.bf16.mxu0 0
        %1199 = vmatpush1.bf16.msra.mxu0 %v1176
        %1200 = vmatprep.subr.bf16.mxu0 0
        %1201 = vmatpush1.bf16.msra.mxu0 %v1177
        %1202 = vmatprep.subr.bf16.mxu0 0
        %1203 = vmatpush1.bf16.msra.mxu0 0
        %1204 = vmatprep.subr.bf16.mxu0 0
        %1205 = vmatpush1.bf16.msra.mxu0 0
        %1206 = vmatprep.subr.bf16.mxu0 0
        %1207 = vmatpush1.bf16.msra.mxu0 0
        %1208 = vmatprep.subr.bf16.mxu0 0
        %1209 = vmatpush1.bf16.msra.mxu0 0
        %1210 = vmatprep.subr.bf16.mxu0 0
        %1211 = vmatpush1.bf16.msra.mxu0 0
        %1212 = vmatprep.subr.bf16.mxu0 0
        %1213 = vmatpush1.bf16.msra.mxu0 0
        %1214 = vmatprep.subr.bf16.mxu0 0
        %1215 = vmatpush1.bf16.msra.mxu0 0
        %1216 = vmatprep.subr.bf16.mxu0 0
        %1217 = vmatpush1.bf16.msra.mxu0 0
        %1218 = vmatprep.mubr.bf16.mxu0 0
        %1219 = vmatmul.mubr.bf16.gmra.mrb[0].mxu0 %v1095
        %v1220 = vpop.f32.mrb[0].mxu0
        %v1221 = vadd.f32 0.0, %v1220
        %v1222 = vpop.f32.mrb[0].mxu0
        %v1223 = vpop.f32.mrb[0].mxu0
        %v1224 = vadd.f32 0.0, %v1223
        %v1225 = vpop.f32.mrb[0].mxu0
        %1226 = vdwg.mxu0
        %v1243 = vunpack.c.l.b16 %v1105
        %v1244 = vunpack.c.l.b16 %v1106
        %v1245 = vunpack.c.l.b16 %v1107
        %v1246 = vunpack.c.l.b16 %v1108
        %v1247 = vunpack.c.l.b16 %v1109
        %v1248 = vunpack.c.l.b16 %v1110
        %v1249 = vunpack.c.l.b16 %v1111
        %v1250 = vunpack.c.l.b16 %v1112
        %v1251 = vunpack.c.l.b16 %v1113
        %v1252 = vunpack.c.l.b16 %v1114
        %v1253 = vunpack.c.l.b16 %v1115
        %v1254 = vunpack.c.l.b16 %v1116
        %v1255 = vunpack.c.l.b16 %v1117
        %v1256 = vunpack.c.l.b16 %v1118
        %v1257 = vunpack.c.l.b16 %v1119
        %v1258 = vunpack.c.l.b16 %v1120
        %v1259 = vpack.c.b16 %v1244, %v1243
        %v1260 = vpack.c.b16 %v1246, %v1245
        %v1261 = vpack.c.b16 %v1248, %v1247
        %v1262 = vpack.c.b16 %v1250, %v1249
        %v1263 = vpack.c.b16 %v1252, %v1251
        %v1264 = vpack.c.b16 %v1254, %v1253
        %v1265 = vpack.c.b16 %v1256, %v1255
        %v1266 = vpack.c.b16 %v1258, %v1257
        %1275 = vmatprep.subr.bf16.mxu0 0
        %1276 = vmatpush1.bf16.msra.mxu0 %v1259
        %1277 = vmatprep.subr.bf16.mxu0 0
        %1278 = vmatpush1.bf16.msra.mxu0 %v1260
        %1279 = vmatprep.subr.bf16.mxu0 0
        %1280 = vmatpush1.bf16.msra.mxu0 %v1261
        %1281 = vmatprep.subr.bf16.mxu0 0
        %1282 = vmatpush1.bf16.msra.mxu0 %v1262
        %1283 = vmatprep.subr.bf16.mxu0 0
        %1284 = vmatpush1.bf16.msra.mxu0 %v1263
        %1285 = vmatprep.subr.bf16.mxu0 0
        %1286 = vmatpush1.bf16.msra.mxu0 %v1264
        %1287 = vmatprep.subr.bf16.mxu0 0
        %1288 = vmatpush1.bf16.msra.mxu0 %v1265
        %1289 = vmatprep.subr.bf16.mxu0 0
        %1290 = vmatpush1.bf16.msra.mxu0 %v1266
        %1291 = vmatprep.subr.bf16.mxu0 0
        %1292 = vmatpush1.bf16.msra.mxu0 0
        %1293 = vmatprep.subr.bf16.mxu0 0
        %1294 = vmatpush1.bf16.msra.mxu0 0
        %1295 = vmatprep.subr.bf16.mxu0 0
        %1296 = vmatpush1.bf16.msra.mxu0 0
        %1297 = vmatprep.subr.bf16.mxu0 0
        %1298 = vmatpush1.bf16.msra.mxu0 0
        %1299 = vmatprep.subr.bf16.mxu0 0
        %1300 = vmatpush1.bf16.msra.mxu0 0
        %1301 = vmatprep.subr.bf16.mxu0 0
        %1302 = vmatpush1.bf16.msra.mxu0 0
        %1303 = vmatprep.subr.bf16.mxu0 0
        %1304 = vmatpush1.bf16.msra.mxu0 0
        %1305 = vmatprep.subr.bf16.mxu0 0
        %1306 = vmatpush1.bf16.msra.mxu0 0
        %1307 = vmatprep.mubr.bf16.mxu0 0
        %1308 = vmatmul.mubr.bf16.gmra.mrb[0].mxu0 %v1104
        %v1309 = vpop.f32.mrb[0].mxu0
        %v1310 = vadd.f32 %v1221, %v1309
        %v1311 = vpop.f32.mrb[0].mxu0
        %v1312 = vpop.f32.mrb[0].mxu0
        %v1313 = vadd.f32 %v1224, %v1312
        %v1314 = vpop.f32.mrb[0].mxu0
        %1315 = vdwg.mxu0
        %v1316 = vpack.c.bf16 %v1103, %v1102
        %s1317 = scalar_lea.vmem [#allocation6], 128
        %v1318 = vld [vmem:[%s1317] sm:$0xf]
        %v1319 = vld [vmem:[%s1317 + $0x4] sm:$0xf]
        %v1320 = vld [vmem:[%s1317 + $0x8] sm:$0xf]
        %v1321 = vld [vmem:[%s1317 + $0xc] sm:$0xf]
        %v1322 = vld [vmem:[%s1317 + $0x10] sm:$0xf]
        %v1323 = vld [vmem:[%s1317 + $0x14] sm:$0xf]
        %v1324 = vld [vmem:[%s1317 + $0x18] sm:$0xf]
        %v1325 = vld [vmem:[%s1317 + $0x1c] sm:$0xf]
        %v1326 = vld [vmem:[%s1317 + $0x20] sm:$0xf]
        %v1327 = vld [vmem:[%s1317 + $0x24] sm:$0xf]
        %v1328 = vld [vmem:[%s1317 + $0x28] sm:$0xf]
        %v1329 = vld [vmem:[%s1317 + $0x2c] sm:$0xf]
        %v1330 = vld [vmem:[%s1317 + $0x30] sm:$0xf]
        %v1331 = vld [vmem:[%s1317 + $0x34] sm:$0xf]
        %v1332 = vld [vmem:[%s1317 + $0x38] sm:$0xf]
        %v1333 = vld [vmem:[%s1317 + $0x3c] sm:$0xf]
        %v1350 = vunpack.c.l.b16 %v1318
        %v1351 = vunpack.c.l.b16 %v1319
        %v1352 = vunpack.c.l.b16 %v1320
        %v1353 = vunpack.c.l.b16 %v1321
        %v1354 = vunpack.c.l.b16 %v1322
        %v1355 = vunpack.c.l.b16 %v1323
        %v1356 = vunpack.c.l.b16 %v1324
        %v1357 = vunpack.c.l.b16 %v1325
        %v1358 = vunpack.c.l.b16 %v1326
        %v1359 = vunpack.c.l.b16 %v1327
        %v1360 = vunpack.c.l.b16 %v1328
        %v1361 = vunpack.c.l.b16 %v1329
        %v1362 = vunpack.c.l.b16 %v1330
        %v1363 = vunpack.c.l.b16 %v1331
        %v1364 = vunpack.c.l.b16 %v1332
        %v1365 = vunpack.c.l.b16 %v1333
        %v1366 = vpack.c.b16 %v1351, %v1350
        %v1367 = vpack.c.b16 %v1353, %v1352
        %v1368 = vpack.c.b16 %v1355, %v1354
        %v1369 = vpack.c.b16 %v1357, %v1356
        %v1370 = vpack.c.b16 %v1359, %v1358
        %v1371 = vpack.c.b16 %v1361, %v1360
        %v1372 = vpack.c.b16 %v1363, %v1362
        %v1373 = vpack.c.b16 %v1365, %v1364
        %1382 = vmatprep.subr.bf16.mxu0 0
        %1383 = vmatpush1.bf16.msra.mxu0 %v1366
        %1384 = vmatprep.subr.bf16.mxu0 0
        %1385 = vmatpush1.bf16.msra.mxu0 %v1367
        %1386 = vmatprep.subr.bf16.mxu0 0
        %1387 = vmatpush1.bf16.msra.mxu0 %v1368
        %1388 = vmatprep.subr.bf16.mxu0 0
        %1389 = vmatpush1.bf16.msra.mxu0 %v1369
        %1390 = vmatprep.subr.bf16.mxu0 0
        %1391 = vmatpush1.bf16.msra.mxu0 %v1370
        %1392 = vmatprep.subr.bf16.mxu0 0
        %1393 = vmatpush1.bf16.msra.mxu0 %v1371
        %1394 = vmatprep.subr.bf16.mxu0 0
        %1395 = vmatpush1.bf16.msra.mxu0 %v1372
        %1396 = vmatprep.subr.bf16.mxu0 0
        %1397 = vmatpush1.bf16.msra.mxu0 %v1373
        %1398 = vmatprep.subr.bf16.mxu0 0
        %1399 = vmatpush1.bf16.msra.mxu0 0
        %1400 = vmatprep.subr.bf16.mxu0 0
        %1401 = vmatpush1.bf16.msra.mxu0 0
        %1402 = vmatprep.subr.bf16.mxu0 0
        %1403 = vmatpush1.bf16.msra.mxu0 0
        %1404 = vmatprep.subr.bf16.mxu0 0
        %1405 = vmatpush1.bf16.msra.mxu0 0
        %1406 = vmatprep.subr.bf16.mxu0 0
        %1407 = vmatpush1.bf16.msra.mxu0 0
        %1408 = vmatprep.subr.bf16.mxu0 0
        %1409 = vmatpush1.bf16.msra.mxu0 0
        %1410 = vmatprep.subr.bf16.mxu0 0
        %1411 = vmatpush1.bf16.msra.mxu0 0
        %1412 = vmatprep.subr.bf16.mxu0 0
        %1413 = vmatpush1.bf16.msra.mxu0 0
        %1414 = vmatprep.mubr.bf16.mxu0 0
        %1415 = vmatmul.mubr.bf16.gmra.mrb[0].mxu0 %v1316
        %v1416 = vpop.f32.mrb[0].mxu0
        %v1417 = vadd.f32 0.0, %v1416
        %v1418 = vpop.f32.mrb[0].mxu0
        %v1419 = vpop.f32.mrb[0].mxu0
        %v1420 = vadd.f32 0.0, %v1419
        %v1421 = vpop.f32.mrb[0].mxu0
        %1422 = vdwg.mxu0
        %v1423 = vadd.f32 %v1310, %v1417
        %v1424 = vadd.f32 %v1313, %v1420
        %v1425 = vld [vmem:[%s6] sm:$0x1]
        %v1427 = vlaneseq
        %v1428 = vshrl.u32 %v1427, 7
        %v1429 = vsub.s32 0, %v1428
        %v1430 = vrot.slane %v1425, %v1429
        %v1432 = vadd.f32 %v1423, %v1430
        %v1433 = vadd.f32 %v1424, %v1430
        %v1434 = vadd.f32 %v1432, %v736
        %v1435 = vadd.f32 %v1433, %v737
        %v1436 = vpack.c.bf16 %v1435, %v1434
        %v1437 = vmul.bf16 %v1436, %v1436
        %v1438 = vmul.bf16 %v1436, %v1437
        %v1439 = vmul.bf16 %v1438, 1027030327
        %v1440 = vadd.bf16 %v1436, %v1439
        %v1441 = vmul.bf16 %v1440, 1061961548
        %v1442 = vtanh.bf16.pop %v1441
        %v1443 = vadd.bf16 %v1442, 1065369472
        %v1444 = vmul.bf16 %v1443, 1056980736
        %v1445 = vmul.bf16 %v1436, %v1444
        %v1446 = vunpack.c.l.bf16 %v1445
        %v1447 = vunpack.c.h.bf16 %v1445
        %1448 = vst [vmem:[#allocation2 + $0x8] sm:$0xff] %v1446
        %1449 = vst [vmem:[#allocation2 + $0x10] sm:$0xff] %v1447
        %v1450 = vld [vmem:[#allocation2 + $0x6] sm:$0xff]
        %v1451 = vld [vmem:[#allocation2 + $0xe] sm:$0xff]
        %v1452 = vld [vmem:[#allocation2 + $0xa] sm:$0xff]
        %v1453 = vld [vmem:[#allocation2 + $0x12] sm:$0xff]
        %v1454 = vpack.c.bf16 %v1451, %v1450
        %v1455 = vld [vmem:[#allocation8] sm:$0xf]
        %v1456 = vld [vmem:[#allocation8 + $0x4] sm:$0xf]
        %v1457 = vld [vmem:[#allocation8 + $0x8] sm:$0xf]
        %v1458 = vld [vmem:[#allocation8 + $0xc] sm:$0xf]
        %v1459 = vld [vmem:[#allocation8 + $0x10] sm:$0xf]
        %v1460 = vld [vmem:[#allocation8 + $0x14] sm:$0xf]
        %v1461 = vld [vmem:[#allocation8 + $0x18] sm:$0xf]
        %v1462 = vld [vmem:[#allocation8 + $0x1c] sm:$0xf]
        %v1463 = vld [vmem:[#allocation8 + $0x20] sm:$0xf]
        %v1464 = vld [vmem:[#allocation8 + $0x24] sm:$0xf]
        %v1465 = vld [vmem:[#allocation8 + $0x28] sm:$0xf]
        %v1466 = vld [vmem:[#allocation8 + $0x2c] sm:$0xf]
        %v1467 = vld [vmem:[#allocation8 + $0x30] sm:$0xf]
        %v1468 = vld [vmem:[#allocation8 + $0x34] sm:$0xf]
        %v1469 = vld [vmem:[#allocation8 + $0x38] sm:$0xf]
        %v1470 = vld [vmem:[#allocation8 + $0x3c] sm:$0xf]
        %s1471 = scalar_lea.vmem [#allocation8], 64
        %v1472 = vld [vmem:[%s1471] sm:$0xf]
        %v1473 = vld [vmem:[%s1471 + $0x4] sm:$0xf]
        %v1474 = vld [vmem:[%s1471 + $0x8] sm:$0xf]
        %v1475 = vld [vmem:[%s1471 + $0xc] sm:$0xf]
        %v1476 = vld [vmem:[%s1471 + $0x10] sm:$0xf]
        %v1477 = vld [vmem:[%s1471 + $0x14] sm:$0xf]
        %v1478 = vld [vmem:[%s1471 + $0x18] sm:$0xf]
        %v1479 = vld [vmem:[%s1471 + $0x1c] sm:$0xf]
        %v1480 = vld [vmem:[%s1471 + $0x20] sm:$0xf]
        %v1481 = vld [vmem:[%s1471 + $0x24] sm:$0xf]
        %v1482 = vld [vmem:[%s1471 + $0x28] sm:$0xf]
        %v1483 = vld [vmem:[%s1471 + $0x2c] sm:$0xf]
        %v1484 = vld [vmem:[%s1471 + $0x30] sm:$0xf]
        %v1485 = vld [vmem:[%s1471 + $0x34] sm:$0xf]
        %v1486 = vld [vmem:[%s1471 + $0x38] sm:$0xf]
        %v1487 = vld [vmem:[%s1471 + $0x3c] sm:$0xf]
        %v1504 = vunpack.c.l.b16 %v1472
        %v1505 = vunpack.c.l.b16 %v1473
        %v1506 = vunpack.c.l.b16 %v1474
        %v1507 = vunpack.c.l.b16 %v1475
        %v1508 = vunpack.c.l.b16 %v1476
        %v1509 = vunpack.c.l.b16 %v1477
        %v1510 = vunpack.c.l.b16 %v1478
        %v1511 = vunpack.c.l.b16 %v1479
        %v1512 = vunpack.c.l.b16 %v1480
        %v1513 = vunpack.c.l.b16 %v1481
        %v1514 = vunpack.c.l.b16 %v1482
        %v1515 = vunpack.c.l.b16 %v1483
        %v1516 = vunpack.c.l.b16 %v1484
        %v1517 = vunpack.c.l.b16 %v1485
        %v1518 = vunpack.c.l.b16 %v1486
        %v1519 = vunpack.c.l.b16 %v1487
        %v1520 = vpack.c.b16 %v1505, %v1504
        %v1521 = vpack.c.b16 %v1507, %v1506
        %v1522 = vpack.c.b16 %v1509, %v1508
        %v1523 = vpack.c.b16 %v1511, %v1510
        %v1524 = vpack.c.b16 %v1513, %v1512
        %v1525 = vpack.c.b16 %v1515, %v1514
        %v1526 = vpack.c.b16 %v1517, %v1516
        %v1527 = vpack.c.b16 %v1519, %v1518
        %1536 = vmatprep.subr.bf16.mxu0 0
        %1537 = vmatpush1.bf16.msra.mxu0 %v1520
        %1538 = vmatprep.subr.bf16.mxu0 0
        %1539 = vmatpush1.bf16.msra.mxu0 %v1521
        %1540 = vmatprep.subr.bf16.mxu0 0
        %1541 = vmatpush1.bf16.msra.mxu0 %v1522
        %1542 = vmatprep.subr.bf16.mxu0 0
        %1543 = vmatpush1.bf16.msra.mxu0 %v1523
        %1544 = vmatprep.subr.bf16.mxu0 0
        %1545 = vmatpush1.bf16.msra.mxu0 %v1524
        %1546 = vmatprep.subr.bf16.mxu0 0
        %1547 = vmatpush1.bf16.msra.mxu0 %v1525
        %1548 = vmatprep.subr.bf16.mxu0 0
        %1549 = vmatpush1.bf16.msra.mxu0 %v1526
        %1550 = vmatprep.subr.bf16.mxu0 0
        %1551 = vmatpush1.bf16.msra.mxu0 %v1527
        %1552 = vmatprep.subr.bf16.mxu0 0
        %1553 = vmatpush1.bf16.msra.mxu0 0
        %1554 = vmatprep.subr.bf16.mxu0 0
        %1555 = vmatpush1.bf16.msra.mxu0 0
        %1556 = vmatprep.subr.bf16.mxu0 0
        %1557 = vmatpush1.bf16.msra.mxu0 0
        %1558 = vmatprep.subr.bf16.mxu0 0
        %1559 = vmatpush1.bf16.msra.mxu0 0
        %1560 = vmatprep.subr.bf16.mxu0 0
        %1561 = vmatpush1.bf16.msra.mxu0 0
        %1562 = vmatprep.subr.bf16.mxu0 0
        %1563 = vmatpush1.bf16.msra.mxu0 0
        %1564 = vmatprep.subr.bf16.mxu0 0
        %1565 = vmatpush1.bf16.msra.mxu0 0
        %1566 = vmatprep.subr.bf16.mxu0 0
        %1567 = vmatpush1.bf16.msra.mxu0 0
        %1568 = vmatprep.mubr.bf16.mxu0 0
        %1569 = vmatmul.mubr.bf16.gmra.mrb[0].mxu0 %v1445
        %v1570 = vpop.f32.mrb[0].mxu0
        %v1571 = vadd.f32 0.0, %v1570
        %v1572 = vpop.f32.mrb[0].mxu0
        %v1573 = vpop.f32.mrb[0].mxu0
        %v1574 = vadd.f32 0.0, %v1573
        %v1575 = vpop.f32.mrb[0].mxu0
        %1576 = vdwg.mxu0
        %v1593 = vunpack.c.l.b16 %v1455
        %v1594 = vunpack.c.l.b16 %v1456
        %v1595 = vunpack.c.l.b16 %v1457
        %v1596 = vunpack.c.l.b16 %v1458
        %v1597 = vunpack.c.l.b16 %v1459
        %v1598 = vunpack.c.l.b16 %v1460
        %v1599 = vunpack.c.l.b16 %v1461
        %v1600 = vunpack.c.l.b16 %v1462
        %v1601 = vunpack.c.l.b16 %v1463
        %v1602 = vunpack.c.l.b16 %v1464
        %v1603 = vunpack.c.l.b16 %v1465
        %v1604 = vunpack.c.l.b16 %v1466
        %v1605 = vunpack.c.l.b16 %v1467
        %v1606 = vunpack.c.l.b16 %v1468
        %v1607 = vunpack.c.l.b16 %v1469
        %v1608 = vunpack.c.l.b16 %v1470
        %v1609 = vpack.c.b16 %v1594, %v1593
        %v1610 = vpack.c.b16 %v1596, %v1595
        %v1611 = vpack.c.b16 %v1598, %v1597
        %v1612 = vpack.c.b16 %v1600, %v1599
        %v1613 = vpack.c.b16 %v1602, %v1601
        %v1614 = vpack.c.b16 %v1604, %v1603
        %v1615 = vpack.c.b16 %v1606, %v1605
        %v1616 = vpack.c.b16 %v1608, %v1607
        %1625 = vmatprep.subr.bf16.mxu0 0
        %1626 = vmatpush1.bf16.msra.mxu0 %v1609
        %1627 = vmatprep.subr.bf16.mxu0 0
        %1628 = vmatpush1.bf16.msra.mxu0 %v1610
        %1629 = vmatprep.subr.bf16.mxu0 0
        %1630 = vmatpush1.bf16.msra.mxu0 %v1611
        %1631 = vmatprep.subr.bf16.mxu0 0
        %1632 = vmatpush1.bf16.msra.mxu0 %v1612
        %1633 = vmatprep.subr.bf16.mxu0 0
        %1634 = vmatpush1.bf16.msra.mxu0 %v1613
        %1635 = vmatprep.subr.bf16.mxu0 0
        %1636 = vmatpush1.bf16.msra.mxu0 %v1614
        %1637 = vmatprep.subr.bf16.mxu0 0
        %1638 = vmatpush1.bf16.msra.mxu0 %v1615
        %1639 = vmatprep.subr.bf16.mxu0 0
        %1640 = vmatpush1.bf16.msra.mxu0 %v1616
        %1641 = vmatprep.subr.bf16.mxu0 0
        %1642 = vmatpush1.bf16.msra.mxu0 0
        %1643 = vmatprep.subr.bf16.mxu0 0
        %1644 = vmatpush1.bf16.msra.mxu0 0
        %1645 = vmatprep.subr.bf16.mxu0 0
        %1646 = vmatpush1.bf16.msra.mxu0 0
        %1647 = vmatprep.subr.bf16.mxu0 0
        %1648 = vmatpush1.bf16.msra.mxu0 0
        %1649 = vmatprep.subr.bf16.mxu0 0
        %1650 = vmatpush1.bf16.msra.mxu0 0
        %1651 = vmatprep.subr.bf16.mxu0 0
        %1652 = vmatpush1.bf16.msra.mxu0 0
        %1653 = vmatprep.subr.bf16.mxu0 0
        %1654 = vmatpush1.bf16.msra.mxu0 0
        %1655 = vmatprep.subr.bf16.mxu0 0
        %1656 = vmatpush1.bf16.msra.mxu0 0
        %1657 = vmatprep.mubr.bf16.mxu0 0
        %1658 = vmatmul.mubr.bf16.gmra.mrb[0].mxu0 %v1454
        %v1659 = vpop.f32.mrb[0].mxu0
        %v1660 = vadd.f32 %v1571, %v1659
        %v1661 = vpop.f32.mrb[0].mxu0
        %v1662 = vpop.f32.mrb[0].mxu0
        %v1663 = vadd.f32 %v1574, %v1662
        %v1664 = vpop.f32.mrb[0].mxu0
        %1665 = vdwg.mxu0
        %v1666 = vpack.c.bf16 %v1453, %v1452
        %s1667 = scalar_lea.vmem [#allocation8], 128
        %v1668 = vld [vmem:[%s1667] sm:$0xf]
        %v1669 = vld [vmem:[%s1667 + $0x4] sm:$0xf]
        %v1670 = vld [vmem:[%s1667 + $0x8] sm:$0xf]
        %v1671 = vld [vmem:[%s1667 + $0xc] sm:$0xf]
        %v1672 = vld [vmem:[%s1667 + $0x10] sm:$0xf]
        %v1673 = vld [vmem:[%s1667 + $0x14] sm:$0xf]
        %v1674 = vld [vmem:[%s1667 + $0x18] sm:$0xf]
        %v1675 = vld [vmem:[%s1667 + $0x1c] sm:$0xf]
        %v1676 = vld [vmem:[%s1667 + $0x20] sm:$0xf]
        %v1677 = vld [vmem:[%s1667 + $0x24] sm:$0xf]
        %v1678 = vld [vmem:[%s1667 + $0x28] sm:$0xf]
        %v1679 = vld [vmem:[%s1667 + $0x2c] sm:$0xf]
        %v1680 = vld [vmem:[%s1667 + $0x30] sm:$0xf]
        %v1681 = vld [vmem:[%s1667 + $0x34] sm:$0xf]
        %v1682 = vld [vmem:[%s1667 + $0x38] sm:$0xf]
        %v1683 = vld [vmem:[%s1667 + $0x3c] sm:$0xf]
        %v1700 = vunpack.c.l.b16 %v1668
        %v1701 = vunpack.c.l.b16 %v1669
        %v1702 = vunpack.c.l.b16 %v1670
        %v1703 = vunpack.c.l.b16 %v1671
        %v1704 = vunpack.c.l.b16 %v1672
        %v1705 = vunpack.c.l.b16 %v1673
        %v1706 = vunpack.c.l.b16 %v1674
        %v1707 = vunpack.c.l.b16 %v1675
        %v1708 = vunpack.c.l.b16 %v1676
        %v1709 = vunpack.c.l.b16 %v1677
        %v1710 = vunpack.c.l.b16 %v1678
        %v1711 = vunpack.c.l.b16 %v1679
        %v1712 = vunpack.c.l.b16 %v1680
        %v1713 = vunpack.c.l.b16 %v1681
        %v1714 = vunpack.c.l.b16 %v1682
        %v1715 = vunpack.c.l.b16 %v1683
        %v1716 = vpack.c.b16 %v1701, %v1700
        %v1717 = vpack.c.b16 %v1703, %v1702
        %v1718 = vpack.c.b16 %v1705, %v1704
        %v1719 = vpack.c.b16 %v1707, %v1706
        %v1720 = vpack.c.b16 %v1709, %v1708
        %v1721 = vpack.c.b16 %v1711, %v1710
        %v1722 = vpack.c.b16 %v1713, %v1712
        %v1723 = vpack.c.b16 %v1715, %v1714
        %1732 = vmatprep.subr.bf16.mxu0 0
        %1733 = vmatpush1.bf16.msra.mxu0 %v1716
        %1734 = vmatprep.subr.bf16.mxu0 0
        %1735 = vmatpush1.bf16.msra.mxu0 %v1717
        %1736 = vmatprep.subr.bf16.mxu0 0
        %1737 = vmatpush1.bf16.msra.mxu0 %v1718
        %1738 = vmatprep.subr.bf16.mxu0 0
        %1739 = vmatpush1.bf16.msra.mxu0 %v1719
        %1740 = vmatprep.subr.bf16.mxu0 0
        %1741 = vmatpush1.bf16.msra.mxu0 %v1720
        %1742 = vmatprep.subr.bf16.mxu0 0
        %1743 = vmatpush1.bf16.msra.mxu0 %v1721
        %1744 = vmatprep.subr.bf16.mxu0 0
        %1745 = vmatpush1.bf16.msra.mxu0 %v1722
        %1746 = vmatprep.subr.bf16.mxu0 0
        %1747 = vmatpush1.bf16.msra.mxu0 %v1723
        %1748 = vmatprep.subr.bf16.mxu0 0
        %1749 = vmatpush1.bf16.msra.mxu0 0
        %1750 = vmatprep.subr.bf16.mxu0 0
        %1751 = vmatpush1.bf16.msra.mxu0 0
        %1752 = vmatprep.subr.bf16.mxu0 0
        %1753 = vmatpush1.bf16.msra.mxu0 0
        %1754 = vmatprep.subr.bf16.mxu0 0
        %1755 = vmatpush1.bf16.msra.mxu0 0
        %1756 = vmatprep.subr.bf16.mxu0 0
        %1757 = vmatpush1.bf16.msra.mxu0 0
        %1758 = vmatprep.subr.bf16.mxu0 0
        %1759 = vmatpush1.bf16.msra.mxu0 0
        %1760 = vmatprep.subr.bf16.mxu0 0
        %1761 = vmatpush1.bf16.msra.mxu0 0
        %1762 = vmatprep.subr.bf16.mxu0 0
        %1763 = vmatpush1.bf16.msra.mxu0 0
        %1764 = vmatprep.mubr.bf16.mxu0 0
        %1765 = vmatmul.mubr.bf16.gmra.mrb[0].mxu0 %v1666
        %v1766 = vpop.f32.mrb[0].mxu0
        %v1767 = vadd.f32 0.0, %v1766
        %v1768 = vpop.f32.mrb[0].mxu0
        %v1769 = vpop.f32.mrb[0].mxu0
        %v1770 = vadd.f32 0.0, %v1769
        %v1771 = vpop.f32.mrb[0].mxu0
        %1772 = vdwg.mxu0
        %v1773 = vadd.f32 %v1660, %v1767
        %v1774 = vadd.f32 %v1663, %v1770
        %v1775 = vld [vmem:[%s8] sm:$0x1]
        %v1777 = vlaneseq
        %v1778 = vshrl.u32 %v1777, 7
        %v1779 = vsub.s32 0, %v1778
        %v1780 = vrot.slane %v1775, %v1779
        %v1782 = vadd.f32 %v1773, %v1780
        %v1783 = vadd.f32 %v1774, %v1780
        %v1784 = vpack.c.bf16 %v1783, %v1782
        %v1785 = vmul.bf16 %v1784, %v1784
        %v1786 = vmul.bf16 %v1784, %v1785
        %v1787 = vmul.bf16 %v1786, 1027030327
        %v1788 = vadd.bf16 %v1784, %v1787
        %v1789 = vmul.bf16 %v1788, 1061961548
        %v1790 = vtanh.bf16.pop %v1789
        %v1791 = vadd.bf16 %v1790, 1065369472
        %v1792 = vmul.bf16 %v1791, 1056980736
        %v1793 = vmul.bf16 %v1784, %v1792
        %v1794 = vunpack.c.l.bf16 %v1793
        %v1795 = vunpack.c.h.bf16 %v1793
        %1796 = vst [vmem:[#allocation2 + $0x8] sm:$0xff] %v1794
        %1797 = vst [vmem:[#allocation2 + $0x10] sm:$0xff] %v1795
        %v1798 = vld [vmem:[#allocation2 + $0x6] sm:$0xff]
        %v1799 = vld [vmem:[#allocation2 + $0xe] sm:$0xff]
        %v1800 = vld [vmem:[#allocation2 + $0xa] sm:$0xff]
        %v1801 = vld [vmem:[#allocation2 + $0x12] sm:$0xff]
        %v1802 = vpack.c.bf16 %v1799, %v1798
        %v1803 = vld [vmem:[#allocation9] sm:$0xf]
        %v1804 = vld [vmem:[#allocation9 + $0x4] sm:$0xf]
        %v1805 = vld [vmem:[#allocation9 + $0x8] sm:$0xf]
        %v1806 = vld [vmem:[#allocation9 + $0xc] sm:$0xf]
        %v1807 = vld [vmem:[#allocation9 + $0x10] sm:$0xf]
        %v1808 = vld [vmem:[#allocation9 + $0x14] sm:$0xf]
        %v1809 = vld [vmem:[#allocation9 + $0x18] sm:$0xf]
        %v1810 = vld [vmem:[#allocation9 + $0x1c] sm:$0xf]
        %v1811 = vld [vmem:[#allocation9 + $0x20] sm:$0xf]
        %v1812 = vld [vmem:[#allocation9 + $0x24] sm:$0xf]
        %v1813 = vld [vmem:[#allocation9 + $0x28] sm:$0xf]
        %v1814 = vld [vmem:[#allocation9 + $0x2c] sm:$0xf]
        %v1815 = vld [vmem:[#allocation9 + $0x30] sm:$0xf]
        %v1816 = vld [vmem:[#allocation9 + $0x34] sm:$0xf]
        %v1817 = vld [vmem:[#allocation9 + $0x38] sm:$0xf]
        %v1818 = vld [vmem:[#allocation9 + $0x3c] sm:$0xf]
        %s1819 = scalar_lea.vmem [#allocation9], 64
        %v1820 = vld [vmem:[%s1819] sm:$0xf]
        %v1821 = vld [vmem:[%s1819 + $0x4] sm:$0xf]
        %v1822 = vld [vmem:[%s1819 + $0x8] sm:$0xf]
        %v1823 = vld [vmem:[%s1819 + $0xc] sm:$0xf]
        %v1824 = vld [vmem:[%s1819 + $0x10] sm:$0xf]
        %v1825 = vld [vmem:[%s1819 + $0x14] sm:$0xf]
        %v1826 = vld [vmem:[%s1819 + $0x18] sm:$0xf]
        %v1827 = vld [vmem:[%s1819 + $0x1c] sm:$0xf]
        %v1828 = vld [vmem:[%s1819 + $0x20] sm:$0xf]
        %v1829 = vld [vmem:[%s1819 + $0x24] sm:$0xf]
        %v1830 = vld [vmem:[%s1819 + $0x28] sm:$0xf]
        %v1831 = vld [vmem:[%s1819 + $0x2c] sm:$0xf]
        %v1832 = vld [vmem:[%s1819 + $0x30] sm:$0xf]
        %v1833 = vld [vmem:[%s1819 + $0x34] sm:$0xf]
        %v1834 = vld [vmem:[%s1819 + $0x38] sm:$0xf]
        %v1835 = vld [vmem:[%s1819 + $0x3c] sm:$0xf]
        %v1852 = vunpack.c.l.b16 %v1820
        %v1853 = vunpack.c.l.b16 %v1821
        %v1854 = vunpack.c.l.b16 %v1822
        %v1855 = vunpack.c.l.b16 %v1823
        %v1856 = vunpack.c.l.b16 %v1824
        %v1857 = vunpack.c.l.b16 %v1825
        %v1858 = vunpack.c.l.b16 %v1826
        %v1859 = vunpack.c.l.b16 %v1827
        %v1860 = vunpack.c.l.b16 %v1828
        %v1861 = vunpack.c.l.b16 %v1829
        %v1862 = vunpack.c.l.b16 %v1830
        %v1863 = vunpack.c.l.b16 %v1831
        %v1864 = vunpack.c.l.b16 %v1832
        %v1865 = vunpack.c.l.b16 %v1833
        %v1866 = vunpack.c.l.b16 %v1834
        %v1867 = vunpack.c.l.b16 %v1835
        %v1868 = vpack.c.b16 %v1853, %v1852
        %v1869 = vpack.c.b16 %v1855, %v1854
        %v1870 = vpack.c.b16 %v1857, %v1856
        %v1871 = vpack.c.b16 %v1859, %v1858
        %v1872 = vpack.c.b16 %v1861, %v1860
        %v1873 = vpack.c.b16 %v1863, %v1862
        %v1874 = vpack.c.b16 %v1865, %v1864
        %v1875 = vpack.c.b16 %v1867, %v1866
        %1884 = vmatprep.subr.bf16.mxu0 0
        %1885 = vmatpush1.bf16.msra.mxu0 %v1868
        %1886 = vmatprep.subr.bf16.mxu0 0
        %1887 = vmatpush1.bf16.msra.mxu0 %v1869
        %1888 = vmatprep.subr.bf16.mxu0 0
        %1889 = vmatpush1.bf16.msra.mxu0 %v1870
        %1890 = vmatprep.subr.bf16.mxu0 0
        %1891 = vmatpush1.bf16.msra.mxu0 %v1871
        %1892 = vmatprep.subr.bf16.mxu0 0
        %1893 = vmatpush1.bf16.msra.mxu0 %v1872
        %1894 = vmatprep.subr.bf16.mxu0 0
        %1895 = vmatpush1.bf16.msra.mxu0 %v1873
        %1896 = vmatprep.subr.bf16.mxu0 0
        %1897 = vmatpush1.bf16.msra.mxu0 %v1874
        %1898 = vmatprep.subr.bf16.mxu0 0
        %1899 = vmatpush1.bf16.msra.mxu0 %v1875
        %1900 = vmatprep.subr.bf16.mxu0 0
        %1901 = vmatpush1.bf16.msra.mxu0 0
        %1902 = vmatprep.subr.bf16.mxu0 0
        %1903 = vmatpush1.bf16.msra.mxu0 0
        %1904 = vmatprep.subr.bf16.mxu0 0
        %1905 = vmatpush1.bf16.msra.mxu0 0
        %1906 = vmatprep.subr.bf16.mxu0 0
        %1907 = vmatpush1.bf16.msra.mxu0 0
        %1908 = vmatprep.subr.bf16.mxu0 0
        %1909 = vmatpush1.bf16.msra.mxu0 0
        %1910 = vmatprep.subr.bf16.mxu0 0
        %1911 = vmatpush1.bf16.msra.mxu0 0
        %1912 = vmatprep.subr.bf16.mxu0 0
        %1913 = vmatpush1.bf16.msra.mxu0 0
        %1914 = vmatprep.subr.bf16.mxu0 0
        %1915 = vmatpush1.bf16.msra.mxu0 0
        %1916 = vmatprep.mubr.bf16.mxu0 0
        %1917 = vmatmul.mubr.bf16.gmra.mrb[0].mxu0 %v1793
        %v1918 = vpop.f32.mrb[0].mxu0
        %v1919 = vadd.f32 0.0, %v1918
        %v1920 = vpop.f32.mrb[0].mxu0
        %v1921 = vpop.f32.mrb[0].mxu0
        %v1922 = vadd.f32 0.0, %v1921
        %v1923 = vpop.f32.mrb[0].mxu0
        %1924 = vdwg.mxu0
        %v1941 = vunpack.c.l.b16 %v1803
        %v1942 = vunpack.c.l.b16 %v1804
        %v1943 = vunpack.c.l.b16 %v1805
        %v1944 = vunpack.c.l.b16 %v1806
        %v1945 = vunpack.c.l.b16 %v1807
        %v1946 = vunpack.c.l.b16 %v1808
        %v1947 = vunpack.c.l.b16 %v1809
        %v1948 = vunpack.c.l.b16 %v1810
        %v1949 = vunpack.c.l.b16 %v1811
        %v1950 = vunpack.c.l.b16 %v1812
        %v1951 = vunpack.c.l.b16 %v1813
        %v1952 = vunpack.c.l.b16 %v1814
        %v1953 = vunpack.c.l.b16 %v1815
        %v1954 = vunpack.c.l.b16 %v1816
        %v1955 = vunpack.c.l.b16 %v1817
        %v1956 = vunpack.c.l.b16 %v1818
        %v1957 = vpack.c.b16 %v1942, %v1941
        %v1958 = vpack.c.b16 %v1944, %v1943
        %v1959 = vpack.c.b16 %v1946, %v1945
        %v1960 = vpack.c.b16 %v1948, %v1947
        %v1961 = vpack.c.b16 %v1950, %v1949
        %v1962 = vpack.c.b16 %v1952, %v1951
        %v1963 = vpack.c.b16 %v1954, %v1953
        %v1964 = vpack.c.b16 %v1956, %v1955
        %1973 = vmatprep.subr.bf16.mxu0 0
        %1974 = vmatpush1.bf16.msra.mxu0 %v1957
        %1975 = vmatprep.subr.bf16.mxu0 0
        %1976 = vmatpush1.bf16.msra.mxu0 %v1958
        %1977 = vmatprep.subr.bf16.mxu0 0
        %1978 = vmatpush1.bf16.msra.mxu0 %v1959
        %1979 = vmatprep.subr.bf16.mxu0 0
        %1980 = vmatpush1.bf16.msra.mxu0 %v1960
        %1981 = vmatprep.subr.bf16.mxu0 0
        %1982 = vmatpush1.bf16.msra.mxu0 %v1961
        %1983 = vmatprep.subr.bf16.mxu0 0
        %1984 = vmatpush1.bf16.msra.mxu0 %v1962
        %1985 = vmatprep.subr.bf16.mxu0 0
        %1986 = vmatpush1.bf16.msra.mxu0 %v1963
        %1987 = vmatprep.subr.bf16.mxu0 0
        %1988 = vmatpush1.bf16.msra.mxu0 %v1964
        %1989 = vmatprep.subr.bf16.mxu0 0
        %1990 = vmatpush1.bf16.msra.mxu0 0
        %1991 = vmatprep.subr.bf16.mxu0 0
        %1992 = vmatpush1.bf16.msra.mxu0 0
        %1993 = vmatprep.subr.bf16.mxu0 0
        %1994 = vmatpush1.bf16.msra.mxu0 0
        %1995 = vmatprep.subr.bf16.mxu0 0
        %1996 = vmatpush1.bf16.msra.mxu0 0
        %1997 = vmatprep.subr.bf16.mxu0 0
        %1998 = vmatpush1.bf16.msra.mxu0 0
        %1999 = vmatprep.subr.bf16.mxu0 0
        %2000 = vmatpush1.bf16.msra.mxu0 0
        %2001 = vmatprep.subr.bf16.mxu0 0
        %2002 = vmatpush1.bf16.msra.mxu0 0
        %2003 = vmatprep.subr.bf16.mxu0 0
        %2004 = vmatpush1.bf16.msra.mxu0 0
        %2005 = vmatprep.mubr.bf16.mxu0 0
        %2006 = vmatmul.mubr.bf16.gmra.mrb[0].mxu0 %v1802
        %v2007 = vpop.f32.mrb[0].mxu0
        %v2008 = vadd.f32 %v1919, %v2007
        %v2009 = vpop.f32.mrb[0].mxu0
        %v2010 = vpop.f32.mrb[0].mxu0
        %v2011 = vadd.f32 %v1922, %v2010
        %v2012 = vpop.f32.mrb[0].mxu0
        %2013 = vdwg.mxu0
        %v2014 = vpack.c.bf16 %v1801, %v1800
        %s2015 = scalar_lea.vmem [#allocation9], 128
        %v2016 = vld [vmem:[%s2015] sm:$0xf]
        %v2017 = vld [vmem:[%s2015 + $0x4] sm:$0xf]
        %v2018 = vld [vmem:[%s2015 + $0x8] sm:$0xf]
        %v2019 = vld [vmem:[%s2015 + $0xc] sm:$0xf]
        %v2020 = vld [vmem:[%s2015 + $0x10] sm:$0xf]
        %v2021 = vld [vmem:[%s2015 + $0x14] sm:$0xf]
        %v2022 = vld [vmem:[%s2015 + $0x18] sm:$0xf]
        %v2023 = vld [vmem:[%s2015 + $0x1c] sm:$0xf]
        %v2024 = vld [vmem:[%s2015 + $0x20] sm:$0xf]
        %v2025 = vld [vmem:[%s2015 + $0x24] sm:$0xf]
        %v2026 = vld [vmem:[%s2015 + $0x28] sm:$0xf]
        %v2027 = vld [vmem:[%s2015 + $0x2c] sm:$0xf]
        %v2028 = vld [vmem:[%s2015 + $0x30] sm:$0xf]
        %v2029 = vld [vmem:[%s2015 + $0x34] sm:$0xf]
        %v2030 = vld [vmem:[%s2015 + $0x38] sm:$0xf]
        %v2031 = vld [vmem:[%s2015 + $0x3c] sm:$0xf]
        %v2048 = vunpack.c.l.b16 %v2016
        %v2049 = vunpack.c.l.b16 %v2017
        %v2050 = vunpack.c.l.b16 %v2018
        %v2051 = vunpack.c.l.b16 %v2019
        %v2052 = vunpack.c.l.b16 %v2020
        %v2053 = vunpack.c.l.b16 %v2021
        %v2054 = vunpack.c.l.b16 %v2022
        %v2055 = vunpack.c.l.b16 %v2023
        %v2056 = vunpack.c.l.b16 %v2024
        %v2057 = vunpack.c.l.b16 %v2025
        %v2058 = vunpack.c.l.b16 %v2026
        %v2059 = vunpack.c.l.b16 %v2027
        %v2060 = vunpack.c.l.b16 %v2028
        %v2061 = vunpack.c.l.b16 %v2029
        %v2062 = vunpack.c.l.b16 %v2030
        %v2063 = vunpack.c.l.b16 %v2031
        %v2064 = vpack.c.b16 %v2049, %v2048
        %v2065 = vpack.c.b16 %v2051, %v2050
        %v2066 = vpack.c.b16 %v2053, %v2052
        %v2067 = vpack.c.b16 %v2055, %v2054
        %v2068 = vpack.c.b16 %v2057, %v2056
        %v2069 = vpack.c.b16 %v2059, %v2058
        %v2070 = vpack.c.b16 %v2061, %v2060
        %v2071 = vpack.c.b16 %v2063, %v2062
        %2080 = vmatprep.subr.bf16.mxu0 0
        %2081 = vmatpush1.bf16.msra.mxu0 %v2064
        %2082 = vmatprep.subr.bf16.mxu0 0
        %2083 = vmatpush1.bf16.msra.mxu0 %v2065
        %2084 = vmatprep.subr.bf16.mxu0 0
        %2085 = vmatpush1.bf16.msra.mxu0 %v2066
        %2086 = vmatprep.subr.bf16.mxu0 0
        %2087 = vmatpush1.bf16.msra.mxu0 %v2067
        %2088 = vmatprep.subr.bf16.mxu0 0
        %2089 = vmatpush1.bf16.msra.mxu0 %v2068
        %2090 = vmatprep.subr.bf16.mxu0 0
        %2091 = vmatpush1.bf16.msra.mxu0 %v2069
        %2092 = vmatprep.subr.bf16.mxu0 0
        %2093 = vmatpush1.bf16.msra.mxu0 %v2070
        %2094 = vmatprep.subr.bf16.mxu0 0
        %2095 = vmatpush1.bf16.msra.mxu0 %v2071
        %2096 = vmatprep.subr.bf16.mxu0 0
        %2097 = vmatpush1.bf16.msra.mxu0 0
        %2098 = vmatprep.subr.bf16.mxu0 0
        %2099 = vmatpush1.bf16.msra.mxu0 0
        %2100 = vmatprep.subr.bf16.mxu0 0
        %2101 = vmatpush1.bf16.msra.mxu0 0
        %2102 = vmatprep.subr.bf16.mxu0 0
        %2103 = vmatpush1.bf16.msra.mxu0 0
        %2104 = vmatprep.subr.bf16.mxu0 0
        %2105 = vmatpush1.bf16.msra.mxu0 0
        %2106 = vmatprep.subr.bf16.mxu0 0
        %2107 = vmatpush1.bf16.msra.mxu0 0
        %2108 = vmatprep.subr.bf16.mxu0 0
        %2109 = vmatpush1.bf16.msra.mxu0 0
        %2110 = vmatprep.subr.bf16.mxu0 0
        %2111 = vmatpush1.bf16.msra.mxu0 0
        %2112 = vmatprep.mubr.bf16.mxu0 0
        %2113 = vmatmul.mubr.bf16.gmra.mrb[0].mxu0 %v2014
        %v2114 = vpop.f32.mrb[0].mxu0
        %v2115 = vadd.f32 0.0, %v2114
        %v2116 = vpop.f32.mrb[0].mxu0
        %v2117 = vpop.f32.mrb[0].mxu0
        %v2118 = vadd.f32 0.0, %v2117
        %v2119 = vpop.f32.mrb[0].mxu0
        %2120 = vdwg.mxu0
        %v2121 = vadd.f32 %v2008, %v2115
        %v2122 = vadd.f32 %v2011, %v2118
        %v2123 = vld [vmem:[%s10] sm:$0x1]
        %v2125 = vlaneseq
        %v2126 = vshrl.u32 %v2125, 7
        %v2127 = vsub.s32 0, %v2126
        %v2128 = vrot.slane %v2123, %v2127
        %v2130 = vadd.f32 %v2121, %v2128
        %v2131 = vadd.f32 %v2122, %v2128
        %v2132 = vadd.f32 %v2130, %v1434
        %v2133 = vadd.f32 %v2131, %v1435
        %v2134 = vpack.c.bf16 %v2133, %v2132
        %v2135 = vld [vmem:[%s15] sm:$0xf]
        %v2136 = vld [vmem:[%s15 + $0x4] sm:$0xf]
        %v2137 = vld [vmem:[%s15 + $0x8] sm:$0xf]
        %v2138 = vld [vmem:[%s15 + $0xc] sm:$0xf]
        %v2139 = vld [vmem:[%s15 + $0x10] sm:$0xf]
        %v2140 = vld [vmem:[%s15 + $0x14] sm:$0xf]
        %v2141 = vld [vmem:[%s15 + $0x18] sm:$0xf]
        %v2142 = vld [vmem:[%s15 + $0x1c] sm:$0xf]
        %v2143 = vld [vmem:[%s15 + $0x20] sm:$0xf]
        %v2144 = vld [vmem:[%s15 + $0x24] sm:$0xf]
        %v2145 = vld [vmem:[%s15 + $0x28] sm:$0xf]
        %v2146 = vld [vmem:[%s15 + $0x2c] sm:$0xf]
        %v2147 = vld [vmem:[%s15 + $0x30] sm:$0xf]
        %v2148 = vld [vmem:[%s15 + $0x34] sm:$0xf]
        %v2149 = vld [vmem:[%s15 + $0x38] sm:$0xf]
        %v2150 = vld [vmem:[%s15 + $0x3c] sm:$0xf]
        %v2151 = vld [vmem:[%s16] sm:$0x1]
        %v2153 = vlaneseq
        %v2154 = vshrl.u32 %v2153, 7
        %v2155 = vsub.s32 0, %v2154
        %v2156 = vrot.slane %v2151, %v2155
        %v2174 = vunpack.c.l.b16 %v2135
        %v2175 = vunpack.c.l.b16 %v2136
        %v2176 = vunpack.c.l.b16 %v2137
        %v2177 = vunpack.c.l.b16 %v2138
        %v2178 = vunpack.c.l.b16 %v2139
        %v2179 = vunpack.c.l.b16 %v2140
        %v2180 = vunpack.c.l.b16 %v2141
        %v2181 = vunpack.c.l.b16 %v2142
        %v2182 = vunpack.c.l.b16 %v2143
        %v2183 = vunpack.c.l.b16 %v2144
        %v2184 = vunpack.c.l.b16 %v2145
        %v2185 = vunpack.c.l.b16 %v2146
        %v2186 = vunpack.c.l.b16 %v2147
        %v2187 = vunpack.c.l.b16 %v2148
        %v2188 = vunpack.c.l.b16 %v2149
        %v2189 = vunpack.c.l.b16 %v2150
        %v2190 = vpack.c.b16 %v2175, %v2174
        %v2191 = vpack.c.b16 %v2177, %v2176
        %v2192 = vpack.c.b16 %v2179, %v2178
        %v2193 = vpack.c.b16 %v2181, %v2180
        %v2194 = vpack.c.b16 %v2183, %v2182
        %v2195 = vpack.c.b16 %v2185, %v2184
        %v2196 = vpack.c.b16 %v2187, %v2186
        %v2197 = vpack.c.b16 %v2189, %v2188
        %2206 = vmatprep.subr.bf16.mxu0 0
        %2207 = vmatpush1.bf16.msra.mxu0 %v2190
        %2208 = vmatprep.subr.bf16.mxu0 0
        %2209 = vmatpush1.bf16.msra.mxu0 %v2191
        %2210 = vmatprep.subr.bf16.mxu0 0
        %2211 = vmatpush1.bf16.msra.mxu0 %v2192
        %2212 = vmatprep.subr.bf16.mxu0 0
        %2213 = vmatpush1.bf16.msra.mxu0 %v2193
        %2214 = vmatprep.subr.bf16.mxu0 0
        %2215 = vmatpush1.bf16.msra.mxu0 %v2194
        %2216 = vmatprep.subr.bf16.mxu0 0
        %2217 = vmatpush1.bf16.msra.mxu0 %v2195
        %2218 = vmatprep.subr.bf16.mxu0 0
        %2219 = vmatpush1.bf16.msra.mxu0 %v2196
        %2220 = vmatprep.subr.bf16.mxu0 0
        %2221 = vmatpush1.bf16.msra.mxu0 %v2197
        %2222 = vmatprep.subr.bf16.mxu0 0
        %2223 = vmatpush1.bf16.msra.mxu0 0
        %2224 = vmatprep.subr.bf16.mxu0 0
        %2225 = vmatpush1.bf16.msra.mxu0 0
        %2226 = vmatprep.subr.bf16.mxu0 0
        %2227 = vmatpush1.bf16.msra.mxu0 0
        %2228 = vmatprep.subr.bf16.mxu0 0
        %2229 = vmatpush1.bf16.msra.mxu0 0
        %2230 = vmatprep.subr.bf16.mxu0 0
        %2231 = vmatpush1.bf16.msra.mxu0 0
        %2232 = vmatprep.subr.bf16.mxu0 0
        %2233 = vmatpush1.bf16.msra.mxu0 0
        %2234 = vmatprep.subr.bf16.mxu0 0
        %2235 = vmatpush1.bf16.msra.mxu0 0
        %2236 = vmatprep.subr.bf16.mxu0 0
        %2237 = vmatpush1.bf16.msra.mxu0 0
        %2238 = vmatprep.mubr.bf16.mxu0 0
        %2239 = vmatmul.mubr.bf16.gmra.mrb[0].mxu0 %v2134
        %v2240 = vpop.f32.mrb[0].mxu0
        %v2241 = vadd.f32 %v2156, %v2240
        %v2242 = vpop.f32.mrb[0].mxu0
        %v2243 = vpop.f32.mrb[0].mxu0
        %v2244 = vadd.f32 %v2156, %v2243
        %v2245 = vpop.f32.mrb[0].mxu0
        %2246 = vdwg.mxu0
        %v2247 = vmul.bf16 %v2134, %v2134
        %v2248 = vmul.bf16 %v2134, %v2247
        %v2249 = vmul.bf16 %v2248, 1027030327
        %v2250 = vadd.bf16 %v2134, %v2249
        %v2251 = vmul.bf16 %v2250, 1061961548
        %v2252 = vtanh.bf16.pop %v2251
        %v2253 = vadd.bf16 %v2252, 1065369472
        %v2254 = vmul.bf16 %v2253, 1056980736
        %v2255 = vmul.bf16 %v2134, %v2254
        %v2256 = vunpack.c.l.bf16 %v2255
        %v2257 = vunpack.c.h.bf16 %v2255
        %2258 = vst [vmem:[#allocation2 + $0x8] sm:$0xff] %v2256
        %2259 = vst [vmem:[#allocation2 + $0x10] sm:$0xff] %v2257
        %v2260 = vld [vmem:[#allocation2 + $0x4] sm:$0xff]
        %v2261 = vld [vmem:[#allocation2 + $0xc] sm:$0xff]
        %v2262 = vld [vmem:[#allocation2 + $0x14] sm:$0xff]
        %v2263 = vpack.c.bf16 %v2261, %v2260
        %v2264 = vld [vmem:[#allocation11] sm:$0xf]
        %v2265 = vld [vmem:[#allocation11 + $0x4] sm:$0xf]
        %v2266 = vld [vmem:[#allocation11 + $0x8] sm:$0xf]
        %v2267 = vld [vmem:[#allocation11 + $0xc] sm:$0xf]
        %v2268 = vld [vmem:[#allocation11 + $0x10] sm:$0xf]
        %v2269 = vld [vmem:[#allocation11 + $0x14] sm:$0xf]
        %v2270 = vld [vmem:[#allocation11 + $0x18] sm:$0xf]
        %v2271 = vld [vmem:[#allocation11 + $0x1c] sm:$0xf]
        %v2272 = vld [vmem:[#allocation11 + $0x20] sm:$0xf]
        %v2273 = vld [vmem:[#allocation11 + $0x24] sm:$0xf]
        %v2274 = vld [vmem:[#allocation11 + $0x28] sm:$0xf]
        %v2275 = vld [vmem:[#allocation11 + $0x2c] sm:$0xf]
        %v2276 = vld [vmem:[#allocation11 + $0x30] sm:$0xf]
        %v2277 = vld [vmem:[#allocation11 + $0x34] sm:$0xf]
        %v2278 = vld [vmem:[#allocation11 + $0x38] sm:$0xf]
        %v2279 = vld [vmem:[#allocation11 + $0x3c] sm:$0xf]
        %s2280 = scalar_lea.vmem [#allocation11], 64
        %v2281 = vld [vmem:[%s2280] sm:$0xf]
        %v2282 = vld [vmem:[%s2280 + $0x4] sm:$0xf]
        %v2283 = vld [vmem:[%s2280 + $0x8] sm:$0xf]
        %v2284 = vld [vmem:[%s2280 + $0xc] sm:$0xf]
        %v2285 = vld [vmem:[%s2280 + $0x10] sm:$0xf]
        %v2286 = vld [vmem:[%s2280 + $0x14] sm:$0xf]
        %v2287 = vld [vmem:[%s2280 + $0x18] sm:$0xf]
        %v2288 = vld [vmem:[%s2280 + $0x1c] sm:$0xf]
        %v2289 = vld [vmem:[%s2280 + $0x20] sm:$0xf]
        %v2290 = vld [vmem:[%s2280 + $0x24] sm:$0xf]
        %v2291 = vld [vmem:[%s2280 + $0x28] sm:$0xf]
        %v2292 = vld [vmem:[%s2280 + $0x2c] sm:$0xf]
        %v2293 = vld [vmem:[%s2280 + $0x30] sm:$0xf]
        %v2294 = vld [vmem:[%s2280 + $0x34] sm:$0xf]
        %v2295 = vld [vmem:[%s2280 + $0x38] sm:$0xf]
        %v2296 = vld [vmem:[%s2280 + $0x3c] sm:$0xf]
        %v2313 = vunpack.c.l.b16 %v2281
        %v2314 = vunpack.c.l.b16 %v2282
        %v2315 = vunpack.c.l.b16 %v2283
        %v2316 = vunpack.c.l.b16 %v2284
        %v2317 = vunpack.c.l.b16 %v2285
        %v2318 = vunpack.c.l.b16 %v2286
        %v2319 = vunpack.c.l.b16 %v2287
        %v2320 = vunpack.c.l.b16 %v2288
        %v2321 = vunpack.c.l.b16 %v2289
        %v2322 = vunpack.c.l.b16 %v2290
        %v2323 = vunpack.c.l.b16 %v2291
        %v2324 = vunpack.c.l.b16 %v2292
        %v2325 = vunpack.c.l.b16 %v2293
        %v2326 = vunpack.c.l.b16 %v2294
        %v2327 = vunpack.c.l.b16 %v2295
        %v2328 = vunpack.c.l.b16 %v2296
        %v2329 = vpack.c.b16 %v2314, %v2313
        %v2330 = vpack.c.b16 %v2316, %v2315
        %v2331 = vpack.c.b16 %v2318, %v2317
        %v2332 = vpack.c.b16 %v2320, %v2319
        %v2333 = vpack.c.b16 %v2322, %v2321
        %v2334 = vpack.c.b16 %v2324, %v2323
        %v2335 = vpack.c.b16 %v2326, %v2325
        %v2336 = vpack.c.b16 %v2328, %v2327
        %2345 = vmatprep.subr.bf16.mxu0 0
        %2346 = vmatpush1.bf16.msra.mxu0 %v2329
        %2347 = vmatprep.subr.bf16.mxu0 0
        %2348 = vmatpush1.bf16.msra.mxu0 %v2330
        %2349 = vmatprep.subr.bf16.mxu0 0
        %2350 = vmatpush1.bf16.msra.mxu0 %v2331
        %2351 = vmatprep.subr.bf16.mxu0 0
        %2352 = vmatpush1.bf16.msra.mxu0 %v2332
        %2353 = vmatprep.subr.bf16.mxu0 0
        %2354 = vmatpush1.bf16.msra.mxu0 %v2333
        %2355 = vmatprep.subr.bf16.mxu0 0
        %2356 = vmatpush1.bf16.msra.mxu0 %v2334
        %2357 = vmatprep.subr.bf16.mxu0 0
        %2358 = vmatpush1.bf16.msra.mxu0 %v2335
        %2359 = vmatprep.subr.bf16.mxu0 0
        %2360 = vmatpush1.bf16.msra.mxu0 %v2336
        %2361 = vmatprep.subr.bf16.mxu0 0
        %2362 = vmatpush1.bf16.msra.mxu0 0
        %2363 = vmatprep.subr.bf16.mxu0 0
        %2364 = vmatpush1.bf16.msra.mxu0 0
        %2365 = vmatprep.subr.bf16.mxu0 0
        %2366 = vmatpush1.bf16.msra.mxu0 0
        %2367 = vmatprep.subr.bf16.mxu0 0
        %2368 = vmatpush1.bf16.msra.mxu0 0
        %2369 = vmatprep.subr.bf16.mxu0 0
        %2370 = vmatpush1.bf16.msra.mxu0 0
        %2371 = vmatprep.subr.bf16.mxu0 0
        %2372 = vmatpush1.bf16.msra.mxu0 0
        %2373 = vmatprep.subr.bf16.mxu0 0
        %2374 = vmatpush1.bf16.msra.mxu0 0
        %2375 = vmatprep.subr.bf16.mxu0 0
        %2376 = vmatpush1.bf16.msra.mxu0 0
        %2377 = vmatprep.mubr.bf16.mxu0 0
        %2378 = vmatmul.mubr.bf16.gmra.mrb[0].mxu0 %v2255
        %v2379 = vpop.f32.mrb[0].mxu0
        %v2380 = vadd.f32 0.0, %v2379
        %v2381 = vpop.f32.mrb[0].mxu0
        %v2382 = vpop.f32.mrb[0].mxu0
        %v2383 = vadd.f32 0.0, %v2382
        %v2384 = vpop.f32.mrb[0].mxu0
        %2385 = vdwg.mxu0
        %v2402 = vunpack.c.l.b16 %v2264
        %v2403 = vunpack.c.l.b16 %v2265
        %v2404 = vunpack.c.l.b16 %v2266
        %v2405 = vunpack.c.l.b16 %v2267
        %v2406 = vunpack.c.l.b16 %v2268
        %v2407 = vunpack.c.l.b16 %v2269
        %v2408 = vunpack.c.l.b16 %v2270
        %v2409 = vunpack.c.l.b16 %v2271
        %v2410 = vunpack.c.l.b16 %v2272
        %v2411 = vunpack.c.l.b16 %v2273
        %v2412 = vunpack.c.l.b16 %v2274
        %v2413 = vunpack.c.l.b16 %v2275
        %v2414 = vunpack.c.l.b16 %v2276
        %v2415 = vunpack.c.l.b16 %v2277
        %v2416 = vunpack.c.l.b16 %v2278
        %v2417 = vunpack.c.l.b16 %v2279
        %v2418 = vpack.c.b16 %v2403, %v2402
        %v2419 = vpack.c.b16 %v2405, %v2404
        %v2420 = vpack.c.b16 %v2407, %v2406
        %v2421 = vpack.c.b16 %v2409, %v2408
        %v2422 = vpack.c.b16 %v2411, %v2410
        %v2423 = vpack.c.b16 %v2413, %v2412
        %v2424 = vpack.c.b16 %v2415, %v2414
        %v2425 = vpack.c.b16 %v2417, %v2416
        %2434 = vmatprep.subr.bf16.mxu0 0
        %2435 = vmatpush1.bf16.msra.mxu0 %v2418
        %2436 = vmatprep.subr.bf16.mxu0 0
        %2437 = vmatpush1.bf16.msra.mxu0 %v2419
        %2438 = vmatprep.subr.bf16.mxu0 0
        %2439 = vmatpush1.bf16.msra.mxu0 %v2420
        %2440 = vmatprep.subr.bf16.mxu0 0
        %2441 = vmatpush1.bf16.msra.mxu0 %v2421
        %2442 = vmatprep.subr.bf16.mxu0 0
        %2443 = vmatpush1.bf16.msra.mxu0 %v2422
        %2444 = vmatprep.subr.bf16.mxu0 0
        %2445 = vmatpush1.bf16.msra.mxu0 %v2423
        %2446 = vmatprep.subr.bf16.mxu0 0
        %2447 = vmatpush1.bf16.msra.mxu0 %v2424
        %2448 = vmatprep.subr.bf16.mxu0 0
        %2449 = vmatpush1.bf16.msra.mxu0 %v2425
        %2450 = vmatprep.subr.bf16.mxu0 0
        %2451 = vmatpush1.bf16.msra.mxu0 0
        %2452 = vmatprep.subr.bf16.mxu0 0
        %2453 = vmatpush1.bf16.msra.mxu0 0
        %2454 = vmatprep.subr.bf16.mxu0 0
        %2455 = vmatpush1.bf16.msra.mxu0 0
        %2456 = vmatprep.subr.bf16.mxu0 0
        %2457 = vmatpush1.bf16.msra.mxu0 0
        %2458 = vmatprep.subr.bf16.mxu0 0
        %2459 = vmatpush1.bf16.msra.mxu0 0
        %2460 = vmatprep.subr.bf16.mxu0 0
        %2461 = vmatpush1.bf16.msra.mxu0 0
        %2462 = vmatprep.subr.bf16.mxu0 0
        %2463 = vmatpush1.bf16.msra.mxu0 0
        %2464 = vmatprep.subr.bf16.mxu0 0
        %2465 = vmatpush1.bf16.msra.mxu0 0
        %2466 = vmatprep.mubr.bf16.mxu0 0
        %2467 = vmatmul.mubr.bf16.gmra.mrb[0].mxu0 %v2263
        %v2468 = vpop.f32.mrb[0].mxu0
        %v2469 = vadd.f32 %v2380, %v2468
        %v2470 = vpop.f32.mrb[0].mxu0
        %v2471 = vpop.f32.mrb[0].mxu0
        %v2472 = vadd.f32 %v2383, %v2471
        %v2473 = vpop.f32.mrb[0].mxu0
        %2474 = vdwg.mxu0
        %v2475 = vpack.c.bf16 %v2262, %v2261
        %s2476 = scalar_lea.vmem [#allocation11], 128
        %v2477 = vld [vmem:[%s2476] sm:$0xf]
        %v2478 = vld [vmem:[%s2476 + $0x4] sm:$0xf]
        %v2479 = vld [vmem:[%s2476 + $0x8] sm:$0xf]
        %v2480 = vld [vmem:[%s2476 + $0xc] sm:$0xf]
        %v2481 = vld [vmem:[%s2476 + $0x10] sm:$0xf]
        %v2482 = vld [vmem:[%s2476 + $0x14] sm:$0xf]
        %v2483 = vld [vmem:[%s2476 + $0x18] sm:$0xf]
        %v2484 = vld [vmem:[%s2476 + $0x1c] sm:$0xf]
        %v2485 = vld [vmem:[%s2476 + $0x20] sm:$0xf]
        %v2486 = vld [vmem:[%s2476 + $0x24] sm:$0xf]
        %v2487 = vld [vmem:[%s2476 + $0x28] sm:$0xf]
        %v2488 = vld [vmem:[%s2476 + $0x2c] sm:$0xf]
        %v2489 = vld [vmem:[%s2476 + $0x30] sm:$0xf]
        %v2490 = vld [vmem:[%s2476 + $0x34] sm:$0xf]
        %v2491 = vld [vmem:[%s2476 + $0x38] sm:$0xf]
        %v2492 = vld [vmem:[%s2476 + $0x3c] sm:$0xf]
        %v2509 = vunpack.c.l.b16 %v2477
        %v2510 = vunpack.c.l.b16 %v2478
        %v2511 = vunpack.c.l.b16 %v2479
        %v2512 = vunpack.c.l.b16 %v2480
        %v2513 = vunpack.c.l.b16 %v2481
        %v2514 = vunpack.c.l.b16 %v2482
        %v2515 = vunpack.c.l.b16 %v2483
        %v2516 = vunpack.c.l.b16 %v2484
        %v2517 = vunpack.c.l.b16 %v2485
        %v2518 = vunpack.c.l.b16 %v2486
        %v2519 = vunpack.c.l.b16 %v2487
        %v2520 = vunpack.c.l.b16 %v2488
        %v2521 = vunpack.c.l.b16 %v2489
        %v2522 = vunpack.c.l.b16 %v2490
        %v2523 = vunpack.c.l.b16 %v2491
        %v2524 = vunpack.c.l.b16 %v2492
        %v2525 = vpack.c.b16 %v2510, %v2509
        %v2526 = vpack.c.b16 %v2512, %v2511
        %v2527 = vpack.c.b16 %v2514, %v2513
        %v2528 = vpack.c.b16 %v2516, %v2515
        %v2529 = vpack.c.b16 %v2518, %v2517
        %v2530 = vpack.c.b16 %v2520, %v2519
        %v2531 = vpack.c.b16 %v2522, %v2521
        %v2532 = vpack.c.b16 %v2524, %v2523
        %2541 = vmatprep.subr.bf16.mxu0 0
        %2542 = vmatpush1.bf16.msra.mxu0 %v2525
        %2543 = vmatprep.subr.bf16.mxu0 0
        %2544 = vmatpush1.bf16.msra.mxu0 %v2526
        %2545 = vmatprep.subr.bf16.mxu0 0
        %2546 = vmatpush1.bf16.msra.mxu0 %v2527
        %2547 = vmatprep.subr.bf16.mxu0 0
        %2548 = vmatpush1.bf16.msra.mxu0 %v2528
        %2549 = vmatprep.subr.bf16.mxu0 0
        %2550 = vmatpush1.bf16.msra.mxu0 %v2529
        %2551 = vmatprep.subr.bf16.mxu0 0
        %2552 = vmatpush1.bf16.msra.mxu0 %v2530
        %2553 = vmatprep.subr.bf16.mxu0 0
        %2554 = vmatpush1.bf16.msra.mxu0 %v2531
        %2555 = vmatprep.subr.bf16.mxu0 0
        %2556 = vmatpush1.bf16.msra.mxu0 %v2532
        %2557 = vmatprep.subr.bf16.mxu0 0
        %2558 = vmatpush1.bf16.msra.mxu0 0
        %2559 = vmatprep.subr.bf16.mxu0 0
        %2560 = vmatpush1.bf16.msra.mxu0 0
        %2561 = vmatprep.subr.bf16.mxu0 0
        %2562 = vmatpush1.bf16.msra.mxu0 0
        %2563 = vmatprep.subr.bf16.mxu0 0
        %2564 = vmatpush1.bf16.msra.mxu0 0
        %2565 = vmatprep.subr.bf16.mxu0 0
        %2566 = vmatpush1.bf16.msra.mxu0 0
        %2567 = vmatprep.subr.bf16.mxu0 0
        %2568 = vmatpush1.bf16.msra.mxu0 0
        %2569 = vmatprep.subr.bf16.mxu0 0
        %2570 = vmatpush1.bf16.msra.mxu0 0
        %2571 = vmatprep.subr.bf16.mxu0 0
        %2572 = vmatpush1.bf16.msra.mxu0 0
        %2573 = vmatprep.mubr.bf16.mxu0 0
        %2574 = vmatmul.mubr.bf16.gmra.mrb[0].mxu0 %v2475
        %v2575 = vpop.f32.mrb[0].mxu0
        %v2576 = vadd.f32 0.0, %v2575
        %v2577 = vpop.f32.mrb[0].mxu0
        %v2578 = vpop.f32.mrb[0].mxu0
        %v2579 = vadd.f32 0.0, %v2578
        %v2580 = vpop.f32.mrb[0].mxu0
        %2581 = vdwg.mxu0
        %v2582 = vadd.f32 %v2469, %v2576
        %v2583 = vadd.f32 %v2472, %v2579
        %v2584 = vld [vmem:[%s12] sm:$0x1]
        %v2586 = vlaneseq
        %v2587 = vshrl.u32 %v2586, 7
        %v2588 = vsub.s32 0, %v2587
        %v2589 = vrot.slane %v2584, %v2588
        %v2591 = vadd.f32 %v2582, %v2589
        %v2592 = vadd.f32 %v2583, %v2589
        %v2593 = vpack.c.bf16 %v2592, %v2591
        %v2594 = vmul.bf16 %v2593, %v2593
        %v2595 = vmul.bf16 %v2593, %v2594
        %v2596 = vmul.bf16 %v2595, 1027030327
        %v2597 = vadd.bf16 %v2593, %v2596
        %v2598 = vmul.bf16 %v2597, 1061961548
        %v2599 = vtanh.bf16.pop %v2598
        %v2600 = vadd.bf16 %v2599, 1065369472
        %v2601 = vmul.bf16 %v2600, 1056980736
        %v2602 = vmul.bf16 %v2593, %v2601
        %v2603 = vunpack.c.l.bf16 %v2602
        %v2604 = vunpack.c.h.bf16 %v2602
        %2605 = vst [vmem:[#allocation2 + $0x8] sm:$0xff] %v2603
        %2606 = vst [vmem:[#allocation2 + $0x10] sm:$0xff] %v2604
        %v2607 = vld [vmem:[#allocation2 + $0x4] sm:$0xff]
        %v2608 = vld [vmem:[#allocation2 + $0xc] sm:$0xff]
        %v2609 = vld [vmem:[#allocation2 + $0x14] sm:$0xff]
        %v2610 = vpack.c.bf16 %v2608, %v2607
        %v2611 = vld [vmem:[#allocation12] sm:$0xf]
        %v2612 = vld [vmem:[#allocation12 + $0x4] sm:$0xf]
        %v2613 = vld [vmem:[#allocation12 + $0x8] sm:$0xf]
        %v2614 = vld [vmem:[#allocation12 + $0xc] sm:$0xf]
        %v2615 = vld [vmem:[#allocation12 + $0x10] sm:$0xf]
        %v2616 = vld [vmem:[#allocation12 + $0x14] sm:$0xf]
        %v2617 = vld [vmem:[#allocation12 + $0x18] sm:$0xf]
        %v2618 = vld [vmem:[#allocation12 + $0x1c] sm:$0xf]
        %v2619 = vld [vmem:[#allocation12 + $0x20] sm:$0xf]
        %v2620 = vld [vmem:[#allocation12 + $0x24] sm:$0xf]
        %v2621 = vld [vmem:[#allocation12 + $0x28] sm:$0xf]
        %v2622 = vld [vmem:[#allocation12 + $0x2c] sm:$0xf]
        %v2623 = vld [vmem:[#allocation12 + $0x30] sm:$0xf]
        %v2624 = vld [vmem:[#allocation12 + $0x34] sm:$0xf]
        %v2625 = vld [vmem:[#allocation12 + $0x38] sm:$0xf]
        %v2626 = vld [vmem:[#allocation12 + $0x3c] sm:$0xf]
        %s2627 = scalar_lea.vmem [#allocation12], 64
        %v2628 = vld [vmem:[%s2627] sm:$0xf]
        %v2629 = vld [vmem:[%s2627 + $0x4] sm:$0xf]
        %v2630 = vld [vmem:[%s2627 + $0x8] sm:$0xf]
        %v2631 = vld [vmem:[%s2627 + $0xc] sm:$0xf]
        %v2632 = vld [vmem:[%s2627 + $0x10] sm:$0xf]
        %v2633 = vld [vmem:[%s2627 + $0x14] sm:$0xf]
        %v2634 = vld [vmem:[%s2627 + $0x18] sm:$0xf]
        %v2635 = vld [vmem:[%s2627 + $0x1c] sm:$0xf]
        %v2636 = vld [vmem:[%s2627 + $0x20] sm:$0xf]
        %v2637 = vld [vmem:[%s2627 + $0x24] sm:$0xf]
        %v2638 = vld [vmem:[%s2627 + $0x28] sm:$0xf]
        %v2639 = vld [vmem:[%s2627 + $0x2c] sm:$0xf]
        %v2640 = vld [vmem:[%s2627 + $0x30] sm:$0xf]
        %v2641 = vld [vmem:[%s2627 + $0x34] sm:$0xf]
        %v2642 = vld [vmem:[%s2627 + $0x38] sm:$0xf]
        %v2643 = vld [vmem:[%s2627 + $0x3c] sm:$0xf]
        %v2660 = vunpack.c.l.b16 %v2628
        %v2661 = vunpack.c.l.b16 %v2629
        %v2662 = vunpack.c.l.b16 %v2630
        %v2663 = vunpack.c.l.b16 %v2631
        %v2664 = vunpack.c.l.b16 %v2632
        %v2665 = vunpack.c.l.b16 %v2633
        %v2666 = vunpack.c.l.b16 %v2634
        %v2667 = vunpack.c.l.b16 %v2635
        %v2668 = vunpack.c.l.b16 %v2636
        %v2669 = vunpack.c.l.b16 %v2637
        %v2670 = vunpack.c.l.b16 %v2638
        %v2671 = vunpack.c.l.b16 %v2639
        %v2672 = vunpack.c.l.b16 %v2640
        %v2673 = vunpack.c.l.b16 %v2641
        %v2674 = vunpack.c.l.b16 %v2642
        %v2675 = vunpack.c.l.b16 %v2643
        %v2676 = vpack.c.b16 %v2661, %v2660
        %v2677 = vpack.c.b16 %v2663, %v2662
        %v2678 = vpack.c.b16 %v2665, %v2664
        %v2679 = vpack.c.b16 %v2667, %v2666
        %v2680 = vpack.c.b16 %v2669, %v2668
        %v2681 = vpack.c.b16 %v2671, %v2670
        %v2682 = vpack.c.b16 %v2673, %v2672
        %v2683 = vpack.c.b16 %v2675, %v2674
        %2692 = vmatprep.subr.bf16.mxu0 0
        %2693 = vmatpush1.bf16.msra.mxu0 %v2676
        %2694 = vmatprep.subr.bf16.mxu0 0
        %2695 = vmatpush1.bf16.msra.mxu0 %v2677
        %2696 = vmatprep.subr.bf16.mxu0 0
        %2697 = vmatpush1.bf16.msra.mxu0 %v2678
        %2698 = vmatprep.subr.bf16.mxu0 0
        %2699 = vmatpush1.bf16.msra.mxu0 %v2679
        %2700 = vmatprep.subr.bf16.mxu0 0
        %2701 = vmatpush1.bf16.msra.mxu0 %v2680
        %2702 = vmatprep.subr.bf16.mxu0 0
        %2703 = vmatpush1.bf16.msra.mxu0 %v2681
        %2704 = vmatprep.subr.bf16.mxu0 0
        %2705 = vmatpush1.bf16.msra.mxu0 %v2682
        %2706 = vmatprep.subr.bf16.mxu0 0
        %2707 = vmatpush1.bf16.msra.mxu0 %v2683
        %2708 = vmatprep.subr.bf16.mxu0 0
        %2709 = vmatpush1.bf16.msra.mxu0 0
        %2710 = vmatprep.subr.bf16.mxu0 0
        %2711 = vmatpush1.bf16.msra.mxu0 0
        %2712 = vmatprep.subr.bf16.mxu0 0
        %2713 = vmatpush1.bf16.msra.mxu0 0
        %2714 = vmatprep.subr.bf16.mxu0 0
        %2715 = vmatpush1.bf16.msra.mxu0 0
        %2716 = vmatprep.subr.bf16.mxu0 0
        %2717 = vmatpush1.bf16.msra.mxu0 0
        %2718 = vmatprep.subr.bf16.mxu0 0
        %2719 = vmatpush1.bf16.msra.mxu0 0
        %2720 = vmatprep.subr.bf16.mxu0 0
        %2721 = vmatpush1.bf16.msra.mxu0 0
        %2722 = vmatprep.subr.bf16.mxu0 0
        %2723 = vmatpush1.bf16.msra.mxu0 0
        %2724 = vmatprep.mubr.bf16.mxu0 0
        %2725 = vmatmul.mubr.bf16.gmra.mrb[0].mxu0 %v2602
        %v2726 = vpop.f32.mrb[0].mxu0
        %v2727 = vadd.f32 0.0, %v2726
        %v2728 = vpop.f32.mrb[0].mxu0
        %v2729 = vpop.f32.mrb[0].mxu0
        %v2730 = vadd.f32 0.0, %v2729
        %v2731 = vpop.f32.mrb[0].mxu0
        %2732 = vdwg.mxu0
        %v2749 = vunpack.c.l.b16 %v2611
        %v2750 = vunpack.c.l.b16 %v2612
        %v2751 = vunpack.c.l.b16 %v2613
        %v2752 = vunpack.c.l.b16 %v2614
        %v2753 = vunpack.c.l.b16 %v2615
        %v2754 = vunpack.c.l.b16 %v2616
        %v2755 = vunpack.c.l.b16 %v2617
        %v2756 = vunpack.c.l.b16 %v2618
        %v2757 = vunpack.c.l.b16 %v2619
        %v2758 = vunpack.c.l.b16 %v2620
        %v2759 = vunpack.c.l.b16 %v2621
        %v2760 = vunpack.c.l.b16 %v2622
        %v2761 = vunpack.c.l.b16 %v2623
        %v2762 = vunpack.c.l.b16 %v2624
        %v2763 = vunpack.c.l.b16 %v2625
        %v2764 = vunpack.c.l.b16 %v2626
        %v2765 = vpack.c.b16 %v2750, %v2749
        %v2766 = vpack.c.b16 %v2752, %v2751
        %v2767 = vpack.c.b16 %v2754, %v2753
        %v2768 = vpack.c.b16 %v2756, %v2755
        %v2769 = vpack.c.b16 %v2758, %v2757
        %v2770 = vpack.c.b16 %v2760, %v2759
        %v2771 = vpack.c.b16 %v2762, %v2761
        %v2772 = vpack.c.b16 %v2764, %v2763
        %2781 = vmatprep.subr.bf16.mxu0 0
        %2782 = vmatpush1.bf16.msra.mxu0 %v2765
        %2783 = vmatprep.subr.bf16.mxu0 0
        %2784 = vmatpush1.bf16.msra.mxu0 %v2766
        %2785 = vmatprep.subr.bf16.mxu0 0
        %2786 = vmatpush1.bf16.msra.mxu0 %v2767
        %2787 = vmatprep.subr.bf16.mxu0 0
        %2788 = vmatpush1.bf16.msra.mxu0 %v2768
        %2789 = vmatprep.subr.bf16.mxu0 0
        %2790 = vmatpush1.bf16.msra.mxu0 %v2769
        %2791 = vmatprep.subr.bf16.mxu0 0
        %2792 = vmatpush1.bf16.msra.mxu0 %v2770
        %2793 = vmatprep.subr.bf16.mxu0 0
        %2794 = vmatpush1.bf16.msra.mxu0 %v2771
        %2795 = vmatprep.subr.bf16.mxu0 0
        %2796 = vmatpush1.bf16.msra.mxu0 %v2772
        %2797 = vmatprep.subr.bf16.mxu0 0
        %2798 = vmatpush1.bf16.msra.mxu0 0
        %2799 = vmatprep.subr.bf16.mxu0 0
        %2800 = vmatpush1.bf16.msra.mxu0 0
        %2801 = vmatprep.subr.bf16.mxu0 0
        %2802 = vmatpush1.bf16.msra.mxu0 0
        %2803 = vmatprep.subr.bf16.mxu0 0
        %2804 = vmatpush1.bf16.msra.mxu0 0
        %2805 = vmatprep.subr.bf16.mxu0 0
        %2806 = vmatpush1.bf16.msra.mxu0 0
        %2807 = vmatprep.subr.bf16.mxu0 0
        %2808 = vmatpush1.bf16.msra.mxu0 0
        %2809 = vmatprep.subr.bf16.mxu0 0
        %2810 = vmatpush1.bf16.msra.mxu0 0
        %2811 = vmatprep.subr.bf16.mxu0 0
        %2812 = vmatpush1.bf16.msra.mxu0 0
        %2813 = vmatprep.mubr.bf16.mxu0 0
        %2814 = vmatmul.mubr.bf16.gmra.mrb[0].mxu0 %v2610
        %v2815 = vpop.f32.mrb[0].mxu0
        %v2816 = vadd.f32 %v2727, %v2815
        %v2817 = vpop.f32.mrb[0].mxu0
        %v2818 = vpop.f32.mrb[0].mxu0
        %v2819 = vadd.f32 %v2730, %v2818
        %v2820 = vpop.f32.mrb[0].mxu0
        %2821 = vdwg.mxu0
        %v2822 = vpack.c.bf16 %v2609, %v2608
        %s2823 = scalar_lea.vmem [#allocation12], 128
        %v2824 = vld [vmem:[%s2823] sm:$0xf]
        %v2825 = vld [vmem:[%s2823 + $0x4] sm:$0xf]
        %v2826 = vld [vmem:[%s2823 + $0x8] sm:$0xf]
        %v2827 = vld [vmem:[%s2823 + $0xc] sm:$0xf]
        %v2828 = vld [vmem:[%s2823 + $0x10] sm:$0xf]
        %v2829 = vld [vmem:[%s2823 + $0x14] sm:$0xf]
        %v2830 = vld [vmem:[%s2823 + $0x18] sm:$0xf]
        %v2831 = vld [vmem:[%s2823 + $0x1c] sm:$0xf]
        %v2832 = vld [vmem:[%s2823 + $0x20] sm:$0xf]
        %v2833 = vld [vmem:[%s2823 + $0x24] sm:$0xf]
        %v2834 = vld [vmem:[%s2823 + $0x28] sm:$0xf]
        %v2835 = vld [vmem:[%s2823 + $0x2c] sm:$0xf]
        %v2836 = vld [vmem:[%s2823 + $0x30] sm:$0xf]
        %v2837 = vld [vmem:[%s2823 + $0x34] sm:$0xf]
        %v2838 = vld [vmem:[%s2823 + $0x38] sm:$0xf]
        %v2839 = vld [vmem:[%s2823 + $0x3c] sm:$0xf]
        %v2856 = vunpack.c.l.b16 %v2824
        %v2857 = vunpack.c.l.b16 %v2825
        %v2858 = vunpack.c.l.b16 %v2826
        %v2859 = vunpack.c.l.b16 %v2827
        %v2860 = vunpack.c.l.b16 %v2828
        %v2861 = vunpack.c.l.b16 %v2829
        %v2862 = vunpack.c.l.b16 %v2830
        %v2863 = vunpack.c.l.b16 %v2831
        %v2864 = vunpack.c.l.b16 %v2832
        %v2865 = vunpack.c.l.b16 %v2833
        %v2866 = vunpack.c.l.b16 %v2834
        %v2867 = vunpack.c.l.b16 %v2835
        %v2868 = vunpack.c.l.b16 %v2836
        %v2869 = vunpack.c.l.b16 %v2837
        %v2870 = vunpack.c.l.b16 %v2838
        %v2871 = vunpack.c.l.b16 %v2839
        %v2872 = vpack.c.b16 %v2857, %v2856
        %v2873 = vpack.c.b16 %v2859, %v2858
        %v2874 = vpack.c.b16 %v2861, %v2860
        %v2875 = vpack.c.b16 %v2863, %v2862
        %v2876 = vpack.c.b16 %v2865, %v2864
        %v2877 = vpack.c.b16 %v2867, %v2866
        %v2878 = vpack.c.b16 %v2869, %v2868
        %v2879 = vpack.c.b16 %v2871, %v2870
        %2888 = vmatprep.subr.bf16.mxu0 0
        %2889 = vmatpush1.bf16.msra.mxu0 %v2872
        %2890 = vmatprep.subr.bf16.mxu0 0
        %2891 = vmatpush1.bf16.msra.mxu0 %v2873
        %2892 = vmatprep.subr.bf16.mxu0 0
        %2893 = vmatpush1.bf16.msra.mxu0 %v2874
        %2894 = vmatprep.subr.bf16.mxu0 0
        %2895 = vmatpush1.bf16.msra.mxu0 %v2875
        %2896 = vmatprep.subr.bf16.mxu0 0
        %2897 = vmatpush1.bf16.msra.mxu0 %v2876
        %2898 = vmatprep.subr.bf16.mxu0 0
        %2899 = vmatpush1.bf16.msra.mxu0 %v2877
        %2900 = vmatprep.subr.bf16.mxu0 0
        %2901 = vmatpush1.bf16.msra.mxu0 %v2878
        %2902 = vmatprep.subr.bf16.mxu0 0
        %2903 = vmatpush1.bf16.msra.mxu0 %v2879
        %2904 = vmatprep.subr.bf16.mxu0 0
        %2905 = vmatpush1.bf16.msra.mxu0 0
        %2906 = vmatprep.subr.bf16.mxu0 0
        %2907 = vmatpush1.bf16.msra.mxu0 0
        %2908 = vmatprep.subr.bf16.mxu0 0
        %2909 = vmatpush1.bf16.msra.mxu0 0
        %2910 = vmatprep.subr.bf16.mxu0 0
        %2911 = vmatpush1.bf16.msra.mxu0 0
        %2912 = vmatprep.subr.bf16.mxu0 0
        %2913 = vmatpush1.bf16.msra.mxu0 0
        %2914 = vmatprep.subr.bf16.mxu0 0
        %2915 = vmatpush1.bf16.msra.mxu0 0
        %2916 = vmatprep.subr.bf16.mxu0 0
        %2917 = vmatpush1.bf16.msra.mxu0 0
        %2918 = vmatprep.subr.bf16.mxu0 0
        %2919 = vmatpush1.bf16.msra.mxu0 0
        %2920 = vmatprep.mubr.bf16.mxu0 0
        %2921 = vmatmul.mubr.bf16.gmra.mrb[0].mxu0 %v2822
        %v2922 = vpop.f32.mrb[0].mxu0
        %v2923 = vadd.f32 0.0, %v2922
        %v2924 = vpop.f32.mrb[0].mxu0
        %v2925 = vpop.f32.mrb[0].mxu0
        %v2926 = vadd.f32 0.0, %v2925
        %v2927 = vpop.f32.mrb[0].mxu0
        %2928 = vdwg.mxu0
        %v2929 = vadd.f32 %v2816, %v2923
        %v2930 = vadd.f32 %v2819, %v2926
        %v2931 = vld [vmem:[%s14] sm:$0x1]
        %v2933 = vlaneseq
        %v2934 = vshrl.u32 %v2933, 7
        %v2935 = vsub.s32 0, %v2934
        %v2936 = vrot.slane %v2931, %v2935
        %v2938 = vadd.f32 %v2929, %v2936
        %v2939 = vadd.f32 %v2930, %v2936
        %v2940 = vadd.f32 %v2938, %v2241
        %v2941 = vadd.f32 %v2939, %v2244
        %v2942 = vmax.f32 %v2940, %v2941
        %v2943 = vrot.slane %v2942, 4
        %v2944 = vmax.f32 %v2942, %v2943
        %v2945 = vrot.slane %v2944, 2
        %v2946 = vmax.f32 %v2944, %v2945
        %v2947 = vrot.slane %v2946, 1
        %v2948 = vmax.f32 %v2946, %v2947
        %v2949 = vmul.f32 %v2948, %v2948
        %2950 = vadd.xlane.f32.xlu0 %v2949
        %v2951 = vpop.xlane.xlu0 %2950
        %v2952 = vmax.f32 %v2951, 1e-24
        %v2953 = vrsqrt.pop %v2952
        %v2954 = vmul.f32 %v2948, %v2953
        %2955 = vst [vmem:[%s628] sm:$0x1] %v2954
        %s2956 = sand.u32 %s405, 1
        %s2957 = scalar_lea.sflag [#allocation5], %s2956
        %s2958 = sand.u32 %s405, 1
        %s2959 = scalar_lea.vmem [#allocation14], %s2958
        // Predicated region
        $region113: #{tpu_custom_call.1} parent=87 // pred_check
          %p2960 = pneg %p415
        $region114: #{tpu_custom_call.1} parent=87 // pred_check_branch
          %2962 = sbr.rel (%p2960) target = $region116
        $region115: #{tpu_custom_call.1} parent=87 // pred_region
          %s2964 = ssub.s32 16, 16
          %2965 = vsyncadd %s2957, %s2964
          %s2966 = smul.addr %s35, 16
          %s2967 = scalar_lea.hbm %s17, %s2966
          %s2969 = sshll.u32 %s2959, 4
          %s2970 = int_to_ptr.vmem [resolvable:$true] %s2969
          %2972 = dma.vmem_to_hbm [thread:$0]  %s2970, 16, %s2967, %s2957
        $region116: #{tpu_custom_call.1} parent=87 // pred_fallthru
          _
      $region88: #{tpu_custom_call.1} parent=5 // pred_fallthru
        _
      %p2973 = scmp.le.s32.totalorder 2, %s30
      // Predicated region
      $region117: #{tpu_custom_call.1} parent=5 // pred_check
        %p2974 = pneg %p2973
      $region118: #{tpu_custom_call.1} parent=5 // pred_check_branch
        %2976 = sbr.rel (%p2974) target = $region120
      $region119: #{tpu_custom_call.1} parent=5 // pred_region
        %s2977 = ssub.s32 %s30, 2
        // Predicated region
        $region121: #{tpu_custom_call.1} parent=119 // pred_check
          %p2978 = pneg %p421
        $region122: #{tpu_custom_call.1} parent=119 // pred_check_branch
          %2980 = sbr.rel (%p2978) target = $region124
        $region123: #{tpu_custom_call.1} parent=119 // pred_region
          %s2981 = sand.u32 %s406, 1
          %s2982 = scalar_lea.sflag [#allocation5], %s2981
          %s2983 = sand.u32 %s406, 1
          %s2984 = scalar_lea.vmem [#allocation14], %s2983
          %2985 = dma.done %s2982, 16
        $region124: #{tpu_custom_call.1} parent=119 // pred_fallthru
          _
      $region120: #{tpu_custom_call.1} parent=5 // pred_fallthru
        _
    $region6: #{tpu_custom_call.1} parent=1 // loop_footer
      %s34 = sadd.s32 1, %s30
    $region7: #{tpu_custom_call.1} parent=1 // loop_footer_branch
      %29 = sbr.rel target = $region3
    $region8: #{tpu_custom_call.1} parent=1 // loop_exit
      _
    %2986 = vsyncpa [#allocation4], 1
    %s2987 = scalar_lea.sflag [#allocation4], 1
    %2988 = vsyncpa %s2987, 1
    %2989 = vsyncpa [#allocation7], 1
    %2990 = vsyncpa [#allocation10], 1
    %2991 = vsyncpa [#allocation13], 1
    %2992 = vsyncpa [#allocation5], 1
    %s2993 = scalar_lea.sflag [#allocation5], 1
    %2994 = vsyncpa %s2993, 1

// kernel: tpu_custom_call.1
$region0: #{tpu_custom_call.1}
  #allocation0 [shape = 'u32[]', space=smem, size = 0x4, offset = 0x4, fixed_abs, tag = 'smem constant byte address 0x4 - core index']
  #allocation1 [shape = 'u32[144,128]{1,0:T(1,128)}', space=vmem, size = 0x12000, scoped, tag = 'internal scratch']
  #allocation2 [shape = 'f32[1,32,128]{2,1,0:T(8,128)}', space=vmem, size = 0x4000, scoped, tag = 'scratch operand']
  %s0 = inlined_call_operand.vmem [shape: f32[2,16,4], index: 0, kind: input, shape index: {}]
  %s1 = inlined_call_operand.vmem [shape: f32[4,128], index: 1, kind: input, shape index: {}]
  %s2 = inlined_call_operand.vmem [shape: f32[1,128], index: 2, kind: input, shape index: {}]
  %s3 = inlined_call_operand.hbm [shape: bf16[3,128,128], index: 3, kind: input, shape index: {}]
  %s4 = inlined_call_operand.vmem [shape: f32[1,128], index: 4, kind: input, shape index: {}]
  %s5 = inlined_call_operand.hbm [shape: bf16[3,128,128], index: 5, kind: input, shape index: {}]
  %s6 = inlined_call_operand.vmem [shape: f32[1,128], index: 6, kind: input, shape index: {}]
  %s7 = inlined_call_operand.hbm [shape: bf16[3,128,128], index: 7, kind: input, shape index: {}]
  %s8 = inlined_call_operand.vmem [shape: f32[1,128], index: 8, kind: input, shape index: {}]
  %s9 = inlined_call_operand.hbm [shape: bf16[3,128,128], index: 9, kind: input, shape index: {}]
  %s10 = inlined_call_operand.vmem [shape: f32[1,128], index: 10, kind: input, shape index: {}]
  %s11 = inlined_call_operand.hbm [shape: bf16[3,128,128], index: 11, kind: input, shape index: {}]
  %s12 = inlined_call_operand.vmem [shape: f32[1,128], index: 12, kind: input, shape index: {}]
  %s13 = inlined_call_operand.hbm [shape: bf16[3,128,128], index: 13, kind: input, shape index: {}]
  %s14 = inlined_call_operand.vmem [shape: f32[1,128], index: 14, kind: input, shape index: {}]
  %s15 = inlined_call_operand.vmem [shape: bf16[128,128], index: 15, kind: input, shape index: {}]
  %s16 = inlined_call_operand.vmem [shape: f32[1,128], index: 16, kind: input, shape index: {}]
  %s17 = inlined_call_operand.hbm [shape: f32[2,1,128], index: 17, kind: output, shape index: {}]
  %s18 = sld [smem:[#allocation0]]
  $region125: #{tpu_custom_call.1} parent=0
    _
  %s20 = ssub.s32 1, %s18
  %s21 = scalar_select 0, %s20, %s18
  $region1: #{tpu_custom_call.1} parent=0
    #allocation3 [shape = 'u8[98304]{0}', space=vmem, size = 0x18000, scoped, tag = 'input window, operand 3, single buffered']
    #allocation4 [shape = 's32[2]{0}', space=sflag, size = 0x8, scoped, tag = 'scoped memory for tpu_custom_call.1']
    #allocation5 [shape = 's32[2]{0}', space=sflag, size = 0x8, scoped, tag = 'scoped memory for tpu_custom_call.1']
    #allocation6 [shape = 'u8[98304]{0}', space=vmem, size = 0x18000, scoped, tag = 'input window, operand 5, single buffered']
    #allocation7 [shape = 's32[1]{0}', space=sflag, size = 0x4, scoped, tag = 'scoped memory for tpu_custom_call.1']
    #allocation8 [shape = 'u8[98304]{0}', space=vmem, size = 0x18000, scoped, tag = 'input window, operand 7, single buffered']
    #allocation9 [shape = 'u8[98304]{0}', space=vmem, size = 0x18000, scoped, tag = 'input window, operand 9, single buffered']
    #allocation10 [shape = 's32[1]{0}', space=sflag, size = 0x4, scoped, tag = 'scoped memory for tpu_custom_call.1']
    #allocation11 [shape = 'u8[98304]{0}', space=vmem, size = 0x18000, scoped, tag = 'input window, operand 11, single buffered']
    #allocation12 [shape = 'u8[98304]{0}', space=vmem, size = 0x18000, scoped, tag = 'input window, operand 13, single buffered']
    #allocation13 [shape = 's32[1]{0}', space=sflag, size = 0x4, scoped, tag = 'scoped memory for tpu_custom_call.1']
    #allocation14 [shape = 'u8[1024]{0}', space=vmem, size = 0x400, scoped, tag = 'output window, operand 0']
    %22 = vsyncpa [#allocation4], 0
    %23 = vsyncpa [#allocation7], 0
    %24 = vsyncpa [#allocation10], 0
    %25 = vsyncpa [#allocation13], 0
    %26 = vsyncpa [#allocation5], 0
    %s27 = scalar_lea.sflag [#allocation5], 1
    %28 = vsyncpa %s27, 0
    loop: start=0, step=1, limit=4
    $region2: #{tpu_custom_call.1} parent=1 // loop_pre_header
      _
    $region3: #{tpu_custom_call.1} parent=1 // loop_header
      %s30 = sphi 0, %s34
      %p31 = scmp.ge.s32.totalorder %s30, 4
      %s40 = sphi 0, %s42
      %s43 = sphi 0, %s40
      %s44 = sphi 0, %s43
      %s60 = sphi 0, %s44
      %s64 = sphi 0, %s64
      %s66 = sphi 0, %s64
      %s67 = sphi 0, %s66
      %s81 = sphi 0, %s67
      %s85 = sphi 0, %s85
      %s87 = sphi 0, %s85
      %s88 = sphi 0, %s87
      %s102 = sphi 0, %s88
      %s106 = sphi 0, %s106
      %s108 = sphi 0, %s106
      %s109 = sphi 0, %s108
      %s123 = sphi 0, %s109
      %s127 = sphi 0, %s127
      %s129 = sphi 0, %s127
      %s130 = sphi 0, %s129
      %s144 = sphi 0, %s130
      %s148 = sphi 0, %s148
      %s150 = sphi 0, %s148
      %s151 = sphi 0, %s150
      %s165 = sphi 0, %s151
      %s169 = sphi 0, %s169
      %s171 = sphi 0, %s169
      %s172 = sphi 0, %s171
      %s186 = sphi 0, %s172
      %s190 = sphi 0, %s190
      %s192 = sphi 0, %s190
      %s193 = sphi 0, %s192
      %s207 = sphi 0, %s193
      %s211 = sphi 0, %s211
      %s213 = sphi 0, %s211
      %s214 = sphi 0, %s213
      %s228 = sphi 0, %s214
      %s232 = sphi 0, %s232
      %s234 = sphi 0, %s232
      %s235 = sphi 0, %s234
      %s249 = sphi 0, %s235
      %s253 = sphi 0, %s253
      %s255 = sphi 0, %s253
      %s256 = sphi 0, %s255
      %s270 = sphi 0, %s256
      %s274 = sphi 0, %s274
      %s276 = sphi 0, %s274
      %s277 = sphi 0, %s276
      %s291 = sphi 0, %s277
      %s295 = sphi 0, %s295
      %s297 = sphi 0, %s295
      %s298 = sphi 0, %s297
      %s312 = sphi 0, %s298
      %s316 = sphi 0, %s316
      %s318 = sphi 0, %s316
      %s319 = sphi 0, %s318
      %s333 = sphi 0, %s319
      %s337 = sphi 0, %s337
      %s339 = sphi 0, %s337
      %s340 = sphi 0, %s339
      %s354 = sphi 0, %s340
      %s358 = sphi 0, %s358
      %s360 = sphi 0, %s358
      %s361 = sphi 0, %s360
      %s375 = sphi 0, %s361
      %s379 = sphi 0, %s379
      %s381 = sphi 0, %s379
      %s382 = sphi 0, %s381
      %s396 = sphi 0, %s382
      %s402 = sphi 0, %s404
      %s405 = sphi 0, %s402
      %s406 = sphi 0, %s405
      %s422 = sphi 0, %s406
    $region4: #{tpu_custom_call.1} parent=1 // loop_header_branch
      %33 = sbr.rel (%p31) target = $region8
    $region5: #{tpu_custom_call.1} parent=1 // loop_body
      %s35 = ssub.s32 %s30, 1
      %s36 = ssub.s32 %s30, 2
      %s37 = sadd.s32 %s30, 1
      %s38 = ssub.s32 %s30, %s37
      %p39 = scmp.eq.s32.totalorder %s38, 0
      %s41 = sadd.s32 %s40, 1
      %s42 = scalar_select %p39, %s40, %s41
      %p45 = pneg %p39
      %p46 = scmp.eq.s32.totalorder %s30, 1
      %p47 = por %p45, %p46
      %p48 = scmp.ne.s32.totalorder %s40, %s43
      %p49 = scmp.eq.s32.totalorder %s30, 0
      %p50 = por %p48, %p49
      %p51 = scmp.ne.s32.totalorder %s40, %s43
      %p52 = scmp.eq.s32.totalorder %s35, 1
      %p53 = por %p51, %p52
      %p54 = scmp.ne.s32.totalorder %s43, %s44
      %p55 = scmp.eq.s32.totalorder %s35, 0
      %p56 = por %p54, %p55
      %p57 = scmp.ne.s32.totalorder %s43, %s44
      %p58 = scmp.eq.s32.totalorder %s36, 1
      %p59 = por %p57, %p58
      %p61 = scmp.ne.s32.totalorder %s44, %s60
      %p62 = scmp.eq.s32.totalorder %s36, 0
      %p63 = por %p61, %p62
      %s65 = sadd.s32 %s64, 1
      %p68 = scmp.eq.s32.totalorder %s30, 1
      %p69 = scmp.ne.s32.totalorder %s64, %s66
      %p70 = scmp.eq.s32.totalorder %s30, 0
      %p71 = por %p69, %p70
      %p72 = scmp.ne.s32.totalorder %s64, %s66
      %p73 = scmp.eq.s32.totalorder %s35, 1
      %p74 = por %p72, %p73
      %p75 = scmp.ne.s32.totalorder %s66, %s67
      %p76 = scmp.eq.s32.totalorder %s35, 0
      %p77 = por %p75, %p76
      %p78 = scmp.ne.s32.totalorder %s66, %s67
      %p79 = scmp.eq.s32.totalorder %s36, 1
      %p80 = por %p78, %p79
      %p82 = scmp.ne.s32.totalorder %s67, %s81
      %p83 = scmp.eq.s32.totalorder %s36, 0
      %p84 = por %p82, %p83
      %s86 = sadd.s32 %s85, 1
      %p89 = scmp.eq.s32.totalorder %s30, 1
      %p90 = scmp.ne.s32.totalorder %s85, %s87
      %p91 = scmp.eq.s32.totalorder %s30, 0
      %p92 = por %p90, %p91
      %p93 = scmp.ne.s32.totalorder %s85, %s87
      %p94 = scmp.eq.s32.totalorder %s35, 1
      %p95 = por %p93, %p94
      %p96 = scmp.ne.s32.totalorder %s87, %s88
      %p97 = scmp.eq.s32.totalorder %s35, 0
      %p98 = por %p96, %p97
      %p99 = scmp.ne.s32.totalorder %s87, %s88
      %p100 = scmp.eq.s32.totalorder %s36, 1
      %p101 = por %p99, %p100
      %p103 = scmp.ne.s32.totalorder %s88, %s102
      %p104 = scmp.eq.s32.totalorder %s36, 0
      %p105 = por %p103, %p104
      %s107 = sadd.s32 %s106, 1
      %p110 = scmp.eq.s32.totalorder %s30, 1
      %p111 = scmp.ne.s32.totalorder %s106, %s108
      %p112 = scmp.eq.s32.totalorder %s30, 0
      %p113 = por %p111, %p112
      %p114 = scmp.ne.s32.totalorder %s106, %s108
      %p115 = scmp.eq.s32.totalorder %s35, 1
      %p116 = por %p114, %p115
      %p117 = scmp.ne.s32.totalorder %s108, %s109
      %p118 = scmp.eq.s32.totalorder %s35, 0
      %p119 = por %p117, %p118
      %p120 = scmp.ne.s32.totalorder %s108, %s109
      %p121 = scmp.eq.s32.totalorder %s36, 1
      %p122 = por %p120, %p121
      %p124 = scmp.ne.s32.totalorder %s109, %s123
      %p125 = scmp.eq.s32.totalorder %s36, 0
      %p126 = por %p124, %p125
      %s128 = sadd.s32 %s127, 1
      %p131 = scmp.eq.s32.totalorder %s30, 1
      %p132 = scmp.ne.s32.totalorder %s127, %s129
      %p133 = scmp.eq.s32.totalorder %s30, 0
      %p134 = por %p132, %p133
      %p135 = scmp.ne.s32.totalorder %s127, %s129
      %p136 = scmp.eq.s32.totalorder %s35, 1
      %p137 = por %p135, %p136
      %p138 = scmp.ne.s32.totalorder %s129, %s130
      %p139 = scmp.eq.s32.totalorder %s35, 0
      %p140 = por %p138, %p139
      %p141 = scmp.ne.s32.totalorder %s129, %s130
      %p142 = scmp.eq.s32.totalorder %s36, 1
      %p143 = por %p141, %p142
      %p145 = scmp.ne.s32.totalorder %s130, %s144
      %p146 = scmp.eq.s32.totalorder %s36, 0
      %p147 = por %p145, %p146
      %s149 = sadd.s32 %s148, 1
      %p152 = scmp.eq.s32.totalorder %s30, 1
      %p153 = scmp.ne.s32.totalorder %s148, %s150
      %p154 = scmp.eq.s32.totalorder %s30, 0
      %p155 = por %p153, %p154
      %p156 = scmp.ne.s32.totalorder %s148, %s150
      %p157 = scmp.eq.s32.totalorder %s35, 1
      %p158 = por %p156, %p157
      %p159 = scmp.ne.s32.totalorder %s150, %s151
      %p160 = scmp.eq.s32.totalorder %s35, 0
      %p161 = por %p159, %p160
      %p162 = scmp.ne.s32.totalorder %s150, %s151
      %p163 = scmp.eq.s32.totalorder %s36, 1
      %p164 = por %p162, %p163
      %p166 = scmp.ne.s32.totalorder %s151, %s165
      %p167 = scmp.eq.s32.totalorder %s36, 0
      %p168 = por %p166, %p167
      %s170 = sadd.s32 %s169, 1
      %p173 = scmp.eq.s32.totalorder %s30, 1
      %p174 = scmp.ne.s32.totalorder %s169, %s171
      %p175 = scmp.eq.s32.totalorder %s30, 0
      %p176 = por %p174, %p175
      %p177 = scmp.ne.s32.totalorder %s169, %s171
      %p178 = scmp.eq.s32.totalorder %s35, 1
      %p179 = por %p177, %p178
      %p180 = scmp.ne.s32.totalorder %s171, %s172
      %p181 = scmp.eq.s32.totalorder %s35, 0
      %p182 = por %p180, %p181
      %p183 = scmp.ne.s32.totalorder %s171, %s172
      %p184 = scmp.eq.s32.totalorder %s36, 1
      %p185 = por %p183, %p184
      %p187 = scmp.ne.s32.totalorder %s172, %s186
      %p188 = scmp.eq.s32.totalorder %s36, 0
      %p189 = por %p187, %p188
      %s191 = sadd.s32 %s190, 1
      %p194 = scmp.eq.s32.totalorder %s30, 1
      %p195 = scmp.ne.s32.totalorder %s190, %s192
      %p196 = scmp.eq.s32.totalorder %s30, 0
      %p197 = por %p195, %p196
      %p198 = scmp.ne.s32.totalorder %s190, %s192
      %p199 = scmp.eq.s32.totalorder %s35, 1
      %p200 = por %p198, %p199
      %p201 = scmp.ne.s32.totalorder %s192, %s193
      %p202 = scmp.eq.s32.totalorder %s35, 0
      %p203 = por %p201, %p202
      %p204 = scmp.ne.s32.totalorder %s192, %s193
      %p205 = scmp.eq.s32.totalorder %s36, 1
      %p206 = por %p204, %p205
      %p208 = scmp.ne.s32.totalorder %s193, %s207
      %p209 = scmp.eq.s32.totalorder %s36, 0
      %p210 = por %p208, %p209
      %s212 = sadd.s32 %s211, 1
      %p215 = scmp.eq.s32.totalorder %s30, 1
      %p216 = scmp.ne.s32.totalorder %s211, %s213
      %p217 = scmp.eq.s32.totalorder %s30, 0
      %p218 = por %p216, %p217
      %p219 = scmp.ne.s32.totalorder %s211, %s213
      %p220 = scmp.eq.s32.totalorder %s35, 1
      %p221 = por %p219, %p220
      %p222 = scmp.ne.s32.totalorder %s213, %s214
      %p223 = scmp.eq.s32.totalorder %s35, 0
      %p224 = por %p222, %p223
      %p225 = scmp.ne.s32.totalorder %s213, %s214
      %p226 = scmp.eq.s32.totalorder %s36, 1
      %p227 = por %p225, %p226
      %p229 = scmp.ne.s32.totalorder %s214, %s228
      %p230 = scmp.eq.s32.totalorder %s36, 0
      %p231 = por %p229, %p230
      %s233 = sadd.s32 %s232, 1
      %p236 = scmp.eq.s32.totalorder %s30, 1
      %p237 = scmp.ne.s32.totalorder %s232, %s234
      %p238 = scmp.eq.s32.totalorder %s30, 0
      %p239 = por %p237, %p238
      %p240 = scmp.ne.s32.totalorder %s232, %s234
      %p241 = scmp.eq.s32.totalorder %s35, 1
      %p242 = por %p240, %p241
      %p243 = scmp.ne.s32.totalorder %s234, %s235
      %p244 = scmp.eq.s32.totalorder %s35, 0
      %p245 = por %p243, %p244
      %p246 = scmp.ne.s32.totalorder %s234, %s235
      %p247 = scmp.eq.s32.totalorder %s36, 1
      %p248 = por %p246, %p247
      %p250 = scmp.ne.s32.totalorder %s235, %s249
      %p251 = scmp.eq.s32.totalorder %s36, 0
      %p252 = por %p250, %p251
      %s254 = sadd.s32 %s253, 1
      %p257 = scmp.eq.s32.totalorder %s30, 1
      %p258 = scmp.ne.s32.totalorder %s253, %s255
      %p259 = scmp.eq.s32.totalorder %s30, 0
      %p260 = por %p258, %p259
      %p261 = scmp.ne.s32.totalorder %s253, %s255
      %p262 = scmp.eq.s32.totalorder %s35, 1
      %p263 = por %p261, %p262
      %p264 = scmp.ne.s32.totalorder %s255, %s256
      %p265 = scmp.eq.s32.totalorder %s35, 0
      %p266 = por %p264, %p265
      %p267 = scmp.ne.s32.totalorder %s255, %s256
      %p268 = scmp.eq.s32.totalorder %s36, 1
      %p269 = por %p267, %p268
      %p271 = scmp.ne.s32.totalorder %s256, %s270
      %p272 = scmp.eq.s32.totalorder %s36, 0
      %p273 = por %p271, %p272
      %s275 = sadd.s32 %s274, 1
      %p278 = scmp.eq.s32.totalorder %s30, 1
      %p279 = scmp.ne.s32.totalorder %s274, %s276
      %p280 = scmp.eq.s32.totalorder %s30, 0
      %p281 = por %p279, %p280
      %p282 = scmp.ne.s32.totalorder %s274, %s276
      %p283 = scmp.eq.s32.totalorder %s35, 1
      %p284 = por %p282, %p283
      %p285 = scmp.ne.s32.totalorder %s276, %s277
      %p286 = scmp.eq.s32.totalorder %s35, 0
      %p287 = por %p285, %p286
      %p288 = scmp.ne.s32.totalorder %s276, %s277
      %p289 = scmp.eq.s32.totalorder %s36, 1
      %p290 = por %p288, %p289
      %p292 = scmp.ne.s32.totalorder %s277, %s291
      %p293 = scmp.eq.s32.totalorder %s36, 0
      %p294 = por %p292, %p293
      %s296 = sadd.s32 %s295, 1
      %p299 = scmp.eq.s32.totalorder %s30, 1
      %p300 = scmp.ne.s32.totalorder %s295, %s297
      %p301 = scmp.eq.s32.totalorder %s30, 0
      %p302 = por %p300, %p301
      %p303 = scmp.ne.s32.totalorder %s295, %s297
      %p304 = scmp.eq.s32.totalorder %s35, 1
      %p305 = por %p303, %p304
      %p306 = scmp.ne.s32.totalorder %s297, %s298
      %p307 = scmp.eq.s32.totalorder %s35, 0
      %p308 = por %p306, %p307
      %p309 = scmp.ne.s32.totalorder %s297, %s298
      %p310 = scmp.eq.s32.totalorder %s36, 1
      %p311 = por %p309, %p310
      %p313 = scmp.ne.s32.totalorder %s298, %s312
      %p314 = scmp.eq.s32.totalorder %s36, 0
      %p315 = por %p313, %p314
      %s317 = sadd.s32 %s316, 1
      %p320 = scmp.eq.s32.totalorder %s30, 1
      %p321 = scmp.ne.s32.totalorder %s316, %s318
      %p322 = scmp.eq.s32.totalorder %s30, 0
      %p323 = por %p321, %p322
      %p324 = scmp.ne.s32.totalorder %s316, %s318
      %p325 = scmp.eq.s32.totalorder %s35, 1
      %p326 = por %p324, %p325
      %p327 = scmp.ne.s32.totalorder %s318, %s319
      %p328 = scmp.eq.s32.totalorder %s35, 0
      %p329 = por %p327, %p328
      %p330 = scmp.ne.s32.totalorder %s318, %s319
      %p331 = scmp.eq.s32.totalorder %s36, 1
      %p332 = por %p330, %p331
      %p334 = scmp.ne.s32.totalorder %s319, %s333
      %p335 = scmp.eq.s32.totalorder %s36, 0
      %p336 = por %p334, %p335
      %s338 = sadd.s32 %s337, 1
      %p341 = scmp.eq.s32.totalorder %s30, 1
      %p342 = scmp.ne.s32.totalorder %s337, %s339
      %p343 = scmp.eq.s32.totalorder %s30, 0
      %p344 = por %p342, %p343
      %p345 = scmp.ne.s32.totalorder %s337, %s339
      %p346 = scmp.eq.s32.totalorder %s35, 1
      %p347 = por %p345, %p346
      %p348 = scmp.ne.s32.totalorder %s339, %s340
      %p349 = scmp.eq.s32.totalorder %s35, 0
      %p350 = por %p348, %p349
      %p351 = scmp.ne.s32.totalorder %s339, %s340
      %p352 = scmp.eq.s32.totalorder %s36, 1
      %p353 = por %p351, %p352
      %p355 = scmp.ne.s32.totalorder %s340, %s354
      %p356 = scmp.eq.s32.totalorder %s36, 0
      %p357 = por %p355, %p356
      %s359 = sadd.s32 %s358, 1
      %p362 = scmp.eq.s32.totalorder %s30, 1
      %p363 = scmp.ne.s32.totalorder %s358, %s360
      %p364 = scmp.eq.s32.totalorder %s30, 0
      %p365 = por %p363, %p364
      %p366 = scmp.ne.s32.totalorder %s358, %s360
      %p367 = scmp.eq.s32.totalorder %s35, 1
      %p368 = por %p366, %p367
      %p369 = scmp.ne.s32.totalorder %s360, %s361
      %p370 = scmp.eq.s32.totalorder %s35, 0
      %p371 = por %p369, %p370
      %p372 = scmp.ne.s32.totalorder %s360, %s361
      %p373 = scmp.eq.s32.totalorder %s36, 1
      %p374 = por %p372, %p373
      %p376 = scmp.ne.s32.totalorder %s361, %s375
      %p377 = scmp.eq.s32.totalorder %s36, 0
      %p378 = por %p376, %p377
      %s380 = sadd.s32 %s379, 1
      %p383 = scmp.eq.s32.totalorder %s30, 1
      %p384 = scmp.ne.s32.totalorder %s379, %s381
      %p385 = scmp.eq.s32.totalorder %s30, 0
      %p386 = por %p384, %p385
      %p387 = scmp.ne.s32.totalorder %s379, %s381
      %p388 = scmp.eq.s32.totalorder %s35, 1
      %p389 = por %p387, %p388
      %p390 = scmp.ne.s32.totalorder %s381, %s382
      %p391 = scmp.eq.s32.totalorder %s35, 0
      %p392 = por %p390, %p391
      %p393 = scmp.ne.s32.totalorder %s381, %s382
      %p394 = scmp.eq.s32.totalorder %s36, 1
      %p395 = por %p393, %p394
      %p397 = scmp.ne.s32.totalorder %s382, %s396
      %p398 = scmp.eq.s32.totalorder %s36, 0
      %p399 = por %p397, %p398
      %s400 = ssub.s32 %s30, %s37
      %p401 = scmp.eq.s32.totalorder %s400, 0
      %s403 = sadd.s32 %s402, 1
      %s404 = scalar_select %p401, %s402, %s403
      %p407 = pneg %p401
      %p408 = scmp.eq.s32.totalorder %s30, 1
      %p409 = por %p407, %p408
      %p410 = scmp.ne.s32.totalorder %s402, %s405
      %p411 = scmp.eq.s32.totalorder %s30, 0
      %p412 = por %p410, %p411
      %p413 = scmp.ne.s32.totalorder %s402, %s405
      %p414 = scmp.eq.s32.totalorder %s35, 1
      %p415 = por %p413, %p414
      %p416 = scmp.ne.s32.totalorder %s405, %s406
      %p417 = scmp.eq.s32.totalorder %s35, 0
      %p418 = por %p416, %p417
      %p419 = scmp.ne.s32.totalorder %s405, %s406
      %p420 = scmp.eq.s32.totalorder %s36, 1
      %p421 = por %p419, %p420
      %p423 = scmp.ne.s32.totalorder %s406, %s422
      %p424 = scmp.eq.s32.totalorder %s36, 0
      %p425 = por %p423, %p424
      %p426 = scmp.le.s32.totalorder 1, %s30
      %p427 = scmp.lt.s32.totalorder %s30, 3
      %p428 = pnand %p426, %p427
      %p429 = pneg %p428
      // Predicated region
      $region9: #{tpu_custom_call.1} parent=5 // pred_check
        _
      $region10: #{tpu_custom_call.1} parent=5 // pred_check_branch
        %431 = sbr.rel (%p428) target = $region12
      $region11: #{tpu_custom_call.1} parent=5 // pred_region
        %s432 = ssub.s32 %s30, 1
        // Predicated region
        $region13: #{tpu_custom_call.1} parent=11 // pred_check
          %p433 = pneg %p77
        $region14: #{tpu_custom_call.1} parent=11 // pred_check_branch
          %435 = sbr.rel (%p433) target = $region16
        $region15: #{tpu_custom_call.1} parent=11 // pred_region
          _
        $region16: #{tpu_custom_call.1} parent=11 // pred_fallthru
          _
        // Predicated region
        $region17: #{tpu_custom_call.1} parent=11 // pred_check
          %p436 = pneg %p98
        $region18: #{tpu_custom_call.1} parent=11 // pred_check_branch
          %438 = sbr.rel (%p436) target = $region20
        $region19: #{tpu_custom_call.1} parent=11 // pred_region
          _
        $region20: #{tpu_custom_call.1} parent=11 // pred_fallthru
          _
        // Predicated region
        $region21: #{tpu_custom_call.1} parent=11 // pred_check
          %p439 = pneg %p119
        $region22: #{tpu_custom_call.1} parent=11 // pred_check_branch
          %441 = sbr.rel (%p439) target = $region24
        $region23: #{tpu_custom_call.1} parent=11 // pred_region
          %s443 = ssub.s32 3072, 3072
          %444 = vsyncadd [#allocation4], %s443
          %s445 = sshll.u32 [#allocation3], 4
          %s446 = int_to_ptr.vmem [resolvable:$true] %s445
          %451 = dma.hbm_to_vmem [thread:$0]  %s3, 3072, %s446, [#allocation4], 64, 64, 4
        $region24: #{tpu_custom_call.1} parent=11 // pred_fallthru
          _
        // Predicated region
        $region25: #{tpu_custom_call.1} parent=11 // pred_check
          %p452 = pneg %p140
        $region26: #{tpu_custom_call.1} parent=11 // pred_check_branch
          %454 = sbr.rel (%p452) target = $region28
        $region27: #{tpu_custom_call.1} parent=11 // pred_region
          _
        $region28: #{tpu_custom_call.1} parent=11 // pred_fallthru
          _
        // Predicated region
        $region29: #{tpu_custom_call.1} parent=11 // pred_check
          %p455 = pneg %p161
        $region30: #{tpu_custom_call.1} parent=11 // pred_check_branch
          %457 = sbr.rel (%p455) target = $region32
        $region31: #{tpu_custom_call.1} parent=11 // pred_region
          %s459 = ssub.s32 3072, 3072
          %460 = vsyncadd [#allocation7], %s459
          %s461 = sshll.u32 [#allocation6], 4
          %s462 = int_to_ptr.vmem [resolvable:$true] %s461
          %467 = dma.hbm_to_vmem [thread:$0]  %s5, 3072, %s462, [#allocation7], 64, 64, 4
        $region32: #{tpu_custom_call.1} parent=11 // pred_fallthru
          _
        // Predicated region
        $region33: #{tpu_custom_call.1} parent=11 // pred_check
          %p468 = pneg %p182
        $region34: #{tpu_custom_call.1} parent=11 // pred_check_branch
          %470 = sbr.rel (%p468) target = $region36
        $region35: #{tpu_custom_call.1} parent=11 // pred_region
          _
        $region36: #{tpu_custom_call.1} parent=11 // pred_fallthru
          _
        // Predicated region
        $region37: #{tpu_custom_call.1} parent=11 // pred_check
          %p471 = pneg %p203
        $region38: #{tpu_custom_call.1} parent=11 // pred_check_branch
          %473 = sbr.rel (%p471) target = $region40
        $region39: #{tpu_custom_call.1} parent=11 // pred_region
          %s475 = ssub.s32 3072, 3072
          %476 = vsyncadd [#allocation7], %s475
          %s477 = sshll.u32 [#allocation8], 4
          %s478 = int_to_ptr.vmem [resolvable:$true] %s477
          %483 = dma.hbm_to_vmem [thread:$0]  %s7, 3072, %s478, [#allocation7], 64, 64, 4
        $region40: #{tpu_custom_call.1} parent=11 // pred_fallthru
          _
        // Predicated region
        $region41: #{tpu_custom_call.1} parent=11 // pred_check
          %p484 = pneg %p224
        $region42: #{tpu_custom_call.1} parent=11 // pred_check_branch
          %486 = sbr.rel (%p484) target = $region44
        $region43: #{tpu_custom_call.1} parent=11 // pred_region
          _
        $region44: #{tpu_custom_call.1} parent=11 // pred_fallthru
          _
        // Predicated region
        $region45: #{tpu_custom_call.1} parent=11 // pred_check
          %p487 = pneg %p245
        $region46: #{tpu_custom_call.1} parent=11 // pred_check_branch
          %489 = sbr.rel (%p487) target = $region48
        $region47: #{tpu_custom_call.1} parent=11 // pred_region
          %s491 = ssub.s32 3072, 3072
          %492 = vsyncadd [#allocation10], %s491
          %s493 = sshll.u32 [#allocation9], 4
          %s494 = int_to_ptr.vmem [resolvable:$true] %s493
          %499 = dma.hbm_to_vmem [thread:$0]  %s9, 3072, %s494, [#allocation10], 64, 64, 4
        $region48: #{tpu_custom_call.1} parent=11 // pred_fallthru
          _
        // Predicated region
        $region49: #{tpu_custom_call.1} parent=11 // pred_check
          %p500 = pneg %p266
        $region50: #{tpu_custom_call.1} parent=11 // pred_check_branch
          %502 = sbr.rel (%p500) target = $region52
        $region51: #{tpu_custom_call.1} parent=11 // pred_region
          _
        $region52: #{tpu_custom_call.1} parent=11 // pred_fallthru
          _
        // Predicated region
        $region53: #{tpu_custom_call.1} parent=11 // pred_check
          %p503 = pneg %p287
        $region54: #{tpu_custom_call.1} parent=11 // pred_check_branch
          %505 = sbr.rel (%p503) target = $region56
        $region55: #{tpu_custom_call.1} parent=11 // pred_region
          %s507 = ssub.s32 3072, 3072
          %508 = vsyncadd [#allocation10], %s507
          %s509 = sshll.u32 [#allocation11], 4
          %s510 = int_to_ptr.vmem [resolvable:$true] %s509
          %515 = dma.hbm_to_vmem [thread:$0]  %s11, 3072, %s510, [#allocation10], 64, 64, 4
        $region56: #{tpu_custom_call.1} parent=11 // pred_fallthru
          _
        // Predicated region
        $region57: #{tpu_custom_call.1} parent=11 // pred_check
          %p516 = pneg %p308
        $region58: #{tpu_custom_call.1} parent=11 // pred_check_branch
          %518 = sbr.rel (%p516) target = $region60
        $region59: #{tpu_custom_call.1} parent=11 // pred_region
          _
        $region60: #{tpu_custom_call.1} parent=11 // pred_fallthru
          _
        // Predicated region
        $region61: #{tpu_custom_call.1} parent=11 // pred_check
          %p519 = pneg %p329
        $region62: #{tpu_custom_call.1} parent=11 // pred_check_branch
          %521 = sbr.rel (%p519) target = $region64
        $region63: #{tpu_custom_call.1} parent=11 // pred_region
          %s523 = ssub.s32 3072, 3072
          %524 = vsyncadd [#allocation13], %s523
          %s525 = sshll.u32 [#allocation12], 4
          %s526 = int_to_ptr.vmem [resolvable:$true] %s525
          %531 = dma.hbm_to_vmem [thread:$0]  %s13, 3072, %s526, [#allocation13], 64, 64, 4
        $region64: #{tpu_custom_call.1} parent=11 // pred_fallthru
          _
        // Predicated region
        $region65: #{tpu_custom_call.1} parent=11 // pred_check
          %p532 = pneg %p350
        $region66: #{tpu_custom_call.1} parent=11 // pred_check_branch
          %534 = sbr.rel (%p532) target = $region68
        $region67: #{tpu_custom_call.1} parent=11 // pred_region
          _
        $region68: #{tpu_custom_call.1} parent=11 // pred_fallthru
          _
        // Predicated region
        $region69: #{tpu_custom_call.1} parent=11 // pred_check
          %p535 = pneg %p371
        $region70: #{tpu_custom_call.1} parent=11 // pred_check_branch
          %537 = sbr.rel (%p535) target = $region72
        $region71: #{tpu_custom_call.1} parent=11 // pred_region
          _
        $region72: #{tpu_custom_call.1} parent=11 // pred_fallthru
          _
        // Predicated region
        $region73: #{tpu_custom_call.1} parent=11 // pred_check
          %p538 = pneg %p392
        $region74: #{tpu_custom_call.1} parent=11 // pred_check_branch
          %540 = sbr.rel (%p538) target = $region76
        $region75: #{tpu_custom_call.1} parent=11 // pred_region
          _
        $region76: #{tpu_custom_call.1} parent=11 // pred_fallthru
          _
      $region12: #{tpu_custom_call.1} parent=5 // pred_fallthru
        _
      %p541 = scmp.lt.s32.totalorder %s30, 2
      // Predicated region
      $region77: #{tpu_custom_call.1} parent=5 // pred_check
        %p542 = pneg %p541
      $region78: #{tpu_custom_call.1} parent=5 // pred_check_branch
        %544 = sbr.rel (%p542) target = $region80
      $region79: #{tpu_custom_call.1} parent=5 // pred_region
        // Predicated region
        $region81: #{tpu_custom_call.1} parent=79 // pred_check
          %p545 = pneg %p50
        $region82: #{tpu_custom_call.1} parent=79 // pred_check_branch
          %547 = sbr.rel (%p545) target = $region84
        $region83: #{tpu_custom_call.1} parent=79 // pred_region
          %p548 = scmp.lt.s32.totalorder %s30, 1
          %s549 = scalar_select %p548, %s30, 1
          %s550 = smul.addr %s549, 2
          %s551 = smul.addr %s550, 8
          %s552 = scalar_lea.vmem %s0, %s551
        $region84: #{tpu_custom_call.1} parent=79 // pred_fallthru
          _
      $region80: #{tpu_custom_call.1} parent=5 // pred_fallthru
        _
      %p553 = scmp.le.s32.totalorder 1, %s30
      %p554 = scmp.lt.s32.totalorder %s30, 3
      %p555 = pnand %p553, %p554
      %p556 = pneg %p555
      // Predicated region
      $region85: #{tpu_custom_call.1} parent=5 // pred_check
        _
      $region86: #{tpu_custom_call.1} parent=5 // pred_check_branch
        %558 = sbr.rel (%p555) target = $region88
      $region87: #{tpu_custom_call.1} parent=5 // pred_region
        %s559 = ssub.s32 %s30, 1
        // Predicated region
        $region89: #{tpu_custom_call.1} parent=87 // pred_check
          %p560 = pneg %p119
        $region90: #{tpu_custom_call.1} parent=87 // pred_check_branch
          %562 = sbr.rel (%p560) target = $region92
        $region91: #{tpu_custom_call.1} parent=87 // pred_region
          %563 = dma.done [#allocation4], 3072
        $region92: #{tpu_custom_call.1} parent=87 // pred_fallthru
          _
        // Predicated region
        $region93: #{tpu_custom_call.1} parent=87 // pred_check
          %p564 = pneg %p161
        $region94: #{tpu_custom_call.1} parent=87 // pred_check_branch
          %566 = sbr.rel (%p564) target = $region96
        $region95: #{tpu_custom_call.1} parent=87 // pred_region
          %567 = dma.done [#allocation7], 3072
        $region96: #{tpu_custom_call.1} parent=87 // pred_fallthru
          _
        // Predicated region
        $region97: #{tpu_custom_call.1} parent=87 // pred_check
          %p568 = pneg %p203
        $region98: #{tpu_custom_call.1} parent=87 // pred_check_branch
          %570 = sbr.rel (%p568) target = $region100
        $region99: #{tpu_custom_call.1} parent=87 // pred_region
          %571 = dma.done [#allocation7], 3072
        $region100: #{tpu_custom_call.1} parent=87 // pred_fallthru
          _
        // Predicated region
        $region101: #{tpu_custom_call.1} parent=87 // pred_check
          %p572 = pneg %p245
        $region102: #{tpu_custom_call.1} parent=87 // pred_check_branch
          %574 = sbr.rel (%p572) target = $region104
        $region103: #{tpu_custom_call.1} parent=87 // pred_region
          %575 = dma.done [#allocation10], 3072
        $region104: #{tpu_custom_call.1} parent=87 // pred_fallthru
          _
        // Predicated region
        $region105: #{tpu_custom_call.1} parent=87 // pred_check
          %p576 = pneg %p287
        $region106: #{tpu_custom_call.1} parent=87 // pred_check_branch
          %578 = sbr.rel (%p576) target = $region108
        $region107: #{tpu_custom_call.1} parent=87 // pred_region
          %579 = dma.done [#allocation10], 3072
        $region108: #{tpu_custom_call.1} parent=87 // pred_fallthru
          _
        // Predicated region
        $region109: #{tpu_custom_call.1} parent=87 // pred_check
          %p580 = pneg %p329
        $region110: #{tpu_custom_call.1} parent=87 // pred_check_branch
          %582 = sbr.rel (%p580) target = $region112
        $region111: #{tpu_custom_call.1} parent=87 // pred_region
          %583 = dma.done [#allocation13], 3072
        $region112: #{tpu_custom_call.1} parent=87 // pred_fallthru
          _
        %p584 = scmp.lt.s32.totalorder %s35, 1
        %s585 = scalar_select %p584, %s35, 1
        %s586 = smul.addr %s585, 2
        %s587 = smul.addr %s586, 8
        %s588 = scalar_lea.vmem %s0, %s587
        %p589 = pneg %p56
        %p590 = pneg %p53
        %p591 = pneg %p77
        %p592 = pneg %p74
        %p593 = pneg %p98
        %p594 = pneg %p95
        %p595 = pneg %p119
        %p596 = pneg %p116
        %p597 = pneg %p140
        %p598 = pneg %p137
        %p599 = pneg %p161
        %p600 = pneg %p158
        %p601 = pneg %p182
        %p602 = pneg %p179
        %p603 = pneg %p203
        %p604 = pneg %p200
        %p605 = pneg %p224
        %p606 = pneg %p221
        %p607 = pneg %p245
        %p608 = pneg %p242
        %p609 = pneg %p266
        %p610 = pneg %p263
        %p611 = pneg %p287
        %p612 = pneg %p284
        %p613 = pneg %p308
        %p614 = pneg %p305
        %p615 = pneg %p329
        %p616 = pneg %p326
        %p617 = pneg %p350
        %p618 = pneg %p347
        %p619 = pneg %p371
        %p620 = pneg %p368
        %p621 = pneg %p392
        %p622 = pneg %p389
        %p623 = pneg %p418
        %p624 = pneg %p415
        %s625 = sand.u32 %s405, 1
        %s626 = scalar_lea.sflag [#allocation5], %s625
        %s627 = sand.u32 %s405, 1
        %s628 = scalar_lea.vmem [#allocation14], %s627
        %p629 = scmp.lt.s32.totalorder %s35, 1
        %s630 = scalar_select %p629, %s35, 1
        %s631 = smul.addr %s630, 2
        %s632 = smul.addr %s631, 8
        %s633 = scalar_lea.vmem %s0, %s632
        %639 = vst [vmem:[#allocation2] sm:$0xff] 0.0
        %640 = vst [vmem:[#allocation2 + $0x18] sm:$0xff] 0.0
        %v641 = vld [vmem:[%s633] sm:$0xff]
        %v642 = vld [vmem:[%s633 + $0x8] sm:$0xff]
        %vm643 = vcmp.ne.f32.partialorder %v641, %v641
        %vm644 = vcmp.ne.f32.partialorder %v642, %v642
        %v645 = vsel %vm643, 1.0, 0.0
        %v646 = vsel %vm644, 1.0, 0.0
        %vm647 = vcmask 31744
        %v648 = vsel %vm647, %v645, 0.0
        %649 = vadd.xlane.f32.xlu0 %v648
        %v650 = vpop.xlane.xlu0 %649
        %v651 = vsel %vm647, %v646, 0.0
        %652 = vadd.xlane.f32.xlu0 %v651
        %v653 = vpop.xlane.xlu0 %652
        %vm654 = vcmp.gt.f32.partialorder %v650, 0.0
        %vm655 = vcmp.gt.f32.partialorder %v653, 0.0
        %v656 = vsel %vm654, 1, 0
        %v657 = vsel %vm655, 1, 0
        %vm658 = vcmp.eq.s32.totalorder %v656, 1
        %vm659 = vcmp.eq.s32.totalorder %v657, 1
        %v660 = vsel %vm658, 0.0, %v641
        %v661 = vsel %vm659, 0.0, %v642
        %v662 = vld [vmem:[%s1] sm:$0xf]
        %664 = vset.pattern.permute.xlu0 0
        %665 = vperm.xlu0 %664, %v660
        %v666 = vpop.permute.xlu0 %665
        %669 = vset.pattern.permute.xlu0 0
        %670 = vperm.xlu0 %669, %v661
        %v671 = vpop.permute.xlu0 %670
        %v673 = vlaneseq
        %v674 = vshrl.u32 %v673, 7
        %v675 = vsub.s32 0, %v674
        %v676 = vrot.slane %v662, %v675
        %v677 = vmul.f32 %v666, %v676
        %v678 = vmul.f32 %v671, %v676
        %679 = vset.pattern.permute.xlu0 1
        %680 = vperm.xlu0 %679, %v660
        %v681 = vpop.permute.xlu0 %680
        %683 = vset.pattern.permute.xlu0 1
        %684 = vperm.xlu0 %683, %v661
        %v685 = vpop.permute.xlu0 %684
        %v687 = vlaneseq
        %v688 = vshrl.u32 %v687, 7
        %v689 = vsub.s32 1, %v688
        %v690 = vrot.slane %v662, %v689
        %v691 = vmul.f32 %v681, %v690
        %v692 = vmul.f32 %v685, %v690
        %v693 = vadd.f32 %v677, %v691
        %v694 = vadd.f32 %v678, %v692
        %695 = vset.pattern.permute.xlu0 2
        %696 = vperm.xlu0 %695, %v660
        %v697 = vpop.permute.xlu0 %696
        %699 = vset.pattern.permute.xlu0 2
        %700 = vperm.xlu0 %699, %v661
        %v701 = vpop.permute.xlu0 %700
        %v703 = vlaneseq
        %v704 = vshrl.u32 %v703, 7
        %v705 = vsub.s32 2, %v704
        %v706 = vrot.slane %v662, %v705
        %v707 = vmul.f32 %v697, %v706
        %v708 = vmul.f32 %v701, %v706
        %v709 = vadd.f32 %v693, %v707
        %v710 = vadd.f32 %v694, %v708
        %711 = vset.pattern.permute.xlu0 3
        %712 = vperm.xlu0 %711, %v660
        %v713 = vpop.permute.xlu0 %712
        %715 = vset.pattern.permute.xlu0 3
        %716 = vperm.xlu0 %715, %v661
        %v717 = vpop.permute.xlu0 %716
        %v719 = vlaneseq
        %v720 = vshrl.u32 %v719, 7
        %v721 = vsub.s32 3, %v720
        %v722 = vrot.slane %v662, %v721
        %v723 = vmul.f32 %v713, %v722
        %v724 = vmul.f32 %v717, %v722
        %v725 = vadd.f32 %v709, %v723
        %v726 = vadd.f32 %v710, %v724
        %v727 = vld [vmem:[%s2] sm:$0x1]
        %v729 = vlaneseq
        %v730 = vshrl.u32 %v729, 7
        %v731 = vsub.s32 0, %v730
        %v732 = vrot.slane %v727, %v731
        %v734 = vadd.f32 %v725, %v732
        %v735 = vadd.f32 %v726, %v732
        %v736 = vsel %vm658, 0.0, %v734
        %v737 = vsel %vm659, 0.0, %v735
        %v738 = vpack.c.bf16 %v737, %v736
        %v739 = vmul.bf16 %v738, %v738
        %v740 = vmul.bf16 %v738, %v739
        %v741 = vmul.bf16 %v740, 1027030327
        %v742 = vadd.bf16 %v738, %v741
        %v743 = vmul.bf16 %v742, 1061961548
        %v744 = vtanh.bf16.pop %v743
        %v745 = vadd.bf16 %v744, 1065369472
        %v746 = vmul.bf16 %v745, 1056980736
        %v747 = vmul.bf16 %v738, %v746
        %v748 = vunpack.c.l.bf16 %v747
        %v749 = vunpack.c.h.bf16 %v747
        %750 = vst [vmem:[#allocation2 + $0x8] sm:$0xff] %v748
        %751 = vst [vmem:[#allocation2 + $0x10] sm:$0xff] %v749
        %v752 = vld [vmem:[#allocation2 + $0x7] sm:$0xff]
        %v753 = vld [vmem:[#allocation2 + $0xf] sm:$0xff]
        %v754 = vld [vmem:[#allocation2 + $0x9] sm:$0xff]
        %v755 = vld [vmem:[#allocation2 + $0x11] sm:$0xff]
        %v756 = vpack.c.bf16 %v753, %v752
        %v757 = vld [vmem:[#allocation3] sm:$0xf]
        %v758 = vld [vmem:[#allocation3 + $0x4] sm:$0xf]
        %v759 = vld [vmem:[#allocation3 + $0x8] sm:$0xf]
        %v760 = vld [vmem:[#allocation3 + $0xc] sm:$0xf]
        %v761 = vld [vmem:[#allocation3 + $0x10] sm:$0xf]
        %v762 = vld [vmem:[#allocation3 + $0x14] sm:$0xf]
        %v763 = vld [vmem:[#allocation3 + $0x18] sm:$0xf]
        %v764 = vld [vmem:[#allocation3 + $0x1c] sm:$0xf]
        %v765 = vld [vmem:[#allocation3 + $0x20] sm:$0xf]
        %v766 = vld [vmem:[#allocation3 + $0x24] sm:$0xf]
        %v767 = vld [vmem:[#allocation3 + $0x28] sm:$0xf]
        %v768 = vld [vmem:[#allocation3 + $0x2c] sm:$0xf]
        %v769 = vld [vmem:[#allocation3 + $0x30] sm:$0xf]
        %v770 = vld [vmem:[#allocation3 + $0x34] sm:$0xf]
        %v771 = vld [vmem:[#allocation3 + $0x38] sm:$0xf]
        %v772 = vld [vmem:[#allocation3 + $0x3c] sm:$0xf]
        %s773 = scalar_lea.vmem [#allocation3], 64
        %v774 = vld [vmem:[%s773] sm:$0xf]
        %v775 = vld [vmem:[%s773 + $0x4] sm:$0xf]
        %v776 = vld [vmem:[%s773 + $0x8] sm:$0xf]
        %v777 = vld [vmem:[%s773 + $0xc] sm:$0xf]
        %v778 = vld [vmem:[%s773 + $0x10] sm:$0xf]
        %v779 = vld [vmem:[%s773 + $0x14] sm:$0xf]
        %v780 = vld [vmem:[%s773 + $0x18] sm:$0xf]
        %v781 = vld [vmem:[%s773 + $0x1c] sm:$0xf]
        %v782 = vld [vmem:[%s773 + $0x20] sm:$0xf]
        %v783 = vld [vmem:[%s773 + $0x24] sm:$0xf]
        %v784 = vld [vmem:[%s773 + $0x28] sm:$0xf]
        %v785 = vld [vmem:[%s773 + $0x2c] sm:$0xf]
        %v786 = vld [vmem:[%s773 + $0x30] sm:$0xf]
        %v787 = vld [vmem:[%s773 + $0x34] sm:$0xf]
        %v788 = vld [vmem:[%s773 + $0x38] sm:$0xf]
        %v789 = vld [vmem:[%s773 + $0x3c] sm:$0xf]
        %v806 = vunpack.c.l.b16 %v774
        %v807 = vunpack.c.l.b16 %v775
        %v808 = vunpack.c.l.b16 %v776
        %v809 = vunpack.c.l.b16 %v777
        %v810 = vunpack.c.l.b16 %v778
        %v811 = vunpack.c.l.b16 %v779
        %v812 = vunpack.c.l.b16 %v780
        %v813 = vunpack.c.l.b16 %v781
        %v814 = vunpack.c.l.b16 %v782
        %v815 = vunpack.c.l.b16 %v783
        %v816 = vunpack.c.l.b16 %v784
        %v817 = vunpack.c.l.b16 %v785
        %v818 = vunpack.c.l.b16 %v786
        %v819 = vunpack.c.l.b16 %v787
        %v820 = vunpack.c.l.b16 %v788
        %v821 = vunpack.c.l.b16 %v789
        %v822 = vpack.c.b16 %v807, %v806
        %v823 = vpack.c.b16 %v809, %v808
        %v824 = vpack.c.b16 %v811, %v810
        %v825 = vpack.c.b16 %v813, %v812
        %v826 = vpack.c.b16 %v815, %v814
        %v827 = vpack.c.b16 %v817, %v816
        %v828 = vpack.c.b16 %v819, %v818
        %v829 = vpack.c.b16 %v821, %v820
        %838 = vmatprep.subr.bf16.mxu0 0
        %839 = vmatpush1.bf16.msra.mxu0 %v822
        %840 = vmatprep.subr.bf16.mxu0 0
        %841 = vmatpush1.bf16.msra.mxu0 %v823
        %842 = vmatprep.subr.bf16.mxu0 0
        %843 = vmatpush1.bf16.msra.mxu0 %v824
        %844 = vmatprep.subr.bf16.mxu0 0
        %845 = vmatpush1.bf16.msra.mxu0 %v825
        %846 = vmatprep.subr.bf16.mxu0 0
        %847 = vmatpush1.bf16.msra.mxu0 %v826
        %848 = vmatprep.subr.bf16.mxu0 0
        %849 = vmatpush1.bf16.msra.mxu0 %v827
        %850 = vmatprep.subr.bf16.mxu0 0
        %851 = vmatpush1.bf16.msra.mxu0 %v828
        %852 = vmatprep.subr.bf16.mxu0 0
        %853 = vmatpush1.bf16.msra.mxu0 %v829
        %854 = vmatprep.subr.bf16.mxu0 0
        %855 = vmatpush1.bf16.msra.mxu0 0
        %856 = vmatprep.subr.bf16.mxu0 0
        %857 = vmatpush1.bf16.msra.mxu0 0
        %858 = vmatprep.subr.bf16.mxu0 0
        %859 = vmatpush1.bf16.msra.mxu0 0
        %860 = vmatprep.subr.bf16.mxu0 0
        %861 = vmatpush1.bf16.msra.mxu0 0
        %862 = vmatprep.subr.bf16.mxu0 0
        %863 = vmatpush1.bf16.msra.mxu0 0
        %864 = vmatprep.subr.bf16.mxu0 0
        %865 = vmatpush1.bf16.msra.mxu0 0
        %866 = vmatprep.subr.bf16.mxu0 0
        %867 = vmatpush1.bf16.msra.mxu0 0
        %868 = vmatprep.subr.bf16.mxu0 0
        %869 = vmatpush1.bf16.msra.mxu0 0
        %870 = vmatprep.mubr.bf16.mxu0 0
        %871 = vmatmul.mubr.bf16.gmra.mrb[0].mxu0 %v747
        %v872 = vpop.f32.mrb[0].mxu0
        %v873 = vadd.f32 0.0, %v872
        %v874 = vpop.f32.mrb[0].mxu0
        %v875 = vpop.f32.mrb[0].mxu0
        %v876 = vadd.f32 0.0, %v875
        %v877 = vpop.f32.mrb[0].mxu0
        %878 = vdwg.mxu0
        %v895 = vunpack.c.l.b16 %v757
        %v896 = vunpack.c.l.b16 %v758
        %v897 = vunpack.c.l.b16 %v759
        %v898 = vunpack.c.l.b16 %v760
        %v899 = vunpack.c.l.b16 %v761
        %v900 = vunpack.c.l.b16 %v762
        %v901 = vunpack.c.l.b16 %v763
        %v902 = vunpack.c.l.b16 %v764
        %v903 = vunpack.c.l.b16 %v765
        %v904 = vunpack.c.l.b16 %v766
        %v905 = vunpack.c.l.b16 %v767
        %v906 = vunpack.c.l.b16 %v768
        %v907 = vunpack.c.l.b16 %v769
        %v908 = vunpack.c.l.b16 %v770
        %v909 = vunpack.c.l.b16 %v771
        %v910 = vunpack.c.l.b16 %v772
        %v911 = vpack.c.b16 %v896, %v895
        %v912 = vpack.c.b16 %v898, %v897
        %v913 = vpack.c.b16 %v900, %v899
        %v914 = vpack.c.b16 %v902, %v901
        %v915 = vpack.c.b16 %v904, %v903
        %v916 = vpack.c.b16 %v906, %v905
        %v917 = vpack.c.b16 %v908, %v907
        %v918 = vpack.c.b16 %v910, %v909
        %927 = vmatprep.subr.bf16.mxu0 0
        %928 = vmatpush1.bf16.msra.mxu0 %v911
        %929 = vmatprep.subr.bf16.mxu0 0
        %930 = vmatpush1.bf16.msra.mxu0 %v912
        %931 = vmatprep.subr.bf16.mxu0 0
        %932 = vmatpush1.bf16.msra.mxu0 %v913
        %933 = vmatprep.subr.bf16.mxu0 0
        %934 = vmatpush1.bf16.msra.mxu0 %v914
        %935 = vmatprep.subr.bf16.mxu0 0
        %936 = vmatpush1.bf16.msra.mxu0 %v915
        %937 = vmatprep.subr.bf16.mxu0 0
        %938 = vmatpush1.bf16.msra.mxu0 %v916
        %939 = vmatprep.subr.bf16.mxu0 0
        %940 = vmatpush1.bf16.msra.mxu0 %v917
        %941 = vmatprep.subr.bf16.mxu0 0
        %942 = vmatpush1.bf16.msra.mxu0 %v918
        %943 = vmatprep.subr.bf16.mxu0 0
        %944 = vmatpush1.bf16.msra.mxu0 0
        %945 = vmatprep.subr.bf16.mxu0 0
        %946 = vmatpush1.bf16.msra.mxu0 0
        %947 = vmatprep.subr.bf16.mxu0 0
        %948 = vmatpush1.bf16.msra.mxu0 0
        %949 = vmatprep.subr.bf16.mxu0 0
        %950 = vmatpush1.bf16.msra.mxu0 0
        %951 = vmatprep.subr.bf16.mxu0 0
        %952 = vmatpush1.bf16.msra.mxu0 0
        %953 = vmatprep.subr.bf16.mxu0 0
        %954 = vmatpush1.bf16.msra.mxu0 0
        %955 = vmatprep.subr.bf16.mxu0 0
        %956 = vmatpush1.bf16.msra.mxu0 0
        %957 = vmatprep.subr.bf16.mxu0 0
        %958 = vmatpush1.bf16.msra.mxu0 0
        %959 = vmatprep.mubr.bf16.mxu0 0
        %960 = vmatmul.mubr.bf16.gmra.mrb[0].mxu0 %v756
        %v961 = vpop.f32.mrb[0].mxu0
        %v962 = vadd.f32 %v873, %v961
        %v963 = vpop.f32.mrb[0].mxu0
        %v964 = vpop.f32.mrb[0].mxu0
        %v965 = vadd.f32 %v876, %v964
        %v966 = vpop.f32.mrb[0].mxu0
        %967 = vdwg.mxu0
        %v968 = vpack.c.bf16 %v755, %v754
        %s969 = scalar_lea.vmem [#allocation3], 128
        %v970 = vld [vmem:[%s969] sm:$0xf]
        %v971 = vld [vmem:[%s969 + $0x4] sm:$0xf]
        %v972 = vld [vmem:[%s969 + $0x8] sm:$0xf]
        %v973 = vld [vmem:[%s969 + $0xc] sm:$0xf]
        %v974 = vld [vmem:[%s969 + $0x10] sm:$0xf]
        %v975 = vld [vmem:[%s969 + $0x14] sm:$0xf]
        %v976 = vld [vmem:[%s969 + $0x18] sm:$0xf]
        %v977 = vld [vmem:[%s969 + $0x1c] sm:$0xf]
        %v978 = vld [vmem:[%s969 + $0x20] sm:$0xf]
        %v979 = vld [vmem:[%s969 + $0x24] sm:$0xf]
        %v980 = vld [vmem:[%s969 + $0x28] sm:$0xf]
        %v981 = vld [vmem:[%s969 + $0x2c] sm:$0xf]
        %v982 = vld [vmem:[%s969 + $0x30] sm:$0xf]
        %v983 = vld [vmem:[%s969 + $0x34] sm:$0xf]
        %v984 = vld [vmem:[%s969 + $0x38] sm:$0xf]
        %v985 = vld [vmem:[%s969 + $0x3c] sm:$0xf]
        %v1002 = vunpack.c.l.b16 %v970
        %v1003 = vunpack.c.l.b16 %v971
        %v1004 = vunpack.c.l.b16 %v972
        %v1005 = vunpack.c.l.b16 %v973
        %v1006 = vunpack.c.l.b16 %v974
        %v1007 = vunpack.c.l.b16 %v975
        %v1008 = vunpack.c.l.b16 %v976
        %v1009 = vunpack.c.l.b16 %v977
        %v1010 = vunpack.c.l.b16 %v978
        %v1011 = vunpack.c.l.b16 %v979
        %v1012 = vunpack.c.l.b16 %v980
        %v1013 = vunpack.c.l.b16 %v981
        %v1014 = vunpack.c.l.b16 %v982
        %v1015 = vunpack.c.l.b16 %v983
        %v1016 = vunpack.c.l.b16 %v984
        %v1017 = vunpack.c.l.b16 %v985
        %v1018 = vpack.c.b16 %v1003, %v1002
        %v1019 = vpack.c.b16 %v1005, %v1004
        %v1020 = vpack.c.b16 %v1007, %v1006
        %v1021 = vpack.c.b16 %v1009, %v1008
        %v1022 = vpack.c.b16 %v1011, %v1010
        %v1023 = vpack.c.b16 %v1013, %v1012
        %v1024 = vpack.c.b16 %v1015, %v1014
        %v1025 = vpack.c.b16 %v1017, %v1016
        %1034 = vmatprep.subr.bf16.mxu0 0
        %1035 = vmatpush1.bf16.msra.mxu0 %v1018
        %1036 = vmatprep.subr.bf16.mxu0 0
        %1037 = vmatpush1.bf16.msra.mxu0 %v1019
        %1038 = vmatprep.subr.bf16.mxu0 0
        %1039 = vmatpush1.bf16.msra.mxu0 %v1020
        %1040 = vmatprep.subr.bf16.mxu0 0
        %1041 = vmatpush1.bf16.msra.mxu0 %v1021
        %1042 = vmatprep.subr.bf16.mxu0 0
        %1043 = vmatpush1.bf16.msra.mxu0 %v1022
        %1044 = vmatprep.subr.bf16.mxu0 0
        %1045 = vmatpush1.bf16.msra.mxu0 %v1023
        %1046 = vmatprep.subr.bf16.mxu0 0
        %1047 = vmatpush1.bf16.msra.mxu0 %v1024
        %1048 = vmatprep.subr.bf16.mxu0 0
        %1049 = vmatpush1.bf16.msra.mxu0 %v1025
        %1050 = vmatprep.subr.bf16.mxu0 0
        %1051 = vmatpush1.bf16.msra.mxu0 0
        %1052 = vmatprep.subr.bf16.mxu0 0
        %1053 = vmatpush1.bf16.msra.mxu0 0
        %1054 = vmatprep.subr.bf16.mxu0 0
        %1055 = vmatpush1.bf16.msra.mxu0 0
        %1056 = vmatprep.subr.bf16.mxu0 0
        %1057 = vmatpush1.bf16.msra.mxu0 0
        %1058 = vmatprep.subr.bf16.mxu0 0
        %1059 = vmatpush1.bf16.msra.mxu0 0
        %1060 = vmatprep.subr.bf16.mxu0 0
        %1061 = vmatpush1.bf16.msra.mxu0 0
        %1062 = vmatprep.subr.bf16.mxu0 0
        %1063 = vmatpush1.bf16.msra.mxu0 0
        %1064 = vmatprep.subr.bf16.mxu0 0
        %1065 = vmatpush1.bf16.msra.mxu0 0
        %1066 = vmatprep.mubr.bf16.mxu0 0
        %1067 = vmatmul.mubr.bf16.gmra.mrb[0].mxu0 %v968
        %v1068 = vpop.f32.mrb[0].mxu0
        %v1069 = vadd.f32 0.0, %v1068
        %v1070 = vpop.f32.mrb[0].mxu0
        %v1071 = vpop.f32.mrb[0].mxu0
        %v1072 = vadd.f32 0.0, %v1071
        %v1073 = vpop.f32.mrb[0].mxu0
        %1074 = vdwg.mxu0
        %v1075 = vadd.f32 %v962, %v1069
        %v1076 = vadd.f32 %v965, %v1072
        %v1077 = vld [vmem:[%s4] sm:$0x1]
        %v1079 = vlaneseq
        %v1080 = vshrl.u32 %v1079, 7
        %v1081 = vsub.s32 0, %v1080
        %v1082 = vrot.slane %v1077, %v1081
        %v1084 = vadd.f32 %v1075, %v1082
        %v1085 = vadd.f32 %v1076, %v1082
        %v1086 = vpack.c.bf16 %v1085, %v1084
        %v1087 = vmul.bf16 %v1086, %v1086
        %v1088 = vmul.bf16 %v1086, %v1087
        %v1089 = vmul.bf16 %v1088, 1027030327
        %v1090 = vadd.bf16 %v1086, %v1089
        %v1091 = vmul.bf16 %v1090, 1061961548
        %v1092 = vtanh.bf16.pop %v1091
        %v1093 = vadd.bf16 %v1092, 1065369472
        %v1094 = vmul.bf16 %v1093, 1056980736
        %v1095 = vmul.bf16 %v1086, %v1094
        %v1096 = vunpack.c.l.bf16 %v1095
        %v1097 = vunpack.c.h.bf16 %v1095
        %1098 = vst [vmem:[#allocation2 + $0x8] sm:$0xff] %v1096
        %1099 = vst [vmem:[#allocation2 + $0x10] sm:$0xff] %v1097
        %v1100 = vld [vmem:[#allocation2 + $0x7] sm:$0xff]
        %v1101 = vld [vmem:[#allocation2 + $0xf] sm:$0xff]
        %v1102 = vld [vmem:[#allocation2 + $0x9] sm:$0xff]
        %v1103 = vld [vmem:[#allocation2 + $0x11] sm:$0xff]
        %v1104 = vpack.c.bf16 %v1101, %v1100
        %v1105 = vld [vmem:[#allocation6] sm:$0xf]
        %v1106 = vld [vmem:[#allocation6 + $0x4] sm:$0xf]
        %v1107 = vld [vmem:[#allocation6 + $0x8] sm:$0xf]
        %v1108 = vld [vmem:[#allocation6 + $0xc] sm:$0xf]
        %v1109 = vld [vmem:[#allocation6 + $0x10] sm:$0xf]
        %v1110 = vld [vmem:[#allocation6 + $0x14] sm:$0xf]
        %v1111 = vld [vmem:[#allocation6 + $0x18] sm:$0xf]
        %v1112 = vld [vmem:[#allocation6 + $0x1c] sm:$0xf]
        %v1113 = vld [vmem:[#allocation6 + $0x20] sm:$0xf]
        %v1114 = vld [vmem:[#allocation6 + $0x24] sm:$0xf]
        %v1115 = vld [vmem:[#allocation6 + $0x28] sm:$0xf]
        %v1116 = vld [vmem:[#allocation6 + $0x2c] sm:$0xf]
        %v1117 = vld [vmem:[#allocation6 + $0x30] sm:$0xf]
        %v1118 = vld [vmem:[#allocation6 + $0x34] sm:$0xf]
        %v1119 = vld [vmem:[#allocation6 + $0x38] sm:$0xf]
        %v1120 = vld [vmem:[#allocation6 + $0x3c] sm:$0xf]
        %s1121 = scalar_lea.vmem [#allocation6], 64
        %v1122 = vld [vmem:[%s1121] sm:$0xf]
        %v1123 = vld [vmem:[%s1121 + $0x4] sm:$0xf]
        %v1124 = vld [vmem:[%s1121 + $0x8] sm:$0xf]
        %v1125 = vld [vmem:[%s1121 + $0xc] sm:$0xf]
        %v1126 = vld [vmem:[%s1121 + $0x10] sm:$0xf]
        %v1127 = vld [vmem:[%s1121 + $0x14] sm:$0xf]
        %v1128 = vld [vmem:[%s1121 + $0x18] sm:$0xf]
        %v1129 = vld [vmem:[%s1121 + $0x1c] sm:$0xf]
        %v1130 = vld [vmem:[%s1121 + $0x20] sm:$0xf]
        %v1131 = vld [vmem:[%s1121 + $0x24] sm:$0xf]
        %v1132 = vld [vmem:[%s1121 + $0x28] sm:$0xf]
        %v1133 = vld [vmem:[%s1121 + $0x2c] sm:$0xf]
        %v1134 = vld [vmem:[%s1121 + $0x30] sm:$0xf]
        %v1135 = vld [vmem:[%s1121 + $0x34] sm:$0xf]
        %v1136 = vld [vmem:[%s1121 + $0x38] sm:$0xf]
        %v1137 = vld [vmem:[%s1121 + $0x3c] sm:$0xf]
        %v1154 = vunpack.c.l.b16 %v1122
        %v1155 = vunpack.c.l.b16 %v1123
        %v1156 = vunpack.c.l.b16 %v1124
        %v1157 = vunpack.c.l.b16 %v1125
        %v1158 = vunpack.c.l.b16 %v1126
        %v1159 = vunpack.c.l.b16 %v1127
        %v1160 = vunpack.c.l.b16 %v1128
        %v1161 = vunpack.c.l.b16 %v1129
        %v1162 = vunpack.c.l.b16 %v1130
        %v1163 = vunpack.c.l.b16 %v1131
        %v1164 = vunpack.c.l.b16 %v1132
        %v1165 = vunpack.c.l.b16 %v1133
        %v1166 = vunpack.c.l.b16 %v1134
        %v1167 = vunpack.c.l.b16 %v1135
        %v1168 = vunpack.c.l.b16 %v1136
        %v1169 = vunpack.c.l.b16 %v1137
        %v1170 = vpack.c.b16 %v1155, %v1154
        %v1171 = vpack.c.b16 %v1157, %v1156
        %v1172 = vpack.c.b16 %v1159, %v1158
        %v1173 = vpack.c.b16 %v1161, %v1160
        %v1174 = vpack.c.b16 %v1163, %v1162
        %v1175 = vpack.c.b16 %v1165, %v1164
        %v1176 = vpack.c.b16 %v1167, %v1166
        %v1177 = vpack.c.b16 %v1169, %v1168
        %1186 = vmatprep.subr.bf16.mxu0 0
        %1187 = vmatpush1.bf16.msra.mxu0 %v1170
        %1188 = vmatprep.subr.bf16.mxu0 0
        %1189 = vmatpush1.bf16.msra.mxu0 %v1171
        %1190 = vmatprep.subr.bf16.mxu0 0
        %1191 = vmatpush1.bf16.msra.mxu0 %v1172
        %1192 = vmatprep.subr.bf16.mxu0 0
        %1193 = vmatpush1.bf16.msra.mxu0 %v1173
        %1194 = vmatprep.subr.bf16.mxu0 0
        %1195 = vmatpush1.bf16.msra.mxu0 %v1174
        %1196 = vmatprep.subr.bf16.mxu0 0
        %1197 = vmatpush1.bf16.msra.mxu0 %v1175
        %1198 = vmatprep.subr.bf16.mxu0 0
        %1199 = vmatpush1.bf16.msra.mxu0 %v1176
        %1200 = vmatprep.subr.bf16.mxu0 0
        %1201 = vmatpush1.bf16.msra.mxu0 %v1177
        %1202 = vmatprep.subr.bf16.mxu0 0
        %1203 = vmatpush1.bf16.msra.mxu0 0
        %1204 = vmatprep.subr.bf16.mxu0 0
        %1205 = vmatpush1.bf16.msra.mxu0 0
        %1206 = vmatprep.subr.bf16.mxu0 0
        %1207 = vmatpush1.bf16.msra.mxu0 0
        %1208 = vmatprep.subr.bf16.mxu0 0
        %1209 = vmatpush1.bf16.msra.mxu0 0
        %1210 = vmatprep.subr.bf16.mxu0 0
        %1211 = vmatpush1.bf16.msra.mxu0 0
        %1212 = vmatprep.subr.bf16.mxu0 0
        %1213 = vmatpush1.bf16.msra.mxu0 0
        %1214 = vmatprep.subr.bf16.mxu0 0
        %1215 = vmatpush1.bf16.msra.mxu0 0
        %1216 = vmatprep.subr.bf16.mxu0 0
        %1217 = vmatpush1.bf16.msra.mxu0 0
        %1218 = vmatprep.mubr.bf16.mxu0 0
        %1219 = vmatmul.mubr.bf16.gmra.mrb[0].mxu0 %v1095
        %v1220 = vpop.f32.mrb[0].mxu0
        %v1221 = vadd.f32 0.0, %v1220
        %v1222 = vpop.f32.mrb[0].mxu0
        %v1223 = vpop.f32.mrb[0].mxu0
        %v1224 = vadd.f32 0.0, %v1223
        %v1225 = vpop.f32.mrb[0].mxu0
        %1226 = vdwg.mxu0
        %v1243 = vunpack.c.l.b16 %v1105
        %v1244 = vunpack.c.l.b16 %v1106
        %v1245 = vunpack.c.l.b16 %v1107
        %v1246 = vunpack.c.l.b16 %v1108
        %v1247 = vunpack.c.l.b16 %v1109
        %v1248 = vunpack.c.l.b16 %v1110
        %v1249 = vunpack.c.l.b16 %v1111
        %v1250 = vunpack.c.l.b16 %v1112
        %v1251 = vunpack.c.l.b16 %v1113
        %v1252 = vunpack.c.l.b16 %v1114
        %v1253 = vunpack.c.l.b16 %v1115
        %v1254 = vunpack.c.l.b16 %v1116
        %v1255 = vunpack.c.l.b16 %v1117
        %v1256 = vunpack.c.l.b16 %v1118
        %v1257 = vunpack.c.l.b16 %v1119
        %v1258 = vunpack.c.l.b16 %v1120
        %v1259 = vpack.c.b16 %v1244, %v1243
        %v1260 = vpack.c.b16 %v1246, %v1245
        %v1261 = vpack.c.b16 %v1248, %v1247
        %v1262 = vpack.c.b16 %v1250, %v1249
        %v1263 = vpack.c.b16 %v1252, %v1251
        %v1264 = vpack.c.b16 %v1254, %v1253
        %v1265 = vpack.c.b16 %v1256, %v1255
        %v1266 = vpack.c.b16 %v1258, %v1257
        %1275 = vmatprep.subr.bf16.mxu0 0
        %1276 = vmatpush1.bf16.msra.mxu0 %v1259
        %1277 = vmatprep.subr.bf16.mxu0 0
        %1278 = vmatpush1.bf16.msra.mxu0 %v1260
        %1279 = vmatprep.subr.bf16.mxu0 0
        %1280 = vmatpush1.bf16.msra.mxu0 %v1261
        %1281 = vmatprep.subr.bf16.mxu0 0
        %1282 = vmatpush1.bf16.msra.mxu0 %v1262
        %1283 = vmatprep.subr.bf16.mxu0 0
        %1284 = vmatpush1.bf16.msra.mxu0 %v1263
        %1285 = vmatprep.subr.bf16.mxu0 0
        %1286 = vmatpush1.bf16.msra.mxu0 %v1264
        %1287 = vmatprep.subr.bf16.mxu0 0
        %1288 = vmatpush1.bf16.msra.mxu0 %v1265
        %1289 = vmatprep.subr.bf16.mxu0 0
        %1290 = vmatpush1.bf16.msra.mxu0 %v1266
        %1291 = vmatprep.subr.bf16.mxu0 0
        %1292 = vmatpush1.bf16.msra.mxu0 0
        %1293 = vmatprep.subr.bf16.mxu0 0
        %1294 = vmatpush1.bf16.msra.mxu0 0
        %1295 = vmatprep.subr.bf16.mxu0 0
        %1296 = vmatpush1.bf16.msra.mxu0 0
        %1297 = vmatprep.subr.bf16.mxu0 0
        %1298 = vmatpush1.bf16.msra.mxu0 0
        %1299 = vmatprep.subr.bf16.mxu0 0
        %1300 = vmatpush1.bf16.msra.mxu0 0
        %1301 = vmatprep.subr.bf16.mxu0 0
        %1302 = vmatpush1.bf16.msra.mxu0 0
        %1303 = vmatprep.subr.bf16.mxu0 0
        %1304 = vmatpush1.bf16.msra.mxu0 0
        %1305 = vmatprep.subr.bf16.mxu0 0
        %1306 = vmatpush1.bf16.msra.mxu0 0
        %1307 = vmatprep.mubr.bf16.mxu0 0
        %1308 = vmatmul.mubr.bf16.gmra.mrb[0].mxu0 %v1104
        %v1309 = vpop.f32.mrb[0].mxu0
        %v1310 = vadd.f32 %v1221, %v1309
        %v1311 = vpop.f32.mrb[0].mxu0
        %v1312 = vpop.f32.mrb[0].mxu0
        %v1313 = vadd.f32 %v1224, %v1312
        %v1314 = vpop.f32.mrb[0].mxu0
        %1315 = vdwg.mxu0
        %v1316 = vpack.c.bf16 %v1103, %v1102
        %s1317 = scalar_lea.vmem [#allocation6], 128
        %v1318 = vld [vmem:[%s1317] sm:$0xf]
        %v1319 = vld [vmem:[%s1317 + $0x4] sm:$0xf]
        %v1320 = vld [vmem:[%s1317 + $0x8] sm:$0xf]
        %v1321 = vld [vmem:[%s1317 + $0xc] sm:$0xf]
        %v1322 = vld [vmem:[%s1317 + $0x10] sm:$0xf]
        %v1323 = vld [vmem:[%s1317 + $0x14] sm:$0xf]
        %v1324 = vld [vmem:[%s1317 + $0x18] sm:$0xf]
        %v1325 = vld [vmem:[%s1317 + $0x1c] sm:$0xf]
        %v1326 = vld [vmem:[%s1317 + $0x20] sm:$0xf]
        %v1327 = vld [vmem:[%s1317 + $0x24] sm:$0xf]
        %v1328 = vld [vmem:[%s1317 + $0x28] sm:$0xf]
        %v1329 = vld [vmem:[%s1317 + $0x2c] sm:$0xf]
        %v1330 = vld [vmem:[%s1317 + $0x30] sm:$0xf]
        %v1331 = vld [vmem:[%s1317 + $0x34] sm:$0xf]
        %v1332 = vld [vmem:[%s1317 + $0x38] sm:$0xf]
        %v1333 = vld [vmem:[%s1317 + $0x3c] sm:$0xf]
        %v1350 = vunpack.c.l.b16 %v1318
        %v1351 = vunpack.c.l.b16 %v1319
        %v1352 = vunpack.c.l.b16 %v1320
        %v1353 = vunpack.c.l.b16 %v1321
        %v1354 = vunpack.c.l.b16 %v1322
        %v1355 = vunpack.c.l.b16 %v1323
        %v1356 = vunpack.c.l.b16 %v1324
        %v1357 = vunpack.c.l.b16 %v1325
        %v1358 = vunpack.c.l.b16 %v1326
        %v1359 = vunpack.c.l.b16 %v1327
        %v1360 = vunpack.c.l.b16 %v1328
        %v1361 = vunpack.c.l.b16 %v1329
        %v1362 = vunpack.c.l.b16 %v1330
        %v1363 = vunpack.c.l.b16 %v1331
        %v1364 = vunpack.c.l.b16 %v1332
        %v1365 = vunpack.c.l.b16 %v1333
        %v1366 = vpack.c.b16 %v1351, %v1350
        %v1367 = vpack.c.b16 %v1353, %v1352
        %v1368 = vpack.c.b16 %v1355, %v1354
        %v1369 = vpack.c.b16 %v1357, %v1356
        %v1370 = vpack.c.b16 %v1359, %v1358
        %v1371 = vpack.c.b16 %v1361, %v1360
        %v1372 = vpack.c.b16 %v1363, %v1362
        %v1373 = vpack.c.b16 %v1365, %v1364
        %1382 = vmatprep.subr.bf16.mxu0 0
        %1383 = vmatpush1.bf16.msra.mxu0 %v1366
        %1384 = vmatprep.subr.bf16.mxu0 0
        %1385 = vmatpush1.bf16.msra.mxu0 %v1367
        %1386 = vmatprep.subr.bf16.mxu0 0
        %1387 = vmatpush1.bf16.msra.mxu0 %v1368
        %1388 = vmatprep.subr.bf16.mxu0 0
        %1389 = vmatpush1.bf16.msra.mxu0 %v1369
        %1390 = vmatprep.subr.bf16.mxu0 0
        %1391 = vmatpush1.bf16.msra.mxu0 %v1370
        %1392 = vmatprep.subr.bf16.mxu0 0
        %1393 = vmatpush1.bf16.msra.mxu0 %v1371
        %1394 = vmatprep.subr.bf16.mxu0 0
        %1395 = vmatpush1.bf16.msra.mxu0 %v1372
        %1396 = vmatprep.subr.bf16.mxu0 0
        %1397 = vmatpush1.bf16.msra.mxu0 %v1373
        %1398 = vmatprep.subr.bf16.mxu0 0
        %1399 = vmatpush1.bf16.msra.mxu0 0
        %1400 = vmatprep.subr.bf16.mxu0 0
        %1401 = vmatpush1.bf16.msra.mxu0 0
        %1402 = vmatprep.subr.bf16.mxu0 0
        %1403 = vmatpush1.bf16.msra.mxu0 0
        %1404 = vmatprep.subr.bf16.mxu0 0
        %1405 = vmatpush1.bf16.msra.mxu0 0
        %1406 = vmatprep.subr.bf16.mxu0 0
        %1407 = vmatpush1.bf16.msra.mxu0 0
        %1408 = vmatprep.subr.bf16.mxu0 0
        %1409 = vmatpush1.bf16.msra.mxu0 0
        %1410 = vmatprep.subr.bf16.mxu0 0
        %1411 = vmatpush1.bf16.msra.mxu0 0
        %1412 = vmatprep.subr.bf16.mxu0 0
        %1413 = vmatpush1.bf16.msra.mxu0 0
        %1414 = vmatprep.mubr.bf16.mxu0 0
        %1415 = vmatmul.mubr.bf16.gmra.mrb[0].mxu0 %v1316
        %v1416 = vpop.f32.mrb[0].mxu0
        %v1417 = vadd.f32 0.0, %v1416
        %v1418 = vpop.f32.mrb[0].mxu0
        %v1419 = vpop.f32.mrb[0].mxu0
        %v1420 = vadd.f32 0.0, %v1419
        %v1421 = vpop.f32.mrb[0].mxu0
        %1422 = vdwg.mxu0
        %v1423 = vadd.f32 %v1310, %v1417
        %v1424 = vadd.f32 %v1313, %v1420
        %v1425 = vld [vmem:[%s6] sm:$0x1]
        %v1427 = vlaneseq
        %v1428 = vshrl.u32 %v1427, 7
        %v1429 = vsub.s32 0, %v1428
        %v1430 = vrot.slane %v1425, %v1429
        %v1432 = vadd.f32 %v1423, %v1430
        %v1433 = vadd.f32 %v1424, %v1430
        %v1434 = vadd.f32 %v1432, %v736
        %v1435 = vadd.f32 %v1433, %v737
        %v1436 = vpack.c.bf16 %v1435, %v1434
        %v1437 = vmul.bf16 %v1436, %v1436
        %v1438 = vmul.bf16 %v1436, %v1437
        %v1439 = vmul.bf16 %v1438, 1027030327
        %v1440 = vadd.bf16 %v1436, %v1439
        %v1441 = vmul.bf16 %v1440, 1061961548
        %v1442 = vtanh.bf16.pop %v1441
        %v1443 = vadd.bf16 %v1442, 1065369472
        %v1444 = vmul.bf16 %v1443, 1056980736
        %v1445 = vmul.bf16 %v1436, %v1444
        %v1446 = vunpack.c.l.bf16 %v1445
        %v1447 = vunpack.c.h.bf16 %v1445
        %1448 = vst [vmem:[#allocation2 + $0x8] sm:$0xff] %v1446
        %1449 = vst [vmem:[#allocation2 + $0x10] sm:$0xff] %v1447
        %v1450 = vld [vmem:[#allocation2 + $0x6] sm:$0xff]
        %v1451 = vld [vmem:[#allocation2 + $0xe] sm:$0xff]
        %v1452 = vld [vmem:[#allocation2 + $0xa] sm:$0xff]
        %v1453 = vld [vmem:[#allocation2 + $0x12] sm:$0xff]
        %v1454 = vpack.c.bf16 %v1451, %v1450
        %v1455 = vld [vmem:[#allocation8] sm:$0xf]
        %v1456 = vld [vmem:[#allocation8 + $0x4] sm:$0xf]
        %v1457 = vld [vmem:[#allocation8 + $0x8] sm:$0xf]
        %v1458 = vld [vmem:[#allocation8 + $0xc] sm:$0xf]
        %v1459 = vld [vmem:[#allocation8 + $0x10] sm:$0xf]
        %v1460 = vld [vmem:[#allocation8 + $0x14] sm:$0xf]
        %v1461 = vld [vmem:[#allocation8 + $0x18] sm:$0xf]
        %v1462 = vld [vmem:[#allocation8 + $0x1c] sm:$0xf]
        %v1463 = vld [vmem:[#allocation8 + $0x20] sm:$0xf]
        %v1464 = vld [vmem:[#allocation8 + $0x24] sm:$0xf]
        %v1465 = vld [vmem:[#allocation8 + $0x28] sm:$0xf]
        %v1466 = vld [vmem:[#allocation8 + $0x2c] sm:$0xf]
        %v1467 = vld [vmem:[#allocation8 + $0x30] sm:$0xf]
        %v1468 = vld [vmem:[#allocation8 + $0x34] sm:$0xf]
        %v1469 = vld [vmem:[#allocation8 + $0x38] sm:$0xf]
        %v1470 = vld [vmem:[#allocation8 + $0x3c] sm:$0xf]
        %s1471 = scalar_lea.vmem [#allocation8], 64
        %v1472 = vld [vmem:[%s1471] sm:$0xf]
        %v1473 = vld [vmem:[%s1471 + $0x4] sm:$0xf]
        %v1474 = vld [vmem:[%s1471 + $0x8] sm:$0xf]
        %v1475 = vld [vmem:[%s1471 + $0xc] sm:$0xf]
        %v1476 = vld [vmem:[%s1471 + $0x10] sm:$0xf]
        %v1477 = vld [vmem:[%s1471 + $0x14] sm:$0xf]
        %v1478 = vld [vmem:[%s1471 + $0x18] sm:$0xf]
        %v1479 = vld [vmem:[%s1471 + $0x1c] sm:$0xf]
        %v1480 = vld [vmem:[%s1471 + $0x20] sm:$0xf]
        %v1481 = vld [vmem:[%s1471 + $0x24] sm:$0xf]
        %v1482 = vld [vmem:[%s1471 + $0x28] sm:$0xf]
        %v1483 = vld [vmem:[%s1471 + $0x2c] sm:$0xf]
        %v1484 = vld [vmem:[%s1471 + $0x30] sm:$0xf]
        %v1485 = vld [vmem:[%s1471 + $0x34] sm:$0xf]
        %v1486 = vld [vmem:[%s1471 + $0x38] sm:$0xf]
        %v1487 = vld [vmem:[%s1471 + $0x3c] sm:$0xf]
        %v1504 = vunpack.c.l.b16 %v1472
        %v1505 = vunpack.c.l.b16 %v1473
        %v1506 = vunpack.c.l.b16 %v1474
        %v1507 = vunpack.c.l.b16 %v1475
        %v1508 = vunpack.c.l.b16 %v1476
        %v1509 = vunpack.c.l.b16 %v1477
        %v1510 = vunpack.c.l.b16 %v1478
        %v1511 = vunpack.c.l.b16 %v1479
        %v1512 = vunpack.c.l.b16 %v1480
        %v1513 = vunpack.c.l.b16 %v1481
        %v1514 = vunpack.c.l.b16 %v1482
        %v1515 = vunpack.c.l.b16 %v1483
        %v1516 = vunpack.c.l.b16 %v1484
        %v1517 = vunpack.c.l.b16 %v1485
        %v1518 = vunpack.c.l.b16 %v1486
        %v1519 = vunpack.c.l.b16 %v1487
        %v1520 = vpack.c.b16 %v1505, %v1504
        %v1521 = vpack.c.b16 %v1507, %v1506
        %v1522 = vpack.c.b16 %v1509, %v1508
        %v1523 = vpack.c.b16 %v1511, %v1510
        %v1524 = vpack.c.b16 %v1513, %v1512
        %v1525 = vpack.c.b16 %v1515, %v1514
        %v1526 = vpack.c.b16 %v1517, %v1516
        %v1527 = vpack.c.b16 %v1519, %v1518
        %1536 = vmatprep.subr.bf16.mxu0 0
        %1537 = vmatpush1.bf16.msra.mxu0 %v1520
        %1538 = vmatprep.subr.bf16.mxu0 0
        %1539 = vmatpush1.bf16.msra.mxu0 %v1521
        %1540 = vmatprep.subr.bf16.mxu0 0
        %1541 = vmatpush1.bf16.msra.mxu0 %v1522
        %1542 = vmatprep.subr.bf16.mxu0 0
        %1543 = vmatpush1.bf16.msra.mxu0 %v1523
        %1544 = vmatprep.subr.bf16.mxu0 0
        %1545 = vmatpush1.bf16.msra.mxu0 %v1524
        %1546 = vmatprep.subr.bf16.mxu0 0
        %1547 = vmatpush1.bf16.msra.mxu0 %v1525
        %1548 = vmatprep.subr.bf16.mxu0 0
        %1549 = vmatpush1.bf16.msra.mxu0 %v1526
        %1550 = vmatprep.subr.bf16.mxu0 0
        %1551 = vmatpush1.bf16.msra.mxu0 %v1527
        %1552 = vmatprep.subr.bf16.mxu0 0
        %1553 = vmatpush1.bf16.msra.mxu0 0
        %1554 = vmatprep.subr.bf16.mxu0 0
        %1555 = vmatpush1.bf16.msra.mxu0 0
        %1556 = vmatprep.subr.bf16.mxu0 0
        %1557 = vmatpush1.bf16.msra.mxu0 0
        %1558 = vmatprep.subr.bf16.mxu0 0
        %1559 = vmatpush1.bf16.msra.mxu0 0
        %1560 = vmatprep.subr.bf16.mxu0 0
        %1561 = vmatpush1.bf16.msra.mxu0 0
        %1562 = vmatprep.subr.bf16.mxu0 0
        %1563 = vmatpush1.bf16.msra.mxu0 0
        %1564 = vmatprep.subr.bf16.mxu0 0
        %1565 = vmatpush1.bf16.msra.mxu0 0
        %1566 = vmatprep.subr.bf16.mxu0 0
        %1567 = vmatpush1.bf16.msra.mxu0 0
        %1568 = vmatprep.mubr.bf16.mxu0 0
        %1569 = vmatmul.mubr.bf16.gmra.mrb[0].mxu0 %v1445
        %v1570 = vpop.f32.mrb[0].mxu0
        %v1571 = vadd.f32 0.0, %v1570
        %v1572 = vpop.f32.mrb[0].mxu0
        %v1573 = vpop.f32.mrb[0].mxu0
        %v1574 = vadd.f32 0.0, %v1573
        %v1575 = vpop.f32.mrb[0].mxu0
        %1576 = vdwg.mxu0
        %v1593 = vunpack.c.l.b16 %v1455
        %v1594 = vunpack.c.l.b16 %v1456
        %v1595 = vunpack.c.l.b16 %v1457
        %v1596 = vunpack.c.l.b16 %v1458
        %v1597 = vunpack.c.l.b16 %v1459
        %v1598 = vunpack.c.l.b16 %v1460
        %v1599 = vunpack.c.l.b16 %v1461
        %v1600 = vunpack.c.l.b16 %v1462
        %v1601 = vunpack.c.l.b16 %v1463
        %v1602 = vunpack.c.l.b16 %v1464
        %v1603 = vunpack.c.l.b16 %v1465
        %v1604 = vunpack.c.l.b16 %v1466
        %v1605 = vunpack.c.l.b16 %v1467
        %v1606 = vunpack.c.l.b16 %v1468
        %v1607 = vunpack.c.l.b16 %v1469
        %v1608 = vunpack.c.l.b16 %v1470
        %v1609 = vpack.c.b16 %v1594, %v1593
        %v1610 = vpack.c.b16 %v1596, %v1595
        %v1611 = vpack.c.b16 %v1598, %v1597
        %v1612 = vpack.c.b16 %v1600, %v1599
        %v1613 = vpack.c.b16 %v1602, %v1601
        %v1614 = vpack.c.b16 %v1604, %v1603
        %v1615 = vpack.c.b16 %v1606, %v1605
        %v1616 = vpack.c.b16 %v1608, %v1607
        %1625 = vmatprep.subr.bf16.mxu0 0
        %1626 = vmatpush1.bf16.msra.mxu0 %v1609
        %1627 = vmatprep.subr.bf16.mxu0 0
        %1628 = vmatpush1.bf16.msra.mxu0 %v1610
        %1629 = vmatprep.subr.bf16.mxu0 0
        %1630 = vmatpush1.bf16.msra.mxu0 %v1611
        %1631 = vmatprep.subr.bf16.mxu0 0
        %1632 = vmatpush1.bf16.msra.mxu0 %v1612
        %1633 = vmatprep.subr.bf16.mxu0 0
        %1634 = vmatpush1.bf16.msra.mxu0 %v1613
        %1635 = vmatprep.subr.bf16.mxu0 0
        %1636 = vmatpush1.bf16.msra.mxu0 %v1614
        %1637 = vmatprep.subr.bf16.mxu0 0
        %1638 = vmatpush1.bf16.msra.mxu0 %v1615
        %1639 = vmatprep.subr.bf16.mxu0 0
        %1640 = vmatpush1.bf16.msra.mxu0 %v1616
        %1641 = vmatprep.subr.bf16.mxu0 0
        %1642 = vmatpush1.bf16.msra.mxu0 0
        %1643 = vmatprep.subr.bf16.mxu0 0
        %1644 = vmatpush1.bf16.msra.mxu0 0
        %1645 = vmatprep.subr.bf16.mxu0 0
        %1646 = vmatpush1.bf16.msra.mxu0 0
        %1647 = vmatprep.subr.bf16.mxu0 0
        %1648 = vmatpush1.bf16.msra.mxu0 0
        %1649 = vmatprep.subr.bf16.mxu0 0
        %1650 = vmatpush1.bf16.msra.mxu0 0
        %1651 = vmatprep.subr.bf16.mxu0 0
        %1652 = vmatpush1.bf16.msra.mxu0 0
        %1653 = vmatprep.subr.bf16.mxu0 0
        %1654 = vmatpush1.bf16.msra.mxu0 0
        %1655 = vmatprep.subr.bf16.mxu0 0
        %1656 = vmatpush1.bf16.msra.mxu0 0
        %1657 = vmatprep.mubr.bf16.mxu0 0
        %1658 = vmatmul.mubr.bf16.gmra.mrb[0].mxu0 %v1454
        %v1659 = vpop.f32.mrb[0].mxu0
        %v1660 = vadd.f32 %v1571, %v1659
        %v1661 = vpop.f32.mrb[0].mxu0
        %v1662 = vpop.f32.mrb[0].mxu0
        %v1663 = vadd.f32 %v1574, %v1662
        %v1664 = vpop.f32.mrb[0].mxu0
        %1665 = vdwg.mxu0
        %v1666 = vpack.c.bf16 %v1453, %v1452
        %s1667 = scalar_lea.vmem [#allocation8], 128
        %v1668 = vld [vmem:[%s1667] sm:$0xf]
        %v1669 = vld [vmem:[%s1667 + $0x4] sm:$0xf]
        %v1670 = vld [vmem:[%s1667 + $0x8] sm:$0xf]
        %v1671 = vld [vmem:[%s1667 + $0xc] sm:$0xf]
        %v1672 = vld [vmem:[%s1667 + $0x10] sm:$0xf]
        %v1673 = vld [vmem:[%s1667 + $0x14] sm:$0xf]
        %v1674 = vld [vmem:[%s1667 + $0x18] sm:$0xf]
        %v1675 = vld [vmem:[%s1667 + $0x1c] sm:$0xf]
        %v1676 = vld [vmem:[%s1667 + $0x20] sm:$0xf]
        %v1677 = vld [vmem:[%s1667 + $0x24] sm:$0xf]
        %v1678 = vld [vmem:[%s1667 + $0x28] sm:$0xf]
        %v1679 = vld [vmem:[%s1667 + $0x2c] sm:$0xf]
        %v1680 = vld [vmem:[%s1667 + $0x30] sm:$0xf]
        %v1681 = vld [vmem:[%s1667 + $0x34] sm:$0xf]
        %v1682 = vld [vmem:[%s1667 + $0x38] sm:$0xf]
        %v1683 = vld [vmem:[%s1667 + $0x3c] sm:$0xf]
        %v1700 = vunpack.c.l.b16 %v1668
        %v1701 = vunpack.c.l.b16 %v1669
        %v1702 = vunpack.c.l.b16 %v1670
        %v1703 = vunpack.c.l.b16 %v1671
        %v1704 = vunpack.c.l.b16 %v1672
        %v1705 = vunpack.c.l.b16 %v1673
        %v1706 = vunpack.c.l.b16 %v1674
        %v1707 = vunpack.c.l.b16 %v1675
        %v1708 = vunpack.c.l.b16 %v1676
        %v1709 = vunpack.c.l.b16 %v1677
        %v1710 = vunpack.c.l.b16 %v1678
        %v1711 = vunpack.c.l.b16 %v1679
        %v1712 = vunpack.c.l.b16 %v1680
        %v1713 = vunpack.c.l.b16 %v1681
        %v1714 = vunpack.c.l.b16 %v1682
        %v1715 = vunpack.c.l.b16 %v1683
        %v1716 = vpack.c.b16 %v1701, %v1700
        %v1717 = vpack.c.b16 %v1703, %v1702
        %v1718 = vpack.c.b16 %v1705, %v1704
        %v1719 = vpack.c.b16 %v1707, %v1706
        %v1720 = vpack.c.b16 %v1709, %v1708
        %v1721 = vpack.c.b16 %v1711, %v1710
        %v1722 = vpack.c.b16 %v1713, %v1712
        %v1723 = vpack.c.b16 %v1715, %v1714
        %1732 = vmatprep.subr.bf16.mxu0 0
        %1733 = vmatpush1.bf16.msra.mxu0 %v1716
        %1734 = vmatprep.subr.bf16.mxu0 0
        %1735 = vmatpush1.bf16.msra.mxu0 %v1717
        %1736 = vmatprep.subr.bf16.mxu0 0
        %1737 = vmatpush1.bf16.msra.mxu0 %v1718
        %1738 = vmatprep.subr.bf16.mxu0 0
        %1739 = vmatpush1.bf16.msra.mxu0 %v1719
        %1740 = vmatprep.subr.bf16.mxu0 0
        %1741 = vmatpush1.bf16.msra.mxu0 %v1720
        %1742 = vmatprep.subr.bf16.mxu0 0
        %1743 = vmatpush1.bf16.msra.mxu0 %v1721
        %1744 = vmatprep.subr.bf16.mxu0 0
        %1745 = vmatpush1.bf16.msra.mxu0 %v1722
        %1746 = vmatprep.subr.bf16.mxu0 0
        %1747 = vmatpush1.bf16.msra.mxu0 %v1723
        %1748 = vmatprep.subr.bf16.mxu0 0
        %1749 = vmatpush1.bf16.msra.mxu0 0
        %1750 = vmatprep.subr.bf16.mxu0 0
        %1751 = vmatpush1.bf16.msra.mxu0 0
        %1752 = vmatprep.subr.bf16.mxu0 0
        %1753 = vmatpush1.bf16.msra.mxu0 0
        %1754 = vmatprep.subr.bf16.mxu0 0
        %1755 = vmatpush1.bf16.msra.mxu0 0
        %1756 = vmatprep.subr.bf16.mxu0 0
        %1757 = vmatpush1.bf16.msra.mxu0 0
        %1758 = vmatprep.subr.bf16.mxu0 0
        %1759 = vmatpush1.bf16.msra.mxu0 0
        %1760 = vmatprep.subr.bf16.mxu0 0
        %1761 = vmatpush1.bf16.msra.mxu0 0
        %1762 = vmatprep.subr.bf16.mxu0 0
        %1763 = vmatpush1.bf16.msra.mxu0 0
        %1764 = vmatprep.mubr.bf16.mxu0 0
        %1765 = vmatmul.mubr.bf16.gmra.mrb[0].mxu0 %v1666
        %v1766 = vpop.f32.mrb[0].mxu0
        %v1767 = vadd.f32 0.0, %v1766
        %v1768 = vpop.f32.mrb[0].mxu0
        %v1769 = vpop.f32.mrb[0].mxu0
        %v1770 = vadd.f32 0.0, %v1769
        %v1771 = vpop.f32.mrb[0].mxu0
        %1772 = vdwg.mxu0
        %v1773 = vadd.f32 %v1660, %v1767
        %v1774 = vadd.f32 %v1663, %v1770
        %v1775 = vld [vmem:[%s8] sm:$0x1]
        %v1777 = vlaneseq
        %v1778 = vshrl.u32 %v1777, 7
        %v1779 = vsub.s32 0, %v1778
        %v1780 = vrot.slane %v1775, %v1779
        %v1782 = vadd.f32 %v1773, %v1780
        %v1783 = vadd.f32 %v1774, %v1780
        %v1784 = vpack.c.bf16 %v1783, %v1782
        %v1785 = vmul.bf16 %v1784, %v1784
        %v1786 = vmul.bf16 %v1784, %v1785
        %v1787 = vmul.bf16 %v1786, 1027030327
        %v1788 = vadd.bf16 %v1784, %v1787
        %v1789 = vmul.bf16 %v1788, 1061961548
        %v1790 = vtanh.bf16.pop %v1789
        %v1791 = vadd.bf16 %v1790, 1065369472
        %v1792 = vmul.bf16 %v1791, 1056980736
        %v1793 = vmul.bf16 %v1784, %v1792
        %v1794 = vunpack.c.l.bf16 %v1793
        %v1795 = vunpack.c.h.bf16 %v1793
        %1796 = vst [vmem:[#allocation2 + $0x8] sm:$0xff] %v1794
        %1797 = vst [vmem:[#allocation2 + $0x10] sm:$0xff] %v1795
        %v1798 = vld [vmem:[#allocation2 + $0x6] sm:$0xff]
        %v1799 = vld [vmem:[#allocation2 + $0xe] sm:$0xff]
        %v1800 = vld [vmem:[#allocation2 + $0xa] sm:$0xff]
        %v1801 = vld [vmem:[#allocation2 + $0x12] sm:$0xff]
        %v1802 = vpack.c.bf16 %v1799, %v1798
        %v1803 = vld [vmem:[#allocation9] sm:$0xf]
        %v1804 = vld [vmem:[#allocation9 + $0x4] sm:$0xf]
        %v1805 = vld [vmem:[#allocation9 + $0x8] sm:$0xf]
        %v1806 = vld [vmem:[#allocation9 + $0xc] sm:$0xf]
        %v1807 = vld [vmem:[#allocation9 + $0x10] sm:$0xf]
        %v1808 = vld [vmem:[#allocation9 + $0x14] sm:$0xf]
        %v1809 = vld [vmem:[#allocation9 + $0x18] sm:$0xf]
        %v1810 = vld [vmem:[#allocation9 + $0x1c] sm:$0xf]
        %v1811 = vld [vmem:[#allocation9 + $0x20] sm:$0xf]
        %v1812 = vld [vmem:[#allocation9 + $0x24] sm:$0xf]
        %v1813 = vld [vmem:[#allocation9 + $0x28] sm:$0xf]
        %v1814 = vld [vmem:[#allocation9 + $0x2c] sm:$0xf]
        %v1815 = vld [vmem:[#allocation9 + $0x30] sm:$0xf]
        %v1816 = vld [vmem:[#allocation9 + $0x34] sm:$0xf]
        %v1817 = vld [vmem:[#allocation9 + $0x38] sm:$0xf]
        %v1818 = vld [vmem:[#allocation9 + $0x3c] sm:$0xf]
        %s1819 = scalar_lea.vmem [#allocation9], 64
        %v1820 = vld [vmem:[%s1819] sm:$0xf]
        %v1821 = vld [vmem:[%s1819 + $0x4] sm:$0xf]
        %v1822 = vld [vmem:[%s1819 + $0x8] sm:$0xf]
        %v1823 = vld [vmem:[%s1819 + $0xc] sm:$0xf]
        %v1824 = vld [vmem:[%s1819 + $0x10] sm:$0xf]
        %v1825 = vld [vmem:[%s1819 + $0x14] sm:$0xf]
        %v1826 = vld [vmem:[%s1819 + $0x18] sm:$0xf]
        %v1827 = vld [vmem:[%s1819 + $0x1c] sm:$0xf]
        %v1828 = vld [vmem:[%s1819 + $0x20] sm:$0xf]
        %v1829 = vld [vmem:[%s1819 + $0x24] sm:$0xf]
        %v1830 = vld [vmem:[%s1819 + $0x28] sm:$0xf]
        %v1831 = vld [vmem:[%s1819 + $0x2c] sm:$0xf]
        %v1832 = vld [vmem:[%s1819 + $0x30] sm:$0xf]
        %v1833 = vld [vmem:[%s1819 + $0x34] sm:$0xf]
        %v1834 = vld [vmem:[%s1819 + $0x38] sm:$0xf]
        %v1835 = vld [vmem:[%s1819 + $0x3c] sm:$0xf]
        %v1852 = vunpack.c.l.b16 %v1820
        %v1853 = vunpack.c.l.b16 %v1821
        %v1854 = vunpack.c.l.b16 %v1822
        %v1855 = vunpack.c.l.b16 %v1823
        %v1856 = vunpack.c.l.b16 %v1824
        %v1857 = vunpack.c.l.b16 %v1825
        %v1858 = vunpack.c.l.b16 %v1826
        %v1859 = vunpack.c.l.b16 %v1827
        %v1860 = vunpack.c.l.b16 %v1828
        %v1861 = vunpack.c.l.b16 %v1829
        %v1862 = vunpack.c.l.b16 %v1830
        %v1863 = vunpack.c.l.b16 %v1831
        %v1864 = vunpack.c.l.b16 %v1832
        %v1865 = vunpack.c.l.b16 %v1833
        %v1866 = vunpack.c.l.b16 %v1834
        %v1867 = vunpack.c.l.b16 %v1835
        %v1868 = vpack.c.b16 %v1853, %v1852
        %v1869 = vpack.c.b16 %v1855, %v1854
        %v1870 = vpack.c.b16 %v1857, %v1856
        %v1871 = vpack.c.b16 %v1859, %v1858
        %v1872 = vpack.c.b16 %v1861, %v1860
        %v1873 = vpack.c.b16 %v1863, %v1862
        %v1874 = vpack.c.b16 %v1865, %v1864
        %v1875 = vpack.c.b16 %v1867, %v1866
        %1884 = vmatprep.subr.bf16.mxu0 0
        %1885 = vmatpush1.bf16.msra.mxu0 %v1868
        %1886 = vmatprep.subr.bf16.mxu0 0
        %1887 = vmatpush1.bf16.msra.mxu0 %v1869
        %1888 = vmatprep.subr.bf16.mxu0 0
        %1889 = vmatpush1.bf16.msra.mxu0 %v1870
        %1890 = vmatprep.subr.bf16.mxu0 0
        %1891 = vmatpush1.bf16.msra.mxu0 %v1871
        %1892 = vmatprep.subr.bf16.mxu0 0
        %1893 = vmatpush1.bf16.msra.mxu0 %v1872
        %1894 = vmatprep.subr.bf16.mxu0 0
        %1895 = vmatpush1.bf16.msra.mxu0 %v1873
        %1896 = vmatprep.subr.bf16.mxu0 0
        %1897 = vmatpush1.bf16.msra.mxu0 %v1874
        %1898 = vmatprep.subr.bf16.mxu0 0
        %1899 = vmatpush1.bf16.msra.mxu0 %v1875
        %1900 = vmatprep.subr.bf16.mxu0 0
        %1901 = vmatpush1.bf16.msra.mxu0 0
        %1902 = vmatprep.subr.bf16.mxu0 0
        %1903 = vmatpush1.bf16.msra.mxu0 0
        %1904 = vmatprep.subr.bf16.mxu0 0
        %1905 = vmatpush1.bf16.msra.mxu0 0
        %1906 = vmatprep.subr.bf16.mxu0 0
        %1907 = vmatpush1.bf16.msra.mxu0 0
        %1908 = vmatprep.subr.bf16.mxu0 0
        %1909 = vmatpush1.bf16.msra.mxu0 0
        %1910 = vmatprep.subr.bf16.mxu0 0
        %1911 = vmatpush1.bf16.msra.mxu0 0
        %1912 = vmatprep.subr.bf16.mxu0 0
        %1913 = vmatpush1.bf16.msra.mxu0 0
        %1914 = vmatprep.subr.bf16.mxu0 0
        %1915 = vmatpush1.bf16.msra.mxu0 0
        %1916 = vmatprep.mubr.bf16.mxu0 0
        %1917 = vmatmul.mubr.bf16.gmra.mrb[0].mxu0 %v1793
        %v1918 = vpop.f32.mrb[0].mxu0
        %v1919 = vadd.f32 0.0, %v1918
        %v1920 = vpop.f32.mrb[0].mxu0
        %v1921 = vpop.f32.mrb[0].mxu0
        %v1922 = vadd.f32 0.0, %v1921
        %v1923 = vpop.f32.mrb[0].mxu0
        %1924 = vdwg.mxu0
        %v1941 = vunpack.c.l.b16 %v1803
        %v1942 = vunpack.c.l.b16 %v1804
        %v1943 = vunpack.c.l.b16 %v1805
        %v1944 = vunpack.c.l.b16 %v1806
        %v1945 = vunpack.c.l.b16 %v1807
        %v1946 = vunpack.c.l.b16 %v1808
        %v1947 = vunpack.c.l.b16 %v1809
        %v1948 = vunpack.c.l.b16 %v1810
        %v1949 = vunpack.c.l.b16 %v1811
        %v1950 = vunpack.c.l.b16 %v1812
        %v1951 = vunpack.c.l.b16 %v1813
        %v1952 = vunpack.c.l.b16 %v1814
        %v1953 = vunpack.c.l.b16 %v1815
        %v1954 = vunpack.c.l.b16 %v1816
        %v1955 = vunpack.c.l.b16 %v1817
        %v1956 = vunpack.c.l.b16 %v1818
        %v1957 = vpack.c.b16 %v1942, %v1941
        %v1958 = vpack.c.b16 %v1944, %v1943
        %v1959 = vpack.c.b16 %v1946, %v1945
        %v1960 = vpack.c.b16 %v1948, %v1947
        %v1961 = vpack.c.b16 %v1950, %v1949
        %v1962 = vpack.c.b16 %v1952, %v1951
        %v1963 = vpack.c.b16 %v1954, %v1953
        %v1964 = vpack.c.b16 %v1956, %v1955
        %1973 = vmatprep.subr.bf16.mxu0 0
        %1974 = vmatpush1.bf16.msra.mxu0 %v1957
        %1975 = vmatprep.subr.bf16.mxu0 0
        %1976 = vmatpush1.bf16.msra.mxu0 %v1958
        %1977 = vmatprep.subr.bf16.mxu0 0
        %1978 = vmatpush1.bf16.msra.mxu0 %v1959
        %1979 = vmatprep.subr.bf16.mxu0 0
        %1980 = vmatpush1.bf16.msra.mxu0 %v1960
        %1981 = vmatprep.subr.bf16.mxu0 0
        %1982 = vmatpush1.bf16.msra.mxu0 %v1961
        %1983 = vmatprep.subr.bf16.mxu0 0
        %1984 = vmatpush1.bf16.msra.mxu0 %v1962
        %1985 = vmatprep.subr.bf16.mxu0 0
        %1986 = vmatpush1.bf16.msra.mxu0 %v1963
        %1987 = vmatprep.subr.bf16.mxu0 0
        %1988 = vmatpush1.bf16.msra.mxu0 %v1964
        %1989 = vmatprep.subr.bf16.mxu0 0
        %1990 = vmatpush1.bf16.msra.mxu0 0
        %1991 = vmatprep.subr.bf16.mxu0 0
        %1992 = vmatpush1.bf16.msra.mxu0 0
        %1993 = vmatprep.subr.bf16.mxu0 0
        %1994 = vmatpush1.bf16.msra.mxu0 0
        %1995 = vmatprep.subr.bf16.mxu0 0
        %1996 = vmatpush1.bf16.msra.mxu0 0
        %1997 = vmatprep.subr.bf16.mxu0 0
        %1998 = vmatpush1.bf16.msra.mxu0 0
        %1999 = vmatprep.subr.bf16.mxu0 0
        %2000 = vmatpush1.bf16.msra.mxu0 0
        %2001 = vmatprep.subr.bf16.mxu0 0
        %2002 = vmatpush1.bf16.msra.mxu0 0
        %2003 = vmatprep.subr.bf16.mxu0 0
        %2004 = vmatpush1.bf16.msra.mxu0 0
        %2005 = vmatprep.mubr.bf16.mxu0 0
        %2006 = vmatmul.mubr.bf16.gmra.mrb[0].mxu0 %v1802
        %v2007 = vpop.f32.mrb[0].mxu0
        %v2008 = vadd.f32 %v1919, %v2007
        %v2009 = vpop.f32.mrb[0].mxu0
        %v2010 = vpop.f32.mrb[0].mxu0
        %v2011 = vadd.f32 %v1922, %v2010
        %v2012 = vpop.f32.mrb[0].mxu0
        %2013 = vdwg.mxu0
        %v2014 = vpack.c.bf16 %v1801, %v1800
        %s2015 = scalar_lea.vmem [#allocation9], 128
        %v2016 = vld [vmem:[%s2015] sm:$0xf]
        %v2017 = vld [vmem:[%s2015 + $0x4] sm:$0xf]
        %v2018 = vld [vmem:[%s2015 + $0x8] sm:$0xf]
        %v2019 = vld [vmem:[%s2015 + $0xc] sm:$0xf]
        %v2020 = vld [vmem:[%s2015 + $0x10] sm:$0xf]
        %v2021 = vld [vmem:[%s2015 + $0x14] sm:$0xf]
        %v2022 = vld [vmem:[%s2015 + $0x18] sm:$0xf]
        %v2023 = vld [vmem:[%s2015 + $0x1c] sm:$0xf]
        %v2024 = vld [vmem:[%s2015 + $0x20] sm:$0xf]
        %v2025 = vld [vmem:[%s2015 + $0x24] sm:$0xf]
        %v2026 = vld [vmem:[%s2015 + $0x28] sm:$0xf]
        %v2027 = vld [vmem:[%s2015 + $0x2c] sm:$0xf]
        %v2028 = vld [vmem:[%s2015 + $0x30] sm:$0xf]
        %v2029 = vld [vmem:[%s2015 + $0x34] sm:$0xf]
        %v2030 = vld [vmem:[%s2015 + $0x38] sm:$0xf]
        %v2031 = vld [vmem:[%s2015 + $0x3c] sm:$0xf]
        %v2048 = vunpack.c.l.b16 %v2016
        %v2049 = vunpack.c.l.b16 %v2017
        %v2050 = vunpack.c.l.b16 %v2018
        %v2051 = vunpack.c.l.b16 %v2019
        %v2052 = vunpack.c.l.b16 %v2020
        %v2053 = vunpack.c.l.b16 %v2021
        %v2054 = vunpack.c.l.b16 %v2022
        %v2055 = vunpack.c.l.b16 %v2023
        %v2056 = vunpack.c.l.b16 %v2024
        %v2057 = vunpack.c.l.b16 %v2025
        %v2058 = vunpack.c.l.b16 %v2026
        %v2059 = vunpack.c.l.b16 %v2027
        %v2060 = vunpack.c.l.b16 %v2028
        %v2061 = vunpack.c.l.b16 %v2029
        %v2062 = vunpack.c.l.b16 %v2030
        %v2063 = vunpack.c.l.b16 %v2031
        %v2064 = vpack.c.b16 %v2049, %v2048
        %v2065 = vpack.c.b16 %v2051, %v2050
        %v2066 = vpack.c.b16 %v2053, %v2052
        %v2067 = vpack.c.b16 %v2055, %v2054
        %v2068 = vpack.c.b16 %v2057, %v2056
        %v2069 = vpack.c.b16 %v2059, %v2058
        %v2070 = vpack.c.b16 %v2061, %v2060
        %v2071 = vpack.c.b16 %v2063, %v2062
        %2080 = vmatprep.subr.bf16.mxu0 0
        %2081 = vmatpush1.bf16.msra.mxu0 %v2064
        %2082 = vmatprep.subr.bf16.mxu0 0
        %2083 = vmatpush1.bf16.msra.mxu0 %v2065
        %2084 = vmatprep.subr.bf16.mxu0 0
        %2085 = vmatpush1.bf16.msra.mxu0 %v2066
        %2086 = vmatprep.subr.bf16.mxu0 0
        %2087 = vmatpush1.bf16.msra.mxu0 %v2067
        %2088 = vmatprep.subr.bf16.mxu0 0
        %2089 = vmatpush1.bf16.msra.mxu0 %v2068
        %2090 = vmatprep.subr.bf16.mxu0 0
        %2091 = vmatpush1.bf16.msra.mxu0 %v2069
        %2092 = vmatprep.subr.bf16.mxu0 0
        %2093 = vmatpush1.bf16.msra.mxu0 %v2070
        %2094 = vmatprep.subr.bf16.mxu0 0
        %2095 = vmatpush1.bf16.msra.mxu0 %v2071
        %2096 = vmatprep.subr.bf16.mxu0 0
        %2097 = vmatpush1.bf16.msra.mxu0 0
        %2098 = vmatprep.subr.bf16.mxu0 0
        %2099 = vmatpush1.bf16.msra.mxu0 0
        %2100 = vmatprep.subr.bf16.mxu0 0
        %2101 = vmatpush1.bf16.msra.mxu0 0
        %2102 = vmatprep.subr.bf16.mxu0 0
        %2103 = vmatpush1.bf16.msra.mxu0 0
        %2104 = vmatprep.subr.bf16.mxu0 0
        %2105 = vmatpush1.bf16.msra.mxu0 0
        %2106 = vmatprep.subr.bf16.mxu0 0
        %2107 = vmatpush1.bf16.msra.mxu0 0
        %2108 = vmatprep.subr.bf16.mxu0 0
        %2109 = vmatpush1.bf16.msra.mxu0 0
        %2110 = vmatprep.subr.bf16.mxu0 0
        %2111 = vmatpush1.bf16.msra.mxu0 0
        %2112 = vmatprep.mubr.bf16.mxu0 0
        %2113 = vmatmul.mubr.bf16.gmra.mrb[0].mxu0 %v2014
        %v2114 = vpop.f32.mrb[0].mxu0
        %v2115 = vadd.f32 0.0, %v2114
        %v2116 = vpop.f32.mrb[0].mxu0
        %v2117 = vpop.f32.mrb[0].mxu0
        %v2118 = vadd.f32 0.0, %v2117
        %v2119 = vpop.f32.mrb[0].mxu0
        %2120 = vdwg.mxu0
        %v2121 = vadd.f32 %v2008, %v2115
        %v2122 = vadd.f32 %v2011, %v2118
        %v2123 = vld [vmem:[%s10] sm:$0x1]
        %v2125 = vlaneseq
        %v2126 = vshrl.u32 %v2125, 7
        %v2127 = vsub.s32 0, %v2126
        %v2128 = vrot.slane %v2123, %v2127
        %v2130 = vadd.f32 %v2121, %v2128
        %v2131 = vadd.f32 %v2122, %v2128
        %v2132 = vadd.f32 %v2130, %v1434
        %v2133 = vadd.f32 %v2131, %v1435
        %v2134 = vpack.c.bf16 %v2133, %v2132
        %v2135 = vld [vmem:[%s15] sm:$0xf]
        %v2136 = vld [vmem:[%s15 + $0x4] sm:$0xf]
        %v2137 = vld [vmem:[%s15 + $0x8] sm:$0xf]
        %v2138 = vld [vmem:[%s15 + $0xc] sm:$0xf]
        %v2139 = vld [vmem:[%s15 + $0x10] sm:$0xf]
        %v2140 = vld [vmem:[%s15 + $0x14] sm:$0xf]
        %v2141 = vld [vmem:[%s15 + $0x18] sm:$0xf]
        %v2142 = vld [vmem:[%s15 + $0x1c] sm:$0xf]
        %v2143 = vld [vmem:[%s15 + $0x20] sm:$0xf]
        %v2144 = vld [vmem:[%s15 + $0x24] sm:$0xf]
        %v2145 = vld [vmem:[%s15 + $0x28] sm:$0xf]
        %v2146 = vld [vmem:[%s15 + $0x2c] sm:$0xf]
        %v2147 = vld [vmem:[%s15 + $0x30] sm:$0xf]
        %v2148 = vld [vmem:[%s15 + $0x34] sm:$0xf]
        %v2149 = vld [vmem:[%s15 + $0x38] sm:$0xf]
        %v2150 = vld [vmem:[%s15 + $0x3c] sm:$0xf]
        %v2151 = vld [vmem:[%s16] sm:$0x1]
        %v2153 = vlaneseq
        %v2154 = vshrl.u32 %v2153, 7
        %v2155 = vsub.s32 0, %v2154
        %v2156 = vrot.slane %v2151, %v2155
        %v2174 = vunpack.c.l.b16 %v2135
        %v2175 = vunpack.c.l.b16 %v2136
        %v2176 = vunpack.c.l.b16 %v2137
        %v2177 = vunpack.c.l.b16 %v2138
        %v2178 = vunpack.c.l.b16 %v2139
        %v2179 = vunpack.c.l.b16 %v2140
        %v2180 = vunpack.c.l.b16 %v2141
        %v2181 = vunpack.c.l.b16 %v2142
        %v2182 = vunpack.c.l.b16 %v2143
        %v2183 = vunpack.c.l.b16 %v2144
        %v2184 = vunpack.c.l.b16 %v2145
        %v2185 = vunpack.c.l.b16 %v2146
        %v2186 = vunpack.c.l.b16 %v2147
        %v2187 = vunpack.c.l.b16 %v2148
        %v2188 = vunpack.c.l.b16 %v2149
        %v2189 = vunpack.c.l.b16 %v2150
        %v2190 = vpack.c.b16 %v2175, %v2174
        %v2191 = vpack.c.b16 %v2177, %v2176
        %v2192 = vpack.c.b16 %v2179, %v2178
        %v2193 = vpack.c.b16 %v2181, %v2180
        %v2194 = vpack.c.b16 %v2183, %v2182
        %v2195 = vpack.c.b16 %v2185, %v2184
        %v2196 = vpack.c.b16 %v2187, %v2186
        %v2197 = vpack.c.b16 %v2189, %v2188
        %2206 = vmatprep.subr.bf16.mxu0 0
        %2207 = vmatpush1.bf16.msra.mxu0 %v2190
        %2208 = vmatprep.subr.bf16.mxu0 0
        %2209 = vmatpush1.bf16.msra.mxu0 %v2191
        %2210 = vmatprep.subr.bf16.mxu0 0
        %2211 = vmatpush1.bf16.msra.mxu0 %v2192
        %2212 = vmatprep.subr.bf16.mxu0 0
        %2213 = vmatpush1.bf16.msra.mxu0 %v2193
        %2214 = vmatprep.subr.bf16.mxu0 0
        %2215 = vmatpush1.bf16.msra.mxu0 %v2194
        %2216 = vmatprep.subr.bf16.mxu0 0
        %2217 = vmatpush1.bf16.msra.mxu0 %v2195
        %2218 = vmatprep.subr.bf16.mxu0 0
        %2219 = vmatpush1.bf16.msra.mxu0 %v2196
        %2220 = vmatprep.subr.bf16.mxu0 0
        %2221 = vmatpush1.bf16.msra.mxu0 %v2197
        %2222 = vmatprep.subr.bf16.mxu0 0
        %2223 = vmatpush1.bf16.msra.mxu0 0
        %2224 = vmatprep.subr.bf16.mxu0 0
        %2225 = vmatpush1.bf16.msra.mxu0 0
        %2226 = vmatprep.subr.bf16.mxu0 0
        %2227 = vmatpush1.bf16.msra.mxu0 0
        %2228 = vmatprep.subr.bf16.mxu0 0
        %2229 = vmatpush1.bf16.msra.mxu0 0
        %2230 = vmatprep.subr.bf16.mxu0 0
        %2231 = vmatpush1.bf16.msra.mxu0 0
        %2232 = vmatprep.subr.bf16.mxu0 0
        %2233 = vmatpush1.bf16.msra.mxu0 0
        %2234 = vmatprep.subr.bf16.mxu0 0
        %2235 = vmatpush1.bf16.msra.mxu0 0
        %2236 = vmatprep.subr.bf16.mxu0 0
        %2237 = vmatpush1.bf16.msra.mxu0 0
        %2238 = vmatprep.mubr.bf16.mxu0 0
        %2239 = vmatmul.mubr.bf16.gmra.mrb[0].mxu0 %v2134
        %v2240 = vpop.f32.mrb[0].mxu0
        %v2241 = vadd.f32 %v2156, %v2240
        %v2242 = vpop.f32.mrb[0].mxu0
        %v2243 = vpop.f32.mrb[0].mxu0
        %v2244 = vadd.f32 %v2156, %v2243
        %v2245 = vpop.f32.mrb[0].mxu0
        %2246 = vdwg.mxu0
        %v2247 = vmul.bf16 %v2134, %v2134
        %v2248 = vmul.bf16 %v2134, %v2247
        %v2249 = vmul.bf16 %v2248, 1027030327
        %v2250 = vadd.bf16 %v2134, %v2249
        %v2251 = vmul.bf16 %v2250, 1061961548
        %v2252 = vtanh.bf16.pop %v2251
        %v2253 = vadd.bf16 %v2252, 1065369472
        %v2254 = vmul.bf16 %v2253, 1056980736
        %v2255 = vmul.bf16 %v2134, %v2254
        %v2256 = vunpack.c.l.bf16 %v2255
        %v2257 = vunpack.c.h.bf16 %v2255
        %2258 = vst [vmem:[#allocation2 + $0x8] sm:$0xff] %v2256
        %2259 = vst [vmem:[#allocation2 + $0x10] sm:$0xff] %v2257
        %v2260 = vld [vmem:[#allocation2 + $0x4] sm:$0xff]
        %v2261 = vld [vmem:[#allocation2 + $0xc] sm:$0xff]
        %v2262 = vld [vmem:[#allocation2 + $0x14] sm:$0xff]
        %v2263 = vpack.c.bf16 %v2261, %v2260
        %v2264 = vld [vmem:[#allocation11] sm:$0xf]
        %v2265 = vld [vmem:[#allocation11 + $0x4] sm:$0xf]
        %v2266 = vld [vmem:[#allocation11 + $0x8] sm:$0xf]
        %v2267 = vld [vmem:[#allocation11 + $0xc] sm:$0xf]
        %v2268 = vld [vmem:[#allocation11 + $0x10] sm:$0xf]
        %v2269 = vld [vmem:[#allocation11 + $0x14] sm:$0xf]
        %v2270 = vld [vmem:[#allocation11 + $0x18] sm:$0xf]
        %v2271 = vld [vmem:[#allocation11 + $0x1c] sm:$0xf]
        %v2272 = vld [vmem:[#allocation11 + $0x20] sm:$0xf]
        %v2273 = vld [vmem:[#allocation11 + $0x24] sm:$0xf]
        %v2274 = vld [vmem:[#allocation11 + $0x28] sm:$0xf]
        %v2275 = vld [vmem:[#allocation11 + $0x2c] sm:$0xf]
        %v2276 = vld [vmem:[#allocation11 + $0x30] sm:$0xf]
        %v2277 = vld [vmem:[#allocation11 + $0x34] sm:$0xf]
        %v2278 = vld [vmem:[#allocation11 + $0x38] sm:$0xf]
        %v2279 = vld [vmem:[#allocation11 + $0x3c] sm:$0xf]
        %s2280 = scalar_lea.vmem [#allocation11], 64
        %v2281 = vld [vmem:[%s2280] sm:$0xf]
        %v2282 = vld [vmem:[%s2280 + $0x4] sm:$0xf]
        %v2283 = vld [vmem:[%s2280 + $0x8] sm:$0xf]
        %v2284 = vld [vmem:[%s2280 + $0xc] sm:$0xf]
        %v2285 = vld [vmem:[%s2280 + $0x10] sm:$0xf]
        %v2286 = vld [vmem:[%s2280 + $0x14] sm:$0xf]
        %v2287 = vld [vmem:[%s2280 + $0x18] sm:$0xf]
        %v2288 = vld [vmem:[%s2280 + $0x1c] sm:$0xf]
        %v2289 = vld [vmem:[%s2280 + $0x20] sm:$0xf]
        %v2290 = vld [vmem:[%s2280 + $0x24] sm:$0xf]
        %v2291 = vld [vmem:[%s2280 + $0x28] sm:$0xf]
        %v2292 = vld [vmem:[%s2280 + $0x2c] sm:$0xf]
        %v2293 = vld [vmem:[%s2280 + $0x30] sm:$0xf]
        %v2294 = vld [vmem:[%s2280 + $0x34] sm:$0xf]
        %v2295 = vld [vmem:[%s2280 + $0x38] sm:$0xf]
        %v2296 = vld [vmem:[%s2280 + $0x3c] sm:$0xf]
        %v2313 = vunpack.c.l.b16 %v2281
        %v2314 = vunpack.c.l.b16 %v2282
        %v2315 = vunpack.c.l.b16 %v2283
        %v2316 = vunpack.c.l.b16 %v2284
        %v2317 = vunpack.c.l.b16 %v2285
        %v2318 = vunpack.c.l.b16 %v2286
        %v2319 = vunpack.c.l.b16 %v2287
        %v2320 = vunpack.c.l.b16 %v2288
        %v2321 = vunpack.c.l.b16 %v2289
        %v2322 = vunpack.c.l.b16 %v2290
        %v2323 = vunpack.c.l.b16 %v2291
        %v2324 = vunpack.c.l.b16 %v2292
        %v2325 = vunpack.c.l.b16 %v2293
        %v2326 = vunpack.c.l.b16 %v2294
        %v2327 = vunpack.c.l.b16 %v2295
        %v2328 = vunpack.c.l.b16 %v2296
        %v2329 = vpack.c.b16 %v2314, %v2313
        %v2330 = vpack.c.b16 %v2316, %v2315
        %v2331 = vpack.c.b16 %v2318, %v2317
        %v2332 = vpack.c.b16 %v2320, %v2319
        %v2333 = vpack.c.b16 %v2322, %v2321
        %v2334 = vpack.c.b16 %v2324, %v2323
        %v2335 = vpack.c.b16 %v2326, %v2325
        %v2336 = vpack.c.b16 %v2328, %v2327
        %2345 = vmatprep.subr.bf16.mxu0 0
        %2346 = vmatpush1.bf16.msra.mxu0 %v2329
        %2347 = vmatprep.subr.bf16.mxu0 0
        %2348 = vmatpush1.bf16.msra.mxu0 %v2330
        %2349 = vmatprep.subr.bf16.mxu0 0
        %2350 = vmatpush1.bf16.msra.mxu0 %v2331
        %2351 = vmatprep.subr.bf16.mxu0 0
        %2352 = vmatpush1.bf16.msra.mxu0 %v2332
        %2353 = vmatprep.subr.bf16.mxu0 0
        %2354 = vmatpush1.bf16.msra.mxu0 %v2333
        %2355 = vmatprep.subr.bf16.mxu0 0
        %2356 = vmatpush1.bf16.msra.mxu0 %v2334
        %2357 = vmatprep.subr.bf16.mxu0 0
        %2358 = vmatpush1.bf16.msra.mxu0 %v2335
        %2359 = vmatprep.subr.bf16.mxu0 0
        %2360 = vmatpush1.bf16.msra.mxu0 %v2336
        %2361 = vmatprep.subr.bf16.mxu0 0
        %2362 = vmatpush1.bf16.msra.mxu0 0
        %2363 = vmatprep.subr.bf16.mxu0 0
        %2364 = vmatpush1.bf16.msra.mxu0 0
        %2365 = vmatprep.subr.bf16.mxu0 0
        %2366 = vmatpush1.bf16.msra.mxu0 0
        %2367 = vmatprep.subr.bf16.mxu0 0
        %2368 = vmatpush1.bf16.msra.mxu0 0
        %2369 = vmatprep.subr.bf16.mxu0 0
        %2370 = vmatpush1.bf16.msra.mxu0 0
        %2371 = vmatprep.subr.bf16.mxu0 0
        %2372 = vmatpush1.bf16.msra.mxu0 0
        %2373 = vmatprep.subr.bf16.mxu0 0
        %2374 = vmatpush1.bf16.msra.mxu0 0
        %2375 = vmatprep.subr.bf16.mxu0 0
        %2376 = vmatpush1.bf16.msra.mxu0 0
        %2377 = vmatprep.mubr.bf16.mxu0 0
        %2378 = vmatmul.mubr.bf16.gmra.mrb[0].mxu0 %v2255
        %v2379 = vpop.f32.mrb[0].mxu0
        %v2380 = vadd.f32 0.0, %v2379
        %v2381 = vpop.f32.mrb[0].mxu0
        %v2382 = vpop.f32.mrb[0].mxu0
        %v2383 = vadd.f32 0.0, %v2382
        %v2384 = vpop.f32.mrb[0].mxu0
        %2385 = vdwg.mxu0
        %v2402 = vunpack.c.l.b16 %v2264
        %v2403 = vunpack.c.l.b16 %v2265
        %v2404 = vunpack.c.l.b16 %v2266
        %v2405 = vunpack.c.l.b16 %v2267
        %v2406 = vunpack.c.l.b16 %v2268
        %v2407 = vunpack.c.l.b16 %v2269
        %v2408 = vunpack.c.l.b16 %v2270
        %v2409 = vunpack.c.l.b16 %v2271
        %v2410 = vunpack.c.l.b16 %v2272
        %v2411 = vunpack.c.l.b16 %v2273
        %v2412 = vunpack.c.l.b16 %v2274
        %v2413 = vunpack.c.l.b16 %v2275
        %v2414 = vunpack.c.l.b16 %v2276
        %v2415 = vunpack.c.l.b16 %v2277
        %v2416 = vunpack.c.l.b16 %v2278
        %v2417 = vunpack.c.l.b16 %v2279
        %v2418 = vpack.c.b16 %v2403, %v2402
        %v2419 = vpack.c.b16 %v2405, %v2404
        %v2420 = vpack.c.b16 %v2407, %v2406
        %v2421 = vpack.c.b16 %v2409, %v2408
        %v2422 = vpack.c.b16 %v2411, %v2410
        %v2423 = vpack.c.b16 %v2413, %v2412
        %v2424 = vpack.c.b16 %v2415, %v2414
        %v2425 = vpack.c.b16 %v2417, %v2416
        %2434 = vmatprep.subr.bf16.mxu0 0
        %2435 = vmatpush1.bf16.msra.mxu0 %v2418
        %2436 = vmatprep.subr.bf16.mxu0 0
        %2437 = vmatpush1.bf16.msra.mxu0 %v2419
        %2438 = vmatprep.subr.bf16.mxu0 0
        %2439 = vmatpush1.bf16.msra.mxu0 %v2420
        %2440 = vmatprep.subr.bf16.mxu0 0
        %2441 = vmatpush1.bf16.msra.mxu0 %v2421
        %2442 = vmatprep.subr.bf16.mxu0 0
        %2443 = vmatpush1.bf16.msra.mxu0 %v2422
        %2444 = vmatprep.subr.bf16.mxu0 0
        %2445 = vmatpush1.bf16.msra.mxu0 %v2423
        %2446 = vmatprep.subr.bf16.mxu0 0
        %2447 = vmatpush1.bf16.msra.mxu0 %v2424
        %2448 = vmatprep.subr.bf16.mxu0 0
        %2449 = vmatpush1.bf16.msra.mxu0 %v2425
        %2450 = vmatprep.subr.bf16.mxu0 0
        %2451 = vmatpush1.bf16.msra.mxu0 0
        %2452 = vmatprep.subr.bf16.mxu0 0
        %2453 = vmatpush1.bf16.msra.mxu0 0
        %2454 = vmatprep.subr.bf16.mxu0 0
        %2455 = vmatpush1.bf16.msra.mxu0 0
        %2456 = vmatprep.subr.bf16.mxu0 0
        %2457 = vmatpush1.bf16.msra.mxu0 0
        %2458 = vmatprep.subr.bf16.mxu0 0
        %2459 = vmatpush1.bf16.msra.mxu0 0
        %2460 = vmatprep.subr.bf16.mxu0 0
        %2461 = vmatpush1.bf16.msra.mxu0 0
        %2462 = vmatprep.subr.bf16.mxu0 0
        %2463 = vmatpush1.bf16.msra.mxu0 0
        %2464 = vmatprep.subr.bf16.mxu0 0
        %2465 = vmatpush1.bf16.msra.mxu0 0
        %2466 = vmatprep.mubr.bf16.mxu0 0
        %2467 = vmatmul.mubr.bf16.gmra.mrb[0].mxu0 %v2263
        %v2468 = vpop.f32.mrb[0].mxu0
        %v2469 = vadd.f32 %v2380, %v2468
        %v2470 = vpop.f32.mrb[0].mxu0
        %v2471 = vpop.f32.mrb[0].mxu0
        %v2472 = vadd.f32 %v2383, %v2471
        %v2473 = vpop.f32.mrb[0].mxu0
        %2474 = vdwg.mxu0
        %v2475 = vpack.c.bf16 %v2262, %v2261
        %s2476 = scalar_lea.vmem [#allocation11], 128
        %v2477 = vld [vmem:[%s2476] sm:$0xf]
        %v2478 = vld [vmem:[%s2476 + $0x4] sm:$0xf]
        %v2479 = vld [vmem:[%s2476 + $0x8] sm:$0xf]
        %v2480 = vld [vmem:[%s2476 + $0xc] sm:$0xf]
        %v2481 = vld [vmem:[%s2476 + $0x10] sm:$0xf]
        %v2482 = vld [vmem:[%s2476 + $0x14] sm:$0xf]
        %v2483 = vld [vmem:[%s2476 + $0x18] sm:$0xf]
        %v2484 = vld [vmem:[%s2476 + $0x1c] sm:$0xf]
        %v2485 = vld [vmem:[%s2476 + $0x20] sm:$0xf]
        %v2486 = vld [vmem:[%s2476 + $0x24] sm:$0xf]
        %v2487 = vld [vmem:[%s2476 + $0x28] sm:$0xf]
        %v2488 = vld [vmem:[%s2476 + $0x2c] sm:$0xf]
        %v2489 = vld [vmem:[%s2476 + $0x30] sm:$0xf]
        %v2490 = vld [vmem:[%s2476 + $0x34] sm:$0xf]
        %v2491 = vld [vmem:[%s2476 + $0x38] sm:$0xf]
        %v2492 = vld [vmem:[%s2476 + $0x3c] sm:$0xf]
        %v2509 = vunpack.c.l.b16 %v2477
        %v2510 = vunpack.c.l.b16 %v2478
        %v2511 = vunpack.c.l.b16 %v2479
        %v2512 = vunpack.c.l.b16 %v2480
        %v2513 = vunpack.c.l.b16 %v2481
        %v2514 = vunpack.c.l.b16 %v2482
        %v2515 = vunpack.c.l.b16 %v2483
        %v2516 = vunpack.c.l.b16 %v2484
        %v2517 = vunpack.c.l.b16 %v2485
        %v2518 = vunpack.c.l.b16 %v2486
        %v2519 = vunpack.c.l.b16 %v2487
        %v2520 = vunpack.c.l.b16 %v2488
        %v2521 = vunpack.c.l.b16 %v2489
        %v2522 = vunpack.c.l.b16 %v2490
        %v2523 = vunpack.c.l.b16 %v2491
        %v2524 = vunpack.c.l.b16 %v2492
        %v2525 = vpack.c.b16 %v2510, %v2509
        %v2526 = vpack.c.b16 %v2512, %v2511
        %v2527 = vpack.c.b16 %v2514, %v2513
        %v2528 = vpack.c.b16 %v2516, %v2515
        %v2529 = vpack.c.b16 %v2518, %v2517
        %v2530 = vpack.c.b16 %v2520, %v2519
        %v2531 = vpack.c.b16 %v2522, %v2521
        %v2532 = vpack.c.b16 %v2524, %v2523
        %2541 = vmatprep.subr.bf16.mxu0 0
        %2542 = vmatpush1.bf16.msra.mxu0 %v2525
        %2543 = vmatprep.subr.bf16.mxu0 0
        %2544 = vmatpush1.bf16.msra.mxu0 %v2526
        %2545 = vmatprep.subr.bf16.mxu0 0
        %2546 = vmatpush1.bf16.msra.mxu0 %v2527
        %2547 = vmatprep.subr.bf16.mxu0 0
        %2548 = vmatpush1.bf16.msra.mxu0 %v2528
        %2549 = vmatprep.subr.bf16.mxu0 0
        %2550 = vmatpush1.bf16.msra.mxu0 %v2529
        %2551 = vmatprep.subr.bf16.mxu0 0
        %2552 = vmatpush1.bf16.msra.mxu0 %v2530
        %2553 = vmatprep.subr.bf16.mxu0 0
        %2554 = vmatpush1.bf16.msra.mxu0 %v2531
        %2555 = vmatprep.subr.bf16.mxu0 0
        %2556 = vmatpush1.bf16.msra.mxu0 %v2532
        %2557 = vmatprep.subr.bf16.mxu0 0
        %2558 = vmatpush1.bf16.msra.mxu0 0
        %2559 = vmatprep.subr.bf16.mxu0 0
        %2560 = vmatpush1.bf16.msra.mxu0 0
        %2561 = vmatprep.subr.bf16.mxu0 0
        %2562 = vmatpush1.bf16.msra.mxu0 0
        %2563 = vmatprep.subr.bf16.mxu0 0
        %2564 = vmatpush1.bf16.msra.mxu0 0
        %2565 = vmatprep.subr.bf16.mxu0 0
        %2566 = vmatpush1.bf16.msra.mxu0 0
        %2567 = vmatprep.subr.bf16.mxu0 0
        %2568 = vmatpush1.bf16.msra.mxu0 0
        %2569 = vmatprep.subr.bf16.mxu0 0
        %2570 = vmatpush1.bf16.msra.mxu0 0
        %2571 = vmatprep.subr.bf16.mxu0 0
        %2572 = vmatpush1.bf16.msra.mxu0 0
        %2573 = vmatprep.mubr.bf16.mxu0 0
        %2574 = vmatmul.mubr.bf16.gmra.mrb[0].mxu0 %v2475
        %v2575 = vpop.f32.mrb[0].mxu0
        %v2576 = vadd.f32 0.0, %v2575
        %v2577 = vpop.f32.mrb[0].mxu0
        %v2578 = vpop.f32.mrb[0].mxu0
        %v2579 = vadd.f32 0.0, %v2578
        %v2580 = vpop.f32.mrb[0].mxu0
        %2581 = vdwg.mxu0
        %v2582 = vadd.f32 %v2469, %v2576
        %v2583 = vadd.f32 %v2472, %v2579
        %v2584 = vld [vmem:[%s12] sm:$0x1]
        %v2586 = vlaneseq
        %v2587 = vshrl.u32 %v2586, 7
        %v2588 = vsub.s32 0, %v2587
        %v2589 = vrot.slane %v2584, %v2588
        %v2591 = vadd.f32 %v2582, %v2589
        %v2592 = vadd.f32 %v2583, %v2589
        %v2593 = vpack.c.bf16 %v2592, %v2591
        %v2594 = vmul.bf16 %v2593, %v2593
        %v2595 = vmul.bf16 %v2593, %v2594
        %v2596 = vmul.bf16 %v2595, 1027030327
        %v2597 = vadd.bf16 %v2593, %v2596
        %v2598 = vmul.bf16 %v2597, 1061961548
        %v2599 = vtanh.bf16.pop %v2598
        %v2600 = vadd.bf16 %v2599, 1065369472
        %v2601 = vmul.bf16 %v2600, 1056980736
        %v2602 = vmul.bf16 %v2593, %v2601
        %v2603 = vunpack.c.l.bf16 %v2602
        %v2604 = vunpack.c.h.bf16 %v2602
        %2605 = vst [vmem:[#allocation2 + $0x8] sm:$0xff] %v2603
        %2606 = vst [vmem:[#allocation2 + $0x10] sm:$0xff] %v2604
        %v2607 = vld [vmem:[#allocation2 + $0x4] sm:$0xff]
        %v2608 = vld [vmem:[#allocation2 + $0xc] sm:$0xff]
        %v2609 = vld [vmem:[#allocation2 + $0x14] sm:$0xff]
        %v2610 = vpack.c.bf16 %v2608, %v2607
        %v2611 = vld [vmem:[#allocation12] sm:$0xf]
        %v2612 = vld [vmem:[#allocation12 + $0x4] sm:$0xf]
        %v2613 = vld [vmem:[#allocation12 + $0x8] sm:$0xf]
        %v2614 = vld [vmem:[#allocation12 + $0xc] sm:$0xf]
        %v2615 = vld [vmem:[#allocation12 + $0x10] sm:$0xf]
        %v2616 = vld [vmem:[#allocation12 + $0x14] sm:$0xf]
        %v2617 = vld [vmem:[#allocation12 + $0x18] sm:$0xf]
        %v2618 = vld [vmem:[#allocation12 + $0x1c] sm:$0xf]
        %v2619 = vld [vmem:[#allocation12 + $0x20] sm:$0xf]
        %v2620 = vld [vmem:[#allocation12 + $0x24] sm:$0xf]
        %v2621 = vld [vmem:[#allocation12 + $0x28] sm:$0xf]
        %v2622 = vld [vmem:[#allocation12 + $0x2c] sm:$0xf]
        %v2623 = vld [vmem:[#allocation12 + $0x30] sm:$0xf]
        %v2624 = vld [vmem:[#allocation12 + $0x34] sm:$0xf]
        %v2625 = vld [vmem:[#allocation12 + $0x38] sm:$0xf]
        %v2626 = vld [vmem:[#allocation12 + $0x3c] sm:$0xf]
        %s2627 = scalar_lea.vmem [#allocation12], 64
        %v2628 = vld [vmem:[%s2627] sm:$0xf]
        %v2629 = vld [vmem:[%s2627 + $0x4] sm:$0xf]
        %v2630 = vld [vmem:[%s2627 + $0x8] sm:$0xf]
        %v2631 = vld [vmem:[%s2627 + $0xc] sm:$0xf]
        %v2632 = vld [vmem:[%s2627 + $0x10] sm:$0xf]
        %v2633 = vld [vmem:[%s2627 + $0x14] sm:$0xf]
        %v2634 = vld [vmem:[%s2627 + $0x18] sm:$0xf]
        %v2635 = vld [vmem:[%s2627 + $0x1c] sm:$0xf]
        %v2636 = vld [vmem:[%s2627 + $0x20] sm:$0xf]
        %v2637 = vld [vmem:[%s2627 + $0x24] sm:$0xf]
        %v2638 = vld [vmem:[%s2627 + $0x28] sm:$0xf]
        %v2639 = vld [vmem:[%s2627 + $0x2c] sm:$0xf]
        %v2640 = vld [vmem:[%s2627 + $0x30] sm:$0xf]
        %v2641 = vld [vmem:[%s2627 + $0x34] sm:$0xf]
        %v2642 = vld [vmem:[%s2627 + $0x38] sm:$0xf]
        %v2643 = vld [vmem:[%s2627 + $0x3c] sm:$0xf]
        %v2660 = vunpack.c.l.b16 %v2628
        %v2661 = vunpack.c.l.b16 %v2629
        %v2662 = vunpack.c.l.b16 %v2630
        %v2663 = vunpack.c.l.b16 %v2631
        %v2664 = vunpack.c.l.b16 %v2632
        %v2665 = vunpack.c.l.b16 %v2633
        %v2666 = vunpack.c.l.b16 %v2634
        %v2667 = vunpack.c.l.b16 %v2635
        %v2668 = vunpack.c.l.b16 %v2636
        %v2669 = vunpack.c.l.b16 %v2637
        %v2670 = vunpack.c.l.b16 %v2638
        %v2671 = vunpack.c.l.b16 %v2639
        %v2672 = vunpack.c.l.b16 %v2640
        %v2673 = vunpack.c.l.b16 %v2641
        %v2674 = vunpack.c.l.b16 %v2642
        %v2675 = vunpack.c.l.b16 %v2643
        %v2676 = vpack.c.b16 %v2661, %v2660
        %v2677 = vpack.c.b16 %v2663, %v2662
        %v2678 = vpack.c.b16 %v2665, %v2664
        %v2679 = vpack.c.b16 %v2667, %v2666
        %v2680 = vpack.c.b16 %v2669, %v2668
        %v2681 = vpack.c.b16 %v2671, %v2670
        %v2682 = vpack.c.b16 %v2673, %v2672
        %v2683 = vpack.c.b16 %v2675, %v2674
        %2692 = vmatprep.subr.bf16.mxu0 0
        %2693 = vmatpush1.bf16.msra.mxu0 %v2676
        %2694 = vmatprep.subr.bf16.mxu0 0
        %2695 = vmatpush1.bf16.msra.mxu0 %v2677
        %2696 = vmatprep.subr.bf16.mxu0 0
        %2697 = vmatpush1.bf16.msra.mxu0 %v2678
        %2698 = vmatprep.subr.bf16.mxu0 0
        %2699 = vmatpush1.bf16.msra.mxu0 %v2679
        %2700 = vmatprep.subr.bf16.mxu0 0
        %2701 = vmatpush1.bf16.msra.mxu0 %v2680
        %2702 = vmatprep.subr.bf16.mxu0 0
        %2703 = vmatpush1.bf16.msra.mxu0 %v2681
        %2704 = vmatprep.subr.bf16.mxu0 0
        %2705 = vmatpush1.bf16.msra.mxu0 %v2682
        %2706 = vmatprep.subr.bf16.mxu0 0
        %2707 = vmatpush1.bf16.msra.mxu0 %v2683
        %2708 = vmatprep.subr.bf16.mxu0 0
        %2709 = vmatpush1.bf16.msra.mxu0 0
        %2710 = vmatprep.subr.bf16.mxu0 0
        %2711 = vmatpush1.bf16.msra.mxu0 0
        %2712 = vmatprep.subr.bf16.mxu0 0
        %2713 = vmatpush1.bf16.msra.mxu0 0
        %2714 = vmatprep.subr.bf16.mxu0 0
        %2715 = vmatpush1.bf16.msra.mxu0 0
        %2716 = vmatprep.subr.bf16.mxu0 0
        %2717 = vmatpush1.bf16.msra.mxu0 0
        %2718 = vmatprep.subr.bf16.mxu0 0
        %2719 = vmatpush1.bf16.msra.mxu0 0
        %2720 = vmatprep.subr.bf16.mxu0 0
        %2721 = vmatpush1.bf16.msra.mxu0 0
        %2722 = vmatprep.subr.bf16.mxu0 0
        %2723 = vmatpush1.bf16.msra.mxu0 0
        %2724 = vmatprep.mubr.bf16.mxu0 0
        %2725 = vmatmul.mubr.bf16.gmra.mrb[0].mxu0 %v2602
        %v2726 = vpop.f32.mrb[0].mxu0
        %v2727 = vadd.f32 0.0, %v2726
        %v2728 = vpop.f32.mrb[0].mxu0
        %v2729 = vpop.f32.mrb[0].mxu0
        %v2730 = vadd.f32 0.0, %v2729
        %v2731 = vpop.f32.mrb[0].mxu0
        %2732 = vdwg.mxu0
        %v2749 = vunpack.c.l.b16 %v2611
        %v2750 = vunpack.c.l.b16 %v2612
        %v2751 = vunpack.c.l.b16 %v2613
        %v2752 = vunpack.c.l.b16 %v2614
        %v2753 = vunpack.c.l.b16 %v2615
        %v2754 = vunpack.c.l.b16 %v2616
        %v2755 = vunpack.c.l.b16 %v2617
        %v2756 = vunpack.c.l.b16 %v2618
        %v2757 = vunpack.c.l.b16 %v2619
        %v2758 = vunpack.c.l.b16 %v2620
        %v2759 = vunpack.c.l.b16 %v2621
        %v2760 = vunpack.c.l.b16 %v2622
        %v2761 = vunpack.c.l.b16 %v2623
        %v2762 = vunpack.c.l.b16 %v2624
        %v2763 = vunpack.c.l.b16 %v2625
        %v2764 = vunpack.c.l.b16 %v2626
        %v2765 = vpack.c.b16 %v2750, %v2749
        %v2766 = vpack.c.b16 %v2752, %v2751
        %v2767 = vpack.c.b16 %v2754, %v2753
        %v2768 = vpack.c.b16 %v2756, %v2755
        %v2769 = vpack.c.b16 %v2758, %v2757
        %v2770 = vpack.c.b16 %v2760, %v2759
        %v2771 = vpack.c.b16 %v2762, %v2761
        %v2772 = vpack.c.b16 %v2764, %v2763
        %2781 = vmatprep.subr.bf16.mxu0 0
        %2782 = vmatpush1.bf16.msra.mxu0 %v2765
        %2783 = vmatprep.subr.bf16.mxu0 0
        %2784 = vmatpush1.bf16.msra.mxu0 %v2766
        %2785 = vmatprep.subr.bf16.mxu0 0
        %2786 = vmatpush1.bf16.msra.mxu0 %v2767
        %2787 = vmatprep.subr.bf16.mxu0 0
        %2788 = vmatpush1.bf16.msra.mxu0 %v2768
        %2789 = vmatprep.subr.bf16.mxu0 0
        %2790 = vmatpush1.bf16.msra.mxu0 %v2769
        %2791 = vmatprep.subr.bf16.mxu0 0
        %2792 = vmatpush1.bf16.msra.mxu0 %v2770
        %2793 = vmatprep.subr.bf16.mxu0 0
        %2794 = vmatpush1.bf16.msra.mxu0 %v2771
        %2795 = vmatprep.subr.bf16.mxu0 0
        %2796 = vmatpush1.bf16.msra.mxu0 %v2772
        %2797 = vmatprep.subr.bf16.mxu0 0
        %2798 = vmatpush1.bf16.msra.mxu0 0
        %2799 = vmatprep.subr.bf16.mxu0 0
        %2800 = vmatpush1.bf16.msra.mxu0 0
        %2801 = vmatprep.subr.bf16.mxu0 0
        %2802 = vmatpush1.bf16.msra.mxu0 0
        %2803 = vmatprep.subr.bf16.mxu0 0
        %2804 = vmatpush1.bf16.msra.mxu0 0
        %2805 = vmatprep.subr.bf16.mxu0 0
        %2806 = vmatpush1.bf16.msra.mxu0 0
        %2807 = vmatprep.subr.bf16.mxu0 0
        %2808 = vmatpush1.bf16.msra.mxu0 0
        %2809 = vmatprep.subr.bf16.mxu0 0
        %2810 = vmatpush1.bf16.msra.mxu0 0
        %2811 = vmatprep.subr.bf16.mxu0 0
        %2812 = vmatpush1.bf16.msra.mxu0 0
        %2813 = vmatprep.mubr.bf16.mxu0 0
        %2814 = vmatmul.mubr.bf16.gmra.mrb[0].mxu0 %v2610
        %v2815 = vpop.f32.mrb[0].mxu0
        %v2816 = vadd.f32 %v2727, %v2815
        %v2817 = vpop.f32.mrb[0].mxu0
        %v2818 = vpop.f32.mrb[0].mxu0
        %v2819 = vadd.f32 %v2730, %v2818
        %v2820 = vpop.f32.mrb[0].mxu0
        %2821 = vdwg.mxu0
        %v2822 = vpack.c.bf16 %v2609, %v2608
        %s2823 = scalar_lea.vmem [#allocation12], 128
        %v2824 = vld [vmem:[%s2823] sm:$0xf]
        %v2825 = vld [vmem:[%s2823 + $0x4] sm:$0xf]
        %v2826 = vld [vmem:[%s2823 + $0x8] sm:$0xf]
        %v2827 = vld [vmem:[%s2823 + $0xc] sm:$0xf]
        %v2828 = vld [vmem:[%s2823 + $0x10] sm:$0xf]
        %v2829 = vld [vmem:[%s2823 + $0x14] sm:$0xf]
        %v2830 = vld [vmem:[%s2823 + $0x18] sm:$0xf]
        %v2831 = vld [vmem:[%s2823 + $0x1c] sm:$0xf]
        %v2832 = vld [vmem:[%s2823 + $0x20] sm:$0xf]
        %v2833 = vld [vmem:[%s2823 + $0x24] sm:$0xf]
        %v2834 = vld [vmem:[%s2823 + $0x28] sm:$0xf]
        %v2835 = vld [vmem:[%s2823 + $0x2c] sm:$0xf]
        %v2836 = vld [vmem:[%s2823 + $0x30] sm:$0xf]
        %v2837 = vld [vmem:[%s2823 + $0x34] sm:$0xf]
        %v2838 = vld [vmem:[%s2823 + $0x38] sm:$0xf]
        %v2839 = vld [vmem:[%s2823 + $0x3c] sm:$0xf]
        %v2856 = vunpack.c.l.b16 %v2824
        %v2857 = vunpack.c.l.b16 %v2825
        %v2858 = vunpack.c.l.b16 %v2826
        %v2859 = vunpack.c.l.b16 %v2827
        %v2860 = vunpack.c.l.b16 %v2828
        %v2861 = vunpack.c.l.b16 %v2829
        %v2862 = vunpack.c.l.b16 %v2830
        %v2863 = vunpack.c.l.b16 %v2831
        %v2864 = vunpack.c.l.b16 %v2832
        %v2865 = vunpack.c.l.b16 %v2833
        %v2866 = vunpack.c.l.b16 %v2834
        %v2867 = vunpack.c.l.b16 %v2835
        %v2868 = vunpack.c.l.b16 %v2836
        %v2869 = vunpack.c.l.b16 %v2837
        %v2870 = vunpack.c.l.b16 %v2838
        %v2871 = vunpack.c.l.b16 %v2839
        %v2872 = vpack.c.b16 %v2857, %v2856
        %v2873 = vpack.c.b16 %v2859, %v2858
        %v2874 = vpack.c.b16 %v2861, %v2860
        %v2875 = vpack.c.b16 %v2863, %v2862
        %v2876 = vpack.c.b16 %v2865, %v2864
        %v2877 = vpack.c.b16 %v2867, %v2866
        %v2878 = vpack.c.b16 %v2869, %v2868
        %v2879 = vpack.c.b16 %v2871, %v2870
        %2888 = vmatprep.subr.bf16.mxu0 0
        %2889 = vmatpush1.bf16.msra.mxu0 %v2872
        %2890 = vmatprep.subr.bf16.mxu0 0
        %2891 = vmatpush1.bf16.msra.mxu0 %v2873
        %2892 = vmatprep.subr.bf16.mxu0 0
        %2893 = vmatpush1.bf16.msra.mxu0 %v2874
        %2894 = vmatprep.subr.bf16.mxu0 0
        %2895 = vmatpush1.bf16.msra.mxu0 %v2875
        %2896 = vmatprep.subr.bf16.mxu0 0
        %2897 = vmatpush1.bf16.msra.mxu0 %v2876
        %2898 = vmatprep.subr.bf16.mxu0 0
        %2899 = vmatpush1.bf16.msra.mxu0 %v2877
        %2900 = vmatprep.subr.bf16.mxu0 0
        %2901 = vmatpush1.bf16.msra.mxu0 %v2878
        %2902 = vmatprep.subr.bf16.mxu0 0
        %2903 = vmatpush1.bf16.msra.mxu0 %v2879
        %2904 = vmatprep.subr.bf16.mxu0 0
        %2905 = vmatpush1.bf16.msra.mxu0 0
        %2906 = vmatprep.subr.bf16.mxu0 0
        %2907 = vmatpush1.bf16.msra.mxu0 0
        %2908 = vmatprep.subr.bf16.mxu0 0
        %2909 = vmatpush1.bf16.msra.mxu0 0
        %2910 = vmatprep.subr.bf16.mxu0 0
        %2911 = vmatpush1.bf16.msra.mxu0 0
        %2912 = vmatprep.subr.bf16.mxu0 0
        %2913 = vmatpush1.bf16.msra.mxu0 0
        %2914 = vmatprep.subr.bf16.mxu0 0
        %2915 = vmatpush1.bf16.msra.mxu0 0
        %2916 = vmatprep.subr.bf16.mxu0 0
        %2917 = vmatpush1.bf16.msra.mxu0 0
        %2918 = vmatprep.subr.bf16.mxu0 0
        %2919 = vmatpush1.bf16.msra.mxu0 0
        %2920 = vmatprep.mubr.bf16.mxu0 0
        %2921 = vmatmul.mubr.bf16.gmra.mrb[0].mxu0 %v2822
        %v2922 = vpop.f32.mrb[0].mxu0
        %v2923 = vadd.f32 0.0, %v2922
        %v2924 = vpop.f32.mrb[0].mxu0
        %v2925 = vpop.f32.mrb[0].mxu0
        %v2926 = vadd.f32 0.0, %v2925
        %v2927 = vpop.f32.mrb[0].mxu0
        %2928 = vdwg.mxu0
        %v2929 = vadd.f32 %v2816, %v2923
        %v2930 = vadd.f32 %v2819, %v2926
        %v2931 = vld [vmem:[%s14] sm:$0x1]
        %v2933 = vlaneseq
        %v2934 = vshrl.u32 %v2933, 7
        %v2935 = vsub.s32 0, %v2934
        %v2936 = vrot.slane %v2931, %v2935
        %v2938 = vadd.f32 %v2929, %v2936
        %v2939 = vadd.f32 %v2930, %v2936
        %v2940 = vadd.f32 %v2938, %v2241
        %v2941 = vadd.f32 %v2939, %v2244
        %v2942 = vmax.f32 %v2940, %v2941
        %v2943 = vrot.slane %v2942, 4
        %v2944 = vmax.f32 %v2942, %v2943
        %v2945 = vrot.slane %v2944, 2
        %v2946 = vmax.f32 %v2944, %v2945
        %v2947 = vrot.slane %v2946, 1
        %v2948 = vmax.f32 %v2946, %v2947
        %v2949 = vmul.f32 %v2948, %v2948
        %2950 = vadd.xlane.f32.xlu0 %v2949
        %v2951 = vpop.xlane.xlu0 %2950
        %v2952 = vmax.f32 %v2951, 1e-24
        %v2953 = vrsqrt.pop %v2952
        %v2954 = vmul.f32 %v2948, %v2953
        %2955 = vst [vmem:[%s628] sm:$0x1] %v2954
        %s2956 = sand.u32 %s405, 1
        %s2957 = scalar_lea.sflag [#allocation5], %s2956
        %s2958 = sand.u32 %s405, 1
        %s2959 = scalar_lea.vmem [#allocation14], %s2958
        // Predicated region
        $region113: #{tpu_custom_call.1} parent=87 // pred_check
          %p2960 = pneg %p415
        $region114: #{tpu_custom_call.1} parent=87 // pred_check_branch
          %2962 = sbr.rel (%p2960) target = $region116
        $region115: #{tpu_custom_call.1} parent=87 // pred_region
          %s2964 = ssub.s32 16, 16
          %2965 = vsyncadd %s2957, %s2964
          %s2966 = smul.addr %s35, 16
          %s2967 = scalar_lea.hbm %s17, %s2966
          %s2969 = sshll.u32 %s2959, 4
          %s2970 = int_to_ptr.vmem [resolvable:$true] %s2969
          %2972 = dma.vmem_to_hbm [thread:$0]  %s2970, 16, %s2967, %s2957
        $region116: #{tpu_custom_call.1} parent=87 // pred_fallthru
          _
      $region88: #{tpu_custom_call.1} parent=5 // pred_fallthru
        _
      %p2973 = scmp.le.s32.totalorder 2, %s30
      // Predicated region
      $region117: #{tpu_custom_call.1} parent=5 // pred_check
        %p2974 = pneg %p2973
      $region118: #{tpu_custom_call.1} parent=5 // pred_check_branch
        %2976 = sbr.rel (%p2974) target = $region120
      $region119: #{tpu_custom_call.1} parent=5 // pred_region
        %s2977 = ssub.s32 %s30, 2
        // Predicated region
        $region121: #{tpu_custom_call.1} parent=119 // pred_check
          %p2978 = pneg %p421
        $region122: #{tpu_custom_call.1} parent=119 // pred_check_branch
          %2980 = sbr.rel (%p2978) target = $region124
        $region123: #{tpu_custom_call.1} parent=119 // pred_region
          %s2981 = sand.u32 %s406, 1
          %s2982 = scalar_lea.sflag [#allocation5], %s2981
          %s2983 = sand.u32 %s406, 1
          %s2984 = scalar_lea.vmem [#allocation14], %s2983
          %2985 = dma.done %s2982, 16
        $region124: #{tpu_custom_call.1} parent=119 // pred_fallthru
          _
      $region120: #{tpu_custom_call.1} parent=5 // pred_fallthru
        _
    $region6: #{tpu_custom_call.1} parent=1 // loop_footer
      %s34 = sadd.s32 1, %s30
    $region7: #{tpu_custom_call.1} parent=1 // loop_footer_branch
      %29 = sbr.rel target = $region3
    $region8: #{tpu_custom_call.1} parent=1 // loop_exit
      _
    %2986 = vsyncpa [#allocation4], 1
    %s2987 = scalar_lea.sflag [#allocation4], 1
    %2988 = vsyncpa %s2987, 1
    %2989 = vsyncpa [#allocation7], 1
    %2990 = vsyncpa [#allocation10], 1
    %2991 = vsyncpa [#allocation13], 1
    %2992 = vsyncpa [#allocation5], 1
    %s2993 = scalar_lea.sflag [#allocation5], 1
    %2994 = vsyncpa %s2993, 1

</llo_original>
